<compile_context>
chip_gen: v5e
topology: v5e:2x2
jax: 0.10.0
libtpu: 0.0.40
codegen_flags: <defaults>
</compile_context>

<pallas_src>
import functools
import math

import jax
import jax.numpy as jnp
from jax.experimental import pallas as pl
from jax.experimental.pallas import tpu as pltpu


# ---------------- Hyperparameters (HP from the original script, chosen small) -----
class HP:
    encoder_dim = 32
    decoder_dim = 32
    nhead = 4
    encoder_feed_forward_dim = 64
    decoder_feed_forward_dim = 64
    encoder_layer = 2
    decoder_layer = 2
    grapheme_size = 30
    phoneme_size = 40
    ENCODER_PAD_IDX = 0
    DECODER_PAD_IDX = 0
    encoder_max_input = 64
    MAX_DECODE_STEP = 64
    ffn_drop_prob = 0.1          # dropout => identity in eval mode
    encoder_drop_prob = 0.1
    decoder_drop_prob = 0.1


NEG_MASK = -1e10                 # masked_fill value from the original module
NEG_CROSS = -2e10                # cross-batch blocks of the flattened-batch attention


# ------------------------------- Fused Pallas kernel -------------------------------
def _fused_transformer_kernel(
    x_ref, m_enc_ref, m_dec_ref, m_crs_ref,
    attn_w_ref, attn_b_ref,
    ffn_w1_ref, ffn_b1_ref, ffn_w2_ref, ffn_b2_ref,
    ln_ref,
    out_ref, attn_out_ref,
    *, n_enc_layers, n_dec_layers, nhead, head_dim,
    n_enc_rows, n_dec_rows, inv_scale, eps,
):
    d = nhead * head_dim
    f32 = jnp.float32

    def layer_norm(x, idx):
        g = ln_ref[idx, 0]                                    # (1, D)
        b = ln_ref[idx, 1]                                    # (1, D)
        mean = jnp.mean(x, axis=-1, keepdims=True)
        c = x - mean
        var = jnp.mean(c * c, axis=-1, keepdims=True)
        return c * jax.lax.rsqrt(var + eps) * g + b

    def attention_core(q, k, v, mask, w_o, b_o, write_attn):
        # q: (Nq, D), k/v: (Nk, D), mask: (Nq, Nk) in {1 attend, 0 masked, -1 cross-batch}
        outs = []
        attns = []
        for h in range(nhead):
            sl = slice(h * head_dim, (h + 1) * head_dim)
            qh, kh, vh = q[:, sl], k[:, sl], v[:, sl]
            energy = jax.lax.dot_general(
                qh, kh, (((1,), (1,)), ((), ())),
                preferred_element_type=f32) * inv_scale
            # exact masked_fill semantics of the reference module
            energy = jnp.where(mask > 0.5, energy, NEG_MASK)
            energy = jnp.where(mask < -0.5, NEG_CROSS, energy)
            energy = energy - jnp.max(energy, axis=-1, keepdims=True)
            p = jnp.exp(energy)
            attn = p / jnp.sum(p, axis=-1, keepdims=True)     # exact softmax
            outs.append(jnp.dot(attn, vh, preferred_element_type=f32))
            if write_attn:
                attns.append(attn)
        o = jnp.concatenate(outs, axis=-1)                    # (Nq, D) concat heads
        if write_attn:
            cat = jnp.concatenate(attns, axis=-1)             # (Nq, H*Nk)
            pad = attn_out_ref.shape[-1] - cat.shape[-1]
            if pad > 0:
                cat = jnp.concatenate(
                    [cat, jnp.zeros((cat.shape[0], pad), f32)], axis=-1)
            attn_out_ref[...] = cat                           # one lane-dense store
        return jnp.dot(o, w_o, preferred_element_type=f32) + b_o

    def self_attention(x, widx, mask, write_attn=False):
        aw = attn_w_ref[widx]                                 # (D, 4D) = [Wq|Wk|Wv|Wo]
        ab = attn_b_ref[widx]                                 # (1, 4D)
        # single 128-lane-wide MXU matmul; last 32 cols (x@Wo) are ignored
        qkv = jnp.dot(x, aw, preferred_element_type=f32) + ab
        q = qkv[:, 0 * d:1 * d]
        k = qkv[:, 1 * d:2 * d]
        v = qkv[:, 2 * d:3 * d]
        return attention_core(q, k, v, mask,
                              aw[:, 3 * d:4 * d], ab[:, 3 * d:4 * d], write_attn)

    def cross_attention(xq, xkv, widx, mask, write_attn=False):
        aw = attn_w_ref[widx]
        ab = attn_b_ref[widx]
        q = jnp.dot(xq, aw[:, 0:d], preferred_element_type=f32) + ab[:, 0:d]
        kv = jnp.dot(xkv, aw[:, d:3 * d], preferred_element_type=f32) + ab[:, d:3 * d]
        k = kv[:, 0:d]
        v = kv[:, d:2 * d]
        return attention_core(q, k, v, mask,
                              aw[:, 3 * d:4 * d], ab[:, 3 * d:4 * d], write_attn)

    def ffn(x, idx):
        h1 = jnp.dot(x, ffn_w1_ref[idx], preferred_element_type=f32) + ffn_b1_ref[idx]
        h1 = jnp.maximum(h1, 0.0)
        return jnp.dot(h1, ffn_w2_ref[idx], preferred_element_type=f32) + ffn_b2_ref[idx]

    # ---- load activations & masks once (hoisted out of all layer loops) ----
    x = x_ref[0:n_enc_rows, :]                                # (B*Ss, D) encoder stream
    t = x_ref[n_enc_rows:n_enc_rows + n_dec_rows, :]          # (B*Sd, D) decoder stream
    m_enc = m_enc_ref[...]
    m_dec = m_dec_ref[...]
    m_crs = m_crs_ref[...]

    # ------------------------------ encoder ------------------------------
    for l in range(n_enc_layers):
        sa = self_attention(x, l, m_enc)
        x = layer_norm(x + sa, 2 * l)
        ff = ffn(x, l)
        x = layer_norm(x + ff, 2 * l + 1)
    enc_out = x

    # ------------------------------ decoder ------------------------------
    for l in range(n_dec_layers):
        sa = self_attention(t, n_enc_layers + 2 * l, m_dec)
        t = layer_norm(t + sa, 2 * n_enc_layers + 3 * l)
        last = (l == n_dec_layers - 1)
        ca = cross_attention(t, enc_out, n_enc_layers + 2 * l + 1, m_crs,
                             write_attn=last)
        t = layer_norm(t + ca, 2 * n_enc_layers + 3 * l + 1)
        ff = ffn(t, n_enc_layers + l)
        t = layer_norm(t + ff, 2 * n_enc_layers + 3 * l + 2)

    # ------------------------- output projection -------------------------
    w_out = attn_w_ref[n_enc_layers + 2 * n_dec_layers]       # (D, 4D), zero-padded
    b_out = attn_b_ref[n_enc_layers + 2 * n_dec_layers]
    out_ref[...] = jnp.dot(t, w_out, preferred_element_type=f32) + b_out


# ------------------------------- Model glue ----------------------------------------
def make_pe(d_model, max_len):
    position = jnp.arange(max_len, dtype=jnp.float32)[:, None]
    div_term = jnp.exp(jnp.arange(0, d_model, 2, dtype=jnp.float32)
                       * (-math.log(10000.0) / d_model))
    pe = jnp.zeros((max_len, d_model), jnp.float32)
    pe = pe.at[:, 0::2].set(jnp.sin(position * div_term))
    pe = pe.at[:, 1::2].set(jnp.cos(position * div_term))
    return pe


def _build_masks(src, trg):
    """Block-diagonal flattened-batch masks with values {1 attend, 0 masked, -1 cross}."""
    B, Ss = src.shape
    Sd = trg.shape[1]
    row_b_e = jnp.repeat(jnp.arange(B), Ss)                  # batch id of encoder rows
    row_b_d = jnp.repeat(jnp.arange(B), Sd)                  # batch id of decoder rows

    src_ok = (src != HP.ENCODER_PAD_IDX).reshape(-1)         # (B*Ss,)
    trg_ok = (trg != HP.DECODER_PAD_IDX).reshape(-1)         # (B*Sd,)
    pos_d = jnp.tile(jnp.arange(Sd), B)                      # position within trg seq

    def code(same, attend):
        return jnp.where(same, jnp.where(attend, 1.0, 0.0), -1.0).astype(jnp.float32)

    same_ee = row_b_e[:, None] == row_b_e[None, :]
    m_enc = code(same_ee, src_ok[None, :])                   # key-only source pad mask

    same_dd = row_b_d[:, None] == row_b_d[None, :]
    causal = pos_d[:, None] >= pos_d[None, :]
    m_dec = code(same_dd, trg_ok[None, :] & causal)          # pad & causal

    same_de = row_b_d[:, None] == row_b_e[None, :]
    m_crs = code(same_de, src_ok[None, :])                   # cross-attn source mask
    return m_enc, m_dec, m_crs


def transformer_forward(params, src, trg):
    B, Ss = src.shape
    Sd = trg.shape[1]
    d = HP.encoder_dim
    h = HP.nhead

    # ---- embedding + positional encoding (XLA glue; gathers are cheap here) ----
    x_enc = (jnp.take(params["enc_emb"], src, axis=0) * math.sqrt(HP.encoder_dim)
             + params["enc_pe"][None, :Ss, :])
    x_dec = (jnp.take(params["dec_emb"], trg, axis=0) * math.sqrt(HP.decoder_dim)
             + params["dec_pe"][None, :Sd, :])
    x = jnp.concatenate([x_enc.reshape(B * Ss, d), x_dec.reshape(B * Sd, d)], axis=0)

    m_enc, m_dec, m_crs = _build_masks(src, trg)

    wpad = params["attn_w"].shape[-1]                        # 4*d = 128 (lane-dense)
    assert h * B * Ss <= wpad and HP.phoneme_size <= wpad

    kernel = functools.partial(
        _fused_transformer_kernel,
        n_enc_layers=HP.encoder_layer, n_dec_layers=HP.decoder_layer,
        nhead=h, head_dim=d // h,
        n_enc_rows=B * Ss, n_dec_rows=B * Sd,
        inv_scale=1.0 / math.sqrt(d),   # original module scales by sqrt(hid_dim)
        eps=1e-5,
    )

    vmem = pl.BlockSpec(memory_space=pltpu.MemorySpace.VMEM)
    inputs = (x, m_enc, m_dec, m_crs,
              params["attn_w"], params["attn_b"],
              params["ffn_w1"], params["ffn_b1"], params["ffn_w2"], params["ffn_b2"],
              params["ln"])

    out_flat, attn_flat = pl.pallas_call(
        kernel,
        out_shape=(jax.ShapeDtypeStruct((B * Sd, wpad), jnp.float32),
                   jax.ShapeDtypeStruct((B * Sd, wpad), jnp.float32)),
        in_specs=[vmem] * len(inputs),
        out_specs=(vmem, vmem),
    )(*inputs)

    out = out_flat[:, :HP.phoneme_size].reshape(B, Sd, HP.phoneme_size)
    # unpack the lane-dense attention blob: (B*Sd, H*B*Ss) -> (B, H, Sd, Ss)
    a = attn_flat[:, :h * B * Ss].reshape(B, Sd, h, B, Ss)
    attention = a[jnp.arange(B), :, :, jnp.arange(B), :]      # diagonal batch blocks
    attention = jnp.transpose(attention, (0, 2, 1, 3))
    return out, attention


# ------------------------------- Parameter init ------------------------------------
def _uniform(key, shape, bound):
    return jax.random.uniform(key, shape, jnp.float32, -bound, bound)


def init_params(key):
    d = HP.encoder_dim
    le, ld = HP.encoder_layer, HP.decoder_layer
    assert HP.encoder_feed_forward_dim == HP.decoder_feed_forward_dim
    ff = HP.encoder_feed_forward_dim
    bd = 1.0 / math.sqrt(d)
    bf = 1.0 / math.sqrt(ff)

    keys = iter(jax.random.split(key, 128))
    nk = lambda: next(keys)

    p = {}
    p["enc_emb"] = jax.random.normal(nk(), (HP.grapheme_size, d), jnp.float32) * 0.02
    p["dec_emb"] = jax.random.normal(nk(), (HP.phoneme_size, d), jnp.float32) * 0.02
    p["enc_pe"] = make_pe(d, HP.encoder_max_input)
    p["dec_pe"] = make_pe(d, HP.MAX_DECODE_STEP)

    def attn_block():
        # fused [Wq | Wk | Wv | Wo] (d, 4d) and [bq | bk | bv | bo] (1, 4d)
        w = jnp.concatenate([_uniform(nk(), (d, d), bd) for _ in range(4)], axis=1)
        b = jnp.concatenate([_uniform(nk(), (d,), bd) for _ in range(4)]).reshape(1, 4 * d)
        return w, b

    attn_w, attn_b = [], []
    for _ in range(le):                       # encoder self-attention layers
        w, b = attn_block(); attn_w.append(w); attn_b.append(b)
    for _ in range(ld):                       # decoder: self then cross per layer
        w, b = attn_block(); attn_w.append(w); attn_b.append(b)
        w, b = attn_block(); attn_w.append(w); attn_b.append(b)
    # final vocab projection, zero-padded to the same 4d (=128) lane width
    w_out = jnp.zeros((d, 4 * d), jnp.float32).at[:, :HP.phoneme_size].set(
        _uniform(nk(), (d, HP.phoneme_size), bd))
    b_out = jnp.zeros((1, 4 * d), jnp.float32).at[:, :HP.phoneme_size].set(
        _uniform(nk(), (1, HP.phoneme_size), bd))
    attn_w.append(w_out); attn_b.append(b_out)
    p["attn_w"] = jnp.stack(attn_w)           # (le + 2*ld + 1, d, 4d)
    p["attn_b"] = jnp.stack(attn_b)           # (le + 2*ld + 1, 1, 4d)

    ffn_w1, ffn_b1, ffn_w2, ffn_b2 = [], [], [], []
    for _ in range(le + ld):                  # encoder layers then decoder layers
        ffn_w1.append(_uniform(nk(), (d, ff), bd))
        ffn_b1.append(_uniform(nk(), (1, ff), bd))
        ffn_w2.append(_uniform(nk(), (ff, d), bf))
        ffn_b2.append(_uniform(nk(), (1, d), bf))
    p["ffn_w1"] = jnp.stack(ffn_w1)           # (le+ld, d, ff)
    p["ffn_b1"] = jnp.stack(ffn_b1)
    p["ffn_w2"] = jnp.stack(ffn_w2)
    p["ffn_b2"] = jnp.stack(ffn_b2)

    n_ln = 2 * le + 3 * ld                    # enc: 2 LNs/layer, dec: 3 LNs/layer
    p["ln"] = jnp.stack([jnp.ones((n_ln, 1, d), jnp.float32),
                         jnp.zeros((n_ln, 1, d), jnp.float32)], axis=1)  # (n_ln, 2, 1, d)
    return p


# ------------------------------------ main ------------------------------------------
if __name__ == "__main__":
    key = jax.random.PRNGKey(0)
    k_params, k_src, k_trg = jax.random.split(key, 3)

    params = init_params(k_params)

    batch, src_len, trg_len = 2, 8, 8
    src = jax.random.randint(k_src, (batch, src_len), 1, HP.grapheme_size, dtype=jnp.int32)
    trg = jax.random.randint(k_trg, (batch, trg_len), 1, HP.phoneme_size, dtype=jnp.int32)
    # add some padding tokens so the masks are exercised
    src = src.at[1, 6:].set(HP.ENCODER_PAD_IDX)
    trg = trg.at[1, 7:].set(HP.DECODER_PAD_IDX)

    fwd = jax.jit(transformer_forward)
    out, attention = fwd(params, src, trg)
    jax.block_until_ready((out, attention))

    assert out.shape == (batch, trg_len, HP.phoneme_size)
    assert attention.shape == (batch, HP.nhead, trg_len, src_len)
    assert bool(jnp.all(jnp.isfinite(out)))
    assert bool(jnp.all(jnp.isfinite(attention)))
    # returned cross-attention rows must be proper probability distributions
    row_sums = jnp.sum(attention, axis=-1)
    assert bool(jnp.all(jnp.abs(row_sums - 1.0) < 1e-3))
    # TODO(synk): Transformer.infer() greedy decode loop (host-side while) not implemented.
    print("KERNEL_OK")
</pallas_src>

<mosaic_0001>
module attributes {stable_mosaic.version = 11 : i64} {
  func.func @_fused_transformer_kernel(%arg0: memref<32x32xf32, #tpu.memory_space<vmem>>, %arg1: memref<16x16xf32, #tpu.memory_space<vmem>>, %arg2: memref<16x16xf32, #tpu.memory_space<vmem>>, %arg3: memref<16x16xf32, #tpu.memory_space<vmem>>, %arg4: memref<7x32x128xf32, #tpu.memory_space<vmem>>, %arg5: memref<7x1x128xf32, #tpu.memory_space<vmem>>, %arg6: memref<4x32x64xf32, #tpu.memory_space<vmem>>, %arg7: memref<4x1x64xf32, #tpu.memory_space<vmem>>, %arg8: memref<4x64x32xf32, #tpu.memory_space<vmem>>, %arg9: memref<4x1x32xf32, #tpu.memory_space<vmem>>, %arg10: memref<10x2x1x32xf32, #tpu.memory_space<vmem>>, %arg11: memref<16x128xf32, #tpu.memory_space<vmem>>, %arg12: memref<16x128xf32, #tpu.memory_space<vmem>>) attributes {dimension_semantics = [], scalar_prefetch = 0 : i64, scratch_operands = 0 : i64, tpu.core_type = #tpu.core_type<tc>} {
    %c0 = arith.constant 0 : index
    %c0_0 = arith.constant 0 : index
    %0 = vector.load %arg0[%c0, %c0_0] : memref<32x32xf32, #tpu.memory_space<vmem>>, vector<16x32xf32>
    %c16 = arith.constant 16 : index
    %c0_1 = arith.constant 0 : index
    %1 = vector.load %arg0[%c16, %c0_1] : memref<32x32xf32, #tpu.memory_space<vmem>>, vector<16x32xf32>
    %c0_2 = arith.constant 0 : index
    %c0_3 = arith.constant 0 : index
    %2 = vector.load %arg1[%c0_2, %c0_3] : memref<16x16xf32, #tpu.memory_space<vmem>>, vector<16x16xf32>
    %c0_4 = arith.constant 0 : index
    %c0_5 = arith.constant 0 : index
    %3 = vector.load %arg2[%c0_4, %c0_5] : memref<16x16xf32, #tpu.memory_space<vmem>>, vector<16x16xf32>
    %c0_6 = arith.constant 0 : index
    %c0_7 = arith.constant 0 : index
    %4 = vector.load %arg3[%c0_6, %c0_7] : memref<16x16xf32, #tpu.memory_space<vmem>>, vector<16x16xf32>
    %c0_8 = arith.constant 0 : index
    %c0_9 = arith.constant 0 : index
    %c0_10 = arith.constant 0 : index
    %5 = vector.load %arg4[%c0_8, %c0_9, %c0_10] : memref<7x32x128xf32, #tpu.memory_space<vmem>>, vector<1x32x128xf32>
    %6 = vector.shape_cast %5 : vector<1x32x128xf32> to vector<32x128xf32>
    %c0_11 = arith.constant 0 : index
    %c0_12 = arith.constant 0 : index
    %c0_13 = arith.constant 0 : index
    %7 = vector.load %arg5[%c0_11, %c0_12, %c0_13] : memref<7x1x128xf32, #tpu.memory_space<vmem>>, vector<1x1x128xf32>
    %8 = vector.shape_cast %7 : vector<1x1x128xf32> to vector<1x128xf32>
    %cst = arith.constant dense<0.000000e+00> : vector<16x128xf32>
    %9 = tpu.matmul %0, %6, %cst {dimension_numbers = #tpu.dot_dimension_numbers<[1], [0], [0], [1], [0, 0, 1, 1], [], []>} : vector<16x32xf32>, vector<32x128xf32>, vector<16x128xf32> -> vector<16x128xf32>
    %10 = vector.broadcast %8 : vector<1x128xf32> to vector<16x128xf32>
    %11 = arith.addf %9, %10 : vector<16x128xf32>
    %12 = vector.extract_strided_slice %11 {offsets = [0, 0], sizes = [16, 32], strides = [1, 1]} : vector<16x128xf32> to vector<16x32xf32>
    %13 = vector.extract_strided_slice %11 {offsets = [0, 32], sizes = [16, 32], strides = [1, 1]} : vector<16x128xf32> to vector<16x32xf32>
    %14 = vector.extract_strided_slice %11 {offsets = [0, 64], sizes = [16, 32], strides = [1, 1]} : vector<16x128xf32> to vector<16x32xf32>
    %15 = vector.extract_strided_slice %6 {offsets = [0, 96], sizes = [32, 32], strides = [1, 1]} : vector<32x128xf32> to vector<32x32xf32>
    %16 = vector.extract_strided_slice %8 {offsets = [0, 96], sizes = [1, 32], strides = [1, 1]} : vector<1x128xf32> to vector<1x32xf32>
    %17 = vector.extract_strided_slice %12 {offsets = [0, 0], sizes = [16, 8], strides = [1, 1]} : vector<16x32xf32> to vector<16x8xf32>
    %18 = vector.extract_strided_slice %13 {offsets = [0, 0], sizes = [16, 8], strides = [1, 1]} : vector<16x32xf32> to vector<16x8xf32>
    %19 = vector.extract_strided_slice %14 {offsets = [0, 0], sizes = [16, 8], strides = [1, 1]} : vector<16x32xf32> to vector<16x8xf32>
    %cst_14 = arith.constant dense<0.000000e+00> : vector<16x16xf32>
    %20 = tpu.matmul %17, %18, %cst_14 {dimension_numbers = #tpu.dot_dimension_numbers<[1], [1], [0], [0], [0, 0, 1, 0], [], []>} : vector<16x8xf32>, vector<16x8xf32>, vector<16x16xf32> -> vector<16x16xf32>
    %cst_15 = arith.constant 0.176776692 : f32
    %21 = vector.broadcast %cst_15 : f32 to vector<16x16xf32>
    %22 = arith.mulf %20, %21 : vector<16x16xf32>
    %cst_16 = arith.constant 5.000000e-01 : f32
    %23 = vector.broadcast %cst_16 : f32 to vector<16x16xf32>
    %24 = arith.cmpf ogt, %2, %23 : vector<16x16xf32>
    %cst_17 = arith.constant -1.000000e+10 : f32
    %25 = vector.broadcast %cst_17 : f32 to vector<16x16xf32>
    %26 = arith.select %24, %22, %25 : vector<16x16xi1>, vector<16x16xf32>
    %cst_18 = arith.constant -5.000000e-01 : f32
    %27 = vector.broadcast %cst_18 : f32 to vector<16x16xf32>
    %28 = arith.cmpf olt, %2, %27 : vector<16x16xf32>
    %cst_19 = arith.constant -2.000000e+10 : f32
    %29 = vector.broadcast %cst_19 : f32 to vector<16x16xf32>
    %30 = arith.select %28, %29, %26 : vector<16x16xi1>, vector<16x16xf32>
    %cst_20 = arith.constant dense<0xFF800000> : vector<16xf32>
    %31 = vector.multi_reduction <maximumf>, %30, %cst_20 [1] : vector<16x16xf32> to vector<16xf32>
    %32 = vector.shape_cast %31 : vector<16xf32> to vector<16x1xf32>
    %33 = vector.broadcast %32 : vector<16x1xf32> to vector<16x16xf32>
    %34 = arith.subf %30, %33 : vector<16x16xf32>
    %35 = math.exp %34 : vector<16x16xf32>
    %cst_21 = arith.constant dense<0.000000e+00> : vector<16xf32>
    %36 = vector.multi_reduction <add>, %35, %cst_21 [1] : vector<16x16xf32> to vector<16xf32>
    %37 = vector.shape_cast %36 : vector<16xf32> to vector<16x1xf32>
    %38 = vector.broadcast %37 : vector<16x1xf32> to vector<16x16xf32>
    %39 = arith.divf %35, %38 : vector<16x16xf32>
    %cst_22 = arith.constant dense<0.000000e+00> : vector<16x8xf32>
    %40 = tpu.matmul %39, %19, %cst_22 {dimension_numbers = #tpu.dot_dimension_numbers<[1], [0], [0], [1], [0, 0, 1, 1], [], []>} : vector<16x16xf32>, vector<16x8xf32>, vector<16x8xf32> -> vector<16x8xf32>
    %41 = vector.extract_strided_slice %12 {offsets = [0, 8], sizes = [16, 8], strides = [1, 1]} : vector<16x32xf32> to vector<16x8xf32>
    %42 = vector.extract_strided_slice %13 {offsets = [0, 8], sizes = [16, 8], strides = [1, 1]} : vector<16x32xf32> to vector<16x8xf32>
    %43 = vector.extract_strided_slice %14 {offsets = [0, 8], sizes = [16, 8], strides = [1, 1]} : vector<16x32xf32> to vector<16x8xf32>
    %cst_23 = arith.constant dense<0.000000e+00> : vector<16x16xf32>
    %44 = tpu.matmul %41, %42, %cst_23 {dimension_numbers = #tpu.dot_dimension_numbers<[1], [1], [0], [0], [0, 0, 1, 0], [], []>} : vector<16x8xf32>, vector<16x8xf32>, vector<16x16xf32> -> vector<16x16xf32>
    %cst_24 = arith.constant 0.176776692 : f32
    %45 = vector.broadcast %cst_24 : f32 to vector<16x16xf32>
    %46 = arith.mulf %44, %45 : vector<16x16xf32>
    %cst_25 = arith.constant 5.000000e-01 : f32
    %47 = vector.broadcast %cst_25 : f32 to vector<16x16xf32>
    %48 = arith.cmpf ogt, %2, %47 : vector<16x16xf32>
    %cst_26 = arith.constant -1.000000e+10 : f32
    %49 = vector.broadcast %cst_26 : f32 to vector<16x16xf32>
    %50 = arith.select %48, %46, %49 : vector<16x16xi1>, vector<16x16xf32>
    %cst_27 = arith.constant -5.000000e-01 : f32
    %51 = vector.broadcast %cst_27 : f32 to vector<16x16xf32>
    %52 = arith.cmpf olt, %2, %51 : vector<16x16xf32>
    %cst_28 = arith.constant -2.000000e+10 : f32
    %53 = vector.broadcast %cst_28 : f32 to vector<16x16xf32>
    %54 = arith.select %52, %53, %50 : vector<16x16xi1>, vector<16x16xf32>
    %cst_29 = arith.constant dense<0xFF800000> : vector<16xf32>
    %55 = vector.multi_reduction <maximumf>, %54, %cst_29 [1] : vector<16x16xf32> to vector<16xf32>
    %56 = vector.shape_cast %55 : vector<16xf32> to vector<16x1xf32>
    %57 = vector.broadcast %56 : vector<16x1xf32> to vector<16x16xf32>
    %58 = arith.subf %54, %57 : vector<16x16xf32>
    %59 = math.exp %58 : vector<16x16xf32>
    %cst_30 = arith.constant dense<0.000000e+00> : vector<16xf32>
    %60 = vector.multi_reduction <add>, %59, %cst_30 [1] : vector<16x16xf32> to vector<16xf32>
    %61 = vector.shape_cast %60 : vector<16xf32> to vector<16x1xf32>
    %62 = vector.broadcast %61 : vector<16x1xf32> to vector<16x16xf32>
    %63 = arith.divf %59, %62 : vector<16x16xf32>
    %cst_31 = arith.constant dense<0.000000e+00> : vector<16x8xf32>
    %64 = tpu.matmul %63, %43, %cst_31 {dimension_numbers = #tpu.dot_dimension_numbers<[1], [0], [0], [1], [0, 0, 1, 1], [], []>} : vector<16x16xf32>, vector<16x8xf32>, vector<16x8xf32> -> vector<16x8xf32>
    %65 = vector.extract_strided_slice %12 {offsets = [0, 16], sizes = [16, 8], strides = [1, 1]} : vector<16x32xf32> to vector<16x8xf32>
    %66 = vector.extract_strided_slice %13 {offsets = [0, 16], sizes = [16, 8], strides = [1, 1]} : vector<16x32xf32> to vector<16x8xf32>
    %67 = vector.extract_strided_slice %14 {offsets = [0, 16], sizes = [16, 8], strides = [1, 1]} : vector<16x32xf32> to vector<16x8xf32>
    %cst_32 = arith.constant dense<0.000000e+00> : vector<16x16xf32>
    %68 = tpu.matmul %65, %66, %cst_32 {dimension_numbers = #tpu.dot_dimension_numbers<[1], [1], [0], [0], [0, 0, 1, 0], [], []>} : vector<16x8xf32>, vector<16x8xf32>, vector<16x16xf32> -> vector<16x16xf32>
    %cst_33 = arith.constant 0.176776692 : f32
    %69 = vector.broadcast %cst_33 : f32 to vector<16x16xf32>
    %70 = arith.mulf %68, %69 : vector<16x16xf32>
    %cst_34 = arith.constant 5.000000e-01 : f32
    %71 = vector.broadcast %cst_34 : f32 to vector<16x16xf32>
    %72 = arith.cmpf ogt, %2, %71 : vector<16x16xf32>
    %cst_35 = arith.constant -1.000000e+10 : f32
    %73 = vector.broadcast %cst_35 : f32 to vector<16x16xf32>
    %74 = arith.select %72, %70, %73 : vector<16x16xi1>, vector<16x16xf32>
    %cst_36 = arith.constant -5.000000e-01 : f32
    %75 = vector.broadcast %cst_36 : f32 to vector<16x16xf32>
    %76 = arith.cmpf olt, %2, %75 : vector<16x16xf32>
    %cst_37 = arith.constant -2.000000e+10 : f32
    %77 = vector.broadcast %cst_37 : f32 to vector<16x16xf32>
    %78 = arith.select %76, %77, %74 : vector<16x16xi1>, vector<16x16xf32>
    %cst_38 = arith.constant dense<0xFF800000> : vector<16xf32>
    %79 = vector.multi_reduction <maximumf>, %78, %cst_38 [1] : vector<16x16xf32> to vector<16xf32>
    %80 = vector.shape_cast %79 : vector<16xf32> to vector<16x1xf32>
    %81 = vector.broadcast %80 : vector<16x1xf32> to vector<16x16xf32>
    %82 = arith.subf %78, %81 : vector<16x16xf32>
    %83 = math.exp %82 : vector<16x16xf32>
    %cst_39 = arith.constant dense<0.000000e+00> : vector<16xf32>
    %84 = vector.multi_reduction <add>, %83, %cst_39 [1] : vector<16x16xf32> to vector<16xf32>
    %85 = vector.shape_cast %84 : vector<16xf32> to vector<16x1xf32>
    %86 = vector.broadcast %85 : vector<16x1xf32> to vector<16x16xf32>
    %87 = arith.divf %83, %86 : vector<16x16xf32>
    %cst_40 = arith.constant dense<0.000000e+00> : vector<16x8xf32>
    %88 = tpu.matmul %87, %67, %cst_40 {dimension_numbers = #tpu.dot_dimension_numbers<[1], [0], [0], [1], [0, 0, 1, 1], [], []>} : vector<16x16xf32>, vector<16x8xf32>, vector<16x8xf32> -> vector<16x8xf32>
    %89 = vector.extract_strided_slice %12 {offsets = [0, 24], sizes = [16, 8], strides = [1, 1]} : vector<16x32xf32> to vector<16x8xf32>
    %90 = vector.extract_strided_slice %13 {offsets = [0, 24], sizes = [16, 8], strides = [1, 1]} : vector<16x32xf32> to vector<16x8xf32>
    %91 = vector.extract_strided_slice %14 {offsets = [0, 24], sizes = [16, 8], strides = [1, 1]} : vector<16x32xf32> to vector<16x8xf32>
    %cst_41 = arith.constant dense<0.000000e+00> : vector<16x16xf32>
    %92 = tpu.matmul %89, %90, %cst_41 {dimension_numbers = #tpu.dot_dimension_numbers<[1], [1], [0], [0], [0, 0, 1, 0], [], []>} : vector<16x8xf32>, vector<16x8xf32>, vector<16x16xf32> -> vector<16x16xf32>
    %cst_42 = arith.constant 0.176776692 : f32
    %93 = vector.broadcast %cst_42 : f32 to vector<16x16xf32>
    %94 = arith.mulf %92, %93 : vector<16x16xf32>
    %cst_43 = arith.constant 5.000000e-01 : f32
    %95 = vector.broadcast %cst_43 : f32 to vector<16x16xf32>
    %96 = arith.cmpf ogt, %2, %95 : vector<16x16xf32>
    %cst_44 = arith.constant -1.000000e+10 : f32
    %97 = vector.broadcast %cst_44 : f32 to vector<16x16xf32>
    %98 = arith.select %96, %94, %97 : vector<16x16xi1>, vector<16x16xf32>
    %cst_45 = arith.constant -5.000000e-01 : f32
    %99 = vector.broadcast %cst_45 : f32 to vector<16x16xf32>
    %100 = arith.cmpf olt, %2, %99 : vector<16x16xf32>
    %cst_46 = arith.constant -2.000000e+10 : f32
    %101 = vector.broadcast %cst_46 : f32 to vector<16x16xf32>
    %102 = arith.select %100, %101, %98 : vector<16x16xi1>, vector<16x16xf32>
    %cst_47 = arith.constant dense<0xFF800000> : vector<16xf32>
    %103 = vector.multi_reduction <maximumf>, %102, %cst_47 [1] : vector<16x16xf32> to vector<16xf32>
    %104 = vector.shape_cast %103 : vector<16xf32> to vector<16x1xf32>
    %105 = vector.broadcast %104 : vector<16x1xf32> to vector<16x16xf32>
    %106 = arith.subf %102, %105 : vector<16x16xf32>
    %107 = math.exp %106 : vector<16x16xf32>
    %cst_48 = arith.constant dense<0.000000e+00> : vector<16xf32>
    %108 = vector.multi_reduction <add>, %107, %cst_48 [1] : vector<16x16xf32> to vector<16xf32>
    %109 = vector.shape_cast %108 : vector<16xf32> to vector<16x1xf32>
    %110 = vector.broadcast %109 : vector<16x1xf32> to vector<16x16xf32>
    %111 = arith.divf %107, %110 : vector<16x16xf32>
    %cst_49 = arith.constant dense<0.000000e+00> : vector<16x8xf32>
    %112 = tpu.matmul %111, %91, %cst_49 {dimension_numbers = #tpu.dot_dimension_numbers<[1], [0], [0], [1], [0, 0, 1, 1], [], []>} : vector<16x16xf32>, vector<16x8xf32>, vector<16x8xf32> -> vector<16x8xf32>
    %113 = tpu.concatenate %40, %64, %88, %112 in 1 : vector<16x8xf32>, vector<16x8xf32>, vector<16x8xf32>, vector<16x8xf32> -> vector<16x32xf32>
    %cst_50 = arith.constant dense<0.000000e+00> : vector<16x32xf32>
    %114 = tpu.matmul %113, %15, %cst_50 {dimension_numbers = #tpu.dot_dimension_numbers<[1], [0], [0], [1], [0, 0, 1, 1], [], []>} : vector<16x32xf32>, vector<32x32xf32>, vector<16x32xf32> -> vector<16x32xf32>
    %115 = vector.broadcast %16 : vector<1x32xf32> to vector<16x32xf32>
    %116 = arith.addf %114, %115 : vector<16x32xf32>
    %117 = arith.addf %0, %116 : vector<16x32xf32>
    %c0_51 = arith.constant 0 : index
    %c0_52 = arith.constant 0 : index
    %c0_53 = arith.constant 0 : index
    %c0_54 = arith.constant 0 : index
    %118 = vector.load %arg10[%c0_51, %c0_52, %c0_53, %c0_54] : memref<10x2x1x32xf32, #tpu.memory_space<vmem>>, vector<1x1x1x32xf32>
    %119 = vector.shape_cast %118 : vector<1x1x1x32xf32> to vector<1x32xf32>
    %c0_55 = arith.constant 0 : index
    %c1 = arith.constant 1 : index
    %c0_56 = arith.constant 0 : index
    %c0_57 = arith.constant 0 : index
    %120 = vector.load %arg10[%c0_55, %c1, %c0_56, %c0_57] : memref<10x2x1x32xf32, #tpu.memory_space<vmem>>, vector<1x1x1x32xf32>
    %121 = vector.shape_cast %120 : vector<1x1x1x32xf32> to vector<1x32xf32>
    %cst_58 = arith.constant dense<0.000000e+00> : vector<16xf32>
    %122 = vector.multi_reduction <add>, %117, %cst_58 [1] : vector<16x32xf32> to vector<16xf32>
    %123 = vector.shape_cast %122 : vector<16xf32> to vector<16x1xf32>
    %cst_59 = arith.constant 3.200000e+01 : f32
    %124 = vector.broadcast %cst_59 : f32 to vector<16x1xf32>
    %125 = arith.divf %123, %124 : vector<16x1xf32>
    %126 = vector.broadcast %125 : vector<16x1xf32> to vector<16x32xf32>
    %127 = arith.subf %117, %126 : vector<16x32xf32>
    %128 = arith.mulf %127, %127 : vector<16x32xf32>
    %cst_60 = arith.constant dense<0.000000e+00> : vector<16xf32>
    %129 = vector.multi_reduction <add>, %128, %cst_60 [1] : vector<16x32xf32> to vector<16xf32>
    %130 = vector.shape_cast %129 : vector<16xf32> to vector<16x1xf32>
    %cst_61 = arith.constant 3.200000e+01 : f32
    %131 = vector.broadcast %cst_61 : f32 to vector<16x1xf32>
    %132 = arith.divf %130, %131 : vector<16x1xf32>
    %cst_62 = arith.constant 9.99999974E-6 : f32
    %133 = vector.broadcast %cst_62 : f32 to vector<16x1xf32>
    %134 = arith.addf %132, %133 : vector<16x1xf32>
    %135 = math.rsqrt %134 : vector<16x1xf32>
    %136 = vector.broadcast %135 : vector<16x1xf32> to vector<16x32xf32>
    %137 = arith.mulf %127, %136 : vector<16x32xf32>
    %138 = vector.broadcast %119 : vector<1x32xf32> to vector<16x32xf32>
    %139 = arith.mulf %137, %138 : vector<16x32xf32>
    %140 = vector.broadcast %121 : vector<1x32xf32> to vector<16x32xf32>
    %141 = arith.addf %139, %140 : vector<16x32xf32>
    %c0_63 = arith.constant 0 : index
    %c0_64 = arith.constant 0 : index
    %c0_65 = arith.constant 0 : index
    %142 = vector.load %arg6[%c0_63, %c0_64, %c0_65] : memref<4x32x64xf32, #tpu.memory_space<vmem>>, vector<1x32x64xf32>
    %143 = vector.shape_cast %142 : vector<1x32x64xf32> to vector<32x64xf32>
    %cst_66 = arith.constant dense<0.000000e+00> : vector<16x64xf32>
    %144 = tpu.matmul %141, %143, %cst_66 {dimension_numbers = #tpu.dot_dimension_numbers<[1], [0], [0], [1], [0, 0, 1, 1], [], []>} : vector<16x32xf32>, vector<32x64xf32>, vector<16x64xf32> -> vector<16x64xf32>
    %c0_67 = arith.constant 0 : index
    %c0_68 = arith.constant 0 : index
    %c0_69 = arith.constant 0 : index
    %145 = vector.load %arg7[%c0_67, %c0_68, %c0_69] : memref<4x1x64xf32, #tpu.memory_space<vmem>>, vector<1x1x64xf32>
    %146 = vector.shape_cast %145 : vector<1x1x64xf32> to vector<1x64xf32>
    %147 = vector.broadcast %146 : vector<1x64xf32> to vector<16x64xf32>
    %148 = arith.addf %144, %147 : vector<16x64xf32>
    %cst_70 = arith.constant 0.000000e+00 : f32
    %149 = vector.broadcast %cst_70 : f32 to vector<16x64xf32>
    %150 = arith.maximumf %148, %149 : vector<16x64xf32>
    %c0_71 = arith.constant 0 : index
    %c0_72 = arith.constant 0 : index
    %c0_73 = arith.constant 0 : index
    %151 = vector.load %arg8[%c0_71, %c0_72, %c0_73] : memref<4x64x32xf32, #tpu.memory_space<vmem>>, vector<1x64x32xf32>
    %152 = vector.shape_cast %151 : vector<1x64x32xf32> to vector<64x32xf32>
    %cst_74 = arith.constant dense<0.000000e+00> : vector<16x32xf32>
    %153 = tpu.matmul %150, %152, %cst_74 {dimension_numbers = #tpu.dot_dimension_numbers<[1], [0], [0], [1], [0, 0, 1, 1], [], []>} : vector<16x64xf32>, vector<64x32xf32>, vector<16x32xf32> -> vector<16x32xf32>
    %c0_75 = arith.constant 0 : index
    %c0_76 = arith.constant 0 : index
    %c0_77 = arith.constant 0 : index
    %154 = vector.load %arg9[%c0_75, %c0_76, %c0_77] : memref<4x1x32xf32, #tpu.memory_space<vmem>>, vector<1x1x32xf32>
    %155 = vector.shape_cast %154 : vector<1x1x32xf32> to vector<1x32xf32>
    %156 = vector.broadcast %155 : vector<1x32xf32> to vector<16x32xf32>
    %157 = arith.addf %153, %156 : vector<16x32xf32>
    %158 = arith.addf %141, %157 : vector<16x32xf32>
    %c1_78 = arith.constant 1 : index
    %c0_79 = arith.constant 0 : index
    %c0_80 = arith.constant 0 : index
    %c0_81 = arith.constant 0 : index
    %159 = vector.load %arg10[%c1_78, %c0_79, %c0_80, %c0_81] : memref<10x2x1x32xf32, #tpu.memory_space<vmem>>, vector<1x1x1x32xf32>
    %160 = vector.shape_cast %159 : vector<1x1x1x32xf32> to vector<1x32xf32>
    %c1_82 = arith.constant 1 : index
    %c1_83 = arith.constant 1 : index
    %c0_84 = arith.constant 0 : index
    %c0_85 = arith.constant 0 : index
    %161 = vector.load %arg10[%c1_82, %c1_83, %c0_84, %c0_85] : memref<10x2x1x32xf32, #tpu.memory_space<vmem>>, vector<1x1x1x32xf32>
    %162 = vector.shape_cast %161 : vector<1x1x1x32xf32> to vector<1x32xf32>
    %cst_86 = arith.constant dense<0.000000e+00> : vector<16xf32>
    %163 = vector.multi_reduction <add>, %158, %cst_86 [1] : vector<16x32xf32> to vector<16xf32>
    %164 = vector.shape_cast %163 : vector<16xf32> to vector<16x1xf32>
    %cst_87 = arith.constant 3.200000e+01 : f32
    %165 = vector.broadcast %cst_87 : f32 to vector<16x1xf32>
    %166 = arith.divf %164, %165 : vector<16x1xf32>
    %167 = vector.broadcast %166 : vector<16x1xf32> to vector<16x32xf32>
    %168 = arith.subf %158, %167 : vector<16x32xf32>
    %169 = arith.mulf %168, %168 : vector<16x32xf32>
    %cst_88 = arith.constant dense<0.000000e+00> : vector<16xf32>
    %170 = vector.multi_reduction <add>, %169, %cst_88 [1] : vector<16x32xf32> to vector<16xf32>
    %171 = vector.shape_cast %170 : vector<16xf32> to vector<16x1xf32>
    %cst_89 = arith.constant 3.200000e+01 : f32
    %172 = vector.broadcast %cst_89 : f32 to vector<16x1xf32>
    %173 = arith.divf %171, %172 : vector<16x1xf32>
    %cst_90 = arith.constant 9.99999974E-6 : f32
    %174 = vector.broadcast %cst_90 : f32 to vector<16x1xf32>
    %175 = arith.addf %173, %174 : vector<16x1xf32>
    %176 = math.rsqrt %175 : vector<16x1xf32>
    %177 = vector.broadcast %176 : vector<16x1xf32> to vector<16x32xf32>
    %178 = arith.mulf %168, %177 : vector<16x32xf32>
    %179 = vector.broadcast %160 : vector<1x32xf32> to vector<16x32xf32>
    %180 = arith.mulf %178, %179 : vector<16x32xf32>
    %181 = vector.broadcast %162 : vector<1x32xf32> to vector<16x32xf32>
    %182 = arith.addf %180, %181 : vector<16x32xf32>
    %c1_91 = arith.constant 1 : index
    %c0_92 = arith.constant 0 : index
    %c0_93 = arith.constant 0 : index
    %183 = vector.load %arg4[%c1_91, %c0_92, %c0_93] : memref<7x32x128xf32, #tpu.memory_space<vmem>>, vector<1x32x128xf32>
    %184 = vector.shape_cast %183 : vector<1x32x128xf32> to vector<32x128xf32>
    %c1_94 = arith.constant 1 : index
    %c0_95 = arith.constant 0 : index
    %c0_96 = arith.constant 0 : index
    %185 = vector.load %arg5[%c1_94, %c0_95, %c0_96] : memref<7x1x128xf32, #tpu.memory_space<vmem>>, vector<1x1x128xf32>
    %186 = vector.shape_cast %185 : vector<1x1x128xf32> to vector<1x128xf32>
    %cst_97 = arith.constant dense<0.000000e+00> : vector<16x128xf32>
    %187 = tpu.matmul %182, %184, %cst_97 {dimension_numbers = #tpu.dot_dimension_numbers<[1], [0], [0], [1], [0, 0, 1, 1], [], []>} : vector<16x32xf32>, vector<32x128xf32>, vector<16x128xf32> -> vector<16x128xf32>
    %188 = vector.broadcast %186 : vector<1x128xf32> to vector<16x128xf32>
    %189 = arith.addf %187, %188 : vector<16x128xf32>
    %190 = vector.extract_strided_slice %189 {offsets = [0, 0], sizes = [16, 32], strides = [1, 1]} : vector<16x128xf32> to vector<16x32xf32>
    %191 = vector.extract_strided_slice %189 {offsets = [0, 32], sizes = [16, 32], strides = [1, 1]} : vector<16x128xf32> to vector<16x32xf32>
    %192 = vector.extract_strided_slice %189 {offsets = [0, 64], sizes = [16, 32], strides = [1, 1]} : vector<16x128xf32> to vector<16x32xf32>
    %193 = vector.extract_strided_slice %184 {offsets = [0, 96], sizes = [32, 32], strides = [1, 1]} : vector<32x128xf32> to vector<32x32xf32>
    %194 = vector.extract_strided_slice %186 {offsets = [0, 96], sizes = [1, 32], strides = [1, 1]} : vector<1x128xf32> to vector<1x32xf32>
    %195 = vector.extract_strided_slice %190 {offsets = [0, 0], sizes = [16, 8], strides = [1, 1]} : vector<16x32xf32> to vector<16x8xf32>
    %196 = vector.extract_strided_slice %191 {offsets = [0, 0], sizes = [16, 8], strides = [1, 1]} : vector<16x32xf32> to vector<16x8xf32>
    %197 = vector.extract_strided_slice %192 {offsets = [0, 0], sizes = [16, 8], strides = [1, 1]} : vector<16x32xf32> to vector<16x8xf32>
    %cst_98 = arith.constant dense<0.000000e+00> : vector<16x16xf32>
    %198 = tpu.matmul %195, %196, %cst_98 {dimension_numbers = #tpu.dot_dimension_numbers<[1], [1], [0], [0], [0, 0, 1, 0], [], []>} : vector<16x8xf32>, vector<16x8xf32>, vector<16x16xf32> -> vector<16x16xf32>
    %cst_99 = arith.constant 0.176776692 : f32
    %199 = vector.broadcast %cst_99 : f32 to vector<16x16xf32>
    %200 = arith.mulf %198, %199 : vector<16x16xf32>
    %cst_100 = arith.constant 5.000000e-01 : f32
    %201 = vector.broadcast %cst_100 : f32 to vector<16x16xf32>
    %202 = arith.cmpf ogt, %2, %201 : vector<16x16xf32>
    %cst_101 = arith.constant -1.000000e+10 : f32
    %203 = vector.broadcast %cst_101 : f32 to vector<16x16xf32>
    %204 = arith.select %202, %200, %203 : vector<16x16xi1>, vector<16x16xf32>
    %cst_102 = arith.constant -5.000000e-01 : f32
    %205 = vector.broadcast %cst_102 : f32 to vector<16x16xf32>
    %206 = arith.cmpf olt, %2, %205 : vector<16x16xf32>
    %cst_103 = arith.constant -2.000000e+10 : f32
    %207 = vector.broadcast %cst_103 : f32 to vector<16x16xf32>
    %208 = arith.select %206, %207, %204 : vector<16x16xi1>, vector<16x16xf32>
    %cst_104 = arith.constant dense<0xFF800000> : vector<16xf32>
    %209 = vector.multi_reduction <maximumf>, %208, %cst_104 [1] : vector<16x16xf32> to vector<16xf32>
    %210 = vector.shape_cast %209 : vector<16xf32> to vector<16x1xf32>
    %211 = vector.broadcast %210 : vector<16x1xf32> to vector<16x16xf32>
    %212 = arith.subf %208, %211 : vector<16x16xf32>
    %213 = math.exp %212 : vector<16x16xf32>
    %cst_105 = arith.constant dense<0.000000e+00> : vector<16xf32>
    %214 = vector.multi_reduction <add>, %213, %cst_105 [1] : vector<16x16xf32> to vector<16xf32>
    %215 = vector.shape_cast %214 : vector<16xf32> to vector<16x1xf32>
    %216 = vector.broadcast %215 : vector<16x1xf32> to vector<16x16xf32>
    %217 = arith.divf %213, %216 : vector<16x16xf32>
    %cst_106 = arith.constant dense<0.000000e+00> : vector<16x8xf32>
    %218 = tpu.matmul %217, %197, %cst_106 {dimension_numbers = #tpu.dot_dimension_numbers<[1], [0], [0], [1], [0, 0, 1, 1], [], []>} : vector<16x16xf32>, vector<16x8xf32>, vector<16x8xf32> -> vector<16x8xf32>
    %219 = vector.extract_strided_slice %190 {offsets = [0, 8], sizes = [16, 8], strides = [1, 1]} : vector<16x32xf32> to vector<16x8xf32>
    %220 = vector.extract_strided_slice %191 {offsets = [0, 8], sizes = [16, 8], strides = [1, 1]} : vector<16x32xf32> to vector<16x8xf32>
    %221 = vector.extract_strided_slice %192 {offsets = [0, 8], sizes = [16, 8], strides = [1, 1]} : vector<16x32xf32> to vector<16x8xf32>
    %cst_107 = arith.constant dense<0.000000e+00> : vector<16x16xf32>
    %222 = tpu.matmul %219, %220, %cst_107 {dimension_numbers = #tpu.dot_dimension_numbers<[1], [1], [0], [0], [0, 0, 1, 0], [], []>} : vector<16x8xf32>, vector<16x8xf32>, vector<16x16xf32> -> vector<16x16xf32>
    %cst_108 = arith.constant 0.176776692 : f32
    %223 = vector.broadcast %cst_108 : f32 to vector<16x16xf32>
    %224 = arith.mulf %222, %223 : vector<16x16xf32>
    %cst_109 = arith.constant 5.000000e-01 : f32
    %225 = vector.broadcast %cst_109 : f32 to vector<16x16xf32>
    %226 = arith.cmpf ogt, %2, %225 : vector<16x16xf32>
    %cst_110 = arith.constant -1.000000e+10 : f32
    %227 = vector.broadcast %cst_110 : f32 to vector<16x16xf32>
    %228 = arith.select %226, %224, %227 : vector<16x16xi1>, vector<16x16xf32>
    %cst_111 = arith.constant -5.000000e-01 : f32
    %229 = vector.broadcast %cst_111 : f32 to vector<16x16xf32>
    %230 = arith.cmpf olt, %2, %229 : vector<16x16xf32>
    %cst_112 = arith.constant -2.000000e+10 : f32
    %231 = vector.broadcast %cst_112 : f32 to vector<16x16xf32>
    %232 = arith.select %230, %231, %228 : vector<16x16xi1>, vector<16x16xf32>
    %cst_113 = arith.constant dense<0xFF800000> : vector<16xf32>
    %233 = vector.multi_reduction <maximumf>, %232, %cst_113 [1] : vector<16x16xf32> to vector<16xf32>
    %234 = vector.shape_cast %233 : vector<16xf32> to vector<16x1xf32>
    %235 = vector.broadcast %234 : vector<16x1xf32> to vector<16x16xf32>
    %236 = arith.subf %232, %235 : vector<16x16xf32>
    %237 = math.exp %236 : vector<16x16xf32>
    %cst_114 = arith.constant dense<0.000000e+00> : vector<16xf32>
    %238 = vector.multi_reduction <add>, %237, %cst_114 [1] : vector<16x16xf32> to vector<16xf32>
    %239 = vector.shape_cast %238 : vector<16xf32> to vector<16x1xf32>
    %240 = vector.broadcast %239 : vector<16x1xf32> to vector<16x16xf32>
    %241 = arith.divf %237, %240 : vector<16x16xf32>
    %cst_115 = arith.constant dense<0.000000e+00> : vector<16x8xf32>
    %242 = tpu.matmul %241, %221, %cst_115 {dimension_numbers = #tpu.dot_dimension_numbers<[1], [0], [0], [1], [0, 0, 1, 1], [], []>} : vector<16x16xf32>, vector<16x8xf32>, vector<16x8xf32> -> vector<16x8xf32>
    %243 = vector.extract_strided_slice %190 {offsets = [0, 16], sizes = [16, 8], strides = [1, 1]} : vector<16x32xf32> to vector<16x8xf32>
    %244 = vector.extract_strided_slice %191 {offsets = [0, 16], sizes = [16, 8], strides = [1, 1]} : vector<16x32xf32> to vector<16x8xf32>
    %245 = vector.extract_strided_slice %192 {offsets = [0, 16], sizes = [16, 8], strides = [1, 1]} : vector<16x32xf32> to vector<16x8xf32>
    %cst_116 = arith.constant dense<0.000000e+00> : vector<16x16xf32>
    %246 = tpu.matmul %243, %244, %cst_116 {dimension_numbers = #tpu.dot_dimension_numbers<[1], [1], [0], [0], [0, 0, 1, 0], [], []>} : vector<16x8xf32>, vector<16x8xf32>, vector<16x16xf32> -> vector<16x16xf32>
    %cst_117 = arith.constant 0.176776692 : f32
    %247 = vector.broadcast %cst_117 : f32 to vector<16x16xf32>
    %248 = arith.mulf %246, %247 : vector<16x16xf32>
    %cst_118 = arith.constant 5.000000e-01 : f32
    %249 = vector.broadcast %cst_118 : f32 to vector<16x16xf32>
    %250 = arith.cmpf ogt, %2, %249 : vector<16x16xf32>
    %cst_119 = arith.constant -1.000000e+10 : f32
    %251 = vector.broadcast %cst_119 : f32 to vector<16x16xf32>
    %252 = arith.select %250, %248, %251 : vector<16x16xi1>, vector<16x16xf32>
    %cst_120 = arith.constant -5.000000e-01 : f32
    %253 = vector.broadcast %cst_120 : f32 to vector<16x16xf32>
    %254 = arith.cmpf olt, %2, %253 : vector<16x16xf32>
    %cst_121 = arith.constant -2.000000e+10 : f32
    %255 = vector.broadcast %cst_121 : f32 to vector<16x16xf32>
    %256 = arith.select %254, %255, %252 : vector<16x16xi1>, vector<16x16xf32>
    %cst_122 = arith.constant dense<0xFF800000> : vector<16xf32>
    %257 = vector.multi_reduction <maximumf>, %256, %cst_122 [1] : vector<16x16xf32> to vector<16xf32>
    %258 = vector.shape_cast %257 : vector<16xf32> to vector<16x1xf32>
    %259 = vector.broadcast %258 : vector<16x1xf32> to vector<16x16xf32>
    %260 = arith.subf %256, %259 : vector<16x16xf32>
    %261 = math.exp %260 : vector<16x16xf32>
    %cst_123 = arith.constant dense<0.000000e+00> : vector<16xf32>
    %262 = vector.multi_reduction <add>, %261, %cst_123 [1] : vector<16x16xf32> to vector<16xf32>
    %263 = vector.shape_cast %262 : vector<16xf32> to vector<16x1xf32>
    %264 = vector.broadcast %263 : vector<16x1xf32> to vector<16x16xf32>
    %265 = arith.divf %261, %264 : vector<16x16xf32>
    %cst_124 = arith.constant dense<0.000000e+00> : vector<16x8xf32>
    %266 = tpu.matmul %265, %245, %cst_124 {dimension_numbers = #tpu.dot_dimension_numbers<[1], [0], [0], [1], [0, 0, 1, 1], [], []>} : vector<16x16xf32>, vector<16x8xf32>, vector<16x8xf32> -> vector<16x8xf32>
    %267 = vector.extract_strided_slice %190 {offsets = [0, 24], sizes = [16, 8], strides = [1, 1]} : vector<16x32xf32> to vector<16x8xf32>
    %268 = vector.extract_strided_slice %191 {offsets = [0, 24], sizes = [16, 8], strides = [1, 1]} : vector<16x32xf32> to vector<16x8xf32>
    %269 = vector.extract_strided_slice %192 {offsets = [0, 24], sizes = [16, 8], strides = [1, 1]} : vector<16x32xf32> to vector<16x8xf32>
    %cst_125 = arith.constant dense<0.000000e+00> : vector<16x16xf32>
    %270 = tpu.matmul %267, %268, %cst_125 {dimension_numbers = #tpu.dot_dimension_numbers<[1], [1], [0], [0], [0, 0, 1, 0], [], []>} : vector<16x8xf32>, vector<16x8xf32>, vector<16x16xf32> -> vector<16x16xf32>
    %cst_126 = arith.constant 0.176776692 : f32
    %271 = vector.broadcast %cst_126 : f32 to vector<16x16xf32>
    %272 = arith.mulf %270, %271 : vector<16x16xf32>
    %cst_127 = arith.constant 5.000000e-01 : f32
    %273 = vector.broadcast %cst_127 : f32 to vector<16x16xf32>
    %274 = arith.cmpf ogt, %2, %273 : vector<16x16xf32>
    %cst_128 = arith.constant -1.000000e+10 : f32
    %275 = vector.broadcast %cst_128 : f32 to vector<16x16xf32>
    %276 = arith.select %274, %272, %275 : vector<16x16xi1>, vector<16x16xf32>
    %cst_129 = arith.constant -5.000000e-01 : f32
    %277 = vector.broadcast %cst_129 : f32 to vector<16x16xf32>
    %278 = arith.cmpf olt, %2, %277 : vector<16x16xf32>
    %cst_130 = arith.constant -2.000000e+10 : f32
    %279 = vector.broadcast %cst_130 : f32 to vector<16x16xf32>
    %280 = arith.select %278, %279, %276 : vector<16x16xi1>, vector<16x16xf32>
    %cst_131 = arith.constant dense<0xFF800000> : vector<16xf32>
    %281 = vector.multi_reduction <maximumf>, %280, %cst_131 [1] : vector<16x16xf32> to vector<16xf32>
    %282 = vector.shape_cast %281 : vector<16xf32> to vector<16x1xf32>
    %283 = vector.broadcast %282 : vector<16x1xf32> to vector<16x16xf32>
    %284 = arith.subf %280, %283 : vector<16x16xf32>
    %285 = math.exp %284 : vector<16x16xf32>
    %cst_132 = arith.constant dense<0.000000e+00> : vector<16xf32>
    %286 = vector.multi_reduction <add>, %285, %cst_132 [1] : vector<16x16xf32> to vector<16xf32>
    %287 = vector.shape_cast %286 : vector<16xf32> to vector<16x1xf32>
    %288 = vector.broadcast %287 : vector<16x1xf32> to vector<16x16xf32>
    %289 = arith.divf %285, %288 : vector<16x16xf32>
    %cst_133 = arith.constant dense<0.000000e+00> : vector<16x8xf32>
    %290 = tpu.matmul %289, %269, %cst_133 {dimension_numbers = #tpu.dot_dimension_numbers<[1], [0], [0], [1], [0, 0, 1, 1], [], []>} : vector<16x16xf32>, vector<16x8xf32>, vector<16x8xf32> -> vector<16x8xf32>
    %291 = tpu.concatenate %218, %242, %266, %290 in 1 : vector<16x8xf32>, vector<16x8xf32>, vector<16x8xf32>, vector<16x8xf32> -> vector<16x32xf32>
    %cst_134 = arith.constant dense<0.000000e+00> : vector<16x32xf32>
    %292 = tpu.matmul %291, %193, %cst_134 {dimension_numbers = #tpu.dot_dimension_numbers<[1], [0], [0], [1], [0, 0, 1, 1], [], []>} : vector<16x32xf32>, vector<32x32xf32>, vector<16x32xf32> -> vector<16x32xf32>
    %293 = vector.broadcast %194 : vector<1x32xf32> to vector<16x32xf32>
    %294 = arith.addf %292, %293 : vector<16x32xf32>
    %295 = arith.addf %182, %294 : vector<16x32xf32>
    %c2 = arith.constant 2 : index
    %c0_135 = arith.constant 0 : index
    %c0_136 = arith.constant 0 : index
    %c0_137 = arith.constant 0 : index
    %296 = vector.load %arg10[%c2, %c0_135, %c0_136, %c0_137] : memref<10x2x1x32xf32, #tpu.memory_space<vmem>>, vector<1x1x1x32xf32>
    %297 = vector.shape_cast %296 : vector<1x1x1x32xf32> to vector<1x32xf32>
    %c2_138 = arith.constant 2 : index
    %c1_139 = arith.constant 1 : index
    %c0_140 = arith.constant 0 : index
    %c0_141 = arith.constant 0 : index
    %298 = vector.load %arg10[%c2_138, %c1_139, %c0_140, %c0_141] : memref<10x2x1x32xf32, #tpu.memory_space<vmem>>, vector<1x1x1x32xf32>
    %299 = vector.shape_cast %298 : vector<1x1x1x32xf32> to vector<1x32xf32>
    %cst_142 = arith.constant dense<0.000000e+00> : vector<16xf32>
    %300 = vector.multi_reduction <add>, %295, %cst_142 [1] : vector<16x32xf32> to vector<16xf32>
    %301 = vector.shape_cast %300 : vector<16xf32> to vector<16x1xf32>
    %cst_143 = arith.constant 3.200000e+01 : f32
    %302 = vector.broadcast %cst_143 : f32 to vector<16x1xf32>
    %303 = arith.divf %301, %302 : vector<16x1xf32>
    %304 = vector.broadcast %303 : vector<16x1xf32> to vector<16x32xf32>
    %305 = arith.subf %295, %304 : vector<16x32xf32>
    %306 = arith.mulf %305, %305 : vector<16x32xf32>
    %cst_144 = arith.constant dense<0.000000e+00> : vector<16xf32>
    %307 = vector.multi_reduction <add>, %306, %cst_144 [1] : vector<16x32xf32> to vector<16xf32>
    %308 = vector.shape_cast %307 : vector<16xf32> to vector<16x1xf32>
    %cst_145 = arith.constant 3.200000e+01 : f32
    %309 = vector.broadcast %cst_145 : f32 to vector<16x1xf32>
    %310 = arith.divf %308, %309 : vector<16x1xf32>
    %cst_146 = arith.constant 9.99999974E-6 : f32
    %311 = vector.broadcast %cst_146 : f32 to vector<16x1xf32>
    %312 = arith.addf %310, %311 : vector<16x1xf32>
    %313 = math.rsqrt %312 : vector<16x1xf32>
    %314 = vector.broadcast %313 : vector<16x1xf32> to vector<16x32xf32>
    %315 = arith.mulf %305, %314 : vector<16x32xf32>
    %316 = vector.broadcast %297 : vector<1x32xf32> to vector<16x32xf32>
    %317 = arith.mulf %315, %316 : vector<16x32xf32>
    %318 = vector.broadcast %299 : vector<1x32xf32> to vector<16x32xf32>
    %319 = arith.addf %317, %318 : vector<16x32xf32>
    %c1_147 = arith.constant 1 : index
    %c0_148 = arith.constant 0 : index
    %c0_149 = arith.constant 0 : index
    %320 = vector.load %arg6[%c1_147, %c0_148, %c0_149] : memref<4x32x64xf32, #tpu.memory_space<vmem>>, vector<1x32x64xf32>
    %321 = vector.shape_cast %320 : vector<1x32x64xf32> to vector<32x64xf32>
    %cst_150 = arith.constant dense<0.000000e+00> : vector<16x64xf32>
    %322 = tpu.matmul %319, %321, %cst_150 {dimension_numbers = #tpu.dot_dimension_numbers<[1], [0], [0], [1], [0, 0, 1, 1], [], []>} : vector<16x32xf32>, vector<32x64xf32>, vector<16x64xf32> -> vector<16x64xf32>
    %c1_151 = arith.constant 1 : index
    %c0_152 = arith.constant 0 : index
    %c0_153 = arith.constant 0 : index
    %323 = vector.load %arg7[%c1_151, %c0_152, %c0_153] : memref<4x1x64xf32, #tpu.memory_space<vmem>>, vector<1x1x64xf32>
    %324 = vector.shape_cast %323 : vector<1x1x64xf32> to vector<1x64xf32>
    %325 = vector.broadcast %324 : vector<1x64xf32> to vector<16x64xf32>
    %326 = arith.addf %322, %325 : vector<16x64xf32>
    %cst_154 = arith.constant 0.000000e+00 : f32
    %327 = vector.broadcast %cst_154 : f32 to vector<16x64xf32>
    %328 = arith.maximumf %326, %327 : vector<16x64xf32>
    %c1_155 = arith.constant 1 : index
    %c0_156 = arith.constant 0 : index
    %c0_157 = arith.constant 0 : index
    %329 = vector.load %arg8[%c1_155, %c0_156, %c0_157] : memref<4x64x32xf32, #tpu.memory_space<vmem>>, vector<1x64x32xf32>
    %330 = vector.shape_cast %329 : vector<1x64x32xf32> to vector<64x32xf32>
    %cst_158 = arith.constant dense<0.000000e+00> : vector<16x32xf32>
    %331 = tpu.matmul %328, %330, %cst_158 {dimension_numbers = #tpu.dot_dimension_numbers<[1], [0], [0], [1], [0, 0, 1, 1], [], []>} : vector<16x64xf32>, vector<64x32xf32>, vector<16x32xf32> -> vector<16x32xf32>
    %c1_159 = arith.constant 1 : index
    %c0_160 = arith.constant 0 : index
    %c0_161 = arith.constant 0 : index
    %332 = vector.load %arg9[%c1_159, %c0_160, %c0_161] : memref<4x1x32xf32, #tpu.memory_space<vmem>>, vector<1x1x32xf32>
    %333 = vector.shape_cast %332 : vector<1x1x32xf32> to vector<1x32xf32>
    %334 = vector.broadcast %333 : vector<1x32xf32> to vector<16x32xf32>
    %335 = arith.addf %331, %334 : vector<16x32xf32>
    %336 = arith.addf %319, %335 : vector<16x32xf32>
    %c3 = arith.constant 3 : index
    %c0_162 = arith.constant 0 : index
    %c0_163 = arith.constant 0 : index
    %c0_164 = arith.constant 0 : index
    %337 = vector.load %arg10[%c3, %c0_162, %c0_163, %c0_164] : memref<10x2x1x32xf32, #tpu.memory_space<vmem>>, vector<1x1x1x32xf32>
    %338 = vector.shape_cast %337 : vector<1x1x1x32xf32> to vector<1x32xf32>
    %c3_165 = arith.constant 3 : index
    %c1_166 = arith.constant 1 : index
    %c0_167 = arith.constant 0 : index
    %c0_168 = arith.constant 0 : index
    %339 = vector.load %arg10[%c3_165, %c1_166, %c0_167, %c0_168] : memref<10x2x1x32xf32, #tpu.memory_space<vmem>>, vector<1x1x1x32xf32>
    %340 = vector.shape_cast %339 : vector<1x1x1x32xf32> to vector<1x32xf32>
    %cst_169 = arith.constant dense<0.000000e+00> : vector<16xf32>
    %341 = vector.multi_reduction <add>, %336, %cst_169 [1] : vector<16x32xf32> to vector<16xf32>
    %342 = vector.shape_cast %341 : vector<16xf32> to vector<16x1xf32>
    %cst_170 = arith.constant 3.200000e+01 : f32
    %343 = vector.broadcast %cst_170 : f32 to vector<16x1xf32>
    %344 = arith.divf %342, %343 : vector<16x1xf32>
    %345 = vector.broadcast %344 : vector<16x1xf32> to vector<16x32xf32>
    %346 = arith.subf %336, %345 : vector<16x32xf32>
    %347 = arith.mulf %346, %346 : vector<16x32xf32>
    %cst_171 = arith.constant dense<0.000000e+00> : vector<16xf32>
    %348 = vector.multi_reduction <add>, %347, %cst_171 [1] : vector<16x32xf32> to vector<16xf32>
    %349 = vector.shape_cast %348 : vector<16xf32> to vector<16x1xf32>
    %cst_172 = arith.constant 3.200000e+01 : f32
    %350 = vector.broadcast %cst_172 : f32 to vector<16x1xf32>
    %351 = arith.divf %349, %350 : vector<16x1xf32>
    %cst_173 = arith.constant 9.99999974E-6 : f32
    %352 = vector.broadcast %cst_173 : f32 to vector<16x1xf32>
    %353 = arith.addf %351, %352 : vector<16x1xf32>
    %354 = math.rsqrt %353 : vector<16x1xf32>
    %355 = vector.broadcast %354 : vector<16x1xf32> to vector<16x32xf32>
    %356 = arith.mulf %346, %355 : vector<16x32xf32>
    %357 = vector.broadcast %338 : vector<1x32xf32> to vector<16x32xf32>
    %358 = arith.mulf %356, %357 : vector<16x32xf32>
    %359 = vector.broadcast %340 : vector<1x32xf32> to vector<16x32xf32>
    %360 = arith.addf %358, %359 : vector<16x32xf32>
    %c2_174 = arith.constant 2 : index
    %c0_175 = arith.constant 0 : index
    %c0_176 = arith.constant 0 : index
    %361 = vector.load %arg4[%c2_174, %c0_175, %c0_176] : memref<7x32x128xf32, #tpu.memory_space<vmem>>, vector<1x32x128xf32>
    %362 = vector.shape_cast %361 : vector<1x32x128xf32> to vector<32x128xf32>
    %c2_177 = arith.constant 2 : index
    %c0_178 = arith.constant 0 : index
    %c0_179 = arith.constant 0 : index
    %363 = vector.load %arg5[%c2_177, %c0_178, %c0_179] : memref<7x1x128xf32, #tpu.memory_space<vmem>>, vector<1x1x128xf32>
    %364 = vector.shape_cast %363 : vector<1x1x128xf32> to vector<1x128xf32>
    %cst_180 = arith.constant dense<0.000000e+00> : vector<16x128xf32>
    %365 = tpu.matmul %1, %362, %cst_180 {dimension_numbers = #tpu.dot_dimension_numbers<[1], [0], [0], [1], [0, 0, 1, 1], [], []>} : vector<16x32xf32>, vector<32x128xf32>, vector<16x128xf32> -> vector<16x128xf32>
    %366 = vector.broadcast %364 : vector<1x128xf32> to vector<16x128xf32>
    %367 = arith.addf %365, %366 : vector<16x128xf32>
    %368 = vector.extract_strided_slice %367 {offsets = [0, 0], sizes = [16, 32], strides = [1, 1]} : vector<16x128xf32> to vector<16x32xf32>
    %369 = vector.extract_strided_slice %367 {offsets = [0, 32], sizes = [16, 32], strides = [1, 1]} : vector<16x128xf32> to vector<16x32xf32>
    %370 = vector.extract_strided_slice %367 {offsets = [0, 64], sizes = [16, 32], strides = [1, 1]} : vector<16x128xf32> to vector<16x32xf32>
    %371 = vector.extract_strided_slice %362 {offsets = [0, 96], sizes = [32, 32], strides = [1, 1]} : vector<32x128xf32> to vector<32x32xf32>
    %372 = vector.extract_strided_slice %364 {offsets = [0, 96], sizes = [1, 32], strides = [1, 1]} : vector<1x128xf32> to vector<1x32xf32>
    %373 = vector.extract_strided_slice %368 {offsets = [0, 0], sizes = [16, 8], strides = [1, 1]} : vector<16x32xf32> to vector<16x8xf32>
    %374 = vector.extract_strided_slice %369 {offsets = [0, 0], sizes = [16, 8], strides = [1, 1]} : vector<16x32xf32> to vector<16x8xf32>
    %375 = vector.extract_strided_slice %370 {offsets = [0, 0], sizes = [16, 8], strides = [1, 1]} : vector<16x32xf32> to vector<16x8xf32>
    %cst_181 = arith.constant dense<0.000000e+00> : vector<16x16xf32>
    %376 = tpu.matmul %373, %374, %cst_181 {dimension_numbers = #tpu.dot_dimension_numbers<[1], [1], [0], [0], [0, 0, 1, 0], [], []>} : vector<16x8xf32>, vector<16x8xf32>, vector<16x16xf32> -> vector<16x16xf32>
    %cst_182 = arith.constant 0.176776692 : f32
    %377 = vector.broadcast %cst_182 : f32 to vector<16x16xf32>
    %378 = arith.mulf %376, %377 : vector<16x16xf32>
    %cst_183 = arith.constant 5.000000e-01 : f32
    %379 = vector.broadcast %cst_183 : f32 to vector<16x16xf32>
    %380 = arith.cmpf ogt, %3, %379 : vector<16x16xf32>
    %cst_184 = arith.constant -1.000000e+10 : f32
    %381 = vector.broadcast %cst_184 : f32 to vector<16x16xf32>
    %382 = arith.select %380, %378, %381 : vector<16x16xi1>, vector<16x16xf32>
    %cst_185 = arith.constant -5.000000e-01 : f32
    %383 = vector.broadcast %cst_185 : f32 to vector<16x16xf32>
    %384 = arith.cmpf olt, %3, %383 : vector<16x16xf32>
    %cst_186 = arith.constant -2.000000e+10 : f32
    %385 = vector.broadcast %cst_186 : f32 to vector<16x16xf32>
    %386 = arith.select %384, %385, %382 : vector<16x16xi1>, vector<16x16xf32>
    %cst_187 = arith.constant dense<0xFF800000> : vector<16xf32>
    %387 = vector.multi_reduction <maximumf>, %386, %cst_187 [1] : vector<16x16xf32> to vector<16xf32>
    %388 = vector.shape_cast %387 : vector<16xf32> to vector<16x1xf32>
    %389 = vector.broadcast %388 : vector<16x1xf32> to vector<16x16xf32>
    %390 = arith.subf %386, %389 : vector<16x16xf32>
    %391 = math.exp %390 : vector<16x16xf32>
    %cst_188 = arith.constant dense<0.000000e+00> : vector<16xf32>
    %392 = vector.multi_reduction <add>, %391, %cst_188 [1] : vector<16x16xf32> to vector<16xf32>
    %393 = vector.shape_cast %392 : vector<16xf32> to vector<16x1xf32>
    %394 = vector.broadcast %393 : vector<16x1xf32> to vector<16x16xf32>
    %395 = arith.divf %391, %394 : vector<16x16xf32>
    %cst_189 = arith.constant dense<0.000000e+00> : vector<16x8xf32>
    %396 = tpu.matmul %395, %375, %cst_189 {dimension_numbers = #tpu.dot_dimension_numbers<[1], [0], [0], [1], [0, 0, 1, 1], [], []>} : vector<16x16xf32>, vector<16x8xf32>, vector<16x8xf32> -> vector<16x8xf32>
    %397 = vector.extract_strided_slice %368 {offsets = [0, 8], sizes = [16, 8], strides = [1, 1]} : vector<16x32xf32> to vector<16x8xf32>
    %398 = vector.extract_strided_slice %369 {offsets = [0, 8], sizes = [16, 8], strides = [1, 1]} : vector<16x32xf32> to vector<16x8xf32>
    %399 = vector.extract_strided_slice %370 {offsets = [0, 8], sizes = [16, 8], strides = [1, 1]} : vector<16x32xf32> to vector<16x8xf32>
    %cst_190 = arith.constant dense<0.000000e+00> : vector<16x16xf32>
    %400 = tpu.matmul %397, %398, %cst_190 {dimension_numbers = #tpu.dot_dimension_numbers<[1], [1], [0], [0], [0, 0, 1, 0], [], []>} : vector<16x8xf32>, vector<16x8xf32>, vector<16x16xf32> -> vector<16x16xf32>
    %cst_191 = arith.constant 0.176776692 : f32
    %401 = vector.broadcast %cst_191 : f32 to vector<16x16xf32>
    %402 = arith.mulf %400, %401 : vector<16x16xf32>
    %cst_192 = arith.constant 5.000000e-01 : f32
    %403 = vector.broadcast %cst_192 : f32 to vector<16x16xf32>
    %404 = arith.cmpf ogt, %3, %403 : vector<16x16xf32>
    %cst_193 = arith.constant -1.000000e+10 : f32
    %405 = vector.broadcast %cst_193 : f32 to vector<16x16xf32>
    %406 = arith.select %404, %402, %405 : vector<16x16xi1>, vector<16x16xf32>
    %cst_194 = arith.constant -5.000000e-01 : f32
    %407 = vector.broadcast %cst_194 : f32 to vector<16x16xf32>
    %408 = arith.cmpf olt, %3, %407 : vector<16x16xf32>
    %cst_195 = arith.constant -2.000000e+10 : f32
    %409 = vector.broadcast %cst_195 : f32 to vector<16x16xf32>
    %410 = arith.select %408, %409, %406 : vector<16x16xi1>, vector<16x16xf32>
    %cst_196 = arith.constant dense<0xFF800000> : vector<16xf32>
    %411 = vector.multi_reduction <maximumf>, %410, %cst_196 [1] : vector<16x16xf32> to vector<16xf32>
    %412 = vector.shape_cast %411 : vector<16xf32> to vector<16x1xf32>
    %413 = vector.broadcast %412 : vector<16x1xf32> to vector<16x16xf32>
    %414 = arith.subf %410, %413 : vector<16x16xf32>
    %415 = math.exp %414 : vector<16x16xf32>
    %cst_197 = arith.constant dense<0.000000e+00> : vector<16xf32>
    %416 = vector.multi_reduction <add>, %415, %cst_197 [1] : vector<16x16xf32> to vector<16xf32>
    %417 = vector.shape_cast %416 : vector<16xf32> to vector<16x1xf32>
    %418 = vector.broadcast %417 : vector<16x1xf32> to vector<16x16xf32>
    %419 = arith.divf %415, %418 : vector<16x16xf32>
    %cst_198 = arith.constant dense<0.000000e+00> : vector<16x8xf32>
    %420 = tpu.matmul %419, %399, %cst_198 {dimension_numbers = #tpu.dot_dimension_numbers<[1], [0], [0], [1], [0, 0, 1, 1], [], []>} : vector<16x16xf32>, vector<16x8xf32>, vector<16x8xf32> -> vector<16x8xf32>
    %421 = vector.extract_strided_slice %368 {offsets = [0, 16], sizes = [16, 8], strides = [1, 1]} : vector<16x32xf32> to vector<16x8xf32>
    %422 = vector.extract_strided_slice %369 {offsets = [0, 16], sizes = [16, 8], strides = [1, 1]} : vector<16x32xf32> to vector<16x8xf32>
    %423 = vector.extract_strided_slice %370 {offsets = [0, 16], sizes = [16, 8], strides = [1, 1]} : vector<16x32xf32> to vector<16x8xf32>
    %cst_199 = arith.constant dense<0.000000e+00> : vector<16x16xf32>
    %424 = tpu.matmul %421, %422, %cst_199 {dimension_numbers = #tpu.dot_dimension_numbers<[1], [1], [0], [0], [0, 0, 1, 0], [], []>} : vector<16x8xf32>, vector<16x8xf32>, vector<16x16xf32> -> vector<16x16xf32>
    %cst_200 = arith.constant 0.176776692 : f32
    %425 = vector.broadcast %cst_200 : f32 to vector<16x16xf32>
    %426 = arith.mulf %424, %425 : vector<16x16xf32>
    %cst_201 = arith.constant 5.000000e-01 : f32
    %427 = vector.broadcast %cst_201 : f32 to vector<16x16xf32>
    %428 = arith.cmpf ogt, %3, %427 : vector<16x16xf32>
    %cst_202 = arith.constant -1.000000e+10 : f32
    %429 = vector.broadcast %cst_202 : f32 to vector<16x16xf32>
    %430 = arith.select %428, %426, %429 : vector<16x16xi1>, vector<16x16xf32>
    %cst_203 = arith.constant -5.000000e-01 : f32
    %431 = vector.broadcast %cst_203 : f32 to vector<16x16xf32>
    %432 = arith.cmpf olt, %3, %431 : vector<16x16xf32>
    %cst_204 = arith.constant -2.000000e+10 : f32
    %433 = vector.broadcast %cst_204 : f32 to vector<16x16xf32>
    %434 = arith.select %432, %433, %430 : vector<16x16xi1>, vector<16x16xf32>
    %cst_205 = arith.constant dense<0xFF800000> : vector<16xf32>
    %435 = vector.multi_reduction <maximumf>, %434, %cst_205 [1] : vector<16x16xf32> to vector<16xf32>
    %436 = vector.shape_cast %435 : vector<16xf32> to vector<16x1xf32>
    %437 = vector.broadcast %436 : vector<16x1xf32> to vector<16x16xf32>
    %438 = arith.subf %434, %437 : vector<16x16xf32>
    %439 = math.exp %438 : vector<16x16xf32>
    %cst_206 = arith.constant dense<0.000000e+00> : vector<16xf32>
    %440 = vector.multi_reduction <add>, %439, %cst_206 [1] : vector<16x16xf32> to vector<16xf32>
    %441 = vector.shape_cast %440 : vector<16xf32> to vector<16x1xf32>
    %442 = vector.broadcast %441 : vector<16x1xf32> to vector<16x16xf32>
    %443 = arith.divf %439, %442 : vector<16x16xf32>
    %cst_207 = arith.constant dense<0.000000e+00> : vector<16x8xf32>
    %444 = tpu.matmul %443, %423, %cst_207 {dimension_numbers = #tpu.dot_dimension_numbers<[1], [0], [0], [1], [0, 0, 1, 1], [], []>} : vector<16x16xf32>, vector<16x8xf32>, vector<16x8xf32> -> vector<16x8xf32>
    %445 = vector.extract_strided_slice %368 {offsets = [0, 24], sizes = [16, 8], strides = [1, 1]} : vector<16x32xf32> to vector<16x8xf32>
    %446 = vector.extract_strided_slice %369 {offsets = [0, 24], sizes = [16, 8], strides = [1, 1]} : vector<16x32xf32> to vector<16x8xf32>
    %447 = vector.extract_strided_slice %370 {offsets = [0, 24], sizes = [16, 8], strides = [1, 1]} : vector<16x32xf32> to vector<16x8xf32>
    %cst_208 = arith.constant dense<0.000000e+00> : vector<16x16xf32>
    %448 = tpu.matmul %445, %446, %cst_208 {dimension_numbers = #tpu.dot_dimension_numbers<[1], [1], [0], [0], [0, 0, 1, 0], [], []>} : vector<16x8xf32>, vector<16x8xf32>, vector<16x16xf32> -> vector<16x16xf32>
    %cst_209 = arith.constant 0.176776692 : f32
    %449 = vector.broadcast %cst_209 : f32 to vector<16x16xf32>
    %450 = arith.mulf %448, %449 : vector<16x16xf32>
    %cst_210 = arith.constant 5.000000e-01 : f32
    %451 = vector.broadcast %cst_210 : f32 to vector<16x16xf32>
    %452 = arith.cmpf ogt, %3, %451 : vector<16x16xf32>
    %cst_211 = arith.constant -1.000000e+10 : f32
    %453 = vector.broadcast %cst_211 : f32 to vector<16x16xf32>
    %454 = arith.select %452, %450, %453 : vector<16x16xi1>, vector<16x16xf32>
    %cst_212 = arith.constant -5.000000e-01 : f32
    %455 = vector.broadcast %cst_212 : f32 to vector<16x16xf32>
    %456 = arith.cmpf olt, %3, %455 : vector<16x16xf32>
    %cst_213 = arith.constant -2.000000e+10 : f32
    %457 = vector.broadcast %cst_213 : f32 to vector<16x16xf32>
    %458 = arith.select %456, %457, %454 : vector<16x16xi1>, vector<16x16xf32>
    %cst_214 = arith.constant dense<0xFF800000> : vector<16xf32>
    %459 = vector.multi_reduction <maximumf>, %458, %cst_214 [1] : vector<16x16xf32> to vector<16xf32>
    %460 = vector.shape_cast %459 : vector<16xf32> to vector<16x1xf32>
    %461 = vector.broadcast %460 : vector<16x1xf32> to vector<16x16xf32>
    %462 = arith.subf %458, %461 : vector<16x16xf32>
    %463 = math.exp %462 : vector<16x16xf32>
    %cst_215 = arith.constant dense<0.000000e+00> : vector<16xf32>
    %464 = vector.multi_reduction <add>, %463, %cst_215 [1] : vector<16x16xf32> to vector<16xf32>
    %465 = vector.shape_cast %464 : vector<16xf32> to vector<16x1xf32>
    %466 = vector.broadcast %465 : vector<16x1xf32> to vector<16x16xf32>
    %467 = arith.divf %463, %466 : vector<16x16xf32>
    %cst_216 = arith.constant dense<0.000000e+00> : vector<16x8xf32>
    %468 = tpu.matmul %467, %447, %cst_216 {dimension_numbers = #tpu.dot_dimension_numbers<[1], [0], [0], [1], [0, 0, 1, 1], [], []>} : vector<16x16xf32>, vector<16x8xf32>, vector<16x8xf32> -> vector<16x8xf32>
    %469 = tpu.concatenate %396, %420, %444, %468 in 1 : vector<16x8xf32>, vector<16x8xf32>, vector<16x8xf32>, vector<16x8xf32> -> vector<16x32xf32>
    %cst_217 = arith.constant dense<0.000000e+00> : vector<16x32xf32>
    %470 = tpu.matmul %469, %371, %cst_217 {dimension_numbers = #tpu.dot_dimension_numbers<[1], [0], [0], [1], [0, 0, 1, 1], [], []>} : vector<16x32xf32>, vector<32x32xf32>, vector<16x32xf32> -> vector<16x32xf32>
    %471 = vector.broadcast %372 : vector<1x32xf32> to vector<16x32xf32>
    %472 = arith.addf %470, %471 : vector<16x32xf32>
    %473 = arith.addf %1, %472 : vector<16x32xf32>
    %c4 = arith.constant 4 : index
    %c0_218 = arith.constant 0 : index
    %c0_219 = arith.constant 0 : index
    %c0_220 = arith.constant 0 : index
    %474 = vector.load %arg10[%c4, %c0_218, %c0_219, %c0_220] : memref<10x2x1x32xf32, #tpu.memory_space<vmem>>, vector<1x1x1x32xf32>
    %475 = vector.shape_cast %474 : vector<1x1x1x32xf32> to vector<1x32xf32>
    %c4_221 = arith.constant 4 : index
    %c1_222 = arith.constant 1 : index
    %c0_223 = arith.constant 0 : index
    %c0_224 = arith.constant 0 : index
    %476 = vector.load %arg10[%c4_221, %c1_222, %c0_223, %c0_224] : memref<10x2x1x32xf32, #tpu.memory_space<vmem>>, vector<1x1x1x32xf32>
    %477 = vector.shape_cast %476 : vector<1x1x1x32xf32> to vector<1x32xf32>
    %cst_225 = arith.constant dense<0.000000e+00> : vector<16xf32>
    %478 = vector.multi_reduction <add>, %473, %cst_225 [1] : vector<16x32xf32> to vector<16xf32>
    %479 = vector.shape_cast %478 : vector<16xf32> to vector<16x1xf32>
    %cst_226 = arith.constant 3.200000e+01 : f32
    %480 = vector.broadcast %cst_226 : f32 to vector<16x1xf32>
    %481 = arith.divf %479, %480 : vector<16x1xf32>
    %482 = vector.broadcast %481 : vector<16x1xf32> to vector<16x32xf32>
    %483 = arith.subf %473, %482 : vector<16x32xf32>
    %484 = arith.mulf %483, %483 : vector<16x32xf32>
    %cst_227 = arith.constant dense<0.000000e+00> : vector<16xf32>
    %485 = vector.multi_reduction <add>, %484, %cst_227 [1] : vector<16x32xf32> to vector<16xf32>
    %486 = vector.shape_cast %485 : vector<16xf32> to vector<16x1xf32>
    %cst_228 = arith.constant 3.200000e+01 : f32
    %487 = vector.broadcast %cst_228 : f32 to vector<16x1xf32>
    %488 = arith.divf %486, %487 : vector<16x1xf32>
    %cst_229 = arith.constant 9.99999974E-6 : f32
    %489 = vector.broadcast %cst_229 : f32 to vector<16x1xf32>
    %490 = arith.addf %488, %489 : vector<16x1xf32>
    %491 = math.rsqrt %490 : vector<16x1xf32>
    %492 = vector.broadcast %491 : vector<16x1xf32> to vector<16x32xf32>
    %493 = arith.mulf %483, %492 : vector<16x32xf32>
    %494 = vector.broadcast %475 : vector<1x32xf32> to vector<16x32xf32>
    %495 = arith.mulf %493, %494 : vector<16x32xf32>
    %496 = vector.broadcast %477 : vector<1x32xf32> to vector<16x32xf32>
    %497 = arith.addf %495, %496 : vector<16x32xf32>
    %c3_230 = arith.constant 3 : index
    %c0_231 = arith.constant 0 : index
    %c0_232 = arith.constant 0 : index
    %498 = vector.load %arg4[%c3_230, %c0_231, %c0_232] : memref<7x32x128xf32, #tpu.memory_space<vmem>>, vector<1x32x128xf32>
    %499 = vector.shape_cast %498 : vector<1x32x128xf32> to vector<32x128xf32>
    %c3_233 = arith.constant 3 : index
    %c0_234 = arith.constant 0 : index
    %c0_235 = arith.constant 0 : index
    %500 = vector.load %arg5[%c3_233, %c0_234, %c0_235] : memref<7x1x128xf32, #tpu.memory_space<vmem>>, vector<1x1x128xf32>
    %501 = vector.shape_cast %500 : vector<1x1x128xf32> to vector<1x128xf32>
    %502 = vector.extract_strided_slice %499 {offsets = [0, 0], sizes = [32, 32], strides = [1, 1]} : vector<32x128xf32> to vector<32x32xf32>
    %cst_236 = arith.constant dense<0.000000e+00> : vector<16x32xf32>
    %503 = tpu.matmul %497, %502, %cst_236 {dimension_numbers = #tpu.dot_dimension_numbers<[1], [0], [0], [1], [0, 0, 1, 1], [], []>} : vector<16x32xf32>, vector<32x32xf32>, vector<16x32xf32> -> vector<16x32xf32>
    %504 = vector.extract_strided_slice %501 {offsets = [0, 0], sizes = [1, 32], strides = [1, 1]} : vector<1x128xf32> to vector<1x32xf32>
    %505 = vector.broadcast %504 : vector<1x32xf32> to vector<16x32xf32>
    %506 = arith.addf %503, %505 : vector<16x32xf32>
    %507 = vector.extract_strided_slice %499 {offsets = [0, 32], sizes = [32, 64], strides = [1, 1]} : vector<32x128xf32> to vector<32x64xf32>
    %cst_237 = arith.constant dense<0.000000e+00> : vector<16x64xf32>
    %508 = tpu.matmul %360, %507, %cst_237 {dimension_numbers = #tpu.dot_dimension_numbers<[1], [0], [0], [1], [0, 0, 1, 1], [], []>} : vector<16x32xf32>, vector<32x64xf32>, vector<16x64xf32> -> vector<16x64xf32>
    %509 = vector.extract_strided_slice %501 {offsets = [0, 32], sizes = [1, 64], strides = [1, 1]} : vector<1x128xf32> to vector<1x64xf32>
    %510 = vector.broadcast %509 : vector<1x64xf32> to vector<16x64xf32>
    %511 = arith.addf %508, %510 : vector<16x64xf32>
    %512 = vector.extract_strided_slice %511 {offsets = [0, 0], sizes = [16, 32], strides = [1, 1]} : vector<16x64xf32> to vector<16x32xf32>
    %513 = vector.extract_strided_slice %511 {offsets = [0, 32], sizes = [16, 32], strides = [1, 1]} : vector<16x64xf32> to vector<16x32xf32>
    %514 = vector.extract_strided_slice %499 {offsets = [0, 96], sizes = [32, 32], strides = [1, 1]} : vector<32x128xf32> to vector<32x32xf32>
    %515 = vector.extract_strided_slice %501 {offsets = [0, 96], sizes = [1, 32], strides = [1, 1]} : vector<1x128xf32> to vector<1x32xf32>
    %516 = vector.extract_strided_slice %506 {offsets = [0, 0], sizes = [16, 8], strides = [1, 1]} : vector<16x32xf32> to vector<16x8xf32>
    %517 = vector.extract_strided_slice %512 {offsets = [0, 0], sizes = [16, 8], strides = [1, 1]} : vector<16x32xf32> to vector<16x8xf32>
    %518 = vector.extract_strided_slice %513 {offsets = [0, 0], sizes = [16, 8], strides = [1, 1]} : vector<16x32xf32> to vector<16x8xf32>
    %cst_238 = arith.constant dense<0.000000e+00> : vector<16x16xf32>
    %519 = tpu.matmul %516, %517, %cst_238 {dimension_numbers = #tpu.dot_dimension_numbers<[1], [1], [0], [0], [0, 0, 1, 0], [], []>} : vector<16x8xf32>, vector<16x8xf32>, vector<16x16xf32> -> vector<16x16xf32>
    %cst_239 = arith.constant 0.176776692 : f32
    %520 = vector.broadcast %cst_239 : f32 to vector<16x16xf32>
    %521 = arith.mulf %519, %520 : vector<16x16xf32>
    %cst_240 = arith.constant 5.000000e-01 : f32
    %522 = vector.broadcast %cst_240 : f32 to vector<16x16xf32>
    %523 = arith.cmpf ogt, %4, %522 : vector<16x16xf32>
    %cst_241 = arith.constant -1.000000e+10 : f32
    %524 = vector.broadcast %cst_241 : f32 to vector<16x16xf32>
    %525 = arith.select %523, %521, %524 : vector<16x16xi1>, vector<16x16xf32>
    %cst_242 = arith.constant -5.000000e-01 : f32
    %526 = vector.broadcast %cst_242 : f32 to vector<16x16xf32>
    %527 = arith.cmpf olt, %4, %526 : vector<16x16xf32>
    %cst_243 = arith.constant -2.000000e+10 : f32
    %528 = vector.broadcast %cst_243 : f32 to vector<16x16xf32>
    %529 = arith.select %527, %528, %525 : vector<16x16xi1>, vector<16x16xf32>
    %cst_244 = arith.constant dense<0xFF800000> : vector<16xf32>
    %530 = vector.multi_reduction <maximumf>, %529, %cst_244 [1] : vector<16x16xf32> to vector<16xf32>
    %531 = vector.shape_cast %530 : vector<16xf32> to vector<16x1xf32>
    %532 = vector.broadcast %531 : vector<16x1xf32> to vector<16x16xf32>
    %533 = arith.subf %529, %532 : vector<16x16xf32>
    %534 = math.exp %533 : vector<16x16xf32>
    %cst_245 = arith.constant dense<0.000000e+00> : vector<16xf32>
    %535 = vector.multi_reduction <add>, %534, %cst_245 [1] : vector<16x16xf32> to vector<16xf32>
    %536 = vector.shape_cast %535 : vector<16xf32> to vector<16x1xf32>
    %537 = vector.broadcast %536 : vector<16x1xf32> to vector<16x16xf32>
    %538 = arith.divf %534, %537 : vector<16x16xf32>
    %cst_246 = arith.constant dense<0.000000e+00> : vector<16x8xf32>
    %539 = tpu.matmul %538, %518, %cst_246 {dimension_numbers = #tpu.dot_dimension_numbers<[1], [0], [0], [1], [0, 0, 1, 1], [], []>} : vector<16x16xf32>, vector<16x8xf32>, vector<16x8xf32> -> vector<16x8xf32>
    %540 = vector.extract_strided_slice %506 {offsets = [0, 8], sizes = [16, 8], strides = [1, 1]} : vector<16x32xf32> to vector<16x8xf32>
    %541 = vector.extract_strided_slice %512 {offsets = [0, 8], sizes = [16, 8], strides = [1, 1]} : vector<16x32xf32> to vector<16x8xf32>
    %542 = vector.extract_strided_slice %513 {offsets = [0, 8], sizes = [16, 8], strides = [1, 1]} : vector<16x32xf32> to vector<16x8xf32>
    %cst_247 = arith.constant dense<0.000000e+00> : vector<16x16xf32>
    %543 = tpu.matmul %540, %541, %cst_247 {dimension_numbers = #tpu.dot_dimension_numbers<[1], [1], [0], [0], [0, 0, 1, 0], [], []>} : vector<16x8xf32>, vector<16x8xf32>, vector<16x16xf32> -> vector<16x16xf32>
    %cst_248 = arith.constant 0.176776692 : f32
    %544 = vector.broadcast %cst_248 : f32 to vector<16x16xf32>
    %545 = arith.mulf %543, %544 : vector<16x16xf32>
    %cst_249 = arith.constant 5.000000e-01 : f32
    %546 = vector.broadcast %cst_249 : f32 to vector<16x16xf32>
    %547 = arith.cmpf ogt, %4, %546 : vector<16x16xf32>
    %cst_250 = arith.constant -1.000000e+10 : f32
    %548 = vector.broadcast %cst_250 : f32 to vector<16x16xf32>
    %549 = arith.select %547, %545, %548 : vector<16x16xi1>, vector<16x16xf32>
    %cst_251 = arith.constant -5.000000e-01 : f32
    %550 = vector.broadcast %cst_251 : f32 to vector<16x16xf32>
    %551 = arith.cmpf olt, %4, %550 : vector<16x16xf32>
    %cst_252 = arith.constant -2.000000e+10 : f32
    %552 = vector.broadcast %cst_252 : f32 to vector<16x16xf32>
    %553 = arith.select %551, %552, %549 : vector<16x16xi1>, vector<16x16xf32>
    %cst_253 = arith.constant dense<0xFF800000> : vector<16xf32>
    %554 = vector.multi_reduction <maximumf>, %553, %cst_253 [1] : vector<16x16xf32> to vector<16xf32>
    %555 = vector.shape_cast %554 : vector<16xf32> to vector<16x1xf32>
    %556 = vector.broadcast %555 : vector<16x1xf32> to vector<16x16xf32>
    %557 = arith.subf %553, %556 : vector<16x16xf32>
    %558 = math.exp %557 : vector<16x16xf32>
    %cst_254 = arith.constant dense<0.000000e+00> : vector<16xf32>
    %559 = vector.multi_reduction <add>, %558, %cst_254 [1] : vector<16x16xf32> to vector<16xf32>
    %560 = vector.shape_cast %559 : vector<16xf32> to vector<16x1xf32>
    %561 = vector.broadcast %560 : vector<16x1xf32> to vector<16x16xf32>
    %562 = arith.divf %558, %561 : vector<16x16xf32>
    %cst_255 = arith.constant dense<0.000000e+00> : vector<16x8xf32>
    %563 = tpu.matmul %562, %542, %cst_255 {dimension_numbers = #tpu.dot_dimension_numbers<[1], [0], [0], [1], [0, 0, 1, 1], [], []>} : vector<16x16xf32>, vector<16x8xf32>, vector<16x8xf32> -> vector<16x8xf32>
    %564 = vector.extract_strided_slice %506 {offsets = [0, 16], sizes = [16, 8], strides = [1, 1]} : vector<16x32xf32> to vector<16x8xf32>
    %565 = vector.extract_strided_slice %512 {offsets = [0, 16], sizes = [16, 8], strides = [1, 1]} : vector<16x32xf32> to vector<16x8xf32>
    %566 = vector.extract_strided_slice %513 {offsets = [0, 16], sizes = [16, 8], strides = [1, 1]} : vector<16x32xf32> to vector<16x8xf32>
    %cst_256 = arith.constant dense<0.000000e+00> : vector<16x16xf32>
    %567 = tpu.matmul %564, %565, %cst_256 {dimension_numbers = #tpu.dot_dimension_numbers<[1], [1], [0], [0], [0, 0, 1, 0], [], []>} : vector<16x8xf32>, vector<16x8xf32>, vector<16x16xf32> -> vector<16x16xf32>
    %cst_257 = arith.constant 0.176776692 : f32
    %568 = vector.broadcast %cst_257 : f32 to vector<16x16xf32>
    %569 = arith.mulf %567, %568 : vector<16x16xf32>
    %cst_258 = arith.constant 5.000000e-01 : f32
    %570 = vector.broadcast %cst_258 : f32 to vector<16x16xf32>
    %571 = arith.cmpf ogt, %4, %570 : vector<16x16xf32>
    %cst_259 = arith.constant -1.000000e+10 : f32
    %572 = vector.broadcast %cst_259 : f32 to vector<16x16xf32>
    %573 = arith.select %571, %569, %572 : vector<16x16xi1>, vector<16x16xf32>
    %cst_260 = arith.constant -5.000000e-01 : f32
    %574 = vector.broadcast %cst_260 : f32 to vector<16x16xf32>
    %575 = arith.cmpf olt, %4, %574 : vector<16x16xf32>
    %cst_261 = arith.constant -2.000000e+10 : f32
    %576 = vector.broadcast %cst_261 : f32 to vector<16x16xf32>
    %577 = arith.select %575, %576, %573 : vector<16x16xi1>, vector<16x16xf32>
    %cst_262 = arith.constant dense<0xFF800000> : vector<16xf32>
    %578 = vector.multi_reduction <maximumf>, %577, %cst_262 [1] : vector<16x16xf32> to vector<16xf32>
    %579 = vector.shape_cast %578 : vector<16xf32> to vector<16x1xf32>
    %580 = vector.broadcast %579 : vector<16x1xf32> to vector<16x16xf32>
    %581 = arith.subf %577, %580 : vector<16x16xf32>
    %582 = math.exp %581 : vector<16x16xf32>
    %cst_263 = arith.constant dense<0.000000e+00> : vector<16xf32>
    %583 = vector.multi_reduction <add>, %582, %cst_263 [1] : vector<16x16xf32> to vector<16xf32>
    %584 = vector.shape_cast %583 : vector<16xf32> to vector<16x1xf32>
    %585 = vector.broadcast %584 : vector<16x1xf32> to vector<16x16xf32>
    %586 = arith.divf %582, %585 : vector<16x16xf32>
    %cst_264 = arith.constant dense<0.000000e+00> : vector<16x8xf32>
    %587 = tpu.matmul %586, %566, %cst_264 {dimension_numbers = #tpu.dot_dimension_numbers<[1], [0], [0], [1], [0, 0, 1, 1], [], []>} : vector<16x16xf32>, vector<16x8xf32>, vector<16x8xf32> -> vector<16x8xf32>
    %588 = vector.extract_strided_slice %506 {offsets = [0, 24], sizes = [16, 8], strides = [1, 1]} : vector<16x32xf32> to vector<16x8xf32>
    %589 = vector.extract_strided_slice %512 {offsets = [0, 24], sizes = [16, 8], strides = [1, 1]} : vector<16x32xf32> to vector<16x8xf32>
    %590 = vector.extract_strided_slice %513 {offsets = [0, 24], sizes = [16, 8], strides = [1, 1]} : vector<16x32xf32> to vector<16x8xf32>
    %cst_265 = arith.constant dense<0.000000e+00> : vector<16x16xf32>
    %591 = tpu.matmul %588, %589, %cst_265 {dimension_numbers = #tpu.dot_dimension_numbers<[1], [1], [0], [0], [0, 0, 1, 0], [], []>} : vector<16x8xf32>, vector<16x8xf32>, vector<16x16xf32> -> vector<16x16xf32>
    %cst_266 = arith.constant 0.176776692 : f32
    %592 = vector.broadcast %cst_266 : f32 to vector<16x16xf32>
    %593 = arith.mulf %591, %592 : vector<16x16xf32>
    %cst_267 = arith.constant 5.000000e-01 : f32
    %594 = vector.broadcast %cst_267 : f32 to vector<16x16xf32>
    %595 = arith.cmpf ogt, %4, %594 : vector<16x16xf32>
    %cst_268 = arith.constant -1.000000e+10 : f32
    %596 = vector.broadcast %cst_268 : f32 to vector<16x16xf32>
    %597 = arith.select %595, %593, %596 : vector<16x16xi1>, vector<16x16xf32>
    %cst_269 = arith.constant -5.000000e-01 : f32
    %598 = vector.broadcast %cst_269 : f32 to vector<16x16xf32>
    %599 = arith.cmpf olt, %4, %598 : vector<16x16xf32>
    %cst_270 = arith.constant -2.000000e+10 : f32
    %600 = vector.broadcast %cst_270 : f32 to vector<16x16xf32>
    %601 = arith.select %599, %600, %597 : vector<16x16xi1>, vector<16x16xf32>
    %cst_271 = arith.constant dense<0xFF800000> : vector<16xf32>
    %602 = vector.multi_reduction <maximumf>, %601, %cst_271 [1] : vector<16x16xf32> to vector<16xf32>
    %603 = vector.shape_cast %602 : vector<16xf32> to vector<16x1xf32>
    %604 = vector.broadcast %603 : vector<16x1xf32> to vector<16x16xf32>
    %605 = arith.subf %601, %604 : vector<16x16xf32>
    %606 = math.exp %605 : vector<16x16xf32>
    %cst_272 = arith.constant dense<0.000000e+00> : vector<16xf32>
    %607 = vector.multi_reduction <add>, %606, %cst_272 [1] : vector<16x16xf32> to vector<16xf32>
    %608 = vector.shape_cast %607 : vector<16xf32> to vector<16x1xf32>
    %609 = vector.broadcast %608 : vector<16x1xf32> to vector<16x16xf32>
    %610 = arith.divf %606, %609 : vector<16x16xf32>
    %cst_273 = arith.constant dense<0.000000e+00> : vector<16x8xf32>
    %611 = tpu.matmul %610, %590, %cst_273 {dimension_numbers = #tpu.dot_dimension_numbers<[1], [0], [0], [1], [0, 0, 1, 1], [], []>} : vector<16x16xf32>, vector<16x8xf32>, vector<16x8xf32> -> vector<16x8xf32>
    %612 = tpu.concatenate %539, %563, %587, %611 in 1 : vector<16x8xf32>, vector<16x8xf32>, vector<16x8xf32>, vector<16x8xf32> -> vector<16x32xf32>
    %cst_274 = arith.constant dense<0.000000e+00> : vector<16x32xf32>
    %613 = tpu.matmul %612, %514, %cst_274 {dimension_numbers = #tpu.dot_dimension_numbers<[1], [0], [0], [1], [0, 0, 1, 1], [], []>} : vector<16x32xf32>, vector<32x32xf32>, vector<16x32xf32> -> vector<16x32xf32>
    %614 = vector.broadcast %515 : vector<1x32xf32> to vector<16x32xf32>
    %615 = arith.addf %613, %614 : vector<16x32xf32>
    %616 = arith.addf %497, %615 : vector<16x32xf32>
    %c5 = arith.constant 5 : index
    %c0_275 = arith.constant 0 : index
    %c0_276 = arith.constant 0 : index
    %c0_277 = arith.constant 0 : index
    %617 = vector.load %arg10[%c5, %c0_275, %c0_276, %c0_277] : memref<10x2x1x32xf32, #tpu.memory_space<vmem>>, vector<1x1x1x32xf32>
    %618 = vector.shape_cast %617 : vector<1x1x1x32xf32> to vector<1x32xf32>
    %c5_278 = arith.constant 5 : index
    %c1_279 = arith.constant 1 : index
    %c0_280 = arith.constant 0 : index
    %c0_281 = arith.constant 0 : index
    %619 = vector.load %arg10[%c5_278, %c1_279, %c0_280, %c0_281] : memref<10x2x1x32xf32, #tpu.memory_space<vmem>>, vector<1x1x1x32xf32>
    %620 = vector.shape_cast %619 : vector<1x1x1x32xf32> to vector<1x32xf32>
    %cst_282 = arith.constant dense<0.000000e+00> : vector<16xf32>
    %621 = vector.multi_reduction <add>, %616, %cst_282 [1] : vector<16x32xf32> to vector<16xf32>
    %622 = vector.shape_cast %621 : vector<16xf32> to vector<16x1xf32>
    %cst_283 = arith.constant 3.200000e+01 : f32
    %623 = vector.broadcast %cst_283 : f32 to vector<16x1xf32>
    %624 = arith.divf %622, %623 : vector<16x1xf32>
    %625 = vector.broadcast %624 : vector<16x1xf32> to vector<16x32xf32>
    %626 = arith.subf %616, %625 : vector<16x32xf32>
    %627 = arith.mulf %626, %626 : vector<16x32xf32>
    %cst_284 = arith.constant dense<0.000000e+00> : vector<16xf32>
    %628 = vector.multi_reduction <add>, %627, %cst_284 [1] : vector<16x32xf32> to vector<16xf32>
    %629 = vector.shape_cast %628 : vector<16xf32> to vector<16x1xf32>
    %cst_285 = arith.constant 3.200000e+01 : f32
    %630 = vector.broadcast %cst_285 : f32 to vector<16x1xf32>
    %631 = arith.divf %629, %630 : vector<16x1xf32>
    %cst_286 = arith.constant 9.99999974E-6 : f32
    %632 = vector.broadcast %cst_286 : f32 to vector<16x1xf32>
    %633 = arith.addf %631, %632 : vector<16x1xf32>
    %634 = math.rsqrt %633 : vector<16x1xf32>
    %635 = vector.broadcast %634 : vector<16x1xf32> to vector<16x32xf32>
    %636 = arith.mulf %626, %635 : vector<16x32xf32>
    %637 = vector.broadcast %618 : vector<1x32xf32> to vector<16x32xf32>
    %638 = arith.mulf %636, %637 : vector<16x32xf32>
    %639 = vector.broadcast %620 : vector<1x32xf32> to vector<16x32xf32>
    %640 = arith.addf %638, %639 : vector<16x32xf32>
    %c2_287 = arith.constant 2 : index
    %c0_288 = arith.constant 0 : index
    %c0_289 = arith.constant 0 : index
    %641 = vector.load %arg6[%c2_287, %c0_288, %c0_289] : memref<4x32x64xf32, #tpu.memory_space<vmem>>, vector<1x32x64xf32>
    %642 = vector.shape_cast %641 : vector<1x32x64xf32> to vector<32x64xf32>
    %cst_290 = arith.constant dense<0.000000e+00> : vector<16x64xf32>
    %643 = tpu.matmul %640, %642, %cst_290 {dimension_numbers = #tpu.dot_dimension_numbers<[1], [0], [0], [1], [0, 0, 1, 1], [], []>} : vector<16x32xf32>, vector<32x64xf32>, vector<16x64xf32> -> vector<16x64xf32>
    %c2_291 = arith.constant 2 : index
    %c0_292 = arith.constant 0 : index
    %c0_293 = arith.constant 0 : index
    %644 = vector.load %arg7[%c2_291, %c0_292, %c0_293] : memref<4x1x64xf32, #tpu.memory_space<vmem>>, vector<1x1x64xf32>
    %645 = vector.shape_cast %644 : vector<1x1x64xf32> to vector<1x64xf32>
    %646 = vector.broadcast %645 : vector<1x64xf32> to vector<16x64xf32>
    %647 = arith.addf %643, %646 : vector<16x64xf32>
    %cst_294 = arith.constant 0.000000e+00 : f32
    %648 = vector.broadcast %cst_294 : f32 to vector<16x64xf32>
    %649 = arith.maximumf %647, %648 : vector<16x64xf32>
    %c2_295 = arith.constant 2 : index
    %c0_296 = arith.constant 0 : index
    %c0_297 = arith.constant 0 : index
    %650 = vector.load %arg8[%c2_295, %c0_296, %c0_297] : memref<4x64x32xf32, #tpu.memory_space<vmem>>, vector<1x64x32xf32>
    %651 = vector.shape_cast %650 : vector<1x64x32xf32> to vector<64x32xf32>
    %cst_298 = arith.constant dense<0.000000e+00> : vector<16x32xf32>
    %652 = tpu.matmul %649, %651, %cst_298 {dimension_numbers = #tpu.dot_dimension_numbers<[1], [0], [0], [1], [0, 0, 1, 1], [], []>} : vector<16x64xf32>, vector<64x32xf32>, vector<16x32xf32> -> vector<16x32xf32>
    %c2_299 = arith.constant 2 : index
    %c0_300 = arith.constant 0 : index
    %c0_301 = arith.constant 0 : index
    %653 = vector.load %arg9[%c2_299, %c0_300, %c0_301] : memref<4x1x32xf32, #tpu.memory_space<vmem>>, vector<1x1x32xf32>
    %654 = vector.shape_cast %653 : vector<1x1x32xf32> to vector<1x32xf32>
    %655 = vector.broadcast %654 : vector<1x32xf32> to vector<16x32xf32>
    %656 = arith.addf %652, %655 : vector<16x32xf32>
    %657 = arith.addf %640, %656 : vector<16x32xf32>
    %c6 = arith.constant 6 : index
    %c0_302 = arith.constant 0 : index
    %c0_303 = arith.constant 0 : index
    %c0_304 = arith.constant 0 : index
    %658 = vector.load %arg10[%c6, %c0_302, %c0_303, %c0_304] : memref<10x2x1x32xf32, #tpu.memory_space<vmem>>, vector<1x1x1x32xf32>
    %659 = vector.shape_cast %658 : vector<1x1x1x32xf32> to vector<1x32xf32>
    %c6_305 = arith.constant 6 : index
    %c1_306 = arith.constant 1 : index
    %c0_307 = arith.constant 0 : index
    %c0_308 = arith.constant 0 : index
    %660 = vector.load %arg10[%c6_305, %c1_306, %c0_307, %c0_308] : memref<10x2x1x32xf32, #tpu.memory_space<vmem>>, vector<1x1x1x32xf32>
    %661 = vector.shape_cast %660 : vector<1x1x1x32xf32> to vector<1x32xf32>
    %cst_309 = arith.constant dense<0.000000e+00> : vector<16xf32>
    %662 = vector.multi_reduction <add>, %657, %cst_309 [1] : vector<16x32xf32> to vector<16xf32>
    %663 = vector.shape_cast %662 : vector<16xf32> to vector<16x1xf32>
    %cst_310 = arith.constant 3.200000e+01 : f32
    %664 = vector.broadcast %cst_310 : f32 to vector<16x1xf32>
    %665 = arith.divf %663, %664 : vector<16x1xf32>
    %666 = vector.broadcast %665 : vector<16x1xf32> to vector<16x32xf32>
    %667 = arith.subf %657, %666 : vector<16x32xf32>
    %668 = arith.mulf %667, %667 : vector<16x32xf32>
    %cst_311 = arith.constant dense<0.000000e+00> : vector<16xf32>
    %669 = vector.multi_reduction <add>, %668, %cst_311 [1] : vector<16x32xf32> to vector<16xf32>
    %670 = vector.shape_cast %669 : vector<16xf32> to vector<16x1xf32>
    %cst_312 = arith.constant 3.200000e+01 : f32
    %671 = vector.broadcast %cst_312 : f32 to vector<16x1xf32>
    %672 = arith.divf %670, %671 : vector<16x1xf32>
    %cst_313 = arith.constant 9.99999974E-6 : f32
    %673 = vector.broadcast %cst_313 : f32 to vector<16x1xf32>
    %674 = arith.addf %672, %673 : vector<16x1xf32>
    %675 = math.rsqrt %674 : vector<16x1xf32>
    %676 = vector.broadcast %675 : vector<16x1xf32> to vector<16x32xf32>
    %677 = arith.mulf %667, %676 : vector<16x32xf32>
    %678 = vector.broadcast %659 : vector<1x32xf32> to vector<16x32xf32>
    %679 = arith.mulf %677, %678 : vector<16x32xf32>
    %680 = vector.broadcast %661 : vector<1x32xf32> to vector<16x32xf32>
    %681 = arith.addf %679, %680 : vector<16x32xf32>
    %c4_314 = arith.constant 4 : index
    %c0_315 = arith.constant 0 : index
    %c0_316 = arith.constant 0 : index
    %682 = vector.load %arg4[%c4_314, %c0_315, %c0_316] : memref<7x32x128xf32, #tpu.memory_space<vmem>>, vector<1x32x128xf32>
    %683 = vector.shape_cast %682 : vector<1x32x128xf32> to vector<32x128xf32>
    %c4_317 = arith.constant 4 : index
    %c0_318 = arith.constant 0 : index
    %c0_319 = arith.constant 0 : index
    %684 = vector.load %arg5[%c4_317, %c0_318, %c0_319] : memref<7x1x128xf32, #tpu.memory_space<vmem>>, vector<1x1x128xf32>
    %685 = vector.shape_cast %684 : vector<1x1x128xf32> to vector<1x128xf32>
    %cst_320 = arith.constant dense<0.000000e+00> : vector<16x128xf32>
    %686 = tpu.matmul %681, %683, %cst_320 {dimension_numbers = #tpu.dot_dimension_numbers<[1], [0], [0], [1], [0, 0, 1, 1], [], []>} : vector<16x32xf32>, vector<32x128xf32>, vector<16x128xf32> -> vector<16x128xf32>
    %687 = vector.broadcast %685 : vector<1x128xf32> to vector<16x128xf32>
    %688 = arith.addf %686, %687 : vector<16x128xf32>
    %689 = vector.extract_strided_slice %688 {offsets = [0, 0], sizes = [16, 32], strides = [1, 1]} : vector<16x128xf32> to vector<16x32xf32>
    %690 = vector.extract_strided_slice %688 {offsets = [0, 32], sizes = [16, 32], strides = [1, 1]} : vector<16x128xf32> to vector<16x32xf32>
    %691 = vector.extract_strided_slice %688 {offsets = [0, 64], sizes = [16, 32], strides = [1, 1]} : vector<16x128xf32> to vector<16x32xf32>
    %692 = vector.extract_strided_slice %683 {offsets = [0, 96], sizes = [32, 32], strides = [1, 1]} : vector<32x128xf32> to vector<32x32xf32>
    %693 = vector.extract_strided_slice %685 {offsets = [0, 96], sizes = [1, 32], strides = [1, 1]} : vector<1x128xf32> to vector<1x32xf32>
    %694 = vector.extract_strided_slice %689 {offsets = [0, 0], sizes = [16, 8], strides = [1, 1]} : vector<16x32xf32> to vector<16x8xf32>
    %695 = vector.extract_strided_slice %690 {offsets = [0, 0], sizes = [16, 8], strides = [1, 1]} : vector<16x32xf32> to vector<16x8xf32>
    %696 = vector.extract_strided_slice %691 {offsets = [0, 0], sizes = [16, 8], strides = [1, 1]} : vector<16x32xf32> to vector<16x8xf32>
    %cst_321 = arith.constant dense<0.000000e+00> : vector<16x16xf32>
    %697 = tpu.matmul %694, %695, %cst_321 {dimension_numbers = #tpu.dot_dimension_numbers<[1], [1], [0], [0], [0, 0, 1, 0], [], []>} : vector<16x8xf32>, vector<16x8xf32>, vector<16x16xf32> -> vector<16x16xf32>
    %cst_322 = arith.constant 0.176776692 : f32
    %698 = vector.broadcast %cst_322 : f32 to vector<16x16xf32>
    %699 = arith.mulf %697, %698 : vector<16x16xf32>
    %cst_323 = arith.constant 5.000000e-01 : f32
    %700 = vector.broadcast %cst_323 : f32 to vector<16x16xf32>
    %701 = arith.cmpf ogt, %3, %700 : vector<16x16xf32>
    %cst_324 = arith.constant -1.000000e+10 : f32
    %702 = vector.broadcast %cst_324 : f32 to vector<16x16xf32>
    %703 = arith.select %701, %699, %702 : vector<16x16xi1>, vector<16x16xf32>
    %cst_325 = arith.constant -5.000000e-01 : f32
    %704 = vector.broadcast %cst_325 : f32 to vector<16x16xf32>
    %705 = arith.cmpf olt, %3, %704 : vector<16x16xf32>
    %cst_326 = arith.constant -2.000000e+10 : f32
    %706 = vector.broadcast %cst_326 : f32 to vector<16x16xf32>
    %707 = arith.select %705, %706, %703 : vector<16x16xi1>, vector<16x16xf32>
    %cst_327 = arith.constant dense<0xFF800000> : vector<16xf32>
    %708 = vector.multi_reduction <maximumf>, %707, %cst_327 [1] : vector<16x16xf32> to vector<16xf32>
    %709 = vector.shape_cast %708 : vector<16xf32> to vector<16x1xf32>
    %710 = vector.broadcast %709 : vector<16x1xf32> to vector<16x16xf32>
    %711 = arith.subf %707, %710 : vector<16x16xf32>
    %712 = math.exp %711 : vector<16x16xf32>
    %cst_328 = arith.constant dense<0.000000e+00> : vector<16xf32>
    %713 = vector.multi_reduction <add>, %712, %cst_328 [1] : vector<16x16xf32> to vector<16xf32>
    %714 = vector.shape_cast %713 : vector<16xf32> to vector<16x1xf32>
    %715 = vector.broadcast %714 : vector<16x1xf32> to vector<16x16xf32>
    %716 = arith.divf %712, %715 : vector<16x16xf32>
    %cst_329 = arith.constant dense<0.000000e+00> : vector<16x8xf32>
    %717 = tpu.matmul %716, %696, %cst_329 {dimension_numbers = #tpu.dot_dimension_numbers<[1], [0], [0], [1], [0, 0, 1, 1], [], []>} : vector<16x16xf32>, vector<16x8xf32>, vector<16x8xf32> -> vector<16x8xf32>
    %718 = vector.extract_strided_slice %689 {offsets = [0, 8], sizes = [16, 8], strides = [1, 1]} : vector<16x32xf32> to vector<16x8xf32>
    %719 = vector.extract_strided_slice %690 {offsets = [0, 8], sizes = [16, 8], strides = [1, 1]} : vector<16x32xf32> to vector<16x8xf32>
    %720 = vector.extract_strided_slice %691 {offsets = [0, 8], sizes = [16, 8], strides = [1, 1]} : vector<16x32xf32> to vector<16x8xf32>
    %cst_330 = arith.constant dense<0.000000e+00> : vector<16x16xf32>
    %721 = tpu.matmul %718, %719, %cst_330 {dimension_numbers = #tpu.dot_dimension_numbers<[1], [1], [0], [0], [0, 0, 1, 0], [], []>} : vector<16x8xf32>, vector<16x8xf32>, vector<16x16xf32> -> vector<16x16xf32>
    %cst_331 = arith.constant 0.176776692 : f32
    %722 = vector.broadcast %cst_331 : f32 to vector<16x16xf32>
    %723 = arith.mulf %721, %722 : vector<16x16xf32>
    %cst_332 = arith.constant 5.000000e-01 : f32
    %724 = vector.broadcast %cst_332 : f32 to vector<16x16xf32>
    %725 = arith.cmpf ogt, %3, %724 : vector<16x16xf32>
    %cst_333 = arith.constant -1.000000e+10 : f32
    %726 = vector.broadcast %cst_333 : f32 to vector<16x16xf32>
    %727 = arith.select %725, %723, %726 : vector<16x16xi1>, vector<16x16xf32>
    %cst_334 = arith.constant -5.000000e-01 : f32
    %728 = vector.broadcast %cst_334 : f32 to vector<16x16xf32>
    %729 = arith.cmpf olt, %3, %728 : vector<16x16xf32>
    %cst_335 = arith.constant -2.000000e+10 : f32
    %730 = vector.broadcast %cst_335 : f32 to vector<16x16xf32>
    %731 = arith.select %729, %730, %727 : vector<16x16xi1>, vector<16x16xf32>
    %cst_336 = arith.constant dense<0xFF800000> : vector<16xf32>
    %732 = vector.multi_reduction <maximumf>, %731, %cst_336 [1] : vector<16x16xf32> to vector<16xf32>
    %733 = vector.shape_cast %732 : vector<16xf32> to vector<16x1xf32>
    %734 = vector.broadcast %733 : vector<16x1xf32> to vector<16x16xf32>
    %735 = arith.subf %731, %734 : vector<16x16xf32>
    %736 = math.exp %735 : vector<16x16xf32>
    %cst_337 = arith.constant dense<0.000000e+00> : vector<16xf32>
    %737 = vector.multi_reduction <add>, %736, %cst_337 [1] : vector<16x16xf32> to vector<16xf32>
    %738 = vector.shape_cast %737 : vector<16xf32> to vector<16x1xf32>
    %739 = vector.broadcast %738 : vector<16x1xf32> to vector<16x16xf32>
    %740 = arith.divf %736, %739 : vector<16x16xf32>
    %cst_338 = arith.constant dense<0.000000e+00> : vector<16x8xf32>
    %741 = tpu.matmul %740, %720, %cst_338 {dimension_numbers = #tpu.dot_dimension_numbers<[1], [0], [0], [1], [0, 0, 1, 1], [], []>} : vector<16x16xf32>, vector<16x8xf32>, vector<16x8xf32> -> vector<16x8xf32>
    %742 = vector.extract_strided_slice %689 {offsets = [0, 16], sizes = [16, 8], strides = [1, 1]} : vector<16x32xf32> to vector<16x8xf32>
    %743 = vector.extract_strided_slice %690 {offsets = [0, 16], sizes = [16, 8], strides = [1, 1]} : vector<16x32xf32> to vector<16x8xf32>
    %744 = vector.extract_strided_slice %691 {offsets = [0, 16], sizes = [16, 8], strides = [1, 1]} : vector<16x32xf32> to vector<16x8xf32>
    %cst_339 = arith.constant dense<0.000000e+00> : vector<16x16xf32>
    %745 = tpu.matmul %742, %743, %cst_339 {dimension_numbers = #tpu.dot_dimension_numbers<[1], [1], [0], [0], [0, 0, 1, 0], [], []>} : vector<16x8xf32>, vector<16x8xf32>, vector<16x16xf32> -> vector<16x16xf32>
    %cst_340 = arith.constant 0.176776692 : f32
    %746 = vector.broadcast %cst_340 : f32 to vector<16x16xf32>
    %747 = arith.mulf %745, %746 : vector<16x16xf32>
    %cst_341 = arith.constant 5.000000e-01 : f32
    %748 = vector.broadcast %cst_341 : f32 to vector<16x16xf32>
    %749 = arith.cmpf ogt, %3, %748 : vector<16x16xf32>
    %cst_342 = arith.constant -1.000000e+10 : f32
    %750 = vector.broadcast %cst_342 : f32 to vector<16x16xf32>
    %751 = arith.select %749, %747, %750 : vector<16x16xi1>, vector<16x16xf32>
    %cst_343 = arith.constant -5.000000e-01 : f32
    %752 = vector.broadcast %cst_343 : f32 to vector<16x16xf32>
    %753 = arith.cmpf olt, %3, %752 : vector<16x16xf32>
    %cst_344 = arith.constant -2.000000e+10 : f32
    %754 = vector.broadcast %cst_344 : f32 to vector<16x16xf32>
    %755 = arith.select %753, %754, %751 : vector<16x16xi1>, vector<16x16xf32>
    %cst_345 = arith.constant dense<0xFF800000> : vector<16xf32>
    %756 = vector.multi_reduction <maximumf>, %755, %cst_345 [1] : vector<16x16xf32> to vector<16xf32>
    %757 = vector.shape_cast %756 : vector<16xf32> to vector<16x1xf32>
    %758 = vector.broadcast %757 : vector<16x1xf32> to vector<16x16xf32>
    %759 = arith.subf %755, %758 : vector<16x16xf32>
    %760 = math.exp %759 : vector<16x16xf32>
    %cst_346 = arith.constant dense<0.000000e+00> : vector<16xf32>
    %761 = vector.multi_reduction <add>, %760, %cst_346 [1] : vector<16x16xf32> to vector<16xf32>
    %762 = vector.shape_cast %761 : vector<16xf32> to vector<16x1xf32>
    %763 = vector.broadcast %762 : vector<16x1xf32> to vector<16x16xf32>
    %764 = arith.divf %760, %763 : vector<16x16xf32>
    %cst_347 = arith.constant dense<0.000000e+00> : vector<16x8xf32>
    %765 = tpu.matmul %764, %744, %cst_347 {dimension_numbers = #tpu.dot_dimension_numbers<[1], [0], [0], [1], [0, 0, 1, 1], [], []>} : vector<16x16xf32>, vector<16x8xf32>, vector<16x8xf32> -> vector<16x8xf32>
    %766 = vector.extract_strided_slice %689 {offsets = [0, 24], sizes = [16, 8], strides = [1, 1]} : vector<16x32xf32> to vector<16x8xf32>
    %767 = vector.extract_strided_slice %690 {offsets = [0, 24], sizes = [16, 8], strides = [1, 1]} : vector<16x32xf32> to vector<16x8xf32>
    %768 = vector.extract_strided_slice %691 {offsets = [0, 24], sizes = [16, 8], strides = [1, 1]} : vector<16x32xf32> to vector<16x8xf32>
    %cst_348 = arith.constant dense<0.000000e+00> : vector<16x16xf32>
    %769 = tpu.matmul %766, %767, %cst_348 {dimension_numbers = #tpu.dot_dimension_numbers<[1], [1], [0], [0], [0, 0, 1, 0], [], []>} : vector<16x8xf32>, vector<16x8xf32>, vector<16x16xf32> -> vector<16x16xf32>
    %cst_349 = arith.constant 0.176776692 : f32
    %770 = vector.broadcast %cst_349 : f32 to vector<16x16xf32>
    %771 = arith.mulf %769, %770 : vector<16x16xf32>
    %cst_350 = arith.constant 5.000000e-01 : f32
    %772 = vector.broadcast %cst_350 : f32 to vector<16x16xf32>
    %773 = arith.cmpf ogt, %3, %772 : vector<16x16xf32>
    %cst_351 = arith.constant -1.000000e+10 : f32
    %774 = vector.broadcast %cst_351 : f32 to vector<16x16xf32>
    %775 = arith.select %773, %771, %774 : vector<16x16xi1>, vector<16x16xf32>
    %cst_352 = arith.constant -5.000000e-01 : f32
    %776 = vector.broadcast %cst_352 : f32 to vector<16x16xf32>
    %777 = arith.cmpf olt, %3, %776 : vector<16x16xf32>
    %cst_353 = arith.constant -2.000000e+10 : f32
    %778 = vector.broadcast %cst_353 : f32 to vector<16x16xf32>
    %779 = arith.select %777, %778, %775 : vector<16x16xi1>, vector<16x16xf32>
    %cst_354 = arith.constant dense<0xFF800000> : vector<16xf32>
    %780 = vector.multi_reduction <maximumf>, %779, %cst_354 [1] : vector<16x16xf32> to vector<16xf32>
    %781 = vector.shape_cast %780 : vector<16xf32> to vector<16x1xf32>
    %782 = vector.broadcast %781 : vector<16x1xf32> to vector<16x16xf32>
    %783 = arith.subf %779, %782 : vector<16x16xf32>
    %784 = math.exp %783 : vector<16x16xf32>
    %cst_355 = arith.constant dense<0.000000e+00> : vector<16xf32>
    %785 = vector.multi_reduction <add>, %784, %cst_355 [1] : vector<16x16xf32> to vector<16xf32>
    %786 = vector.shape_cast %785 : vector<16xf32> to vector<16x1xf32>
    %787 = vector.broadcast %786 : vector<16x1xf32> to vector<16x16xf32>
    %788 = arith.divf %784, %787 : vector<16x16xf32>
    %cst_356 = arith.constant dense<0.000000e+00> : vector<16x8xf32>
    %789 = tpu.matmul %788, %768, %cst_356 {dimension_numbers = #tpu.dot_dimension_numbers<[1], [0], [0], [1], [0, 0, 1, 1], [], []>} : vector<16x16xf32>, vector<16x8xf32>, vector<16x8xf32> -> vector<16x8xf32>
    %790 = tpu.concatenate %717, %741, %765, %789 in 1 : vector<16x8xf32>, vector<16x8xf32>, vector<16x8xf32>, vector<16x8xf32> -> vector<16x32xf32>
    %cst_357 = arith.constant dense<0.000000e+00> : vector<16x32xf32>
    %791 = tpu.matmul %790, %692, %cst_357 {dimension_numbers = #tpu.dot_dimension_numbers<[1], [0], [0], [1], [0, 0, 1, 1], [], []>} : vector<16x32xf32>, vector<32x32xf32>, vector<16x32xf32> -> vector<16x32xf32>
    %792 = vector.broadcast %693 : vector<1x32xf32> to vector<16x32xf32>
    %793 = arith.addf %791, %792 : vector<16x32xf32>
    %794 = arith.addf %681, %793 : vector<16x32xf32>
    %c7 = arith.constant 7 : index
    %c0_358 = arith.constant 0 : index
    %c0_359 = arith.constant 0 : index
    %c0_360 = arith.constant 0 : index
    %795 = vector.load %arg10[%c7, %c0_358, %c0_359, %c0_360] : memref<10x2x1x32xf32, #tpu.memory_space<vmem>>, vector<1x1x1x32xf32>
    %796 = vector.shape_cast %795 : vector<1x1x1x32xf32> to vector<1x32xf32>
    %c7_361 = arith.constant 7 : index
    %c1_362 = arith.constant 1 : index
    %c0_363 = arith.constant 0 : index
    %c0_364 = arith.constant 0 : index
    %797 = vector.load %arg10[%c7_361, %c1_362, %c0_363, %c0_364] : memref<10x2x1x32xf32, #tpu.memory_space<vmem>>, vector<1x1x1x32xf32>
    %798 = vector.shape_cast %797 : vector<1x1x1x32xf32> to vector<1x32xf32>
    %cst_365 = arith.constant dense<0.000000e+00> : vector<16xf32>
    %799 = vector.multi_reduction <add>, %794, %cst_365 [1] : vector<16x32xf32> to vector<16xf32>
    %800 = vector.shape_cast %799 : vector<16xf32> to vector<16x1xf32>
    %cst_366 = arith.constant 3.200000e+01 : f32
    %801 = vector.broadcast %cst_366 : f32 to vector<16x1xf32>
    %802 = arith.divf %800, %801 : vector<16x1xf32>
    %803 = vector.broadcast %802 : vector<16x1xf32> to vector<16x32xf32>
    %804 = arith.subf %794, %803 : vector<16x32xf32>
    %805 = arith.mulf %804, %804 : vector<16x32xf32>
    %cst_367 = arith.constant dense<0.000000e+00> : vector<16xf32>
    %806 = vector.multi_reduction <add>, %805, %cst_367 [1] : vector<16x32xf32> to vector<16xf32>
    %807 = vector.shape_cast %806 : vector<16xf32> to vector<16x1xf32>
    %cst_368 = arith.constant 3.200000e+01 : f32
    %808 = vector.broadcast %cst_368 : f32 to vector<16x1xf32>
    %809 = arith.divf %807, %808 : vector<16x1xf32>
    %cst_369 = arith.constant 9.99999974E-6 : f32
    %810 = vector.broadcast %cst_369 : f32 to vector<16x1xf32>
    %811 = arith.addf %809, %810 : vector<16x1xf32>
    %812 = math.rsqrt %811 : vector<16x1xf32>
    %813 = vector.broadcast %812 : vector<16x1xf32> to vector<16x32xf32>
    %814 = arith.mulf %804, %813 : vector<16x32xf32>
    %815 = vector.broadcast %796 : vector<1x32xf32> to vector<16x32xf32>
    %816 = arith.mulf %814, %815 : vector<16x32xf32>
    %817 = vector.broadcast %798 : vector<1x32xf32> to vector<16x32xf32>
    %818 = arith.addf %816, %817 : vector<16x32xf32>
    %c5_370 = arith.constant 5 : index
    %c0_371 = arith.constant 0 : index
    %c0_372 = arith.constant 0 : index
    %819 = vector.load %arg4[%c5_370, %c0_371, %c0_372] : memref<7x32x128xf32, #tpu.memory_space<vmem>>, vector<1x32x128xf32>
    %820 = vector.shape_cast %819 : vector<1x32x128xf32> to vector<32x128xf32>
    %c5_373 = arith.constant 5 : index
    %c0_374 = arith.constant 0 : index
    %c0_375 = arith.constant 0 : index
    %821 = vector.load %arg5[%c5_373, %c0_374, %c0_375] : memref<7x1x128xf32, #tpu.memory_space<vmem>>, vector<1x1x128xf32>
    %822 = vector.shape_cast %821 : vector<1x1x128xf32> to vector<1x128xf32>
    %823 = vector.extract_strided_slice %820 {offsets = [0, 0], sizes = [32, 32], strides = [1, 1]} : vector<32x128xf32> to vector<32x32xf32>
    %cst_376 = arith.constant dense<0.000000e+00> : vector<16x32xf32>
    %824 = tpu.matmul %818, %823, %cst_376 {dimension_numbers = #tpu.dot_dimension_numbers<[1], [0], [0], [1], [0, 0, 1, 1], [], []>} : vector<16x32xf32>, vector<32x32xf32>, vector<16x32xf32> -> vector<16x32xf32>
    %825 = vector.extract_strided_slice %822 {offsets = [0, 0], sizes = [1, 32], strides = [1, 1]} : vector<1x128xf32> to vector<1x32xf32>
    %826 = vector.broadcast %825 : vector<1x32xf32> to vector<16x32xf32>
    %827 = arith.addf %824, %826 : vector<16x32xf32>
    %828 = vector.extract_strided_slice %820 {offsets = [0, 32], sizes = [32, 64], strides = [1, 1]} : vector<32x128xf32> to vector<32x64xf32>
    %cst_377 = arith.constant dense<0.000000e+00> : vector<16x64xf32>
    %829 = tpu.matmul %360, %828, %cst_377 {dimension_numbers = #tpu.dot_dimension_numbers<[1], [0], [0], [1], [0, 0, 1, 1], [], []>} : vector<16x32xf32>, vector<32x64xf32>, vector<16x64xf32> -> vector<16x64xf32>
    %830 = vector.extract_strided_slice %822 {offsets = [0, 32], sizes = [1, 64], strides = [1, 1]} : vector<1x128xf32> to vector<1x64xf32>
    %831 = vector.broadcast %830 : vector<1x64xf32> to vector<16x64xf32>
    %832 = arith.addf %829, %831 : vector<16x64xf32>
    %833 = vector.extract_strided_slice %832 {offsets = [0, 0], sizes = [16, 32], strides = [1, 1]} : vector<16x64xf32> to vector<16x32xf32>
    %834 = vector.extract_strided_slice %832 {offsets = [0, 32], sizes = [16, 32], strides = [1, 1]} : vector<16x64xf32> to vector<16x32xf32>
    %835 = vector.extract_strided_slice %820 {offsets = [0, 96], sizes = [32, 32], strides = [1, 1]} : vector<32x128xf32> to vector<32x32xf32>
    %836 = vector.extract_strided_slice %822 {offsets = [0, 96], sizes = [1, 32], strides = [1, 1]} : vector<1x128xf32> to vector<1x32xf32>
    %837 = vector.extract_strided_slice %827 {offsets = [0, 0], sizes = [16, 8], strides = [1, 1]} : vector<16x32xf32> to vector<16x8xf32>
    %838 = vector.extract_strided_slice %833 {offsets = [0, 0], sizes = [16, 8], strides = [1, 1]} : vector<16x32xf32> to vector<16x8xf32>
    %839 = vector.extract_strided_slice %834 {offsets = [0, 0], sizes = [16, 8], strides = [1, 1]} : vector<16x32xf32> to vector<16x8xf32>
    %cst_378 = arith.constant dense<0.000000e+00> : vector<16x16xf32>
    %840 = tpu.matmul %837, %838, %cst_378 {dimension_numbers = #tpu.dot_dimension_numbers<[1], [1], [0], [0], [0, 0, 1, 0], [], []>} : vector<16x8xf32>, vector<16x8xf32>, vector<16x16xf32> -> vector<16x16xf32>
    %cst_379 = arith.constant 0.176776692 : f32
    %841 = vector.broadcast %cst_379 : f32 to vector<16x16xf32>
    %842 = arith.mulf %840, %841 : vector<16x16xf32>
    %cst_380 = arith.constant 5.000000e-01 : f32
    %843 = vector.broadcast %cst_380 : f32 to vector<16x16xf32>
    %844 = arith.cmpf ogt, %4, %843 : vector<16x16xf32>
    %cst_381 = arith.constant -1.000000e+10 : f32
    %845 = vector.broadcast %cst_381 : f32 to vector<16x16xf32>
    %846 = arith.select %844, %842, %845 : vector<16x16xi1>, vector<16x16xf32>
    %cst_382 = arith.constant -5.000000e-01 : f32
    %847 = vector.broadcast %cst_382 : f32 to vector<16x16xf32>
    %848 = arith.cmpf olt, %4, %847 : vector<16x16xf32>
    %cst_383 = arith.constant -2.000000e+10 : f32
    %849 = vector.broadcast %cst_383 : f32 to vector<16x16xf32>
    %850 = arith.select %848, %849, %846 : vector<16x16xi1>, vector<16x16xf32>
    %cst_384 = arith.constant dense<0xFF800000> : vector<16xf32>
    %851 = vector.multi_reduction <maximumf>, %850, %cst_384 [1] : vector<16x16xf32> to vector<16xf32>
    %852 = vector.shape_cast %851 : vector<16xf32> to vector<16x1xf32>
    %853 = vector.broadcast %852 : vector<16x1xf32> to vector<16x16xf32>
    %854 = arith.subf %850, %853 : vector<16x16xf32>
    %855 = math.exp %854 : vector<16x16xf32>
    %cst_385 = arith.constant dense<0.000000e+00> : vector<16xf32>
    %856 = vector.multi_reduction <add>, %855, %cst_385 [1] : vector<16x16xf32> to vector<16xf32>
    %857 = vector.shape_cast %856 : vector<16xf32> to vector<16x1xf32>
    %858 = vector.broadcast %857 : vector<16x1xf32> to vector<16x16xf32>
    %859 = arith.divf %855, %858 : vector<16x16xf32>
    %cst_386 = arith.constant dense<0.000000e+00> : vector<16x8xf32>
    %860 = tpu.matmul %859, %839, %cst_386 {dimension_numbers = #tpu.dot_dimension_numbers<[1], [0], [0], [1], [0, 0, 1, 1], [], []>} : vector<16x16xf32>, vector<16x8xf32>, vector<16x8xf32> -> vector<16x8xf32>
    %861 = vector.extract_strided_slice %827 {offsets = [0, 8], sizes = [16, 8], strides = [1, 1]} : vector<16x32xf32> to vector<16x8xf32>
    %862 = vector.extract_strided_slice %833 {offsets = [0, 8], sizes = [16, 8], strides = [1, 1]} : vector<16x32xf32> to vector<16x8xf32>
    %863 = vector.extract_strided_slice %834 {offsets = [0, 8], sizes = [16, 8], strides = [1, 1]} : vector<16x32xf32> to vector<16x8xf32>
    %cst_387 = arith.constant dense<0.000000e+00> : vector<16x16xf32>
    %864 = tpu.matmul %861, %862, %cst_387 {dimension_numbers = #tpu.dot_dimension_numbers<[1], [1], [0], [0], [0, 0, 1, 0], [], []>} : vector<16x8xf32>, vector<16x8xf32>, vector<16x16xf32> -> vector<16x16xf32>
    %cst_388 = arith.constant 0.176776692 : f32
    %865 = vector.broadcast %cst_388 : f32 to vector<16x16xf32>
    %866 = arith.mulf %864, %865 : vector<16x16xf32>
    %cst_389 = arith.constant 5.000000e-01 : f32
    %867 = vector.broadcast %cst_389 : f32 to vector<16x16xf32>
    %868 = arith.cmpf ogt, %4, %867 : vector<16x16xf32>
    %cst_390 = arith.constant -1.000000e+10 : f32
    %869 = vector.broadcast %cst_390 : f32 to vector<16x16xf32>
    %870 = arith.select %868, %866, %869 : vector<16x16xi1>, vector<16x16xf32>
    %cst_391 = arith.constant -5.000000e-01 : f32
    %871 = vector.broadcast %cst_391 : f32 to vector<16x16xf32>
    %872 = arith.cmpf olt, %4, %871 : vector<16x16xf32>
    %cst_392 = arith.constant -2.000000e+10 : f32
    %873 = vector.broadcast %cst_392 : f32 to vector<16x16xf32>
    %874 = arith.select %872, %873, %870 : vector<16x16xi1>, vector<16x16xf32>
    %cst_393 = arith.constant dense<0xFF800000> : vector<16xf32>
    %875 = vector.multi_reduction <maximumf>, %874, %cst_393 [1] : vector<16x16xf32> to vector<16xf32>
    %876 = vector.shape_cast %875 : vector<16xf32> to vector<16x1xf32>
    %877 = vector.broadcast %876 : vector<16x1xf32> to vector<16x16xf32>
    %878 = arith.subf %874, %877 : vector<16x16xf32>
    %879 = math.exp %878 : vector<16x16xf32>
    %cst_394 = arith.constant dense<0.000000e+00> : vector<16xf32>
    %880 = vector.multi_reduction <add>, %879, %cst_394 [1] : vector<16x16xf32> to vector<16xf32>
    %881 = vector.shape_cast %880 : vector<16xf32> to vector<16x1xf32>
    %882 = vector.broadcast %881 : vector<16x1xf32> to vector<16x16xf32>
    %883 = arith.divf %879, %882 : vector<16x16xf32>
    %cst_395 = arith.constant dense<0.000000e+00> : vector<16x8xf32>
    %884 = tpu.matmul %883, %863, %cst_395 {dimension_numbers = #tpu.dot_dimension_numbers<[1], [0], [0], [1], [0, 0, 1, 1], [], []>} : vector<16x16xf32>, vector<16x8xf32>, vector<16x8xf32> -> vector<16x8xf32>
    %885 = vector.extract_strided_slice %827 {offsets = [0, 16], sizes = [16, 8], strides = [1, 1]} : vector<16x32xf32> to vector<16x8xf32>
    %886 = vector.extract_strided_slice %833 {offsets = [0, 16], sizes = [16, 8], strides = [1, 1]} : vector<16x32xf32> to vector<16x8xf32>
    %887 = vector.extract_strided_slice %834 {offsets = [0, 16], sizes = [16, 8], strides = [1, 1]} : vector<16x32xf32> to vector<16x8xf32>
    %cst_396 = arith.constant dense<0.000000e+00> : vector<16x16xf32>
    %888 = tpu.matmul %885, %886, %cst_396 {dimension_numbers = #tpu.dot_dimension_numbers<[1], [1], [0], [0], [0, 0, 1, 0], [], []>} : vector<16x8xf32>, vector<16x8xf32>, vector<16x16xf32> -> vector<16x16xf32>
    %cst_397 = arith.constant 0.176776692 : f32
    %889 = vector.broadcast %cst_397 : f32 to vector<16x16xf32>
    %890 = arith.mulf %888, %889 : vector<16x16xf32>
    %cst_398 = arith.constant 5.000000e-01 : f32
    %891 = vector.broadcast %cst_398 : f32 to vector<16x16xf32>
    %892 = arith.cmpf ogt, %4, %891 : vector<16x16xf32>
    %cst_399 = arith.constant -1.000000e+10 : f32
    %893 = vector.broadcast %cst_399 : f32 to vector<16x16xf32>
    %894 = arith.select %892, %890, %893 : vector<16x16xi1>, vector<16x16xf32>
    %cst_400 = arith.constant -5.000000e-01 : f32
    %895 = vector.broadcast %cst_400 : f32 to vector<16x16xf32>
    %896 = arith.cmpf olt, %4, %895 : vector<16x16xf32>
    %cst_401 = arith.constant -2.000000e+10 : f32
    %897 = vector.broadcast %cst_401 : f32 to vector<16x16xf32>
    %898 = arith.select %896, %897, %894 : vector<16x16xi1>, vector<16x16xf32>
    %cst_402 = arith.constant dense<0xFF800000> : vector<16xf32>
    %899 = vector.multi_reduction <maximumf>, %898, %cst_402 [1] : vector<16x16xf32> to vector<16xf32>
    %900 = vector.shape_cast %899 : vector<16xf32> to vector<16x1xf32>
    %901 = vector.broadcast %900 : vector<16x1xf32> to vector<16x16xf32>
    %902 = arith.subf %898, %901 : vector<16x16xf32>
    %903 = math.exp %902 : vector<16x16xf32>
    %cst_403 = arith.constant dense<0.000000e+00> : vector<16xf32>
    %904 = vector.multi_reduction <add>, %903, %cst_403 [1] : vector<16x16xf32> to vector<16xf32>
    %905 = vector.shape_cast %904 : vector<16xf32> to vector<16x1xf32>
    %906 = vector.broadcast %905 : vector<16x1xf32> to vector<16x16xf32>
    %907 = arith.divf %903, %906 : vector<16x16xf32>
    %cst_404 = arith.constant dense<0.000000e+00> : vector<16x8xf32>
    %908 = tpu.matmul %907, %887, %cst_404 {dimension_numbers = #tpu.dot_dimension_numbers<[1], [0], [0], [1], [0, 0, 1, 1], [], []>} : vector<16x16xf32>, vector<16x8xf32>, vector<16x8xf32> -> vector<16x8xf32>
    %909 = vector.extract_strided_slice %827 {offsets = [0, 24], sizes = [16, 8], strides = [1, 1]} : vector<16x32xf32> to vector<16x8xf32>
    %910 = vector.extract_strided_slice %833 {offsets = [0, 24], sizes = [16, 8], strides = [1, 1]} : vector<16x32xf32> to vector<16x8xf32>
    %911 = vector.extract_strided_slice %834 {offsets = [0, 24], sizes = [16, 8], strides = [1, 1]} : vector<16x32xf32> to vector<16x8xf32>
    %cst_405 = arith.constant dense<0.000000e+00> : vector<16x16xf32>
    %912 = tpu.matmul %909, %910, %cst_405 {dimension_numbers = #tpu.dot_dimension_numbers<[1], [1], [0], [0], [0, 0, 1, 0], [], []>} : vector<16x8xf32>, vector<16x8xf32>, vector<16x16xf32> -> vector<16x16xf32>
    %cst_406 = arith.constant 0.176776692 : f32
    %913 = vector.broadcast %cst_406 : f32 to vector<16x16xf32>
    %914 = arith.mulf %912, %913 : vector<16x16xf32>
    %cst_407 = arith.constant 5.000000e-01 : f32
    %915 = vector.broadcast %cst_407 : f32 to vector<16x16xf32>
    %916 = arith.cmpf ogt, %4, %915 : vector<16x16xf32>
    %cst_408 = arith.constant -1.000000e+10 : f32
    %917 = vector.broadcast %cst_408 : f32 to vector<16x16xf32>
    %918 = arith.select %916, %914, %917 : vector<16x16xi1>, vector<16x16xf32>
    %cst_409 = arith.constant -5.000000e-01 : f32
    %919 = vector.broadcast %cst_409 : f32 to vector<16x16xf32>
    %920 = arith.cmpf olt, %4, %919 : vector<16x16xf32>
    %cst_410 = arith.constant -2.000000e+10 : f32
    %921 = vector.broadcast %cst_410 : f32 to vector<16x16xf32>
    %922 = arith.select %920, %921, %918 : vector<16x16xi1>, vector<16x16xf32>
    %cst_411 = arith.constant dense<0xFF800000> : vector<16xf32>
    %923 = vector.multi_reduction <maximumf>, %922, %cst_411 [1] : vector<16x16xf32> to vector<16xf32>
    %924 = vector.shape_cast %923 : vector<16xf32> to vector<16x1xf32>
    %925 = vector.broadcast %924 : vector<16x1xf32> to vector<16x16xf32>
    %926 = arith.subf %922, %925 : vector<16x16xf32>
    %927 = math.exp %926 : vector<16x16xf32>
    %cst_412 = arith.constant dense<0.000000e+00> : vector<16xf32>
    %928 = vector.multi_reduction <add>, %927, %cst_412 [1] : vector<16x16xf32> to vector<16xf32>
    %929 = vector.shape_cast %928 : vector<16xf32> to vector<16x1xf32>
    %930 = vector.broadcast %929 : vector<16x1xf32> to vector<16x16xf32>
    %931 = arith.divf %927, %930 : vector<16x16xf32>
    %cst_413 = arith.constant dense<0.000000e+00> : vector<16x8xf32>
    %932 = tpu.matmul %931, %911, %cst_413 {dimension_numbers = #tpu.dot_dimension_numbers<[1], [0], [0], [1], [0, 0, 1, 1], [], []>} : vector<16x16xf32>, vector<16x8xf32>, vector<16x8xf32> -> vector<16x8xf32>
    %933 = tpu.concatenate %860, %884, %908, %932 in 1 : vector<16x8xf32>, vector<16x8xf32>, vector<16x8xf32>, vector<16x8xf32> -> vector<16x32xf32>
    %934 = tpu.concatenate %859, %883, %907, %931 in 1 : vector<16x16xf32>, vector<16x16xf32>, vector<16x16xf32>, vector<16x16xf32> -> vector<16x64xf32>
    %cst_414 = arith.constant 0.000000e+00 : f32
    %935 = vector.broadcast %cst_414 : f32 to vector<16x64xf32>
    %936 = tpu.concatenate %934, %935 in 1 : vector<16x64xf32>, vector<16x64xf32> -> vector<16x128xf32>
    %c0_415 = arith.constant 0 : index
    %c0_416 = arith.constant 0 : index
    %937 = vector.load %arg12[%c0_415, %c0_416] : memref<16x128xf32, #tpu.memory_space<vmem>>, vector<16x128xf32>
    tpu.vector_store %arg12[%c0_415, %c0_416], %936 {strides = array<i32>} : memref<16x128xf32, #tpu.memory_space<vmem>>, vector<16x128xf32>,
    %cst_417 = arith.constant dense<0.000000e+00> : vector<16x32xf32>
    %938 = tpu.matmul %933, %835, %cst_417 {dimension_numbers = #tpu.dot_dimension_numbers<[1], [0], [0], [1], [0, 0, 1, 1], [], []>} : vector<16x32xf32>, vector<32x32xf32>, vector<16x32xf32> -> vector<16x32xf32>
    %939 = vector.broadcast %836 : vector<1x32xf32> to vector<16x32xf32>
    %940 = arith.addf %938, %939 : vector<16x32xf32>
    %941 = arith.addf %818, %940 : vector<16x32xf32>
    %c8 = arith.constant 8 : index
    %c0_418 = arith.constant 0 : index
    %c0_419 = arith.constant 0 : index
    %c0_420 = arith.constant 0 : index
    %942 = vector.load %arg10[%c8, %c0_418, %c0_419, %c0_420] : memref<10x2x1x32xf32, #tpu.memory_space<vmem>>, vector<1x1x1x32xf32>
    %943 = vector.shape_cast %942 : vector<1x1x1x32xf32> to vector<1x32xf32>
    %c8_421 = arith.constant 8 : index
    %c1_422 = arith.constant 1 : index
    %c0_423 = arith.constant 0 : index
    %c0_424 = arith.constant 0 : index
    %944 = vector.load %arg10[%c8_421, %c1_422, %c0_423, %c0_424] : memref<10x2x1x32xf32, #tpu.memory_space<vmem>>, vector<1x1x1x32xf32>
    %945 = vector.shape_cast %944 : vector<1x1x1x32xf32> to vector<1x32xf32>
    %cst_425 = arith.constant dense<0.000000e+00> : vector<16xf32>
    %946 = vector.multi_reduction <add>, %941, %cst_425 [1] : vector<16x32xf32> to vector<16xf32>
    %947 = vector.shape_cast %946 : vector<16xf32> to vector<16x1xf32>
    %cst_426 = arith.constant 3.200000e+01 : f32
    %948 = vector.broadcast %cst_426 : f32 to vector<16x1xf32>
    %949 = arith.divf %947, %948 : vector<16x1xf32>
    %950 = vector.broadcast %949 : vector<16x1xf32> to vector<16x32xf32>
    %951 = arith.subf %941, %950 : vector<16x32xf32>
    %952 = arith.mulf %951, %951 : vector<16x32xf32>
    %cst_427 = arith.constant dense<0.000000e+00> : vector<16xf32>
    %953 = vector.multi_reduction <add>, %952, %cst_427 [1] : vector<16x32xf32> to vector<16xf32>
    %954 = vector.shape_cast %953 : vector<16xf32> to vector<16x1xf32>
    %cst_428 = arith.constant 3.200000e+01 : f32
    %955 = vector.broadcast %cst_428 : f32 to vector<16x1xf32>
    %956 = arith.divf %954, %955 : vector<16x1xf32>
    %cst_429 = arith.constant 9.99999974E-6 : f32
    %957 = vector.broadcast %cst_429 : f32 to vector<16x1xf32>
    %958 = arith.addf %956, %957 : vector<16x1xf32>
    %959 = math.rsqrt %958 : vector<16x1xf32>
    %960 = vector.broadcast %959 : vector<16x1xf32> to vector<16x32xf32>
    %961 = arith.mulf %951, %960 : vector<16x32xf32>
    %962 = vector.broadcast %943 : vector<1x32xf32> to vector<16x32xf32>
    %963 = arith.mulf %961, %962 : vector<16x32xf32>
    %964 = vector.broadcast %945 : vector<1x32xf32> to vector<16x32xf32>
    %965 = arith.addf %963, %964 : vector<16x32xf32>
    %c3_430 = arith.constant 3 : index
    %c0_431 = arith.constant 0 : index
    %c0_432 = arith.constant 0 : index
    %966 = vector.load %arg6[%c3_430, %c0_431, %c0_432] : memref<4x32x64xf32, #tpu.memory_space<vmem>>, vector<1x32x64xf32>
    %967 = vector.shape_cast %966 : vector<1x32x64xf32> to vector<32x64xf32>
    %cst_433 = arith.constant dense<0.000000e+00> : vector<16x64xf32>
    %968 = tpu.matmul %965, %967, %cst_433 {dimension_numbers = #tpu.dot_dimension_numbers<[1], [0], [0], [1], [0, 0, 1, 1], [], []>} : vector<16x32xf32>, vector<32x64xf32>, vector<16x64xf32> -> vector<16x64xf32>
    %c3_434 = arith.constant 3 : index
    %c0_435 = arith.constant 0 : index
    %c0_436 = arith.constant 0 : index
    %969 = vector.load %arg7[%c3_434, %c0_435, %c0_436] : memref<4x1x64xf32, #tpu.memory_space<vmem>>, vector<1x1x64xf32>
    %970 = vector.shape_cast %969 : vector<1x1x64xf32> to vector<1x64xf32>
    %971 = vector.broadcast %970 : vector<1x64xf32> to vector<16x64xf32>
    %972 = arith.addf %968, %971 : vector<16x64xf32>
    %cst_437 = arith.constant 0.000000e+00 : f32
    %973 = vector.broadcast %cst_437 : f32 to vector<16x64xf32>
    %974 = arith.maximumf %972, %973 : vector<16x64xf32>
    %c3_438 = arith.constant 3 : index
    %c0_439 = arith.constant 0 : index
    %c0_440 = arith.constant 0 : index
    %975 = vector.load %arg8[%c3_438, %c0_439, %c0_440] : memref<4x64x32xf32, #tpu.memory_space<vmem>>, vector<1x64x32xf32>
    %976 = vector.shape_cast %975 : vector<1x64x32xf32> to vector<64x32xf32>
    %cst_441 = arith.constant dense<0.000000e+00> : vector<16x32xf32>
    %977 = tpu.matmul %974, %976, %cst_441 {dimension_numbers = #tpu.dot_dimension_numbers<[1], [0], [0], [1], [0, 0, 1, 1], [], []>} : vector<16x64xf32>, vector<64x32xf32>, vector<16x32xf32> -> vector<16x32xf32>
    %c3_442 = arith.constant 3 : index
    %c0_443 = arith.constant 0 : index
    %c0_444 = arith.constant 0 : index
    %978 = vector.load %arg9[%c3_442, %c0_443, %c0_444] : memref<4x1x32xf32, #tpu.memory_space<vmem>>, vector<1x1x32xf32>
    %979 = vector.shape_cast %978 : vector<1x1x32xf32> to vector<1x32xf32>
    %980 = vector.broadcast %979 : vector<1x32xf32> to vector<16x32xf32>
    %981 = arith.addf %977, %980 : vector<16x32xf32>
    %982 = arith.addf %965, %981 : vector<16x32xf32>
    %c9 = arith.constant 9 : index
    %c0_445 = arith.constant 0 : index
    %c0_446 = arith.constant 0 : index
    %c0_447 = arith.constant 0 : index
    %983 = vector.load %arg10[%c9, %c0_445, %c0_446, %c0_447] : memref<10x2x1x32xf32, #tpu.memory_space<vmem>>, vector<1x1x1x32xf32>
    %984 = vector.shape_cast %983 : vector<1x1x1x32xf32> to vector<1x32xf32>
    %c9_448 = arith.constant 9 : index
    %c1_449 = arith.constant 1 : index
    %c0_450 = arith.constant 0 : index
    %c0_451 = arith.constant 0 : index
    %985 = vector.load %arg10[%c9_448, %c1_449, %c0_450, %c0_451] : memref<10x2x1x32xf32, #tpu.memory_space<vmem>>, vector<1x1x1x32xf32>
    %986 = vector.shape_cast %985 : vector<1x1x1x32xf32> to vector<1x32xf32>
    %cst_452 = arith.constant dense<0.000000e+00> : vector<16xf32>
    %987 = vector.multi_reduction <add>, %982, %cst_452 [1] : vector<16x32xf32> to vector<16xf32>
    %988 = vector.shape_cast %987 : vector<16xf32> to vector<16x1xf32>
    %cst_453 = arith.constant 3.200000e+01 : f32
    %989 = vector.broadcast %cst_453 : f32 to vector<16x1xf32>
    %990 = arith.divf %988, %989 : vector<16x1xf32>
    %991 = vector.broadcast %990 : vector<16x1xf32> to vector<16x32xf32>
    %992 = arith.subf %982, %991 : vector<16x32xf32>
    %993 = arith.mulf %992, %992 : vector<16x32xf32>
    %cst_454 = arith.constant dense<0.000000e+00> : vector<16xf32>
    %994 = vector.multi_reduction <add>, %993, %cst_454 [1] : vector<16x32xf32> to vector<16xf32>
    %995 = vector.shape_cast %994 : vector<16xf32> to vector<16x1xf32>
    %cst_455 = arith.constant 3.200000e+01 : f32
    %996 = vector.broadcast %cst_455 : f32 to vector<16x1xf32>
    %997 = arith.divf %995, %996 : vector<16x1xf32>
    %cst_456 = arith.constant 9.99999974E-6 : f32
    %998 = vector.broadcast %cst_456 : f32 to vector<16x1xf32>
    %999 = arith.addf %997, %998 : vector<16x1xf32>
    %1000 = math.rsqrt %999 : vector<16x1xf32>
    %1001 = vector.broadcast %1000 : vector<16x1xf32> to vector<16x32xf32>
    %1002 = arith.mulf %992, %1001 : vector<16x32xf32>
    %1003 = vector.broadcast %984 : vector<1x32xf32> to vector<16x32xf32>
    %1004 = arith.mulf %1002, %1003 : vector<16x32xf32>
    %1005 = vector.broadcast %986 : vector<1x32xf32> to vector<16x32xf32>
    %1006 = arith.addf %1004, %1005 : vector<16x32xf32>
    %c6_457 = arith.constant 6 : index
    %c0_458 = arith.constant 0 : index
    %c0_459 = arith.constant 0 : index
    %1007 = vector.load %arg4[%c6_457, %c0_458, %c0_459] : memref<7x32x128xf32, #tpu.memory_space<vmem>>, vector<1x32x128xf32>
    %1008 = vector.shape_cast %1007 : vector<1x32x128xf32> to vector<32x128xf32>
    %c6_460 = arith.constant 6 : index
    %c0_461 = arith.constant 0 : index
    %c0_462 = arith.constant 0 : index
    %1009 = vector.load %arg5[%c6_460, %c0_461, %c0_462] : memref<7x1x128xf32, #tpu.memory_space<vmem>>, vector<1x1x128xf32>
    %1010 = vector.shape_cast %1009 : vector<1x1x128xf32> to vector<1x128xf32>
    %cst_463 = arith.constant dense<0.000000e+00> : vector<16x128xf32>
    %1011 = tpu.matmul %1006, %1008, %cst_463 {dimension_numbers = #tpu.dot_dimension_numbers<[1], [0], [0], [1], [0, 0, 1, 1], [], []>} : vector<16x32xf32>, vector<32x128xf32>, vector<16x128xf32> -> vector<16x128xf32>
    %1012 = vector.broadcast %1010 : vector<1x128xf32> to vector<16x128xf32>
    %1013 = arith.addf %1011, %1012 : vector<16x128xf32>
    %c0_464 = arith.constant 0 : index
    %c0_465 = arith.constant 0 : index
    %1014 = vector.load %arg11[%c0_464, %c0_465] : memref<16x128xf32, #tpu.memory_space<vmem>>, vector<16x128xf32>
    tpu.vector_store %arg11[%c0_464, %c0_465], %1013 {strides = array<i32>} : memref<16x128xf32, #tpu.memory_space<vmem>>, vector<16x128xf32>,
    return
  }
}

</mosaic_0001>

<llo_original>
// kernel: eq.22
$region0: #{eq.22}
  %s0 = inlined_call_operand.vmem [shape: s32[2,8], index: 0, kind: input, shape index: {}]
  %s1 = inlined_call_operand.vmem [shape: s32[16], index: 1, kind: output, shape index: {}]
  $region1: #{eq.22} parent=0
    #allocation0 [shape = 'u8[4096]{0}', space=vmem, size = 0x1000, scoped, tag = 'scoped mem for output reshape']
    #allocation1 [shape = 'u8[4096]{0}', space=vmem, size = 0x1000, scoped, tag = 'scoped mem for input reshape']
    %s3 = ssub.s32 4, 1
    %v4 = vld [vmem:[%s0] sm:%s3]
    %5 = vst [vmem:[#allocation1] sm:%s3] %v4
    %v6 = vld [vmem:[#allocation1] sm:$0x1]
    %vm7 = vcmask 64512
    %8 = vst.msk [vmem:[#allocation0] sm:$0x1] %vm7, %v6
    %s9 = scalar_lea.vmem [#allocation1], 1
    %v10 = vld [vmem:[%s9] sm:$0x1]
    %11 = vrot.lane.b32.xlu0 %v10, 8
    %v12 = vpop.permute.xlu0 %11
    %vm13 = vcmask 130112
    %14 = vst.msk [vmem:[#allocation0] sm:$0x1] %vm13, %v12
    %s16 = ssub.s32 2, 1
    %v17 = vld [vmem:[#allocation0] sm:%s16]
    %s19 = ssub.s32 2, 1
    %20 = vst [vmem:[%s1] sm:%s19] %v17

// kernel: transformer_forward.1
$region0: #{transformer_forward.1}
  #allocation0 [shape = 'u32[]', space=smem, size = 0x4, offset = 0x4, fixed_abs, tag = 'smem constant byte address 0x4 - core index']
  #allocation1 [shape = 'u32[72,128]{1,0:T(1,128)}', space=vmem, size = 0x9000, scoped, tag = 'internal scratch']
  %s0 = inlined_call_operand.vmem [shape: f32[32,32], index: 0, kind: input, shape index: {}]
  %s1 = inlined_call_operand.vmem [shape: f32[16,16], index: 1, kind: input, shape index: {}, may-alias: {1,3}]
  %s2 = inlined_call_operand.vmem [shape: f32[16,16], index: 2, kind: input, shape index: {}]
  %s3 = inlined_call_operand.vmem [shape: f32[16,16], index: 3, kind: input, shape index: {}, may-alias: {1,3}]
  %s4 = inlined_call_operand.vmem [shape: f32[7,32,128], index: 4, kind: input, shape index: {}]
  %s5 = inlined_call_operand.vmem [shape: f32[7,1,128], index: 5, kind: input, shape index: {}]
  %s6 = inlined_call_operand.vmem [shape: f32[4,32,64], index: 6, kind: input, shape index: {}]
  %s7 = inlined_call_operand.vmem [shape: f32[4,1,64], index: 7, kind: input, shape index: {}]
  %s8 = inlined_call_operand.vmem [shape: f32[4,64,32], index: 8, kind: input, shape index: {}]
  %s9 = inlined_call_operand.vmem [shape: f32[4,1,32], index: 9, kind: input, shape index: {}]
  %s10 = inlined_call_operand.vmem [shape: f32[10,2,1,32], index: 10, kind: input, shape index: {}]
  %s11 = inlined_call_operand.vmem [shape: f32[16,128], index: 11, kind: output, shape index: {0}]
  %s12 = inlined_call_operand.vmem [shape: f32[16,128], index: 12, kind: output, shape index: {1}]
  %13 = xla_tuple %s11, %s12
  %s14 = sld [smem:[#allocation0]]
  $region62: #{transformer_forward.1} parent=0
    _
  %s16 = ssub.s32 1, %s14
  %s17 = scalar_select 0, %s16, %s14
  // Predicated region
  $region2: #{transformer_forward.1} parent=0 // pred_check
    _
  $region3: #{transformer_forward.1} parent=0 // pred_check_branch
    %19 = sbr.rel (0) target = $region5
  $region4: #{transformer_forward.1} parent=0 // pred_region
    _
  $region5: #{transformer_forward.1} parent=0 // pred_fallthru
    _
  // Predicated region
  $region6: #{transformer_forward.1} parent=0 // pred_check
    _
  $region7: #{transformer_forward.1} parent=0 // pred_check_branch
    %21 = sbr.rel (0) target = $region9
  $region8: #{transformer_forward.1} parent=0 // pred_region
    _
  $region9: #{transformer_forward.1} parent=0 // pred_fallthru
    _
  // Predicated region
  $region10: #{transformer_forward.1} parent=0 // pred_check
    _
  $region11: #{transformer_forward.1} parent=0 // pred_check_branch
    %23 = sbr.rel (0) target = $region13
  $region12: #{transformer_forward.1} parent=0 // pred_region
    _
  $region13: #{transformer_forward.1} parent=0 // pred_fallthru
    _
  // Predicated region
  $region14: #{transformer_forward.1} parent=0 // pred_check
    _
  $region15: #{transformer_forward.1} parent=0 // pred_check_branch
    %25 = sbr.rel (0) target = $region17
  $region16: #{transformer_forward.1} parent=0 // pred_region
    _
  $region17: #{transformer_forward.1} parent=0 // pred_fallthru
    _
  // Predicated region
  $region18: #{transformer_forward.1} parent=0 // pred_check
    _
  $region19: #{transformer_forward.1} parent=0 // pred_check_branch
    %27 = sbr.rel (0) target = $region21
  $region20: #{transformer_forward.1} parent=0 // pred_region
    _
  $region21: #{transformer_forward.1} parent=0 // pred_fallthru
    _
  // Predicated region
  $region22: #{transformer_forward.1} parent=0 // pred_check
    _
  $region23: #{transformer_forward.1} parent=0 // pred_check_branch
    %29 = sbr.rel (0) target = $region25
  $region24: #{transformer_forward.1} parent=0 // pred_region
    _
  $region25: #{transformer_forward.1} parent=0 // pred_fallthru
    _
  // Predicated region
  $region26: #{transformer_forward.1} parent=0 // pred_check
    _
  $region27: #{transformer_forward.1} parent=0 // pred_check_branch
    %31 = sbr.rel (0) target = $region29
  $region28: #{transformer_forward.1} parent=0 // pred_region
    _
  $region29: #{transformer_forward.1} parent=0 // pred_fallthru
    _
  // Predicated region
  $region30: #{transformer_forward.1} parent=0 // pred_check
    _
  $region31: #{transformer_forward.1} parent=0 // pred_check_branch
    %33 = sbr.rel (0) target = $region33
  $region32: #{transformer_forward.1} parent=0 // pred_region
    _
  $region33: #{transformer_forward.1} parent=0 // pred_fallthru
    _
  // Predicated region
  $region34: #{transformer_forward.1} parent=0 // pred_check
    _
  $region35: #{transformer_forward.1} parent=0 // pred_check_branch
    %35 = sbr.rel (0) target = $region37
  $region36: #{transformer_forward.1} parent=0 // pred_region
    _
  $region37: #{transformer_forward.1} parent=0 // pred_fallthru
    _
  // Predicated region
  $region38: #{transformer_forward.1} parent=0 // pred_check
    _
  $region39: #{transformer_forward.1} parent=0 // pred_check_branch
    %37 = sbr.rel (0) target = $region41
  $region40: #{transformer_forward.1} parent=0 // pred_region
    _
  $region41: #{transformer_forward.1} parent=0 // pred_fallthru
    _
  // Predicated region
  $region42: #{transformer_forward.1} parent=0 // pred_check
    _
  $region43: #{transformer_forward.1} parent=0 // pred_check_branch
    %39 = sbr.rel (0) target = $region45
  $region44: #{transformer_forward.1} parent=0 // pred_region
    _
  $region45: #{transformer_forward.1} parent=0 // pred_fallthru
    _
  %v40 = vld [vmem:[%s0] sm:$0xff]
  %v41 = vld [vmem:[%s0 + $0x8] sm:$0xff]
  %v42 = vld [vmem:[%s0 + $0x10] sm:$0xff]
  %v43 = vld [vmem:[%s0 + $0x18] sm:$0xff]
  %v44 = vld [vmem:[%s1] sm:$0xff]
  %v45 = vld [vmem:[%s1 + $0x8] sm:$0xff]
  %v46 = vld [vmem:[%s2] sm:$0xff]
  %v47 = vld [vmem:[%s2 + $0x8] sm:$0xff]
  %v48 = vld [vmem:[%s3] sm:$0xff]
  %v49 = vld [vmem:[%s3 + $0x8] sm:$0xff]
  %v50 = vld [vmem:[%s4] sm:$0xff]
  %v51 = vld [vmem:[%s4 + $0x8] sm:$0xff]
  %v52 = vld [vmem:[%s4 + $0x10] sm:$0xff]
  %v53 = vld [vmem:[%s4 + $0x18] sm:$0xff]
  %v54 = vld [vmem:[%s5] sm:$0x1]
  %v56 = vperm.slane %v54, 0
  %vm58 = vcmask 261120
  %v60 = vsel %vm58, %v40, 0
  %v63 = vsel %vm58, %v41, 0
  %65 = vmatpush.msra.mxu0 0.0
  %66 = vmatpush.msra.mxu0 0.0
  %67 = vmatpush.msra.mxu0 0.0
  %68 = vmatpush.msra.mxu0 0.0
  %69 = vmatpush.msra.mxu0 0.0
  %70 = vmatpush.msra.mxu0 0.0
  %71 = vmatpush.msra.mxu0 0.0
  %72 = vmatpush.msra.mxu0 0.0
  %73 = vmatpush.msra.mxu0 0.0
  %74 = vmatpush.msra.mxu0 0.0
  %75 = vmatpush.msra.mxu0 0.0
  %76 = vmatpush.msra.mxu0 0.0
  %77 = vmatpush.msra.mxu0 %v53
  %78 = vmatpush.msra.mxu0 %v52
  %79 = vmatpush.msra.mxu0 %v51
  %80 = vmatpush.msra.mxu0 %v50
  %81 = vmatmul.f32.gmra.mxu0 %v60
  %v82 = vpop.f32.mrf.mxu0
  %v83 = vadd.f32 %v56, %v82
  %84 = vmatmul.f32.gmra.mxu0 %v63
  %v85 = vpop.f32.mrf.mxu0
  %v86 = vadd.f32 %v56, %v85
  %87 = vdwg.mxu0
  %90 = vrot.lane.b32.xlu0 %v83, 96
  %v91 = vpop.permute.xlu0 %90
  %92 = vrot.lane.b32.xlu0 %v86, 96
  %v93 = vpop.permute.xlu0 %92
  %vm94 = vcmask 64512
  %v95 = vsel %vm94, %v83, 0
  %v97 = vsel %vm94, %v86, 0
  %v99 = vsel %vm94, %v91, 0
  %v101 = vsel %vm94, %v93, 0
  %103 = vmatpush.xpose.msra.mxu0 0.0
  %104 = vmatpush.xpose.msra.mxu0 0.0
  %105 = vmatpush.xpose.msra.mxu0 0.0
  %106 = vmatpush.xpose.msra.mxu0 0.0
  %107 = vmatpush.xpose.msra.mxu0 0.0
  %108 = vmatpush.xpose.msra.mxu0 0.0
  %109 = vmatpush.xpose.msra.mxu0 0.0
  %110 = vmatpush.xpose.msra.mxu0 0.0
  %111 = vmatpush.xpose.msra.mxu0 0.0
  %112 = vmatpush.xpose.msra.mxu0 0.0
  %113 = vmatpush.xpose.msra.mxu0 0.0
  %114 = vmatpush.xpose.msra.mxu0 0.0
  %115 = vmatpush.xpose.msra.mxu0 0.0
  %116 = vmatpush.xpose.msra.mxu0 0.0
  %117 = vmatpush.xpose.msra.mxu0 %v101
  %118 = vmatpush.xpose.msra.mxu0 %v99
  %119 = vmatmul.f32.gmra.mxu0 %v95
  %v120 = vpop.f32.mrf.mxu0
  %v121 = vadd.f32 0.0, %v120
  %122 = vmatmul.f32.gmra.mxu0 %v97
  %v123 = vpop.f32.mrf.mxu0
  %v124 = vadd.f32 0.0, %v123
  %125 = vdwg.mxu0
  %v126 = vmul.f32 %v121, 0.17677669
  %v127 = vmul.f32 %v124, 0.17677669
  %vm128 = vcmp.gt.f32.partialorder %v44, 0.5
  %vm129 = vcmp.gt.f32.partialorder %v45, 0.5
  %v130 = vsel %vm128, %v126, -1e+10
  %v131 = vsel %vm129, %v127, -1e+10
  %vm132 = vcmp.lt.f32.partialorder %v44, -0.5
  %vm133 = vcmp.lt.f32.partialorder %v45, -0.5
  %v134 = vsel %vm132, -2e+10, %v130
  %v135 = vsel %vm133, -2e+10, %v131
  %vm136 = vcmask 130048
  %v137 = vsel %vm136, %v134, -inf
  %138 = vmax.xlane.f32.xlu0 %v137
  %v139 = vpop.xlane.xlu0 %138
  %v140 = vsel %vm136, %v135, -inf
  %141 = vmax.xlane.f32.xlu0 %v140
  %v142 = vpop.xlane.xlu0 %141
  %v143 = vsub.f32 %v134, %v139
  %v144 = vsub.f32 %v135, %v142
  %v145 = vmul.f32 %v143, 1.442695
  %v146 = vpow.pop %v145
  %v147 = vmul.f32 %v144, 1.442695
  %v148 = vpow.pop %v147
  %v149 = vsel %vm136, %v146, 0.0
  %150 = vadd.xlane.f32.xlu0 %v149
  %v151 = vpop.xlane.xlu0 %150
  %v152 = vsel %vm136, %v148, 0.0
  %153 = vadd.xlane.f32.xlu0 %v152
  %v154 = vpop.xlane.xlu0 %153
  %v155 = vrcp.pop %v151
  %v156 = vmul.f32 %v151, %v155
  %v157 = vsub.f32 1.0, %v156
  %v158 = vmul.f32 %v155, %v157
  %v159 = vadd.f32 %v155, %v158
  %vm160 = vweird.f32 %v151
  %vm161 = vweird.f32 %v155
  %vm162 = vmor %vm160, %vm161
  %v163 = vsel %vm162, %v155, %v159
  %v164 = vand.u32 2147483647, %v151
  %vm165 = vcmp.eq.f32.partialorder %v164, 8.507059e+37
  %v166 = vand.u32 %v151, 2147483648
  %v167 = vor.u32 1.1754944e-38, %v166
  %v168 = vsel %vm165, %v167, %v163
  %v169 = vmul.f32 %v146, %v168
  %v170 = vrcp.pop %v154
  %v171 = vmul.f32 %v154, %v170
  %v172 = vsub.f32 1.0, %v171
  %v173 = vmul.f32 %v170, %v172
  %v174 = vadd.f32 %v170, %v173
  %vm175 = vweird.f32 %v154
  %vm176 = vweird.f32 %v170
  %vm177 = vmor %vm175, %vm176
  %v178 = vsel %vm177, %v170, %v174
  %v179 = vand.u32 2147483647, %v154
  %vm180 = vcmp.eq.f32.partialorder %v179, 8.507059e+37
  %v181 = vand.u32 %v154, 2147483648
  %v182 = vor.u32 1.1754944e-38, %v181
  %v183 = vsel %vm180, %v182, %v178
  %v184 = vmul.f32 %v148, %v183
  %185 = vrot.lane.b32.xlu0 %v83, 64
  %v186 = vpop.permute.xlu0 %185
  %187 = vrot.lane.b32.xlu0 %v86, 64
  %v188 = vpop.permute.xlu0 %187
  %v192 = vsel %vm136, %v169, 0
  %v195 = vsel %vm136, %v184, 0
  %197 = vmatpush.msra.mxu0 0.0
  %198 = vmatpush.msra.mxu0 0.0
  %199 = vmatpush.msra.mxu0 0.0
  %200 = vmatpush.msra.mxu0 0.0
  %201 = vmatpush.msra.mxu0 0.0
  %202 = vmatpush.msra.mxu0 0.0
  %203 = vmatpush.msra.mxu0 0.0
  %204 = vmatpush.msra.mxu0 0.0
  %205 = vmatpush.msra.mxu0 0.0
  %206 = vmatpush.msra.mxu0 0.0
  %207 = vmatpush.msra.mxu0 0.0
  %208 = vmatpush.msra.mxu0 0.0
  %209 = vmatpush.msra.mxu0 0.0
  %210 = vmatpush.msra.mxu0 0.0
  %211 = vmatpush.msra.mxu0 %v188
  %212 = vmatpush.msra.mxu0 %v186
  %213 = vmatmul.f32.gmra.mxu0 %v192
  %v214 = vpop.f32.mrf.mxu0
  %v215 = vadd.f32 0.0, %v214
  %216 = vmatmul.f32.gmra.mxu0 %v195
  %v217 = vpop.f32.mrf.mxu0
  %v218 = vadd.f32 0.0, %v217
  %219 = vdwg.mxu0
  %220 = vrot.lane.b32.xlu0 %v83, 120
  %v221 = vpop.permute.xlu0 %220
  %222 = vrot.lane.b32.xlu0 %v86, 120
  %v223 = vpop.permute.xlu0 %222
  %224 = vrot.lane.b32.xlu0 %v83, 88
  %v225 = vpop.permute.xlu0 %224
  %226 = vrot.lane.b32.xlu0 %v86, 88
  %v227 = vpop.permute.xlu0 %226
  %v228 = vsel %vm94, %v221, 0
  %v230 = vsel %vm94, %v223, 0
  %v232 = vsel %vm94, %v225, 0
  %v234 = vsel %vm94, %v227, 0
  %236 = vmatpush.xpose.msra.mxu0 0.0
  %237 = vmatpush.xpose.msra.mxu0 0.0
  %238 = vmatpush.xpose.msra.mxu0 0.0
  %239 = vmatpush.xpose.msra.mxu0 0.0
  %240 = vmatpush.xpose.msra.mxu0 0.0
  %241 = vmatpush.xpose.msra.mxu0 0.0
  %242 = vmatpush.xpose.msra.mxu0 0.0
  %243 = vmatpush.xpose.msra.mxu0 0.0
  %244 = vmatpush.xpose.msra.mxu0 0.0
  %245 = vmatpush.xpose.msra.mxu0 0.0
  %246 = vmatpush.xpose.msra.mxu0 0.0
  %247 = vmatpush.xpose.msra.mxu0 0.0
  %248 = vmatpush.xpose.msra.mxu0 0.0
  %249 = vmatpush.xpose.msra.mxu0 0.0
  %250 = vmatpush.xpose.msra.mxu0 %v234
  %251 = vmatpush.xpose.msra.mxu0 %v232
  %252 = vmatmul.f32.gmra.mxu0 %v228
  %v253 = vpop.f32.mrf.mxu0
  %v254 = vadd.f32 0.0, %v253
  %255 = vmatmul.f32.gmra.mxu0 %v230
  %v256 = vpop.f32.mrf.mxu0
  %v257 = vadd.f32 0.0, %v256
  %258 = vdwg.mxu0
  %v259 = vmul.f32 %v254, 0.17677669
  %v260 = vmul.f32 %v257, 0.17677669
  %v261 = vsel %vm128, %v259, -1e+10
  %v262 = vsel %vm129, %v260, -1e+10
  %v263 = vsel %vm132, -2e+10, %v261
  %v264 = vsel %vm133, -2e+10, %v262
  %v265 = vsel %vm136, %v263, -inf
  %266 = vmax.xlane.f32.xlu0 %v265
  %v267 = vpop.xlane.xlu0 %266
  %v268 = vsel %vm136, %v264, -inf
  %269 = vmax.xlane.f32.xlu0 %v268
  %v270 = vpop.xlane.xlu0 %269
  %v271 = vsub.f32 %v263, %v267
  %v272 = vsub.f32 %v264, %v270
  %v273 = vmul.f32 %v271, 1.442695
  %v274 = vpow.pop %v273
  %v275 = vmul.f32 %v272, 1.442695
  %v276 = vpow.pop %v275
  %v277 = vsel %vm136, %v274, 0.0
  %278 = vadd.xlane.f32.xlu0 %v277
  %v279 = vpop.xlane.xlu0 %278
  %v280 = vsel %vm136, %v276, 0.0
  %281 = vadd.xlane.f32.xlu0 %v280
  %v282 = vpop.xlane.xlu0 %281
  %v283 = vrcp.pop %v279
  %v284 = vmul.f32 %v279, %v283
  %v285 = vsub.f32 1.0, %v284
  %v286 = vmul.f32 %v283, %v285
  %v287 = vadd.f32 %v283, %v286
  %vm288 = vweird.f32 %v279
  %vm289 = vweird.f32 %v283
  %vm290 = vmor %vm288, %vm289
  %v291 = vsel %vm290, %v283, %v287
  %v292 = vand.u32 2147483647, %v279
  %vm293 = vcmp.eq.f32.partialorder %v292, 8.507059e+37
  %v294 = vand.u32 %v279, 2147483648
  %v295 = vor.u32 1.1754944e-38, %v294
  %v296 = vsel %vm293, %v295, %v291
  %v297 = vmul.f32 %v274, %v296
  %v298 = vrcp.pop %v282
  %v299 = vmul.f32 %v282, %v298
  %v300 = vsub.f32 1.0, %v299
  %v301 = vmul.f32 %v298, %v300
  %v302 = vadd.f32 %v298, %v301
  %vm303 = vweird.f32 %v282
  %vm304 = vweird.f32 %v298
  %vm305 = vmor %vm303, %vm304
  %v306 = vsel %vm305, %v298, %v302
  %v307 = vand.u32 2147483647, %v282
  %vm308 = vcmp.eq.f32.partialorder %v307, 8.507059e+37
  %v309 = vand.u32 %v282, 2147483648
  %v310 = vor.u32 1.1754944e-38, %v309
  %v311 = vsel %vm308, %v310, %v306
  %v312 = vmul.f32 %v276, %v311
  %313 = vrot.lane.b32.xlu0 %v83, 56
  %v314 = vpop.permute.xlu0 %313
  %315 = vrot.lane.b32.xlu0 %v86, 56
  %v316 = vpop.permute.xlu0 %315
  %v320 = vsel %vm136, %v297, 0
  %v323 = vsel %vm136, %v312, 0
  %325 = vmatpush.msra.mxu0 0.0
  %326 = vmatpush.msra.mxu0 0.0
  %327 = vmatpush.msra.mxu0 0.0
  %328 = vmatpush.msra.mxu0 0.0
  %329 = vmatpush.msra.mxu0 0.0
  %330 = vmatpush.msra.mxu0 0.0
  %331 = vmatpush.msra.mxu0 0.0
  %332 = vmatpush.msra.mxu0 0.0
  %333 = vmatpush.msra.mxu0 0.0
  %334 = vmatpush.msra.mxu0 0.0
  %335 = vmatpush.msra.mxu0 0.0
  %336 = vmatpush.msra.mxu0 0.0
  %337 = vmatpush.msra.mxu0 0.0
  %338 = vmatpush.msra.mxu0 0.0
  %339 = vmatpush.msra.mxu0 %v316
  %340 = vmatpush.msra.mxu0 %v314
  %341 = vmatmul.f32.gmra.mxu0 %v320
  %v342 = vpop.f32.mrf.mxu0
  %v343 = vadd.f32 0.0, %v342
  %344 = vmatmul.f32.gmra.mxu0 %v323
  %v345 = vpop.f32.mrf.mxu0
  %v346 = vadd.f32 0.0, %v345
  %347 = vdwg.mxu0
  %348 = vrot.lane.b32.xlu0 %v83, 112
  %v349 = vpop.permute.xlu0 %348
  %350 = vrot.lane.b32.xlu0 %v86, 112
  %v351 = vpop.permute.xlu0 %350
  %352 = vrot.lane.b32.xlu0 %v83, 80
  %v353 = vpop.permute.xlu0 %352
  %354 = vrot.lane.b32.xlu0 %v86, 80
  %v355 = vpop.permute.xlu0 %354
  %v356 = vsel %vm94, %v349, 0
  %v358 = vsel %vm94, %v351, 0
  %v360 = vsel %vm94, %v353, 0
  %v362 = vsel %vm94, %v355, 0
  %364 = vmatpush.xpose.msra.mxu0 0.0
  %365 = vmatpush.xpose.msra.mxu0 0.0
  %366 = vmatpush.xpose.msra.mxu0 0.0
  %367 = vmatpush.xpose.msra.mxu0 0.0
  %368 = vmatpush.xpose.msra.mxu0 0.0
  %369 = vmatpush.xpose.msra.mxu0 0.0
  %370 = vmatpush.xpose.msra.mxu0 0.0
  %371 = vmatpush.xpose.msra.mxu0 0.0
  %372 = vmatpush.xpose.msra.mxu0 0.0
  %373 = vmatpush.xpose.msra.mxu0 0.0
  %374 = vmatpush.xpose.msra.mxu0 0.0
  %375 = vmatpush.xpose.msra.mxu0 0.0
  %376 = vmatpush.xpose.msra.mxu0 0.0
  %377 = vmatpush.xpose.msra.mxu0 0.0
  %378 = vmatpush.xpose.msra.mxu0 %v362
  %379 = vmatpush.xpose.msra.mxu0 %v360
  %380 = vmatmul.f32.gmra.mxu0 %v356
  %v381 = vpop.f32.mrf.mxu0
  %v382 = vadd.f32 0.0, %v381
  %383 = vmatmul.f32.gmra.mxu0 %v358
  %v384 = vpop.f32.mrf.mxu0
  %v385 = vadd.f32 0.0, %v384
  %386 = vdwg.mxu0
  %v387 = vmul.f32 %v382, 0.17677669
  %v388 = vmul.f32 %v385, 0.17677669
  %v389 = vsel %vm128, %v387, -1e+10
  %v390 = vsel %vm129, %v388, -1e+10
  %v391 = vsel %vm132, -2e+10, %v389
  %v392 = vsel %vm133, -2e+10, %v390
  %v393 = vsel %vm136, %v391, -inf
  %394 = vmax.xlane.f32.xlu0 %v393
  %v395 = vpop.xlane.xlu0 %394
  %v396 = vsel %vm136, %v392, -inf
  %397 = vmax.xlane.f32.xlu0 %v396
  %v398 = vpop.xlane.xlu0 %397
  %v399 = vsub.f32 %v391, %v395
  %v400 = vsub.f32 %v392, %v398
  %v401 = vmul.f32 %v399, 1.442695
  %v402 = vpow.pop %v401
  %v403 = vmul.f32 %v400, 1.442695
  %v404 = vpow.pop %v403
  %v405 = vsel %vm136, %v402, 0.0
  %406 = vadd.xlane.f32.xlu0 %v405
  %v407 = vpop.xlane.xlu0 %406
  %v408 = vsel %vm136, %v404, 0.0
  %409 = vadd.xlane.f32.xlu0 %v408
  %v410 = vpop.xlane.xlu0 %409
  %v411 = vrcp.pop %v407
  %v412 = vmul.f32 %v407, %v411
  %v413 = vsub.f32 1.0, %v412
  %v414 = vmul.f32 %v411, %v413
  %v415 = vadd.f32 %v411, %v414
  %vm416 = vweird.f32 %v407
  %vm417 = vweird.f32 %v411
  %vm418 = vmor %vm416, %vm417
  %v419 = vsel %vm418, %v411, %v415
  %v420 = vand.u32 2147483647, %v407
  %vm421 = vcmp.eq.f32.partialorder %v420, 8.507059e+37
  %v422 = vand.u32 %v407, 2147483648
  %v423 = vor.u32 1.1754944e-38, %v422
  %v424 = vsel %vm421, %v423, %v419
  %v425 = vmul.f32 %v402, %v424
  %v426 = vrcp.pop %v410
  %v427 = vmul.f32 %v410, %v426
  %v428 = vsub.f32 1.0, %v427
  %v429 = vmul.f32 %v426, %v428
  %v430 = vadd.f32 %v426, %v429
  %vm431 = vweird.f32 %v410
  %vm432 = vweird.f32 %v426
  %vm433 = vmor %vm431, %vm432
  %v434 = vsel %vm433, %v426, %v430
  %v435 = vand.u32 2147483647, %v410
  %vm436 = vcmp.eq.f32.partialorder %v435, 8.507059e+37
  %v437 = vand.u32 %v410, 2147483648
  %v438 = vor.u32 1.1754944e-38, %v437
  %v439 = vsel %vm436, %v438, %v434
  %v440 = vmul.f32 %v404, %v439
  %441 = vrot.lane.b32.xlu0 %v83, 48
  %v442 = vpop.permute.xlu0 %441
  %443 = vrot.lane.b32.xlu0 %v86, 48
  %v444 = vpop.permute.xlu0 %443
  %v448 = vsel %vm136, %v425, 0
  %v451 = vsel %vm136, %v440, 0
  %453 = vmatpush.msra.mxu0 0.0
  %454 = vmatpush.msra.mxu0 0.0
  %455 = vmatpush.msra.mxu0 0.0
  %456 = vmatpush.msra.mxu0 0.0
  %457 = vmatpush.msra.mxu0 0.0
  %458 = vmatpush.msra.mxu0 0.0
  %459 = vmatpush.msra.mxu0 0.0
  %460 = vmatpush.msra.mxu0 0.0
  %461 = vmatpush.msra.mxu0 0.0
  %462 = vmatpush.msra.mxu0 0.0
  %463 = vmatpush.msra.mxu0 0.0
  %464 = vmatpush.msra.mxu0 0.0
  %465 = vmatpush.msra.mxu0 0.0
  %466 = vmatpush.msra.mxu0 0.0
  %467 = vmatpush.msra.mxu0 %v444
  %468 = vmatpush.msra.mxu0 %v442
  %469 = vmatmul.f32.gmra.mxu0 %v448
  %v470 = vpop.f32.mrf.mxu0
  %v471 = vadd.f32 0.0, %v470
  %472 = vmatmul.f32.gmra.mxu0 %v451
  %v473 = vpop.f32.mrf.mxu0
  %v474 = vadd.f32 0.0, %v473
  %475 = vdwg.mxu0
  %476 = vrot.lane.b32.xlu0 %v83, 104
  %v477 = vpop.permute.xlu0 %476
  %478 = vrot.lane.b32.xlu0 %v86, 104
  %v479 = vpop.permute.xlu0 %478
  %480 = vrot.lane.b32.xlu0 %v83, 72
  %v481 = vpop.permute.xlu0 %480
  %482 = vrot.lane.b32.xlu0 %v86, 72
  %v483 = vpop.permute.xlu0 %482
  %v484 = vsel %vm94, %v477, 0
  %v486 = vsel %vm94, %v479, 0
  %v488 = vsel %vm94, %v481, 0
  %v490 = vsel %vm94, %v483, 0
  %492 = vmatpush.xpose.msra.mxu0 0.0
  %493 = vmatpush.xpose.msra.mxu0 0.0
  %494 = vmatpush.xpose.msra.mxu0 0.0
  %495 = vmatpush.xpose.msra.mxu0 0.0
  %496 = vmatpush.xpose.msra.mxu0 0.0
  %497 = vmatpush.xpose.msra.mxu0 0.0
  %498 = vmatpush.xpose.msra.mxu0 0.0
  %499 = vmatpush.xpose.msra.mxu0 0.0
  %500 = vmatpush.xpose.msra.mxu0 0.0
  %501 = vmatpush.xpose.msra.mxu0 0.0
  %502 = vmatpush.xpose.msra.mxu0 0.0
  %503 = vmatpush.xpose.msra.mxu0 0.0
  %504 = vmatpush.xpose.msra.mxu0 0.0
  %505 = vmatpush.xpose.msra.mxu0 0.0
  %506 = vmatpush.xpose.msra.mxu0 %v490
  %507 = vmatpush.xpose.msra.mxu0 %v488
  %508 = vmatmul.f32.gmra.mxu0 %v484
  %v509 = vpop.f32.mrf.mxu0
  %v510 = vadd.f32 0.0, %v509
  %511 = vmatmul.f32.gmra.mxu0 %v486
  %v512 = vpop.f32.mrf.mxu0
  %v513 = vadd.f32 0.0, %v512
  %514 = vdwg.mxu0
  %v515 = vmul.f32 %v510, 0.17677669
  %v516 = vmul.f32 %v513, 0.17677669
  %v517 = vsel %vm128, %v515, -1e+10
  %v518 = vsel %vm129, %v516, -1e+10
  %v519 = vsel %vm132, -2e+10, %v517
  %v520 = vsel %vm133, -2e+10, %v518
  %v521 = vsel %vm136, %v519, -inf
  %522 = vmax.xlane.f32.xlu0 %v521
  %v523 = vpop.xlane.xlu0 %522
  %v524 = vsel %vm136, %v520, -inf
  %525 = vmax.xlane.f32.xlu0 %v524
  %v526 = vpop.xlane.xlu0 %525
  %v527 = vsub.f32 %v519, %v523
  %v528 = vsub.f32 %v520, %v526
  %v529 = vmul.f32 %v527, 1.442695
  %v530 = vpow.pop %v529
  %v531 = vmul.f32 %v528, 1.442695
  %v532 = vpow.pop %v531
  %v533 = vsel %vm136, %v530, 0.0
  %534 = vadd.xlane.f32.xlu0 %v533
  %v535 = vpop.xlane.xlu0 %534
  %v536 = vsel %vm136, %v532, 0.0
  %537 = vadd.xlane.f32.xlu0 %v536
  %v538 = vpop.xlane.xlu0 %537
  %v539 = vrcp.pop %v535
  %v540 = vmul.f32 %v535, %v539
  %v541 = vsub.f32 1.0, %v540
  %v542 = vmul.f32 %v539, %v541
  %v543 = vadd.f32 %v539, %v542
  %vm544 = vweird.f32 %v535
  %vm545 = vweird.f32 %v539
  %vm546 = vmor %vm544, %vm545
  %v547 = vsel %vm546, %v539, %v543
  %v548 = vand.u32 2147483647, %v535
  %vm549 = vcmp.eq.f32.partialorder %v548, 8.507059e+37
  %v550 = vand.u32 %v535, 2147483648
  %v551 = vor.u32 1.1754944e-38, %v550
  %v552 = vsel %vm549, %v551, %v547
  %v553 = vmul.f32 %v530, %v552
  %v554 = vrcp.pop %v538
  %v555 = vmul.f32 %v538, %v554
  %v556 = vsub.f32 1.0, %v555
  %v557 = vmul.f32 %v554, %v556
  %v558 = vadd.f32 %v554, %v557
  %vm559 = vweird.f32 %v538
  %vm560 = vweird.f32 %v554
  %vm561 = vmor %vm559, %vm560
  %v562 = vsel %vm561, %v554, %v558
  %v563 = vand.u32 2147483647, %v538
  %vm564 = vcmp.eq.f32.partialorder %v563, 8.507059e+37
  %v565 = vand.u32 %v538, 2147483648
  %v566 = vor.u32 1.1754944e-38, %v565
  %v567 = vsel %vm564, %v566, %v562
  %v568 = vmul.f32 %v532, %v567
  %569 = vrot.lane.b32.xlu0 %v83, 40
  %v570 = vpop.permute.xlu0 %569
  %571 = vrot.lane.b32.xlu0 %v86, 40
  %v572 = vpop.permute.xlu0 %571
  %v576 = vsel %vm136, %v553, 0
  %v579 = vsel %vm136, %v568, 0
  %581 = vmatpush.msra.mxu0 0.0
  %582 = vmatpush.msra.mxu0 0.0
  %583 = vmatpush.msra.mxu0 0.0
  %584 = vmatpush.msra.mxu0 0.0
  %585 = vmatpush.msra.mxu0 0.0
  %586 = vmatpush.msra.mxu0 0.0
  %587 = vmatpush.msra.mxu0 0.0
  %588 = vmatpush.msra.mxu0 0.0
  %589 = vmatpush.msra.mxu0 0.0
  %590 = vmatpush.msra.mxu0 0.0
  %591 = vmatpush.msra.mxu0 0.0
  %592 = vmatpush.msra.mxu0 0.0
  %593 = vmatpush.msra.mxu0 0.0
  %594 = vmatpush.msra.mxu0 0.0
  %595 = vmatpush.msra.mxu0 %v572
  %596 = vmatpush.msra.mxu0 %v570
  %597 = vmatmul.f32.gmra.mxu0 %v576
  %v598 = vpop.f32.mrf.mxu0
  %v599 = vadd.f32 0.0, %v598
  %600 = vmatmul.f32.gmra.mxu0 %v579
  %v601 = vpop.f32.mrf.mxu0
  %v602 = vadd.f32 0.0, %v601
  %603 = vdwg.mxu0
  %606 = vrot.lane.b32.xlu0 %v343, 8
  %v607 = vpop.permute.xlu0 %606
  %608 = vrot.lane.b32.xlu0 %v346, 8
  %v609 = vpop.permute.xlu0 %608
  %614 = vrot.lane.b32.xlu0 %v471, 16
  %v615 = vpop.permute.xlu0 %614
  %616 = vrot.lane.b32.xlu0 %v474, 16
  %v617 = vpop.permute.xlu0 %616
  %622 = vrot.lane.b32.xlu0 %v599, 24
  %v623 = vpop.permute.xlu0 %622
  %624 = vrot.lane.b32.xlu0 %v602, 24
  %v625 = vpop.permute.xlu0 %624
  %v628 = vsel %vm94, %v215, %v607
  %v629 = vsel %vm94, %v218, %v609
  %v630 = vsel %vm136, %v628, %v615
  %v631 = vsel %vm136, %v629, %v617
  %vm632 = vcmask 195584
  %v633 = vsel %vm632, %v630, %v623
  %v634 = vsel %vm632, %v631, %v625
  %639 = vrot.lane.b32.xlu0 %v50, 32
  %v640 = vpop.permute.xlu0 %639
  %641 = vrot.lane.b32.xlu0 %v51, 32
  %v642 = vpop.permute.xlu0 %641
  %643 = vrot.lane.b32.xlu0 %v52, 32
  %v644 = vpop.permute.xlu0 %643
  %645 = vrot.lane.b32.xlu0 %v53, 32
  %v646 = vpop.permute.xlu0 %645
  %651 = vrot.lane.b32.xlu0 %v56, 32
  %v652 = vpop.permute.xlu0 %651
  %v655 = vsel %vm58, %v633, 0
  %v658 = vsel %vm58, %v634, 0
  %660 = vmatpush.msra.mxu0 0.0
  %661 = vmatpush.msra.mxu0 0.0
  %662 = vmatpush.msra.mxu0 0.0
  %663 = vmatpush.msra.mxu0 0.0
  %664 = vmatpush.msra.mxu0 0.0
  %665 = vmatpush.msra.mxu0 0.0
  %666 = vmatpush.msra.mxu0 0.0
  %667 = vmatpush.msra.mxu0 0.0
  %668 = vmatpush.msra.mxu0 0.0
  %669 = vmatpush.msra.mxu0 0.0
  %670 = vmatpush.msra.mxu0 0.0
  %671 = vmatpush.msra.mxu0 0.0
  %672 = vmatpush.msra.mxu0 %v646
  %673 = vmatpush.msra.mxu0 %v644
  %674 = vmatpush.msra.mxu0 %v642
  %675 = vmatpush.msra.mxu0 %v640
  %676 = vmatmul.f32.gmra.mxu0 %v655
  %v677 = vpop.f32.mrf.mxu0
  %v678 = vadd.f32 %v652, %v677
  %679 = vmatmul.f32.gmra.mxu0 %v658
  %v680 = vpop.f32.mrf.mxu0
  %v681 = vadd.f32 %v652, %v680
  %682 = vdwg.mxu0
  %v683 = vadd.f32 %v40, %v678
  %v684 = vadd.f32 %v41, %v681
  %v685 = vld [vmem:[%s10] sm:$0x1]
  %s686 = scalar_lea.vmem %s10, 1
  %v687 = vld [vmem:[%s686] sm:$0x1]
  %v688 = vsel %vm58, %v683, 0.0
  %689 = vadd.xlane.f32.xlu0 %v688
  %v690 = vpop.xlane.xlu0 %689
  %v691 = vsel %vm58, %v684, 0.0
  %692 = vadd.xlane.f32.xlu0 %v691
  %v693 = vpop.xlane.xlu0 %692
  %v694 = vrcp.pop 32.0
  %v695 = vmul.f32 32.0, %v694
  %v696 = vsub.f32 1.0, %v695
  %v697 = vmul.f32 %v694, %v696
  %v698 = vadd.f32 %v694, %v697
  %vm699 = vweird.f32 %v694
  %v700 = vsel %vm699, %v694, %v698
  %v701 = vmul.f32 %v690, %v700
  %v702 = vmul.f32 %v693, %v700
  %v703 = vsub.f32 %v683, %v701
  %v704 = vsub.f32 %v684, %v702
  %v705 = vmul.f32 %v703, %v703
  %v706 = vmul.f32 %v704, %v704
  %v707 = vsel %vm58, %v705, 0.0
  %708 = vadd.xlane.f32.xlu0 %v707
  %v709 = vpop.xlane.xlu0 %708
  %v710 = vsel %vm58, %v706, 0.0
  %711 = vadd.xlane.f32.xlu0 %v710
  %v712 = vpop.xlane.xlu0 %711
  %v713 = vmul.f32 %v709, %v700
  %v714 = vmul.f32 %v712, %v700
  %v715 = vadd.f32 %v713, 1e-05
  %v716 = vadd.f32 %v714, 1e-05
  %v717 = vrsqrt.pop %v715
  %v718 = vmul.f32 %v717, %v715
  %v719 = vmul.f32 %v718, %v717
  %v720 = vmul.f32 0.5, %v719
  %v721 = vsub.f32 1.5, %v720
  %v722 = vmul.f32 %v717, %v721
  %vm723 = vweird.f32 %v715
  %vm724 = vweird.f32 %v717
  %vm725 = vmor %vm723, %vm724
  %v726 = vsel %vm725, %v717, %v722
  %v727 = vrsqrt.pop %v716
  %v728 = vmul.f32 %v727, %v716
  %v729 = vmul.f32 %v728, %v727
  %v730 = vmul.f32 0.5, %v729
  %v731 = vsub.f32 1.5, %v730
  %v732 = vmul.f32 %v727, %v731
  %vm733 = vweird.f32 %v716
  %vm734 = vweird.f32 %v727
  %vm735 = vmor %vm733, %vm734
  %v736 = vsel %vm735, %v727, %v732
  %v737 = vmul.f32 %v703, %v726
  %v738 = vmul.f32 %v704, %v736
  %v740 = vperm.slane %v685, 0
  %v742 = vmul.f32 %v737, %v740
  %v743 = vmul.f32 %v738, %v740
  %v745 = vperm.slane %v687, 0
  %v747 = vadd.f32 %v742, %v745
  %v748 = vadd.f32 %v743, %v745
  %v749 = vld [vmem:[%s6] sm:$0xff]
  %v750 = vld [vmem:[%s6 + $0x8] sm:$0xff]
  %v751 = vld [vmem:[%s6 + $0x10] sm:$0xff]
  %v752 = vld [vmem:[%s6 + $0x18] sm:$0xff]
  %v753 = vld [vmem:[%s7] sm:$0x1]
  %v755 = vperm.slane %v753, 0
  %v758 = vsel %vm58, %v747, 0
  %v761 = vsel %vm58, %v748, 0
  %763 = vmatpush.msra.mxu0 0.0
  %764 = vmatpush.msra.mxu0 0.0
  %765 = vmatpush.msra.mxu0 0.0
  %766 = vmatpush.msra.mxu0 0.0
  %767 = vmatpush.msra.mxu0 0.0
  %768 = vmatpush.msra.mxu0 0.0
  %769 = vmatpush.msra.mxu0 0.0
  %770 = vmatpush.msra.mxu0 0.0
  %771 = vmatpush.msra.mxu0 0.0
  %772 = vmatpush.msra.mxu0 0.0
  %773 = vmatpush.msra.mxu0 0.0
  %774 = vmatpush.msra.mxu0 0.0
  %775 = vmatpush.msra.mxu0 %v752
  %776 = vmatpush.msra.mxu0 %v751
  %777 = vmatpush.msra.mxu0 %v750
  %778 = vmatpush.msra.mxu0 %v749
  %779 = vmatmul.f32.gmra.mxu0 %v758
  %v780 = vpop.f32.mrf.mxu0
  %v781 = vadd.f32 %v755, %v780
  %782 = vmatmul.f32.gmra.mxu0 %v761
  %v783 = vpop.f32.mrf.mxu0
  %v784 = vadd.f32 %v755, %v783
  %785 = vdwg.mxu0
  %v786 = vmax.f32 %v781, 0.0
  %v787 = vmax.f32 %v784, 0.0
  %v788 = vld [vmem:[%s8] sm:$0xff]
  %v789 = vld [vmem:[%s8 + $0x8] sm:$0xff]
  %v790 = vld [vmem:[%s8 + $0x10] sm:$0xff]
  %v791 = vld [vmem:[%s8 + $0x18] sm:$0xff]
  %v792 = vld [vmem:[%s8 + $0x20] sm:$0xff]
  %v793 = vld [vmem:[%s8 + $0x28] sm:$0xff]
  %v794 = vld [vmem:[%s8 + $0x30] sm:$0xff]
  %v795 = vld [vmem:[%s8 + $0x38] sm:$0xff]
  %v796 = vld [vmem:[%s9] sm:$0x1]
  %v798 = vperm.slane %v796, 0
  %vm800 = vcmask 523264
  %v802 = vsel %vm800, %v786, 0
  %v805 = vsel %vm800, %v787, 0
  %807 = vmatpush.msra.mxu0 0.0
  %808 = vmatpush.msra.mxu0 0.0
  %809 = vmatpush.msra.mxu0 0.0
  %810 = vmatpush.msra.mxu0 0.0
  %811 = vmatpush.msra.mxu0 0.0
  %812 = vmatpush.msra.mxu0 0.0
  %813 = vmatpush.msra.mxu0 0.0
  %814 = vmatpush.msra.mxu0 0.0
  %815 = vmatpush.msra.mxu0 %v795
  %816 = vmatpush.msra.mxu0 %v794
  %817 = vmatpush.msra.mxu0 %v793
  %818 = vmatpush.msra.mxu0 %v792
  %819 = vmatpush.msra.mxu0 %v791
  %820 = vmatpush.msra.mxu0 %v790
  %821 = vmatpush.msra.mxu0 %v789
  %822 = vmatpush.msra.mxu0 %v788
  %823 = vmatmul.f32.gmra.mxu0 %v802
  %v824 = vpop.f32.mrf.mxu0
  %v825 = vadd.f32 %v798, %v824
  %826 = vmatmul.f32.gmra.mxu0 %v805
  %v827 = vpop.f32.mrf.mxu0
  %v828 = vadd.f32 %v798, %v827
  %829 = vdwg.mxu0
  %v830 = vadd.f32 %v747, %v825
  %v831 = vadd.f32 %v748, %v828
  %s832 = scalar_lea.vmem %s10, 2
  %v833 = vld [vmem:[%s832] sm:$0x1]
  %s834 = scalar_lea.vmem %s10, 3
  %v835 = vld [vmem:[%s834] sm:$0x1]
  %v836 = vsel %vm58, %v830, 0.0
  %837 = vadd.xlane.f32.xlu0 %v836
  %v838 = vpop.xlane.xlu0 %837
  %v839 = vsel %vm58, %v831, 0.0
  %840 = vadd.xlane.f32.xlu0 %v839
  %v841 = vpop.xlane.xlu0 %840
  %v842 = vmul.f32 %v838, %v700
  %v843 = vmul.f32 %v841, %v700
  %v844 = vsub.f32 %v830, %v842
  %v845 = vsub.f32 %v831, %v843
  %v846 = vmul.f32 %v844, %v844
  %v847 = vmul.f32 %v845, %v845
  %v848 = vsel %vm58, %v846, 0.0
  %849 = vadd.xlane.f32.xlu0 %v848
  %v850 = vpop.xlane.xlu0 %849
  %v851 = vsel %vm58, %v847, 0.0
  %852 = vadd.xlane.f32.xlu0 %v851
  %v853 = vpop.xlane.xlu0 %852
  %v854 = vmul.f32 %v850, %v700
  %v855 = vmul.f32 %v853, %v700
  %v856 = vadd.f32 %v854, 1e-05
  %v857 = vadd.f32 %v855, 1e-05
  %v858 = vrsqrt.pop %v856
  %v859 = vmul.f32 %v858, %v856
  %v860 = vmul.f32 %v859, %v858
  %v861 = vmul.f32 0.5, %v860
  %v862 = vsub.f32 1.5, %v861
  %v863 = vmul.f32 %v858, %v862
  %vm864 = vweird.f32 %v856
  %vm865 = vweird.f32 %v858
  %vm866 = vmor %vm864, %vm865
  %v867 = vsel %vm866, %v858, %v863
  %v868 = vrsqrt.pop %v857
  %v869 = vmul.f32 %v868, %v857
  %v870 = vmul.f32 %v869, %v868
  %v871 = vmul.f32 0.5, %v870
  %v872 = vsub.f32 1.5, %v871
  %v873 = vmul.f32 %v868, %v872
  %vm874 = vweird.f32 %v857
  %vm875 = vweird.f32 %v868
  %vm876 = vmor %vm874, %vm875
  %v877 = vsel %vm876, %v868, %v873
  %v878 = vmul.f32 %v844, %v867
  %v879 = vmul.f32 %v845, %v877
  %v881 = vperm.slane %v833, 0
  %v883 = vmul.f32 %v878, %v881
  %v884 = vmul.f32 %v879, %v881
  %v886 = vperm.slane %v835, 0
  %v888 = vadd.f32 %v883, %v886
  %v889 = vadd.f32 %v884, %v886
  %s890 = scalar_lea.vmem %s4, 32
  %v891 = vld [vmem:[%s890] sm:$0xff]
  %v892 = vld [vmem:[%s890 + $0x8] sm:$0xff]
  %v893 = vld [vmem:[%s890 + $0x10] sm:$0xff]
  %v894 = vld [vmem:[%s890 + $0x18] sm:$0xff]
  %s895 = scalar_lea.vmem %s5, 1
  %v896 = vld [vmem:[%s895] sm:$0x1]
  %v898 = vperm.slane %v896, 0
  %v901 = vsel %vm58, %v888, 0
  %v904 = vsel %vm58, %v889, 0
  %906 = vmatpush.msra.mxu0 0.0
  %907 = vmatpush.msra.mxu0 0.0
  %908 = vmatpush.msra.mxu0 0.0
  %909 = vmatpush.msra.mxu0 0.0
  %910 = vmatpush.msra.mxu0 0.0
  %911 = vmatpush.msra.mxu0 0.0
  %912 = vmatpush.msra.mxu0 0.0
  %913 = vmatpush.msra.mxu0 0.0
  %914 = vmatpush.msra.mxu0 0.0
  %915 = vmatpush.msra.mxu0 0.0
  %916 = vmatpush.msra.mxu0 0.0
  %917 = vmatpush.msra.mxu0 0.0
  %918 = vmatpush.msra.mxu0 %v894
  %919 = vmatpush.msra.mxu0 %v893
  %920 = vmatpush.msra.mxu0 %v892
  %921 = vmatpush.msra.mxu0 %v891
  %922 = vmatmul.f32.gmra.mxu0 %v901
  %v923 = vpop.f32.mrf.mxu0
  %v924 = vadd.f32 %v898, %v923
  %925 = vmatmul.f32.gmra.mxu0 %v904
  %v926 = vpop.f32.mrf.mxu0
  %v927 = vadd.f32 %v898, %v926
  %928 = vdwg.mxu0
  %931 = vrot.lane.b32.xlu0 %v924, 96
  %v932 = vpop.permute.xlu0 %931
  %933 = vrot.lane.b32.xlu0 %v927, 96
  %v934 = vpop.permute.xlu0 %933
  %v935 = vsel %vm94, %v924, 0
  %v937 = vsel %vm94, %v927, 0
  %v939 = vsel %vm94, %v932, 0
  %v941 = vsel %vm94, %v934, 0
  %943 = vmatpush.xpose.msra.mxu0 0.0
  %944 = vmatpush.xpose.msra.mxu0 0.0
  %945 = vmatpush.xpose.msra.mxu0 0.0
  %946 = vmatpush.xpose.msra.mxu0 0.0
  %947 = vmatpush.xpose.msra.mxu0 0.0
  %948 = vmatpush.xpose.msra.mxu0 0.0
  %949 = vmatpush.xpose.msra.mxu0 0.0
  %950 = vmatpush.xpose.msra.mxu0 0.0
  %951 = vmatpush.xpose.msra.mxu0 0.0
  %952 = vmatpush.xpose.msra.mxu0 0.0
  %953 = vmatpush.xpose.msra.mxu0 0.0
  %954 = vmatpush.xpose.msra.mxu0 0.0
  %955 = vmatpush.xpose.msra.mxu0 0.0
  %956 = vmatpush.xpose.msra.mxu0 0.0
  %957 = vmatpush.xpose.msra.mxu0 %v941
  %958 = vmatpush.xpose.msra.mxu0 %v939
  %959 = vmatmul.f32.gmra.mxu0 %v935
  %v960 = vpop.f32.mrf.mxu0
  %v961 = vadd.f32 0.0, %v960
  %962 = vmatmul.f32.gmra.mxu0 %v937
  %v963 = vpop.f32.mrf.mxu0
  %v964 = vadd.f32 0.0, %v963
  %965 = vdwg.mxu0
  %v966 = vmul.f32 %v961, 0.17677669
  %v967 = vmul.f32 %v964, 0.17677669
  %v968 = vsel %vm128, %v966, -1e+10
  %v969 = vsel %vm129, %v967, -1e+10
  %v970 = vsel %vm132, -2e+10, %v968
  %v971 = vsel %vm133, -2e+10, %v969
  %v972 = vsel %vm136, %v970, -inf
  %973 = vmax.xlane.f32.xlu0 %v972
  %v974 = vpop.xlane.xlu0 %973
  %v975 = vsel %vm136, %v971, -inf
  %976 = vmax.xlane.f32.xlu0 %v975
  %v977 = vpop.xlane.xlu0 %976
  %v978 = vsub.f32 %v970, %v974
  %v979 = vsub.f32 %v971, %v977
  %v980 = vmul.f32 %v978, 1.442695
  %v981 = vpow.pop %v980
  %v982 = vmul.f32 %v979, 1.442695
  %v983 = vpow.pop %v982
  %v984 = vsel %vm136, %v981, 0.0
  %985 = vadd.xlane.f32.xlu0 %v984
  %v986 = vpop.xlane.xlu0 %985
  %v987 = vsel %vm136, %v983, 0.0
  %988 = vadd.xlane.f32.xlu0 %v987
  %v989 = vpop.xlane.xlu0 %988
  %v990 = vrcp.pop %v986
  %v991 = vmul.f32 %v986, %v990
  %v992 = vsub.f32 1.0, %v991
  %v993 = vmul.f32 %v990, %v992
  %v994 = vadd.f32 %v990, %v993
  %vm995 = vweird.f32 %v986
  %vm996 = vweird.f32 %v990
  %vm997 = vmor %vm995, %vm996
  %v998 = vsel %vm997, %v990, %v994
  %v999 = vand.u32 2147483647, %v986
  %vm1000 = vcmp.eq.f32.partialorder %v999, 8.507059e+37
  %v1001 = vand.u32 %v986, 2147483648
  %v1002 = vor.u32 1.1754944e-38, %v1001
  %v1003 = vsel %vm1000, %v1002, %v998
  %v1004 = vmul.f32 %v981, %v1003
  %v1005 = vrcp.pop %v989
  %v1006 = vmul.f32 %v989, %v1005
  %v1007 = vsub.f32 1.0, %v1006
  %v1008 = vmul.f32 %v1005, %v1007
  %v1009 = vadd.f32 %v1005, %v1008
  %vm1010 = vweird.f32 %v989
  %vm1011 = vweird.f32 %v1005
  %vm1012 = vmor %vm1010, %vm1011
  %v1013 = vsel %vm1012, %v1005, %v1009
  %v1014 = vand.u32 2147483647, %v989
  %vm1015 = vcmp.eq.f32.partialorder %v1014, 8.507059e+37
  %v1016 = vand.u32 %v989, 2147483648
  %v1017 = vor.u32 1.1754944e-38, %v1016
  %v1018 = vsel %vm1015, %v1017, %v1013
  %v1019 = vmul.f32 %v983, %v1018
  %1020 = vrot.lane.b32.xlu0 %v924, 64
  %v1021 = vpop.permute.xlu0 %1020
  %1022 = vrot.lane.b32.xlu0 %v927, 64
  %v1023 = vpop.permute.xlu0 %1022
  %v1027 = vsel %vm136, %v1004, 0
  %v1030 = vsel %vm136, %v1019, 0
  %1032 = vmatpush.msra.mxu0 0.0
  %1033 = vmatpush.msra.mxu0 0.0
  %1034 = vmatpush.msra.mxu0 0.0
  %1035 = vmatpush.msra.mxu0 0.0
  %1036 = vmatpush.msra.mxu0 0.0
  %1037 = vmatpush.msra.mxu0 0.0
  %1038 = vmatpush.msra.mxu0 0.0
  %1039 = vmatpush.msra.mxu0 0.0
  %1040 = vmatpush.msra.mxu0 0.0
  %1041 = vmatpush.msra.mxu0 0.0
  %1042 = vmatpush.msra.mxu0 0.0
  %1043 = vmatpush.msra.mxu0 0.0
  %1044 = vmatpush.msra.mxu0 0.0
  %1045 = vmatpush.msra.mxu0 0.0
  %1046 = vmatpush.msra.mxu0 %v1023
  %1047 = vmatpush.msra.mxu0 %v1021
  %1048 = vmatmul.f32.gmra.mxu0 %v1027
  %v1049 = vpop.f32.mrf.mxu0
  %v1050 = vadd.f32 0.0, %v1049
  %1051 = vmatmul.f32.gmra.mxu0 %v1030
  %v1052 = vpop.f32.mrf.mxu0
  %v1053 = vadd.f32 0.0, %v1052
  %1054 = vdwg.mxu0
  %1055 = vrot.lane.b32.xlu0 %v924, 120
  %v1056 = vpop.permute.xlu0 %1055
  %1057 = vrot.lane.b32.xlu0 %v927, 120
  %v1058 = vpop.permute.xlu0 %1057
  %1059 = vrot.lane.b32.xlu0 %v924, 88
  %v1060 = vpop.permute.xlu0 %1059
  %1061 = vrot.lane.b32.xlu0 %v927, 88
  %v1062 = vpop.permute.xlu0 %1061
  %v1063 = vsel %vm94, %v1056, 0
  %v1065 = vsel %vm94, %v1058, 0
  %v1067 = vsel %vm94, %v1060, 0
  %v1069 = vsel %vm94, %v1062, 0
  %1071 = vmatpush.xpose.msra.mxu0 0.0
  %1072 = vmatpush.xpose.msra.mxu0 0.0
  %1073 = vmatpush.xpose.msra.mxu0 0.0
  %1074 = vmatpush.xpose.msra.mxu0 0.0
  %1075 = vmatpush.xpose.msra.mxu0 0.0
  %1076 = vmatpush.xpose.msra.mxu0 0.0
  %1077 = vmatpush.xpose.msra.mxu0 0.0
  %1078 = vmatpush.xpose.msra.mxu0 0.0
  %1079 = vmatpush.xpose.msra.mxu0 0.0
  %1080 = vmatpush.xpose.msra.mxu0 0.0
  %1081 = vmatpush.xpose.msra.mxu0 0.0
  %1082 = vmatpush.xpose.msra.mxu0 0.0
  %1083 = vmatpush.xpose.msra.mxu0 0.0
  %1084 = vmatpush.xpose.msra.mxu0 0.0
  %1085 = vmatpush.xpose.msra.mxu0 %v1069
  %1086 = vmatpush.xpose.msra.mxu0 %v1067
  %1087 = vmatmul.f32.gmra.mxu0 %v1063
  %v1088 = vpop.f32.mrf.mxu0
  %v1089 = vadd.f32 0.0, %v1088
  %1090 = vmatmul.f32.gmra.mxu0 %v1065
  %v1091 = vpop.f32.mrf.mxu0
  %v1092 = vadd.f32 0.0, %v1091
  %1093 = vdwg.mxu0
  %v1094 = vmul.f32 %v1089, 0.17677669
  %v1095 = vmul.f32 %v1092, 0.17677669
  %v1096 = vsel %vm128, %v1094, -1e+10
  %v1097 = vsel %vm129, %v1095, -1e+10
  %v1098 = vsel %vm132, -2e+10, %v1096
  %v1099 = vsel %vm133, -2e+10, %v1097
  %v1100 = vsel %vm136, %v1098, -inf
  %1101 = vmax.xlane.f32.xlu0 %v1100
  %v1102 = vpop.xlane.xlu0 %1101
  %v1103 = vsel %vm136, %v1099, -inf
  %1104 = vmax.xlane.f32.xlu0 %v1103
  %v1105 = vpop.xlane.xlu0 %1104
  %v1106 = vsub.f32 %v1098, %v1102
  %v1107 = vsub.f32 %v1099, %v1105
  %v1108 = vmul.f32 %v1106, 1.442695
  %v1109 = vpow.pop %v1108
  %v1110 = vmul.f32 %v1107, 1.442695
  %v1111 = vpow.pop %v1110
  %v1112 = vsel %vm136, %v1109, 0.0
  %1113 = vadd.xlane.f32.xlu0 %v1112
  %v1114 = vpop.xlane.xlu0 %1113
  %v1115 = vsel %vm136, %v1111, 0.0
  %1116 = vadd.xlane.f32.xlu0 %v1115
  %v1117 = vpop.xlane.xlu0 %1116
  %v1118 = vrcp.pop %v1114
  %v1119 = vmul.f32 %v1114, %v1118
  %v1120 = vsub.f32 1.0, %v1119
  %v1121 = vmul.f32 %v1118, %v1120
  %v1122 = vadd.f32 %v1118, %v1121
  %vm1123 = vweird.f32 %v1114
  %vm1124 = vweird.f32 %v1118
  %vm1125 = vmor %vm1123, %vm1124
  %v1126 = vsel %vm1125, %v1118, %v1122
  %v1127 = vand.u32 2147483647, %v1114
  %vm1128 = vcmp.eq.f32.partialorder %v1127, 8.507059e+37
  %v1129 = vand.u32 %v1114, 2147483648
  %v1130 = vor.u32 1.1754944e-38, %v1129
  %v1131 = vsel %vm1128, %v1130, %v1126
  %v1132 = vmul.f32 %v1109, %v1131
  %v1133 = vrcp.pop %v1117
  %v1134 = vmul.f32 %v1117, %v1133
  %v1135 = vsub.f32 1.0, %v1134
  %v1136 = vmul.f32 %v1133, %v1135
  %v1137 = vadd.f32 %v1133, %v1136
  %vm1138 = vweird.f32 %v1117
  %vm1139 = vweird.f32 %v1133
  %vm1140 = vmor %vm1138, %vm1139
  %v1141 = vsel %vm1140, %v1133, %v1137
  %v1142 = vand.u32 2147483647, %v1117
  %vm1143 = vcmp.eq.f32.partialorder %v1142, 8.507059e+37
  %v1144 = vand.u32 %v1117, 2147483648
  %v1145 = vor.u32 1.1754944e-38, %v1144
  %v1146 = vsel %vm1143, %v1145, %v1141
  %v1147 = vmul.f32 %v1111, %v1146
  %1148 = vrot.lane.b32.xlu0 %v924, 56
  %v1149 = vpop.permute.xlu0 %1148
  %1150 = vrot.lane.b32.xlu0 %v927, 56
  %v1151 = vpop.permute.xlu0 %1150
  %v1155 = vsel %vm136, %v1132, 0
  %v1158 = vsel %vm136, %v1147, 0
  %1160 = vmatpush.msra.mxu0 0.0
  %1161 = vmatpush.msra.mxu0 0.0
  %1162 = vmatpush.msra.mxu0 0.0
  %1163 = vmatpush.msra.mxu0 0.0
  %1164 = vmatpush.msra.mxu0 0.0
  %1165 = vmatpush.msra.mxu0 0.0
  %1166 = vmatpush.msra.mxu0 0.0
  %1167 = vmatpush.msra.mxu0 0.0
  %1168 = vmatpush.msra.mxu0 0.0
  %1169 = vmatpush.msra.mxu0 0.0
  %1170 = vmatpush.msra.mxu0 0.0
  %1171 = vmatpush.msra.mxu0 0.0
  %1172 = vmatpush.msra.mxu0 0.0
  %1173 = vmatpush.msra.mxu0 0.0
  %1174 = vmatpush.msra.mxu0 %v1151
  %1175 = vmatpush.msra.mxu0 %v1149
  %1176 = vmatmul.f32.gmra.mxu0 %v1155
  %v1177 = vpop.f32.mrf.mxu0
  %v1178 = vadd.f32 0.0, %v1177
  %1179 = vmatmul.f32.gmra.mxu0 %v1158
  %v1180 = vpop.f32.mrf.mxu0
  %v1181 = vadd.f32 0.0, %v1180
  %1182 = vdwg.mxu0
  %1183 = vrot.lane.b32.xlu0 %v924, 112
  %v1184 = vpop.permute.xlu0 %1183
  %1185 = vrot.lane.b32.xlu0 %v927, 112
  %v1186 = vpop.permute.xlu0 %1185
  %1187 = vrot.lane.b32.xlu0 %v924, 80
  %v1188 = vpop.permute.xlu0 %1187
  %1189 = vrot.lane.b32.xlu0 %v927, 80
  %v1190 = vpop.permute.xlu0 %1189
  %v1191 = vsel %vm94, %v1184, 0
  %v1193 = vsel %vm94, %v1186, 0
  %v1195 = vsel %vm94, %v1188, 0
  %v1197 = vsel %vm94, %v1190, 0
  %1199 = vmatpush.xpose.msra.mxu0 0.0
  %1200 = vmatpush.xpose.msra.mxu0 0.0
  %1201 = vmatpush.xpose.msra.mxu0 0.0
  %1202 = vmatpush.xpose.msra.mxu0 0.0
  %1203 = vmatpush.xpose.msra.mxu0 0.0
  %1204 = vmatpush.xpose.msra.mxu0 0.0
  %1205 = vmatpush.xpose.msra.mxu0 0.0
  %1206 = vmatpush.xpose.msra.mxu0 0.0
  %1207 = vmatpush.xpose.msra.mxu0 0.0
  %1208 = vmatpush.xpose.msra.mxu0 0.0
  %1209 = vmatpush.xpose.msra.mxu0 0.0
  %1210 = vmatpush.xpose.msra.mxu0 0.0
  %1211 = vmatpush.xpose.msra.mxu0 0.0
  %1212 = vmatpush.xpose.msra.mxu0 0.0
  %1213 = vmatpush.xpose.msra.mxu0 %v1197
  %1214 = vmatpush.xpose.msra.mxu0 %v1195
  %1215 = vmatmul.f32.gmra.mxu0 %v1191
  %v1216 = vpop.f32.mrf.mxu0
  %v1217 = vadd.f32 0.0, %v1216
  %1218 = vmatmul.f32.gmra.mxu0 %v1193
  %v1219 = vpop.f32.mrf.mxu0
  %v1220 = vadd.f32 0.0, %v1219
  %1221 = vdwg.mxu0
  %v1222 = vmul.f32 %v1217, 0.17677669
  %v1223 = vmul.f32 %v1220, 0.17677669
  %v1224 = vsel %vm128, %v1222, -1e+10
  %v1225 = vsel %vm129, %v1223, -1e+10
  %v1226 = vsel %vm132, -2e+10, %v1224
  %v1227 = vsel %vm133, -2e+10, %v1225
  %v1228 = vsel %vm136, %v1226, -inf
  %1229 = vmax.xlane.f32.xlu0 %v1228
  %v1230 = vpop.xlane.xlu0 %1229
  %v1231 = vsel %vm136, %v1227, -inf
  %1232 = vmax.xlane.f32.xlu0 %v1231
  %v1233 = vpop.xlane.xlu0 %1232
  %v1234 = vsub.f32 %v1226, %v1230
  %v1235 = vsub.f32 %v1227, %v1233
  %v1236 = vmul.f32 %v1234, 1.442695
  %v1237 = vpow.pop %v1236
  %v1238 = vmul.f32 %v1235, 1.442695
  %v1239 = vpow.pop %v1238
  %v1240 = vsel %vm136, %v1237, 0.0
  %1241 = vadd.xlane.f32.xlu0 %v1240
  %v1242 = vpop.xlane.xlu0 %1241
  %v1243 = vsel %vm136, %v1239, 0.0
  %1244 = vadd.xlane.f32.xlu0 %v1243
  %v1245 = vpop.xlane.xlu0 %1244
  %v1246 = vrcp.pop %v1242
  %v1247 = vmul.f32 %v1242, %v1246
  %v1248 = vsub.f32 1.0, %v1247
  %v1249 = vmul.f32 %v1246, %v1248
  %v1250 = vadd.f32 %v1246, %v1249
  %vm1251 = vweird.f32 %v1242
  %vm1252 = vweird.f32 %v1246
  %vm1253 = vmor %vm1251, %vm1252
  %v1254 = vsel %vm1253, %v1246, %v1250
  %v1255 = vand.u32 2147483647, %v1242
  %vm1256 = vcmp.eq.f32.partialorder %v1255, 8.507059e+37
  %v1257 = vand.u32 %v1242, 2147483648
  %v1258 = vor.u32 1.1754944e-38, %v1257
  %v1259 = vsel %vm1256, %v1258, %v1254
  %v1260 = vmul.f32 %v1237, %v1259
  %v1261 = vrcp.pop %v1245
  %v1262 = vmul.f32 %v1245, %v1261
  %v1263 = vsub.f32 1.0, %v1262
  %v1264 = vmul.f32 %v1261, %v1263
  %v1265 = vadd.f32 %v1261, %v1264
  %vm1266 = vweird.f32 %v1245
  %vm1267 = vweird.f32 %v1261
  %vm1268 = vmor %vm1266, %vm1267
  %v1269 = vsel %vm1268, %v1261, %v1265
  %v1270 = vand.u32 2147483647, %v1245
  %vm1271 = vcmp.eq.f32.partialorder %v1270, 8.507059e+37
  %v1272 = vand.u32 %v1245, 2147483648
  %v1273 = vor.u32 1.1754944e-38, %v1272
  %v1274 = vsel %vm1271, %v1273, %v1269
  %v1275 = vmul.f32 %v1239, %v1274
  %1276 = vrot.lane.b32.xlu0 %v924, 48
  %v1277 = vpop.permute.xlu0 %1276
  %1278 = vrot.lane.b32.xlu0 %v927, 48
  %v1279 = vpop.permute.xlu0 %1278
  %v1283 = vsel %vm136, %v1260, 0
  %v1286 = vsel %vm136, %v1275, 0
  %1288 = vmatpush.msra.mxu0 0.0
  %1289 = vmatpush.msra.mxu0 0.0
  %1290 = vmatpush.msra.mxu0 0.0
  %1291 = vmatpush.msra.mxu0 0.0
  %1292 = vmatpush.msra.mxu0 0.0
  %1293 = vmatpush.msra.mxu0 0.0
  %1294 = vmatpush.msra.mxu0 0.0
  %1295 = vmatpush.msra.mxu0 0.0
  %1296 = vmatpush.msra.mxu0 0.0
  %1297 = vmatpush.msra.mxu0 0.0
  %1298 = vmatpush.msra.mxu0 0.0
  %1299 = vmatpush.msra.mxu0 0.0
  %1300 = vmatpush.msra.mxu0 0.0
  %1301 = vmatpush.msra.mxu0 0.0
  %1302 = vmatpush.msra.mxu0 %v1279
  %1303 = vmatpush.msra.mxu0 %v1277
  %1304 = vmatmul.f32.gmra.mxu0 %v1283
  %v1305 = vpop.f32.mrf.mxu0
  %v1306 = vadd.f32 0.0, %v1305
  %1307 = vmatmul.f32.gmra.mxu0 %v1286
  %v1308 = vpop.f32.mrf.mxu0
  %v1309 = vadd.f32 0.0, %v1308
  %1310 = vdwg.mxu0
  %1311 = vrot.lane.b32.xlu0 %v924, 104
  %v1312 = vpop.permute.xlu0 %1311
  %1313 = vrot.lane.b32.xlu0 %v927, 104
  %v1314 = vpop.permute.xlu0 %1313
  %1315 = vrot.lane.b32.xlu0 %v924, 72
  %v1316 = vpop.permute.xlu0 %1315
  %1317 = vrot.lane.b32.xlu0 %v927, 72
  %v1318 = vpop.permute.xlu0 %1317
  %v1319 = vsel %vm94, %v1312, 0
  %v1321 = vsel %vm94, %v1314, 0
  %v1323 = vsel %vm94, %v1316, 0
  %v1325 = vsel %vm94, %v1318, 0
  %1327 = vmatpush.xpose.msra.mxu0 0.0
  %1328 = vmatpush.xpose.msra.mxu0 0.0
  %1329 = vmatpush.xpose.msra.mxu0 0.0
  %1330 = vmatpush.xpose.msra.mxu0 0.0
  %1331 = vmatpush.xpose.msra.mxu0 0.0
  %1332 = vmatpush.xpose.msra.mxu0 0.0
  %1333 = vmatpush.xpose.msra.mxu0 0.0
  %1334 = vmatpush.xpose.msra.mxu0 0.0
  %1335 = vmatpush.xpose.msra.mxu0 0.0
  %1336 = vmatpush.xpose.msra.mxu0 0.0
  %1337 = vmatpush.xpose.msra.mxu0 0.0
  %1338 = vmatpush.xpose.msra.mxu0 0.0
  %1339 = vmatpush.xpose.msra.mxu0 0.0
  %1340 = vmatpush.xpose.msra.mxu0 0.0
  %1341 = vmatpush.xpose.msra.mxu0 %v1325
  %1342 = vmatpush.xpose.msra.mxu0 %v1323
  %1343 = vmatmul.f32.gmra.mxu0 %v1319
  %v1344 = vpop.f32.mrf.mxu0
  %v1345 = vadd.f32 0.0, %v1344
  %1346 = vmatmul.f32.gmra.mxu0 %v1321
  %v1347 = vpop.f32.mrf.mxu0
  %v1348 = vadd.f32 0.0, %v1347
  %1349 = vdwg.mxu0
  %v1350 = vmul.f32 %v1345, 0.17677669
  %v1351 = vmul.f32 %v1348, 0.17677669
  %v1352 = vsel %vm128, %v1350, -1e+10
  %v1353 = vsel %vm129, %v1351, -1e+10
  %v1354 = vsel %vm132, -2e+10, %v1352
  %v1355 = vsel %vm133, -2e+10, %v1353
  %v1356 = vsel %vm136, %v1354, -inf
  %1357 = vmax.xlane.f32.xlu0 %v1356
  %v1358 = vpop.xlane.xlu0 %1357
  %v1359 = vsel %vm136, %v1355, -inf
  %1360 = vmax.xlane.f32.xlu0 %v1359
  %v1361 = vpop.xlane.xlu0 %1360
  %v1362 = vsub.f32 %v1354, %v1358
  %v1363 = vsub.f32 %v1355, %v1361
  %v1364 = vmul.f32 %v1362, 1.442695
  %v1365 = vpow.pop %v1364
  %v1366 = vmul.f32 %v1363, 1.442695
  %v1367 = vpow.pop %v1366
  %v1368 = vsel %vm136, %v1365, 0.0
  %1369 = vadd.xlane.f32.xlu0 %v1368
  %v1370 = vpop.xlane.xlu0 %1369
  %v1371 = vsel %vm136, %v1367, 0.0
  %1372 = vadd.xlane.f32.xlu0 %v1371
  %v1373 = vpop.xlane.xlu0 %1372
  %v1374 = vrcp.pop %v1370
  %v1375 = vmul.f32 %v1370, %v1374
  %v1376 = vsub.f32 1.0, %v1375
  %v1377 = vmul.f32 %v1374, %v1376
  %v1378 = vadd.f32 %v1374, %v1377
  %vm1379 = vweird.f32 %v1370
  %vm1380 = vweird.f32 %v1374
  %vm1381 = vmor %vm1379, %vm1380
  %v1382 = vsel %vm1381, %v1374, %v1378
  %v1383 = vand.u32 2147483647, %v1370
  %vm1384 = vcmp.eq.f32.partialorder %v1383, 8.507059e+37
  %v1385 = vand.u32 %v1370, 2147483648
  %v1386 = vor.u32 1.1754944e-38, %v1385
  %v1387 = vsel %vm1384, %v1386, %v1382
  %v1388 = vmul.f32 %v1365, %v1387
  %v1389 = vrcp.pop %v1373
  %v1390 = vmul.f32 %v1373, %v1389
  %v1391 = vsub.f32 1.0, %v1390
  %v1392 = vmul.f32 %v1389, %v1391
  %v1393 = vadd.f32 %v1389, %v1392
  %vm1394 = vweird.f32 %v1373
  %vm1395 = vweird.f32 %v1389
  %vm1396 = vmor %vm1394, %vm1395
  %v1397 = vsel %vm1396, %v1389, %v1393
  %v1398 = vand.u32 2147483647, %v1373
  %vm1399 = vcmp.eq.f32.partialorder %v1398, 8.507059e+37
  %v1400 = vand.u32 %v1373, 2147483648
  %v1401 = vor.u32 1.1754944e-38, %v1400
  %v1402 = vsel %vm1399, %v1401, %v1397
  %v1403 = vmul.f32 %v1367, %v1402
  %1404 = vrot.lane.b32.xlu0 %v924, 40
  %v1405 = vpop.permute.xlu0 %1404
  %1406 = vrot.lane.b32.xlu0 %v927, 40
  %v1407 = vpop.permute.xlu0 %1406
  %v1411 = vsel %vm136, %v1388, 0
  %v1414 = vsel %vm136, %v1403, 0
  %1416 = vmatpush.msra.mxu0 0.0
  %1417 = vmatpush.msra.mxu0 0.0
  %1418 = vmatpush.msra.mxu0 0.0
  %1419 = vmatpush.msra.mxu0 0.0
  %1420 = vmatpush.msra.mxu0 0.0
  %1421 = vmatpush.msra.mxu0 0.0
  %1422 = vmatpush.msra.mxu0 0.0
  %1423 = vmatpush.msra.mxu0 0.0
  %1424 = vmatpush.msra.mxu0 0.0
  %1425 = vmatpush.msra.mxu0 0.0
  %1426 = vmatpush.msra.mxu0 0.0
  %1427 = vmatpush.msra.mxu0 0.0
  %1428 = vmatpush.msra.mxu0 0.0
  %1429 = vmatpush.msra.mxu0 0.0
  %1430 = vmatpush.msra.mxu0 %v1407
  %1431 = vmatpush.msra.mxu0 %v1405
  %1432 = vmatmul.f32.gmra.mxu0 %v1411
  %v1433 = vpop.f32.mrf.mxu0
  %v1434 = vadd.f32 0.0, %v1433
  %1435 = vmatmul.f32.gmra.mxu0 %v1414
  %v1436 = vpop.f32.mrf.mxu0
  %v1437 = vadd.f32 0.0, %v1436
  %1438 = vdwg.mxu0
  %1441 = vrot.lane.b32.xlu0 %v1178, 8
  %v1442 = vpop.permute.xlu0 %1441
  %1443 = vrot.lane.b32.xlu0 %v1181, 8
  %v1444 = vpop.permute.xlu0 %1443
  %1449 = vrot.lane.b32.xlu0 %v1306, 16
  %v1450 = vpop.permute.xlu0 %1449
  %1451 = vrot.lane.b32.xlu0 %v1309, 16
  %v1452 = vpop.permute.xlu0 %1451
  %1457 = vrot.lane.b32.xlu0 %v1434, 24
  %v1458 = vpop.permute.xlu0 %1457
  %1459 = vrot.lane.b32.xlu0 %v1437, 24
  %v1460 = vpop.permute.xlu0 %1459
  %v1463 = vsel %vm94, %v1050, %v1442
  %v1464 = vsel %vm94, %v1053, %v1444
  %v1465 = vsel %vm136, %v1463, %v1450
  %v1466 = vsel %vm136, %v1464, %v1452
  %v1467 = vsel %vm632, %v1465, %v1458
  %v1468 = vsel %vm632, %v1466, %v1460
  %1473 = vrot.lane.b32.xlu0 %v891, 32
  %v1474 = vpop.permute.xlu0 %1473
  %1475 = vrot.lane.b32.xlu0 %v892, 32
  %v1476 = vpop.permute.xlu0 %1475
  %1477 = vrot.lane.b32.xlu0 %v893, 32
  %v1478 = vpop.permute.xlu0 %1477
  %1479 = vrot.lane.b32.xlu0 %v894, 32
  %v1480 = vpop.permute.xlu0 %1479
  %1485 = vrot.lane.b32.xlu0 %v898, 32
  %v1486 = vpop.permute.xlu0 %1485
  %v1489 = vsel %vm58, %v1467, 0
  %v1492 = vsel %vm58, %v1468, 0
  %1494 = vmatpush.msra.mxu0 0.0
  %1495 = vmatpush.msra.mxu0 0.0
  %1496 = vmatpush.msra.mxu0 0.0
  %1497 = vmatpush.msra.mxu0 0.0
  %1498 = vmatpush.msra.mxu0 0.0
  %1499 = vmatpush.msra.mxu0 0.0
  %1500 = vmatpush.msra.mxu0 0.0
  %1501 = vmatpush.msra.mxu0 0.0
  %1502 = vmatpush.msra.mxu0 0.0
  %1503 = vmatpush.msra.mxu0 0.0
  %1504 = vmatpush.msra.mxu0 0.0
  %1505 = vmatpush.msra.mxu0 0.0
  %1506 = vmatpush.msra.mxu0 %v1480
  %1507 = vmatpush.msra.mxu0 %v1478
  %1508 = vmatpush.msra.mxu0 %v1476
  %1509 = vmatpush.msra.mxu0 %v1474
  %1510 = vmatmul.f32.gmra.mxu0 %v1489
  %v1511 = vpop.f32.mrf.mxu0
  %v1512 = vadd.f32 %v1486, %v1511
  %1513 = vmatmul.f32.gmra.mxu0 %v1492
  %v1514 = vpop.f32.mrf.mxu0
  %v1515 = vadd.f32 %v1486, %v1514
  %1516 = vdwg.mxu0
  %v1517 = vadd.f32 %v888, %v1512
  %v1518 = vadd.f32 %v889, %v1515
  %s1519 = scalar_lea.vmem %s10, 4
  %v1520 = vld [vmem:[%s1519] sm:$0x1]
  %s1521 = scalar_lea.vmem %s10, 5
  %v1522 = vld [vmem:[%s1521] sm:$0x1]
  %v1523 = vsel %vm58, %v1517, 0.0
  %1524 = vadd.xlane.f32.xlu0 %v1523
  %v1525 = vpop.xlane.xlu0 %1524
  %v1526 = vsel %vm58, %v1518, 0.0
  %1527 = vadd.xlane.f32.xlu0 %v1526
  %v1528 = vpop.xlane.xlu0 %1527
  %v1529 = vmul.f32 %v1525, %v700
  %v1530 = vmul.f32 %v1528, %v700
  %v1531 = vsub.f32 %v1517, %v1529
  %v1532 = vsub.f32 %v1518, %v1530
  %v1533 = vmul.f32 %v1531, %v1531
  %v1534 = vmul.f32 %v1532, %v1532
  %v1535 = vsel %vm58, %v1533, 0.0
  %1536 = vadd.xlane.f32.xlu0 %v1535
  %v1537 = vpop.xlane.xlu0 %1536
  %v1538 = vsel %vm58, %v1534, 0.0
  %1539 = vadd.xlane.f32.xlu0 %v1538
  %v1540 = vpop.xlane.xlu0 %1539
  %v1541 = vmul.f32 %v1537, %v700
  %v1542 = vmul.f32 %v1540, %v700
  %v1543 = vadd.f32 %v1541, 1e-05
  %v1544 = vadd.f32 %v1542, 1e-05
  %v1545 = vrsqrt.pop %v1543
  %v1546 = vmul.f32 %v1545, %v1543
  %v1547 = vmul.f32 %v1546, %v1545
  %v1548 = vmul.f32 0.5, %v1547
  %v1549 = vsub.f32 1.5, %v1548
  %v1550 = vmul.f32 %v1545, %v1549
  %vm1551 = vweird.f32 %v1543
  %vm1552 = vweird.f32 %v1545
  %vm1553 = vmor %vm1551, %vm1552
  %v1554 = vsel %vm1553, %v1545, %v1550
  %v1555 = vrsqrt.pop %v1544
  %v1556 = vmul.f32 %v1555, %v1544
  %v1557 = vmul.f32 %v1556, %v1555
  %v1558 = vmul.f32 0.5, %v1557
  %v1559 = vsub.f32 1.5, %v1558
  %v1560 = vmul.f32 %v1555, %v1559
  %vm1561 = vweird.f32 %v1544
  %vm1562 = vweird.f32 %v1555
  %vm1563 = vmor %vm1561, %vm1562
  %v1564 = vsel %vm1563, %v1555, %v1560
  %v1565 = vmul.f32 %v1531, %v1554
  %v1566 = vmul.f32 %v1532, %v1564
  %v1568 = vperm.slane %v1520, 0
  %v1570 = vmul.f32 %v1565, %v1568
  %v1571 = vmul.f32 %v1566, %v1568
  %v1573 = vperm.slane %v1522, 0
  %v1575 = vadd.f32 %v1570, %v1573
  %v1576 = vadd.f32 %v1571, %v1573
  %s1577 = scalar_lea.vmem %s6, 32
  %v1578 = vld [vmem:[%s1577] sm:$0xff]
  %v1579 = vld [vmem:[%s1577 + $0x8] sm:$0xff]
  %v1580 = vld [vmem:[%s1577 + $0x10] sm:$0xff]
  %v1581 = vld [vmem:[%s1577 + $0x18] sm:$0xff]
  %s1582 = scalar_lea.vmem %s7, 1
  %v1583 = vld [vmem:[%s1582] sm:$0x1]
  %v1585 = vperm.slane %v1583, 0
  %v1588 = vsel %vm58, %v1575, 0
  %v1591 = vsel %vm58, %v1576, 0
  %1593 = vmatpush.msra.mxu0 0.0
  %1594 = vmatpush.msra.mxu0 0.0
  %1595 = vmatpush.msra.mxu0 0.0
  %1596 = vmatpush.msra.mxu0 0.0
  %1597 = vmatpush.msra.mxu0 0.0
  %1598 = vmatpush.msra.mxu0 0.0
  %1599 = vmatpush.msra.mxu0 0.0
  %1600 = vmatpush.msra.mxu0 0.0
  %1601 = vmatpush.msra.mxu0 0.0
  %1602 = vmatpush.msra.mxu0 0.0
  %1603 = vmatpush.msra.mxu0 0.0
  %1604 = vmatpush.msra.mxu0 0.0
  %1605 = vmatpush.msra.mxu0 %v1581
  %1606 = vmatpush.msra.mxu0 %v1580
  %1607 = vmatpush.msra.mxu0 %v1579
  %1608 = vmatpush.msra.mxu0 %v1578
  %1609 = vmatmul.f32.gmra.mxu0 %v1588
  %v1610 = vpop.f32.mrf.mxu0
  %v1611 = vadd.f32 %v1585, %v1610
  %1612 = vmatmul.f32.gmra.mxu0 %v1591
  %v1613 = vpop.f32.mrf.mxu0
  %v1614 = vadd.f32 %v1585, %v1613
  %1615 = vdwg.mxu0
  %v1616 = vmax.f32 %v1611, 0.0
  %v1617 = vmax.f32 %v1614, 0.0
  %s1618 = scalar_lea.vmem %s8, 64
  %v1619 = vld [vmem:[%s1618] sm:$0xff]
  %v1620 = vld [vmem:[%s1618 + $0x8] sm:$0xff]
  %v1621 = vld [vmem:[%s1618 + $0x10] sm:$0xff]
  %v1622 = vld [vmem:[%s1618 + $0x18] sm:$0xff]
  %v1623 = vld [vmem:[%s1618 + $0x20] sm:$0xff]
  %v1624 = vld [vmem:[%s1618 + $0x28] sm:$0xff]
  %v1625 = vld [vmem:[%s1618 + $0x30] sm:$0xff]
  %v1626 = vld [vmem:[%s1618 + $0x38] sm:$0xff]
  %s1627 = scalar_lea.vmem %s9, 1
  %v1628 = vld [vmem:[%s1627] sm:$0x1]
  %v1630 = vperm.slane %v1628, 0
  %v1633 = vsel %vm800, %v1616, 0
  %v1636 = vsel %vm800, %v1617, 0
  %1638 = vmatpush.msra.mxu0 0.0
  %1639 = vmatpush.msra.mxu0 0.0
  %1640 = vmatpush.msra.mxu0 0.0
  %1641 = vmatpush.msra.mxu0 0.0
  %1642 = vmatpush.msra.mxu0 0.0
  %1643 = vmatpush.msra.mxu0 0.0
  %1644 = vmatpush.msra.mxu0 0.0
  %1645 = vmatpush.msra.mxu0 0.0
  %1646 = vmatpush.msra.mxu0 %v1626
  %1647 = vmatpush.msra.mxu0 %v1625
  %1648 = vmatpush.msra.mxu0 %v1624
  %1649 = vmatpush.msra.mxu0 %v1623
  %1650 = vmatpush.msra.mxu0 %v1622
  %1651 = vmatpush.msra.mxu0 %v1621
  %1652 = vmatpush.msra.mxu0 %v1620
  %1653 = vmatpush.msra.mxu0 %v1619
  %1654 = vmatmul.f32.gmra.mxu0 %v1633
  %v1655 = vpop.f32.mrf.mxu0
  %v1656 = vadd.f32 %v1630, %v1655
  %1657 = vmatmul.f32.gmra.mxu0 %v1636
  %v1658 = vpop.f32.mrf.mxu0
  %v1659 = vadd.f32 %v1630, %v1658
  %1660 = vdwg.mxu0
  %v1661 = vadd.f32 %v1575, %v1656
  %v1662 = vadd.f32 %v1576, %v1659
  %s1663 = scalar_lea.vmem %s10, 6
  %v1664 = vld [vmem:[%s1663] sm:$0x1]
  %s1665 = scalar_lea.vmem %s10, 7
  %v1666 = vld [vmem:[%s1665] sm:$0x1]
  %v1667 = vsel %vm58, %v1661, 0.0
  %1668 = vadd.xlane.f32.xlu0 %v1667
  %v1669 = vpop.xlane.xlu0 %1668
  %v1670 = vsel %vm58, %v1662, 0.0
  %1671 = vadd.xlane.f32.xlu0 %v1670
  %v1672 = vpop.xlane.xlu0 %1671
  %v1673 = vmul.f32 %v1669, %v700
  %v1674 = vmul.f32 %v1672, %v700
  %v1675 = vsub.f32 %v1661, %v1673
  %v1676 = vsub.f32 %v1662, %v1674
  %v1677 = vmul.f32 %v1675, %v1675
  %v1678 = vmul.f32 %v1676, %v1676
  %v1679 = vsel %vm58, %v1677, 0.0
  %1680 = vadd.xlane.f32.xlu0 %v1679
  %v1681 = vpop.xlane.xlu0 %1680
  %v1682 = vsel %vm58, %v1678, 0.0
  %1683 = vadd.xlane.f32.xlu0 %v1682
  %v1684 = vpop.xlane.xlu0 %1683
  %v1685 = vmul.f32 %v1681, %v700
  %v1686 = vmul.f32 %v1684, %v700
  %v1687 = vadd.f32 %v1685, 1e-05
  %v1688 = vadd.f32 %v1686, 1e-05
  %v1689 = vrsqrt.pop %v1687
  %v1690 = vmul.f32 %v1689, %v1687
  %v1691 = vmul.f32 %v1690, %v1689
  %v1692 = vmul.f32 0.5, %v1691
  %v1693 = vsub.f32 1.5, %v1692
  %v1694 = vmul.f32 %v1689, %v1693
  %vm1695 = vweird.f32 %v1687
  %vm1696 = vweird.f32 %v1689
  %vm1697 = vmor %vm1695, %vm1696
  %v1698 = vsel %vm1697, %v1689, %v1694
  %v1699 = vrsqrt.pop %v1688
  %v1700 = vmul.f32 %v1699, %v1688
  %v1701 = vmul.f32 %v1700, %v1699
  %v1702 = vmul.f32 0.5, %v1701
  %v1703 = vsub.f32 1.5, %v1702
  %v1704 = vmul.f32 %v1699, %v1703
  %vm1705 = vweird.f32 %v1688
  %vm1706 = vweird.f32 %v1699
  %vm1707 = vmor %vm1705, %vm1706
  %v1708 = vsel %vm1707, %v1699, %v1704
  %v1709 = vmul.f32 %v1675, %v1698
  %v1710 = vmul.f32 %v1676, %v1708
  %v1712 = vperm.slane %v1664, 0
  %v1714 = vmul.f32 %v1709, %v1712
  %v1715 = vmul.f32 %v1710, %v1712
  %v1717 = vperm.slane %v1666, 0
  %v1719 = vadd.f32 %v1714, %v1717
  %v1720 = vadd.f32 %v1715, %v1717
  %s1721 = scalar_lea.vmem %s4, 64
  %v1722 = vld [vmem:[%s1721] sm:$0xff]
  %v1723 = vld [vmem:[%s1721 + $0x8] sm:$0xff]
  %v1724 = vld [vmem:[%s1721 + $0x10] sm:$0xff]
  %v1725 = vld [vmem:[%s1721 + $0x18] sm:$0xff]
  %s1726 = scalar_lea.vmem %s5, 2
  %v1727 = vld [vmem:[%s1726] sm:$0x1]
  %v1729 = vperm.slane %v1727, 0
  %v1732 = vsel %vm58, %v42, 0
  %v1735 = vsel %vm58, %v43, 0
  %1737 = vmatpush.msra.mxu0 0.0
  %1738 = vmatpush.msra.mxu0 0.0
  %1739 = vmatpush.msra.mxu0 0.0
  %1740 = vmatpush.msra.mxu0 0.0
  %1741 = vmatpush.msra.mxu0 0.0
  %1742 = vmatpush.msra.mxu0 0.0
  %1743 = vmatpush.msra.mxu0 0.0
  %1744 = vmatpush.msra.mxu0 0.0
  %1745 = vmatpush.msra.mxu0 0.0
  %1746 = vmatpush.msra.mxu0 0.0
  %1747 = vmatpush.msra.mxu0 0.0
  %1748 = vmatpush.msra.mxu0 0.0
  %1749 = vmatpush.msra.mxu0 %v1725
  %1750 = vmatpush.msra.mxu0 %v1724
  %1751 = vmatpush.msra.mxu0 %v1723
  %1752 = vmatpush.msra.mxu0 %v1722
  %1753 = vmatmul.f32.gmra.mxu0 %v1732
  %v1754 = vpop.f32.mrf.mxu0
  %v1755 = vadd.f32 %v1729, %v1754
  %1756 = vmatmul.f32.gmra.mxu0 %v1735
  %v1757 = vpop.f32.mrf.mxu0
  %v1758 = vadd.f32 %v1729, %v1757
  %1759 = vdwg.mxu0
  %1762 = vrot.lane.b32.xlu0 %v1755, 96
  %v1763 = vpop.permute.xlu0 %1762
  %1764 = vrot.lane.b32.xlu0 %v1758, 96
  %v1765 = vpop.permute.xlu0 %1764
  %v1766 = vsel %vm94, %v1755, 0
  %v1768 = vsel %vm94, %v1758, 0
  %v1770 = vsel %vm94, %v1763, 0
  %v1772 = vsel %vm94, %v1765, 0
  %1774 = vmatpush.xpose.msra.mxu0 0.0
  %1775 = vmatpush.xpose.msra.mxu0 0.0
  %1776 = vmatpush.xpose.msra.mxu0 0.0
  %1777 = vmatpush.xpose.msra.mxu0 0.0
  %1778 = vmatpush.xpose.msra.mxu0 0.0
  %1779 = vmatpush.xpose.msra.mxu0 0.0
  %1780 = vmatpush.xpose.msra.mxu0 0.0
  %1781 = vmatpush.xpose.msra.mxu0 0.0
  %1782 = vmatpush.xpose.msra.mxu0 0.0
  %1783 = vmatpush.xpose.msra.mxu0 0.0
  %1784 = vmatpush.xpose.msra.mxu0 0.0
  %1785 = vmatpush.xpose.msra.mxu0 0.0
  %1786 = vmatpush.xpose.msra.mxu0 0.0
  %1787 = vmatpush.xpose.msra.mxu0 0.0
  %1788 = vmatpush.xpose.msra.mxu0 %v1772
  %1789 = vmatpush.xpose.msra.mxu0 %v1770
  %1790 = vmatmul.f32.gmra.mxu0 %v1766
  %v1791 = vpop.f32.mrf.mxu0
  %v1792 = vadd.f32 0.0, %v1791
  %1793 = vmatmul.f32.gmra.mxu0 %v1768
  %v1794 = vpop.f32.mrf.mxu0
  %v1795 = vadd.f32 0.0, %v1794
  %1796 = vdwg.mxu0
  %v1797 = vmul.f32 %v1792, 0.17677669
  %v1798 = vmul.f32 %v1795, 0.17677669
  %vm1799 = vcmp.gt.f32.partialorder %v46, 0.5
  %vm1800 = vcmp.gt.f32.partialorder %v47, 0.5
  %v1801 = vsel %vm1799, %v1797, -1e+10
  %v1802 = vsel %vm1800, %v1798, -1e+10
  %vm1803 = vcmp.lt.f32.partialorder %v46, -0.5
  %vm1804 = vcmp.lt.f32.partialorder %v47, -0.5
  %v1805 = vsel %vm1803, -2e+10, %v1801
  %v1806 = vsel %vm1804, -2e+10, %v1802
  %v1807 = vsel %vm136, %v1805, -inf
  %1808 = vmax.xlane.f32.xlu0 %v1807
  %v1809 = vpop.xlane.xlu0 %1808
  %v1810 = vsel %vm136, %v1806, -inf
  %1811 = vmax.xlane.f32.xlu0 %v1810
  %v1812 = vpop.xlane.xlu0 %1811
  %v1813 = vsub.f32 %v1805, %v1809
  %v1814 = vsub.f32 %v1806, %v1812
  %v1815 = vmul.f32 %v1813, 1.442695
  %v1816 = vpow.pop %v1815
  %v1817 = vmul.f32 %v1814, 1.442695
  %v1818 = vpow.pop %v1817
  %v1819 = vsel %vm136, %v1816, 0.0
  %1820 = vadd.xlane.f32.xlu0 %v1819
  %v1821 = vpop.xlane.xlu0 %1820
  %v1822 = vsel %vm136, %v1818, 0.0
  %1823 = vadd.xlane.f32.xlu0 %v1822
  %v1824 = vpop.xlane.xlu0 %1823
  %v1825 = vrcp.pop %v1821
  %v1826 = vmul.f32 %v1821, %v1825
  %v1827 = vsub.f32 1.0, %v1826
  %v1828 = vmul.f32 %v1825, %v1827
  %v1829 = vadd.f32 %v1825, %v1828
  %vm1830 = vweird.f32 %v1821
  %vm1831 = vweird.f32 %v1825
  %vm1832 = vmor %vm1830, %vm1831
  %v1833 = vsel %vm1832, %v1825, %v1829
  %v1834 = vand.u32 2147483647, %v1821
  %vm1835 = vcmp.eq.f32.partialorder %v1834, 8.507059e+37
  %v1836 = vand.u32 %v1821, 2147483648
  %v1837 = vor.u32 1.1754944e-38, %v1836
  %v1838 = vsel %vm1835, %v1837, %v1833
  %v1839 = vmul.f32 %v1816, %v1838
  %v1840 = vrcp.pop %v1824
  %v1841 = vmul.f32 %v1824, %v1840
  %v1842 = vsub.f32 1.0, %v1841
  %v1843 = vmul.f32 %v1840, %v1842
  %v1844 = vadd.f32 %v1840, %v1843
  %vm1845 = vweird.f32 %v1824
  %vm1846 = vweird.f32 %v1840
  %vm1847 = vmor %vm1845, %vm1846
  %v1848 = vsel %vm1847, %v1840, %v1844
  %v1849 = vand.u32 2147483647, %v1824
  %vm1850 = vcmp.eq.f32.partialorder %v1849, 8.507059e+37
  %v1851 = vand.u32 %v1824, 2147483648
  %v1852 = vor.u32 1.1754944e-38, %v1851
  %v1853 = vsel %vm1850, %v1852, %v1848
  %v1854 = vmul.f32 %v1818, %v1853
  %1855 = vrot.lane.b32.xlu0 %v1755, 64
  %v1856 = vpop.permute.xlu0 %1855
  %1857 = vrot.lane.b32.xlu0 %v1758, 64
  %v1858 = vpop.permute.xlu0 %1857
  %v1862 = vsel %vm136, %v1839, 0
  %v1865 = vsel %vm136, %v1854, 0
  %1867 = vmatpush.msra.mxu0 0.0
  %1868 = vmatpush.msra.mxu0 0.0
  %1869 = vmatpush.msra.mxu0 0.0
  %1870 = vmatpush.msra.mxu0 0.0
  %1871 = vmatpush.msra.mxu0 0.0
  %1872 = vmatpush.msra.mxu0 0.0
  %1873 = vmatpush.msra.mxu0 0.0
  %1874 = vmatpush.msra.mxu0 0.0
  %1875 = vmatpush.msra.mxu0 0.0
  %1876 = vmatpush.msra.mxu0 0.0
  %1877 = vmatpush.msra.mxu0 0.0
  %1878 = vmatpush.msra.mxu0 0.0
  %1879 = vmatpush.msra.mxu0 0.0
  %1880 = vmatpush.msra.mxu0 0.0
  %1881 = vmatpush.msra.mxu0 %v1858
  %1882 = vmatpush.msra.mxu0 %v1856
  %1883 = vmatmul.f32.gmra.mxu0 %v1862
  %v1884 = vpop.f32.mrf.mxu0
  %v1885 = vadd.f32 0.0, %v1884
  %1886 = vmatmul.f32.gmra.mxu0 %v1865
  %v1887 = vpop.f32.mrf.mxu0
  %v1888 = vadd.f32 0.0, %v1887
  %1889 = vdwg.mxu0
  %1890 = vrot.lane.b32.xlu0 %v1755, 120
  %v1891 = vpop.permute.xlu0 %1890
  %1892 = vrot.lane.b32.xlu0 %v1758, 120
  %v1893 = vpop.permute.xlu0 %1892
  %1894 = vrot.lane.b32.xlu0 %v1755, 88
  %v1895 = vpop.permute.xlu0 %1894
  %1896 = vrot.lane.b32.xlu0 %v1758, 88
  %v1897 = vpop.permute.xlu0 %1896
  %v1898 = vsel %vm94, %v1891, 0
  %v1900 = vsel %vm94, %v1893, 0
  %v1902 = vsel %vm94, %v1895, 0
  %v1904 = vsel %vm94, %v1897, 0
  %1906 = vmatpush.xpose.msra.mxu0 0.0
  %1907 = vmatpush.xpose.msra.mxu0 0.0
  %1908 = vmatpush.xpose.msra.mxu0 0.0
  %1909 = vmatpush.xpose.msra.mxu0 0.0
  %1910 = vmatpush.xpose.msra.mxu0 0.0
  %1911 = vmatpush.xpose.msra.mxu0 0.0
  %1912 = vmatpush.xpose.msra.mxu0 0.0
  %1913 = vmatpush.xpose.msra.mxu0 0.0
  %1914 = vmatpush.xpose.msra.mxu0 0.0
  %1915 = vmatpush.xpose.msra.mxu0 0.0
  %1916 = vmatpush.xpose.msra.mxu0 0.0
  %1917 = vmatpush.xpose.msra.mxu0 0.0
  %1918 = vmatpush.xpose.msra.mxu0 0.0
  %1919 = vmatpush.xpose.msra.mxu0 0.0
  %1920 = vmatpush.xpose.msra.mxu0 %v1904
  %1921 = vmatpush.xpose.msra.mxu0 %v1902
  %1922 = vmatmul.f32.gmra.mxu0 %v1898
  %v1923 = vpop.f32.mrf.mxu0
  %v1924 = vadd.f32 0.0, %v1923
  %1925 = vmatmul.f32.gmra.mxu0 %v1900
  %v1926 = vpop.f32.mrf.mxu0
  %v1927 = vadd.f32 0.0, %v1926
  %1928 = vdwg.mxu0
  %v1929 = vmul.f32 %v1924, 0.17677669
  %v1930 = vmul.f32 %v1927, 0.17677669
  %v1931 = vsel %vm1799, %v1929, -1e+10
  %v1932 = vsel %vm1800, %v1930, -1e+10
  %v1933 = vsel %vm1803, -2e+10, %v1931
  %v1934 = vsel %vm1804, -2e+10, %v1932
  %v1935 = vsel %vm136, %v1933, -inf
  %1936 = vmax.xlane.f32.xlu0 %v1935
  %v1937 = vpop.xlane.xlu0 %1936
  %v1938 = vsel %vm136, %v1934, -inf
  %1939 = vmax.xlane.f32.xlu0 %v1938
  %v1940 = vpop.xlane.xlu0 %1939
  %v1941 = vsub.f32 %v1933, %v1937
  %v1942 = vsub.f32 %v1934, %v1940
  %v1943 = vmul.f32 %v1941, 1.442695
  %v1944 = vpow.pop %v1943
  %v1945 = vmul.f32 %v1942, 1.442695
  %v1946 = vpow.pop %v1945
  %v1947 = vsel %vm136, %v1944, 0.0
  %1948 = vadd.xlane.f32.xlu0 %v1947
  %v1949 = vpop.xlane.xlu0 %1948
  %v1950 = vsel %vm136, %v1946, 0.0
  %1951 = vadd.xlane.f32.xlu0 %v1950
  %v1952 = vpop.xlane.xlu0 %1951
  %v1953 = vrcp.pop %v1949
  %v1954 = vmul.f32 %v1949, %v1953
  %v1955 = vsub.f32 1.0, %v1954
  %v1956 = vmul.f32 %v1953, %v1955
  %v1957 = vadd.f32 %v1953, %v1956
  %vm1958 = vweird.f32 %v1949
  %vm1959 = vweird.f32 %v1953
  %vm1960 = vmor %vm1958, %vm1959
  %v1961 = vsel %vm1960, %v1953, %v1957
  %v1962 = vand.u32 2147483647, %v1949
  %vm1963 = vcmp.eq.f32.partialorder %v1962, 8.507059e+37
  %v1964 = vand.u32 %v1949, 2147483648
  %v1965 = vor.u32 1.1754944e-38, %v1964
  %v1966 = vsel %vm1963, %v1965, %v1961
  %v1967 = vmul.f32 %v1944, %v1966
  %v1968 = vrcp.pop %v1952
  %v1969 = vmul.f32 %v1952, %v1968
  %v1970 = vsub.f32 1.0, %v1969
  %v1971 = vmul.f32 %v1968, %v1970
  %v1972 = vadd.f32 %v1968, %v1971
  %vm1973 = vweird.f32 %v1952
  %vm1974 = vweird.f32 %v1968
  %vm1975 = vmor %vm1973, %vm1974
  %v1976 = vsel %vm1975, %v1968, %v1972
  %v1977 = vand.u32 2147483647, %v1952
  %vm1978 = vcmp.eq.f32.partialorder %v1977, 8.507059e+37
  %v1979 = vand.u32 %v1952, 2147483648
  %v1980 = vor.u32 1.1754944e-38, %v1979
  %v1981 = vsel %vm1978, %v1980, %v1976
  %v1982 = vmul.f32 %v1946, %v1981
  %1983 = vrot.lane.b32.xlu0 %v1755, 56
  %v1984 = vpop.permute.xlu0 %1983
  %1985 = vrot.lane.b32.xlu0 %v1758, 56
  %v1986 = vpop.permute.xlu0 %1985
  %v1990 = vsel %vm136, %v1967, 0
  %v1993 = vsel %vm136, %v1982, 0
  %1995 = vmatpush.msra.mxu0 0.0
  %1996 = vmatpush.msra.mxu0 0.0
  %1997 = vmatpush.msra.mxu0 0.0
  %1998 = vmatpush.msra.mxu0 0.0
  %1999 = vmatpush.msra.mxu0 0.0
  %2000 = vmatpush.msra.mxu0 0.0
  %2001 = vmatpush.msra.mxu0 0.0
  %2002 = vmatpush.msra.mxu0 0.0
  %2003 = vmatpush.msra.mxu0 0.0
  %2004 = vmatpush.msra.mxu0 0.0
  %2005 = vmatpush.msra.mxu0 0.0
  %2006 = vmatpush.msra.mxu0 0.0
  %2007 = vmatpush.msra.mxu0 0.0
  %2008 = vmatpush.msra.mxu0 0.0
  %2009 = vmatpush.msra.mxu0 %v1986
  %2010 = vmatpush.msra.mxu0 %v1984
  %2011 = vmatmul.f32.gmra.mxu0 %v1990
  %v2012 = vpop.f32.mrf.mxu0
  %v2013 = vadd.f32 0.0, %v2012
  %2014 = vmatmul.f32.gmra.mxu0 %v1993
  %v2015 = vpop.f32.mrf.mxu0
  %v2016 = vadd.f32 0.0, %v2015
  %2017 = vdwg.mxu0
  %2018 = vrot.lane.b32.xlu0 %v1755, 112
  %v2019 = vpop.permute.xlu0 %2018
  %2020 = vrot.lane.b32.xlu0 %v1758, 112
  %v2021 = vpop.permute.xlu0 %2020
  %2022 = vrot.lane.b32.xlu0 %v1755, 80
  %v2023 = vpop.permute.xlu0 %2022
  %2024 = vrot.lane.b32.xlu0 %v1758, 80
  %v2025 = vpop.permute.xlu0 %2024
  %v2026 = vsel %vm94, %v2019, 0
  %v2028 = vsel %vm94, %v2021, 0
  %v2030 = vsel %vm94, %v2023, 0
  %v2032 = vsel %vm94, %v2025, 0
  %2034 = vmatpush.xpose.msra.mxu0 0.0
  %2035 = vmatpush.xpose.msra.mxu0 0.0
  %2036 = vmatpush.xpose.msra.mxu0 0.0
  %2037 = vmatpush.xpose.msra.mxu0 0.0
  %2038 = vmatpush.xpose.msra.mxu0 0.0
  %2039 = vmatpush.xpose.msra.mxu0 0.0
  %2040 = vmatpush.xpose.msra.mxu0 0.0
  %2041 = vmatpush.xpose.msra.mxu0 0.0
  %2042 = vmatpush.xpose.msra.mxu0 0.0
  %2043 = vmatpush.xpose.msra.mxu0 0.0
  %2044 = vmatpush.xpose.msra.mxu0 0.0
  %2045 = vmatpush.xpose.msra.mxu0 0.0
  %2046 = vmatpush.xpose.msra.mxu0 0.0
  %2047 = vmatpush.xpose.msra.mxu0 0.0
  %2048 = vmatpush.xpose.msra.mxu0 %v2032
  %2049 = vmatpush.xpose.msra.mxu0 %v2030
  %2050 = vmatmul.f32.gmra.mxu0 %v2026
  %v2051 = vpop.f32.mrf.mxu0
  %v2052 = vadd.f32 0.0, %v2051
  %2053 = vmatmul.f32.gmra.mxu0 %v2028
  %v2054 = vpop.f32.mrf.mxu0
  %v2055 = vadd.f32 0.0, %v2054
  %2056 = vdwg.mxu0
  %v2057 = vmul.f32 %v2052, 0.17677669
  %v2058 = vmul.f32 %v2055, 0.17677669
  %v2059 = vsel %vm1799, %v2057, -1e+10
  %v2060 = vsel %vm1800, %v2058, -1e+10
  %v2061 = vsel %vm1803, -2e+10, %v2059
  %v2062 = vsel %vm1804, -2e+10, %v2060
  %v2063 = vsel %vm136, %v2061, -inf
  %2064 = vmax.xlane.f32.xlu0 %v2063
  %v2065 = vpop.xlane.xlu0 %2064
  %v2066 = vsel %vm136, %v2062, -inf
  %2067 = vmax.xlane.f32.xlu0 %v2066
  %v2068 = vpop.xlane.xlu0 %2067
  %v2069 = vsub.f32 %v2061, %v2065
  %v2070 = vsub.f32 %v2062, %v2068
  %v2071 = vmul.f32 %v2069, 1.442695
  %v2072 = vpow.pop %v2071
  %v2073 = vmul.f32 %v2070, 1.442695
  %v2074 = vpow.pop %v2073
  %v2075 = vsel %vm136, %v2072, 0.0
  %2076 = vadd.xlane.f32.xlu0 %v2075
  %v2077 = vpop.xlane.xlu0 %2076
  %v2078 = vsel %vm136, %v2074, 0.0
  %2079 = vadd.xlane.f32.xlu0 %v2078
  %v2080 = vpop.xlane.xlu0 %2079
  %v2081 = vrcp.pop %v2077
  %v2082 = vmul.f32 %v2077, %v2081
  %v2083 = vsub.f32 1.0, %v2082
  %v2084 = vmul.f32 %v2081, %v2083
  %v2085 = vadd.f32 %v2081, %v2084
  %vm2086 = vweird.f32 %v2077
  %vm2087 = vweird.f32 %v2081
  %vm2088 = vmor %vm2086, %vm2087
  %v2089 = vsel %vm2088, %v2081, %v2085
  %v2090 = vand.u32 2147483647, %v2077
  %vm2091 = vcmp.eq.f32.partialorder %v2090, 8.507059e+37
  %v2092 = vand.u32 %v2077, 2147483648
  %v2093 = vor.u32 1.1754944e-38, %v2092
  %v2094 = vsel %vm2091, %v2093, %v2089
  %v2095 = vmul.f32 %v2072, %v2094
  %v2096 = vrcp.pop %v2080
  %v2097 = vmul.f32 %v2080, %v2096
  %v2098 = vsub.f32 1.0, %v2097
  %v2099 = vmul.f32 %v2096, %v2098
  %v2100 = vadd.f32 %v2096, %v2099
  %vm2101 = vweird.f32 %v2080
  %vm2102 = vweird.f32 %v2096
  %vm2103 = vmor %vm2101, %vm2102
  %v2104 = vsel %vm2103, %v2096, %v2100
  %v2105 = vand.u32 2147483647, %v2080
  %vm2106 = vcmp.eq.f32.partialorder %v2105, 8.507059e+37
  %v2107 = vand.u32 %v2080, 2147483648
  %v2108 = vor.u32 1.1754944e-38, %v2107
  %v2109 = vsel %vm2106, %v2108, %v2104
  %v2110 = vmul.f32 %v2074, %v2109
  %2111 = vrot.lane.b32.xlu0 %v1755, 48
  %v2112 = vpop.permute.xlu0 %2111
  %2113 = vrot.lane.b32.xlu0 %v1758, 48
  %v2114 = vpop.permute.xlu0 %2113
  %v2118 = vsel %vm136, %v2095, 0
  %v2121 = vsel %vm136, %v2110, 0
  %2123 = vmatpush.msra.mxu0 0.0
  %2124 = vmatpush.msra.mxu0 0.0
  %2125 = vmatpush.msra.mxu0 0.0
  %2126 = vmatpush.msra.mxu0 0.0
  %2127 = vmatpush.msra.mxu0 0.0
  %2128 = vmatpush.msra.mxu0 0.0
  %2129 = vmatpush.msra.mxu0 0.0
  %2130 = vmatpush.msra.mxu0 0.0
  %2131 = vmatpush.msra.mxu0 0.0
  %2132 = vmatpush.msra.mxu0 0.0
  %2133 = vmatpush.msra.mxu0 0.0
  %2134 = vmatpush.msra.mxu0 0.0
  %2135 = vmatpush.msra.mxu0 0.0
  %2136 = vmatpush.msra.mxu0 0.0
  %2137 = vmatpush.msra.mxu0 %v2114
  %2138 = vmatpush.msra.mxu0 %v2112
  %2139 = vmatmul.f32.gmra.mxu0 %v2118
  %v2140 = vpop.f32.mrf.mxu0
  %v2141 = vadd.f32 0.0, %v2140
  %2142 = vmatmul.f32.gmra.mxu0 %v2121
  %v2143 = vpop.f32.mrf.mxu0
  %v2144 = vadd.f32 0.0, %v2143
  %2145 = vdwg.mxu0
  %2146 = vrot.lane.b32.xlu0 %v1755, 104
  %v2147 = vpop.permute.xlu0 %2146
  %2148 = vrot.lane.b32.xlu0 %v1758, 104
  %v2149 = vpop.permute.xlu0 %2148
  %2150 = vrot.lane.b32.xlu0 %v1755, 72
  %v2151 = vpop.permute.xlu0 %2150
  %2152 = vrot.lane.b32.xlu0 %v1758, 72
  %v2153 = vpop.permute.xlu0 %2152
  %v2154 = vsel %vm94, %v2147, 0
  %v2156 = vsel %vm94, %v2149, 0
  %v2158 = vsel %vm94, %v2151, 0
  %v2160 = vsel %vm94, %v2153, 0
  %2162 = vmatpush.xpose.msra.mxu0 0.0
  %2163 = vmatpush.xpose.msra.mxu0 0.0
  %2164 = vmatpush.xpose.msra.mxu0 0.0
  %2165 = vmatpush.xpose.msra.mxu0 0.0
  %2166 = vmatpush.xpose.msra.mxu0 0.0
  %2167 = vmatpush.xpose.msra.mxu0 0.0
  %2168 = vmatpush.xpose.msra.mxu0 0.0
  %2169 = vmatpush.xpose.msra.mxu0 0.0
  %2170 = vmatpush.xpose.msra.mxu0 0.0
  %2171 = vmatpush.xpose.msra.mxu0 0.0
  %2172 = vmatpush.xpose.msra.mxu0 0.0
  %2173 = vmatpush.xpose.msra.mxu0 0.0
  %2174 = vmatpush.xpose.msra.mxu0 0.0
  %2175 = vmatpush.xpose.msra.mxu0 0.0
  %2176 = vmatpush.xpose.msra.mxu0 %v2160
  %2177 = vmatpush.xpose.msra.mxu0 %v2158
  %2178 = vmatmul.f32.gmra.mxu0 %v2154
  %v2179 = vpop.f32.mrf.mxu0
  %v2180 = vadd.f32 0.0, %v2179
  %2181 = vmatmul.f32.gmra.mxu0 %v2156
  %v2182 = vpop.f32.mrf.mxu0
  %v2183 = vadd.f32 0.0, %v2182
  %2184 = vdwg.mxu0
  %v2185 = vmul.f32 %v2180, 0.17677669
  %v2186 = vmul.f32 %v2183, 0.17677669
  %v2187 = vsel %vm1799, %v2185, -1e+10
  %v2188 = vsel %vm1800, %v2186, -1e+10
  %v2189 = vsel %vm1803, -2e+10, %v2187
  %v2190 = vsel %vm1804, -2e+10, %v2188
  %v2191 = vsel %vm136, %v2189, -inf
  %2192 = vmax.xlane.f32.xlu0 %v2191
  %v2193 = vpop.xlane.xlu0 %2192
  %v2194 = vsel %vm136, %v2190, -inf
  %2195 = vmax.xlane.f32.xlu0 %v2194
  %v2196 = vpop.xlane.xlu0 %2195
  %v2197 = vsub.f32 %v2189, %v2193
  %v2198 = vsub.f32 %v2190, %v2196
  %v2199 = vmul.f32 %v2197, 1.442695
  %v2200 = vpow.pop %v2199
  %v2201 = vmul.f32 %v2198, 1.442695
  %v2202 = vpow.pop %v2201
  %v2203 = vsel %vm136, %v2200, 0.0
  %2204 = vadd.xlane.f32.xlu0 %v2203
  %v2205 = vpop.xlane.xlu0 %2204
  %v2206 = vsel %vm136, %v2202, 0.0
  %2207 = vadd.xlane.f32.xlu0 %v2206
  %v2208 = vpop.xlane.xlu0 %2207
  %v2209 = vrcp.pop %v2205
  %v2210 = vmul.f32 %v2205, %v2209
  %v2211 = vsub.f32 1.0, %v2210
  %v2212 = vmul.f32 %v2209, %v2211
  %v2213 = vadd.f32 %v2209, %v2212
  %vm2214 = vweird.f32 %v2205
  %vm2215 = vweird.f32 %v2209
  %vm2216 = vmor %vm2214, %vm2215
  %v2217 = vsel %vm2216, %v2209, %v2213
  %v2218 = vand.u32 2147483647, %v2205
  %vm2219 = vcmp.eq.f32.partialorder %v2218, 8.507059e+37
  %v2220 = vand.u32 %v2205, 2147483648
  %v2221 = vor.u32 1.1754944e-38, %v2220
  %v2222 = vsel %vm2219, %v2221, %v2217
  %v2223 = vmul.f32 %v2200, %v2222
  %v2224 = vrcp.pop %v2208
  %v2225 = vmul.f32 %v2208, %v2224
  %v2226 = vsub.f32 1.0, %v2225
  %v2227 = vmul.f32 %v2224, %v2226
  %v2228 = vadd.f32 %v2224, %v2227
  %vm2229 = vweird.f32 %v2208
  %vm2230 = vweird.f32 %v2224
  %vm2231 = vmor %vm2229, %vm2230
  %v2232 = vsel %vm2231, %v2224, %v2228
  %v2233 = vand.u32 2147483647, %v2208
  %vm2234 = vcmp.eq.f32.partialorder %v2233, 8.507059e+37
  %v2235 = vand.u32 %v2208, 2147483648
  %v2236 = vor.u32 1.1754944e-38, %v2235
  %v2237 = vsel %vm2234, %v2236, %v2232
  %v2238 = vmul.f32 %v2202, %v2237
  %2239 = vrot.lane.b32.xlu0 %v1755, 40
  %v2240 = vpop.permute.xlu0 %2239
  %2241 = vrot.lane.b32.xlu0 %v1758, 40
  %v2242 = vpop.permute.xlu0 %2241
  %v2246 = vsel %vm136, %v2223, 0
  %v2249 = vsel %vm136, %v2238, 0
  %2251 = vmatpush.msra.mxu0 0.0
  %2252 = vmatpush.msra.mxu0 0.0
  %2253 = vmatpush.msra.mxu0 0.0
  %2254 = vmatpush.msra.mxu0 0.0
  %2255 = vmatpush.msra.mxu0 0.0
  %2256 = vmatpush.msra.mxu0 0.0
  %2257 = vmatpush.msra.mxu0 0.0
  %2258 = vmatpush.msra.mxu0 0.0
  %2259 = vmatpush.msra.mxu0 0.0
  %2260 = vmatpush.msra.mxu0 0.0
  %2261 = vmatpush.msra.mxu0 0.0
  %2262 = vmatpush.msra.mxu0 0.0
  %2263 = vmatpush.msra.mxu0 0.0
  %2264 = vmatpush.msra.mxu0 0.0
  %2265 = vmatpush.msra.mxu0 %v2242
  %2266 = vmatpush.msra.mxu0 %v2240
  %2267 = vmatmul.f32.gmra.mxu0 %v2246
  %v2268 = vpop.f32.mrf.mxu0
  %v2269 = vadd.f32 0.0, %v2268
  %2270 = vmatmul.f32.gmra.mxu0 %v2249
  %v2271 = vpop.f32.mrf.mxu0
  %v2272 = vadd.f32 0.0, %v2271
  %2273 = vdwg.mxu0
  %2276 = vrot.lane.b32.xlu0 %v2013, 8
  %v2277 = vpop.permute.xlu0 %2276
  %2278 = vrot.lane.b32.xlu0 %v2016, 8
  %v2279 = vpop.permute.xlu0 %2278
  %2284 = vrot.lane.b32.xlu0 %v2141, 16
  %v2285 = vpop.permute.xlu0 %2284
  %2286 = vrot.lane.b32.xlu0 %v2144, 16
  %v2287 = vpop.permute.xlu0 %2286
  %2292 = vrot.lane.b32.xlu0 %v2269, 24
  %v2293 = vpop.permute.xlu0 %2292
  %2294 = vrot.lane.b32.xlu0 %v2272, 24
  %v2295 = vpop.permute.xlu0 %2294
  %v2298 = vsel %vm94, %v1885, %v2277
  %v2299 = vsel %vm94, %v1888, %v2279
  %v2300 = vsel %vm136, %v2298, %v2285
  %v2301 = vsel %vm136, %v2299, %v2287
  %v2302 = vsel %vm632, %v2300, %v2293
  %v2303 = vsel %vm632, %v2301, %v2295
  %2308 = vrot.lane.b32.xlu0 %v1722, 32
  %v2309 = vpop.permute.xlu0 %2308
  %2310 = vrot.lane.b32.xlu0 %v1723, 32
  %v2311 = vpop.permute.xlu0 %2310
  %2312 = vrot.lane.b32.xlu0 %v1724, 32
  %v2313 = vpop.permute.xlu0 %2312
  %2314 = vrot.lane.b32.xlu0 %v1725, 32
  %v2315 = vpop.permute.xlu0 %2314
  %2320 = vrot.lane.b32.xlu0 %v1729, 32
  %v2321 = vpop.permute.xlu0 %2320
  %v2324 = vsel %vm58, %v2302, 0
  %v2327 = vsel %vm58, %v2303, 0
  %2329 = vmatpush.msra.mxu0 0.0
  %2330 = vmatpush.msra.mxu0 0.0
  %2331 = vmatpush.msra.mxu0 0.0
  %2332 = vmatpush.msra.mxu0 0.0
  %2333 = vmatpush.msra.mxu0 0.0
  %2334 = vmatpush.msra.mxu0 0.0
  %2335 = vmatpush.msra.mxu0 0.0
  %2336 = vmatpush.msra.mxu0 0.0
  %2337 = vmatpush.msra.mxu0 0.0
  %2338 = vmatpush.msra.mxu0 0.0
  %2339 = vmatpush.msra.mxu0 0.0
  %2340 = vmatpush.msra.mxu0 0.0
  %2341 = vmatpush.msra.mxu0 %v2315
  %2342 = vmatpush.msra.mxu0 %v2313
  %2343 = vmatpush.msra.mxu0 %v2311
  %2344 = vmatpush.msra.mxu0 %v2309
  %2345 = vmatmul.f32.gmra.mxu0 %v2324
  %v2346 = vpop.f32.mrf.mxu0
  %v2347 = vadd.f32 %v2321, %v2346
  %2348 = vmatmul.f32.gmra.mxu0 %v2327
  %v2349 = vpop.f32.mrf.mxu0
  %v2350 = vadd.f32 %v2321, %v2349
  %2351 = vdwg.mxu0
  %v2352 = vadd.f32 %v42, %v2347
  %v2353 = vadd.f32 %v43, %v2350
  %s2354 = scalar_lea.vmem %s10, 8
  %v2355 = vld [vmem:[%s2354] sm:$0x1]
  %s2356 = scalar_lea.vmem %s10, 9
  %v2357 = vld [vmem:[%s2356] sm:$0x1]
  %v2358 = vsel %vm58, %v2352, 0.0
  %2359 = vadd.xlane.f32.xlu0 %v2358
  %v2360 = vpop.xlane.xlu0 %2359
  %v2361 = vsel %vm58, %v2353, 0.0
  %2362 = vadd.xlane.f32.xlu0 %v2361
  %v2363 = vpop.xlane.xlu0 %2362
  %v2364 = vmul.f32 %v2360, %v700
  %v2365 = vmul.f32 %v2363, %v700
  %v2366 = vsub.f32 %v2352, %v2364
  %v2367 = vsub.f32 %v2353, %v2365
  %v2368 = vmul.f32 %v2366, %v2366
  %v2369 = vmul.f32 %v2367, %v2367
  %v2370 = vsel %vm58, %v2368, 0.0
  %2371 = vadd.xlane.f32.xlu0 %v2370
  %v2372 = vpop.xlane.xlu0 %2371
  %v2373 = vsel %vm58, %v2369, 0.0
  %2374 = vadd.xlane.f32.xlu0 %v2373
  %v2375 = vpop.xlane.xlu0 %2374
  %v2376 = vmul.f32 %v2372, %v700
  %v2377 = vmul.f32 %v2375, %v700
  %v2378 = vadd.f32 %v2376, 1e-05
  %v2379 = vadd.f32 %v2377, 1e-05
  %v2380 = vrsqrt.pop %v2378
  %v2381 = vmul.f32 %v2380, %v2378
  %v2382 = vmul.f32 %v2381, %v2380
  %v2383 = vmul.f32 0.5, %v2382
  %v2384 = vsub.f32 1.5, %v2383
  %v2385 = vmul.f32 %v2380, %v2384
  %vm2386 = vweird.f32 %v2378
  %vm2387 = vweird.f32 %v2380
  %vm2388 = vmor %vm2386, %vm2387
  %v2389 = vsel %vm2388, %v2380, %v2385
  %v2390 = vrsqrt.pop %v2379
  %v2391 = vmul.f32 %v2390, %v2379
  %v2392 = vmul.f32 %v2391, %v2390
  %v2393 = vmul.f32 0.5, %v2392
  %v2394 = vsub.f32 1.5, %v2393
  %v2395 = vmul.f32 %v2390, %v2394
  %vm2396 = vweird.f32 %v2379
  %vm2397 = vweird.f32 %v2390
  %vm2398 = vmor %vm2396, %vm2397
  %v2399 = vsel %vm2398, %v2390, %v2395
  %v2400 = vmul.f32 %v2366, %v2389
  %v2401 = vmul.f32 %v2367, %v2399
  %v2403 = vperm.slane %v2355, 0
  %v2405 = vmul.f32 %v2400, %v2403
  %v2406 = vmul.f32 %v2401, %v2403
  %v2408 = vperm.slane %v2357, 0
  %v2410 = vadd.f32 %v2405, %v2408
  %v2411 = vadd.f32 %v2406, %v2408
  %s2412 = scalar_lea.vmem %s4, 96
  %v2413 = vld [vmem:[%s2412] sm:$0xff]
  %v2414 = vld [vmem:[%s2412 + $0x8] sm:$0xff]
  %v2415 = vld [vmem:[%s2412 + $0x10] sm:$0xff]
  %v2416 = vld [vmem:[%s2412 + $0x18] sm:$0xff]
  %s2417 = scalar_lea.vmem %s5, 3
  %v2418 = vld [vmem:[%s2417] sm:$0x1]
  %v2420 = vperm.slane %v2418, 0
  %v2423 = vsel %vm58, %v2410, 0
  %v2426 = vsel %vm58, %v2411, 0
  %2428 = vmatpush.msra.mxu0 0.0
  %2429 = vmatpush.msra.mxu0 0.0
  %2430 = vmatpush.msra.mxu0 0.0
  %2431 = vmatpush.msra.mxu0 0.0
  %2432 = vmatpush.msra.mxu0 0.0
  %2433 = vmatpush.msra.mxu0 0.0
  %2434 = vmatpush.msra.mxu0 0.0
  %2435 = vmatpush.msra.mxu0 0.0
  %2436 = vmatpush.msra.mxu0 0.0
  %2437 = vmatpush.msra.mxu0 0.0
  %2438 = vmatpush.msra.mxu0 0.0
  %2439 = vmatpush.msra.mxu0 0.0
  %2440 = vmatpush.msra.mxu0 %v2416
  %2441 = vmatpush.msra.mxu0 %v2415
  %2442 = vmatpush.msra.mxu0 %v2414
  %2443 = vmatpush.msra.mxu0 %v2413
  %2444 = vmatmul.f32.gmra.mxu0 %v2423
  %v2445 = vpop.f32.mrf.mxu0
  %v2446 = vadd.f32 %v2420, %v2445
  %2447 = vmatmul.f32.gmra.mxu0 %v2426
  %v2448 = vpop.f32.mrf.mxu0
  %v2449 = vadd.f32 %v2420, %v2448
  %2450 = vdwg.mxu0
  %2455 = vrot.lane.b32.xlu0 %v2413, 96
  %v2456 = vpop.permute.xlu0 %2455
  %2457 = vrot.lane.b32.xlu0 %v2414, 96
  %v2458 = vpop.permute.xlu0 %2457
  %2459 = vrot.lane.b32.xlu0 %v2415, 96
  %v2460 = vpop.permute.xlu0 %2459
  %2461 = vrot.lane.b32.xlu0 %v2416, 96
  %v2462 = vpop.permute.xlu0 %2461
  %2467 = vrot.lane.b32.xlu0 %v2420, 96
  %v2468 = vpop.permute.xlu0 %2467
  %v2471 = vsel %vm58, %v1719, 0
  %v2474 = vsel %vm58, %v1720, 0
  %2476 = vmatpush.msra.mxu0 0.0
  %2477 = vmatpush.msra.mxu0 0.0
  %2478 = vmatpush.msra.mxu0 0.0
  %2479 = vmatpush.msra.mxu0 0.0
  %2480 = vmatpush.msra.mxu0 0.0
  %2481 = vmatpush.msra.mxu0 0.0
  %2482 = vmatpush.msra.mxu0 0.0
  %2483 = vmatpush.msra.mxu0 0.0
  %2484 = vmatpush.msra.mxu0 0.0
  %2485 = vmatpush.msra.mxu0 0.0
  %2486 = vmatpush.msra.mxu0 0.0
  %2487 = vmatpush.msra.mxu0 0.0
  %2488 = vmatpush.msra.mxu0 %v2462
  %2489 = vmatpush.msra.mxu0 %v2460
  %2490 = vmatpush.msra.mxu0 %v2458
  %2491 = vmatpush.msra.mxu0 %v2456
  %2492 = vmatmul.f32.gmra.mxu0 %v2471
  %v2493 = vpop.f32.mrf.mxu0
  %v2494 = vadd.f32 %v2468, %v2493
  %2495 = vmatmul.f32.gmra.mxu0 %v2474
  %v2496 = vpop.f32.mrf.mxu0
  %v2497 = vadd.f32 %v2468, %v2496
  %2498 = vdwg.mxu0
  %v2500 = vsel %vm94, %v2446, 0
  %v2503 = vsel %vm94, %v2449, 0
  %v2506 = vsel %vm94, %v2494, 0
  %v2509 = vsel %vm94, %v2497, 0
  %2511 = vmatpush.xpose.msra.mxu0 0.0
  %2512 = vmatpush.xpose.msra.mxu0 0.0
  %2513 = vmatpush.xpose.msra.mxu0 0.0
  %2514 = vmatpush.xpose.msra.mxu0 0.0
  %2515 = vmatpush.xpose.msra.mxu0 0.0
  %2516 = vmatpush.xpose.msra.mxu0 0.0
  %2517 = vmatpush.xpose.msra.mxu0 0.0
  %2518 = vmatpush.xpose.msra.mxu0 0.0
  %2519 = vmatpush.xpose.msra.mxu0 0.0
  %2520 = vmatpush.xpose.msra.mxu0 0.0
  %2521 = vmatpush.xpose.msra.mxu0 0.0
  %2522 = vmatpush.xpose.msra.mxu0 0.0
  %2523 = vmatpush.xpose.msra.mxu0 0.0
  %2524 = vmatpush.xpose.msra.mxu0 0.0
  %2525 = vmatpush.xpose.msra.mxu0 %v2509
  %2526 = vmatpush.xpose.msra.mxu0 %v2506
  %2527 = vmatmul.f32.gmra.mxu0 %v2500
  %v2528 = vpop.f32.mrf.mxu0
  %v2529 = vadd.f32 0.0, %v2528
  %2530 = vmatmul.f32.gmra.mxu0 %v2503
  %v2531 = vpop.f32.mrf.mxu0
  %v2532 = vadd.f32 0.0, %v2531
  %2533 = vdwg.mxu0
  %v2534 = vmul.f32 %v2529, 0.17677669
  %v2535 = vmul.f32 %v2532, 0.17677669
  %vm2536 = vcmp.gt.f32.partialorder %v48, 0.5
  %vm2537 = vcmp.gt.f32.partialorder %v49, 0.5
  %v2538 = vsel %vm2536, %v2534, -1e+10
  %v2539 = vsel %vm2537, %v2535, -1e+10
  %vm2540 = vcmp.lt.f32.partialorder %v48, -0.5
  %vm2541 = vcmp.lt.f32.partialorder %v49, -0.5
  %v2542 = vsel %vm2540, -2e+10, %v2538
  %v2543 = vsel %vm2541, -2e+10, %v2539
  %v2544 = vsel %vm136, %v2542, -inf
  %2545 = vmax.xlane.f32.xlu0 %v2544
  %v2546 = vpop.xlane.xlu0 %2545
  %v2547 = vsel %vm136, %v2543, -inf
  %2548 = vmax.xlane.f32.xlu0 %v2547
  %v2549 = vpop.xlane.xlu0 %2548
  %v2550 = vsub.f32 %v2542, %v2546
  %v2551 = vsub.f32 %v2543, %v2549
  %v2552 = vmul.f32 %v2550, 1.442695
  %v2553 = vpow.pop %v2552
  %v2554 = vmul.f32 %v2551, 1.442695
  %v2555 = vpow.pop %v2554
  %v2556 = vsel %vm136, %v2553, 0.0
  %2557 = vadd.xlane.f32.xlu0 %v2556
  %v2558 = vpop.xlane.xlu0 %2557
  %v2559 = vsel %vm136, %v2555, 0.0
  %2560 = vadd.xlane.f32.xlu0 %v2559
  %v2561 = vpop.xlane.xlu0 %2560
  %v2562 = vrcp.pop %v2558
  %v2563 = vmul.f32 %v2558, %v2562
  %v2564 = vsub.f32 1.0, %v2563
  %v2565 = vmul.f32 %v2562, %v2564
  %v2566 = vadd.f32 %v2562, %v2565
  %vm2567 = vweird.f32 %v2558
  %vm2568 = vweird.f32 %v2562
  %vm2569 = vmor %vm2567, %vm2568
  %v2570 = vsel %vm2569, %v2562, %v2566
  %v2571 = vand.u32 2147483647, %v2558
  %vm2572 = vcmp.eq.f32.partialorder %v2571, 8.507059e+37
  %v2573 = vand.u32 %v2558, 2147483648
  %v2574 = vor.u32 1.1754944e-38, %v2573
  %v2575 = vsel %vm2572, %v2574, %v2570
  %v2576 = vmul.f32 %v2553, %v2575
  %v2577 = vrcp.pop %v2561
  %v2578 = vmul.f32 %v2561, %v2577
  %v2579 = vsub.f32 1.0, %v2578
  %v2580 = vmul.f32 %v2577, %v2579
  %v2581 = vadd.f32 %v2577, %v2580
  %vm2582 = vweird.f32 %v2561
  %vm2583 = vweird.f32 %v2577
  %vm2584 = vmor %vm2582, %vm2583
  %v2585 = vsel %vm2584, %v2577, %v2581
  %v2586 = vand.u32 2147483647, %v2561
  %vm2587 = vcmp.eq.f32.partialorder %v2586, 8.507059e+37
  %v2588 = vand.u32 %v2561, 2147483648
  %v2589 = vor.u32 1.1754944e-38, %v2588
  %v2590 = vsel %vm2587, %v2589, %v2585
  %v2591 = vmul.f32 %v2555, %v2590
  %2592 = vrot.lane.b32.xlu0 %v2494, 96
  %v2593 = vpop.permute.xlu0 %2592
  %2594 = vrot.lane.b32.xlu0 %v2497, 96
  %v2595 = vpop.permute.xlu0 %2594
  %v2599 = vsel %vm136, %v2576, 0
  %v2602 = vsel %vm136, %v2591, 0
  %2604 = vmatpush.msra.mxu0 0.0
  %2605 = vmatpush.msra.mxu0 0.0
  %2606 = vmatpush.msra.mxu0 0.0
  %2607 = vmatpush.msra.mxu0 0.0
  %2608 = vmatpush.msra.mxu0 0.0
  %2609 = vmatpush.msra.mxu0 0.0
  %2610 = vmatpush.msra.mxu0 0.0
  %2611 = vmatpush.msra.mxu0 0.0
  %2612 = vmatpush.msra.mxu0 0.0
  %2613 = vmatpush.msra.mxu0 0.0
  %2614 = vmatpush.msra.mxu0 0.0
  %2615 = vmatpush.msra.mxu0 0.0
  %2616 = vmatpush.msra.mxu0 0.0
  %2617 = vmatpush.msra.mxu0 0.0
  %2618 = vmatpush.msra.mxu0 %v2595
  %2619 = vmatpush.msra.mxu0 %v2593
  %2620 = vmatmul.f32.gmra.mxu0 %v2599
  %v2621 = vpop.f32.mrf.mxu0
  %v2622 = vadd.f32 0.0, %v2621
  %2623 = vmatmul.f32.gmra.mxu0 %v2602
  %v2624 = vpop.f32.mrf.mxu0
  %v2625 = vadd.f32 0.0, %v2624
  %2626 = vdwg.mxu0
  %2627 = vrot.lane.b32.xlu0 %v2446, 120
  %v2628 = vpop.permute.xlu0 %2627
  %2629 = vrot.lane.b32.xlu0 %v2449, 120
  %v2630 = vpop.permute.xlu0 %2629
  %2631 = vrot.lane.b32.xlu0 %v2494, 120
  %v2632 = vpop.permute.xlu0 %2631
  %2633 = vrot.lane.b32.xlu0 %v2497, 120
  %v2634 = vpop.permute.xlu0 %2633
  %v2635 = vsel %vm94, %v2628, 0
  %v2637 = vsel %vm94, %v2630, 0
  %v2639 = vsel %vm94, %v2632, 0
  %v2641 = vsel %vm94, %v2634, 0
  %2643 = vmatpush.xpose.msra.mxu0 0.0
  %2644 = vmatpush.xpose.msra.mxu0 0.0
  %2645 = vmatpush.xpose.msra.mxu0 0.0
  %2646 = vmatpush.xpose.msra.mxu0 0.0
  %2647 = vmatpush.xpose.msra.mxu0 0.0
  %2648 = vmatpush.xpose.msra.mxu0 0.0
  %2649 = vmatpush.xpose.msra.mxu0 0.0
  %2650 = vmatpush.xpose.msra.mxu0 0.0
  %2651 = vmatpush.xpose.msra.mxu0 0.0
  %2652 = vmatpush.xpose.msra.mxu0 0.0
  %2653 = vmatpush.xpose.msra.mxu0 0.0
  %2654 = vmatpush.xpose.msra.mxu0 0.0
  %2655 = vmatpush.xpose.msra.mxu0 0.0
  %2656 = vmatpush.xpose.msra.mxu0 0.0
  %2657 = vmatpush.xpose.msra.mxu0 %v2641
  %2658 = vmatpush.xpose.msra.mxu0 %v2639
  %2659 = vmatmul.f32.gmra.mxu0 %v2635
  %v2660 = vpop.f32.mrf.mxu0
  %v2661 = vadd.f32 0.0, %v2660
  %2662 = vmatmul.f32.gmra.mxu0 %v2637
  %v2663 = vpop.f32.mrf.mxu0
  %v2664 = vadd.f32 0.0, %v2663
  %2665 = vdwg.mxu0
  %v2666 = vmul.f32 %v2661, 0.17677669
  %v2667 = vmul.f32 %v2664, 0.17677669
  %v2668 = vsel %vm2536, %v2666, -1e+10
  %v2669 = vsel %vm2537, %v2667, -1e+10
  %v2670 = vsel %vm2540, -2e+10, %v2668
  %v2671 = vsel %vm2541, -2e+10, %v2669
  %v2672 = vsel %vm136, %v2670, -inf
  %2673 = vmax.xlane.f32.xlu0 %v2672
  %v2674 = vpop.xlane.xlu0 %2673
  %v2675 = vsel %vm136, %v2671, -inf
  %2676 = vmax.xlane.f32.xlu0 %v2675
  %v2677 = vpop.xlane.xlu0 %2676
  %v2678 = vsub.f32 %v2670, %v2674
  %v2679 = vsub.f32 %v2671, %v2677
  %v2680 = vmul.f32 %v2678, 1.442695
  %v2681 = vpow.pop %v2680
  %v2682 = vmul.f32 %v2679, 1.442695
  %v2683 = vpow.pop %v2682
  %v2684 = vsel %vm136, %v2681, 0.0
  %2685 = vadd.xlane.f32.xlu0 %v2684
  %v2686 = vpop.xlane.xlu0 %2685
  %v2687 = vsel %vm136, %v2683, 0.0
  %2688 = vadd.xlane.f32.xlu0 %v2687
  %v2689 = vpop.xlane.xlu0 %2688
  %v2690 = vrcp.pop %v2686
  %v2691 = vmul.f32 %v2686, %v2690
  %v2692 = vsub.f32 1.0, %v2691
  %v2693 = vmul.f32 %v2690, %v2692
  %v2694 = vadd.f32 %v2690, %v2693
  %vm2695 = vweird.f32 %v2686
  %vm2696 = vweird.f32 %v2690
  %vm2697 = vmor %vm2695, %vm2696
  %v2698 = vsel %vm2697, %v2690, %v2694
  %v2699 = vand.u32 2147483647, %v2686
  %vm2700 = vcmp.eq.f32.partialorder %v2699, 8.507059e+37
  %v2701 = vand.u32 %v2686, 2147483648
  %v2702 = vor.u32 1.1754944e-38, %v2701
  %v2703 = vsel %vm2700, %v2702, %v2698
  %v2704 = vmul.f32 %v2681, %v2703
  %v2705 = vrcp.pop %v2689
  %v2706 = vmul.f32 %v2689, %v2705
  %v2707 = vsub.f32 1.0, %v2706
  %v2708 = vmul.f32 %v2705, %v2707
  %v2709 = vadd.f32 %v2705, %v2708
  %vm2710 = vweird.f32 %v2689
  %vm2711 = vweird.f32 %v2705
  %vm2712 = vmor %vm2710, %vm2711
  %v2713 = vsel %vm2712, %v2705, %v2709
  %v2714 = vand.u32 2147483647, %v2689
  %vm2715 = vcmp.eq.f32.partialorder %v2714, 8.507059e+37
  %v2716 = vand.u32 %v2689, 2147483648
  %v2717 = vor.u32 1.1754944e-38, %v2716
  %v2718 = vsel %vm2715, %v2717, %v2713
  %v2719 = vmul.f32 %v2683, %v2718
  %2720 = vrot.lane.b32.xlu0 %v2494, 88
  %v2721 = vpop.permute.xlu0 %2720
  %2722 = vrot.lane.b32.xlu0 %v2497, 88
  %v2723 = vpop.permute.xlu0 %2722
  %v2727 = vsel %vm136, %v2704, 0
  %v2730 = vsel %vm136, %v2719, 0
  %2732 = vmatpush.msra.mxu0 0.0
  %2733 = vmatpush.msra.mxu0 0.0
  %2734 = vmatpush.msra.mxu0 0.0
  %2735 = vmatpush.msra.mxu0 0.0
  %2736 = vmatpush.msra.mxu0 0.0
  %2737 = vmatpush.msra.mxu0 0.0
  %2738 = vmatpush.msra.mxu0 0.0
  %2739 = vmatpush.msra.mxu0 0.0
  %2740 = vmatpush.msra.mxu0 0.0
  %2741 = vmatpush.msra.mxu0 0.0
  %2742 = vmatpush.msra.mxu0 0.0
  %2743 = vmatpush.msra.mxu0 0.0
  %2744 = vmatpush.msra.mxu0 0.0
  %2745 = vmatpush.msra.mxu0 0.0
  %2746 = vmatpush.msra.mxu0 %v2723
  %2747 = vmatpush.msra.mxu0 %v2721
  %2748 = vmatmul.f32.gmra.mxu0 %v2727
  %v2749 = vpop.f32.mrf.mxu0
  %v2750 = vadd.f32 0.0, %v2749
  %2751 = vmatmul.f32.gmra.mxu0 %v2730
  %v2752 = vpop.f32.mrf.mxu0
  %v2753 = vadd.f32 0.0, %v2752
  %2754 = vdwg.mxu0
  %2755 = vrot.lane.b32.xlu0 %v2446, 112
  %v2756 = vpop.permute.xlu0 %2755
  %2757 = vrot.lane.b32.xlu0 %v2449, 112
  %v2758 = vpop.permute.xlu0 %2757
  %2759 = vrot.lane.b32.xlu0 %v2494, 112
  %v2760 = vpop.permute.xlu0 %2759
  %2761 = vrot.lane.b32.xlu0 %v2497, 112
  %v2762 = vpop.permute.xlu0 %2761
  %v2763 = vsel %vm94, %v2756, 0
  %v2765 = vsel %vm94, %v2758, 0
  %v2767 = vsel %vm94, %v2760, 0
  %v2769 = vsel %vm94, %v2762, 0
  %2771 = vmatpush.xpose.msra.mxu0 0.0
  %2772 = vmatpush.xpose.msra.mxu0 0.0
  %2773 = vmatpush.xpose.msra.mxu0 0.0
  %2774 = vmatpush.xpose.msra.mxu0 0.0
  %2775 = vmatpush.xpose.msra.mxu0 0.0
  %2776 = vmatpush.xpose.msra.mxu0 0.0
  %2777 = vmatpush.xpose.msra.mxu0 0.0
  %2778 = vmatpush.xpose.msra.mxu0 0.0
  %2779 = vmatpush.xpose.msra.mxu0 0.0
  %2780 = vmatpush.xpose.msra.mxu0 0.0
  %2781 = vmatpush.xpose.msra.mxu0 0.0
  %2782 = vmatpush.xpose.msra.mxu0 0.0
  %2783 = vmatpush.xpose.msra.mxu0 0.0
  %2784 = vmatpush.xpose.msra.mxu0 0.0
  %2785 = vmatpush.xpose.msra.mxu0 %v2769
  %2786 = vmatpush.xpose.msra.mxu0 %v2767
  %2787 = vmatmul.f32.gmra.mxu0 %v2763
  %v2788 = vpop.f32.mrf.mxu0
  %v2789 = vadd.f32 0.0, %v2788
  %2790 = vmatmul.f32.gmra.mxu0 %v2765
  %v2791 = vpop.f32.mrf.mxu0
  %v2792 = vadd.f32 0.0, %v2791
  %2793 = vdwg.mxu0
  %v2794 = vmul.f32 %v2789, 0.17677669
  %v2795 = vmul.f32 %v2792, 0.17677669
  %v2796 = vsel %vm2536, %v2794, -1e+10
  %v2797 = vsel %vm2537, %v2795, -1e+10
  %v2798 = vsel %vm2540, -2e+10, %v2796
  %v2799 = vsel %vm2541, -2e+10, %v2797
  %v2800 = vsel %vm136, %v2798, -inf
  %2801 = vmax.xlane.f32.xlu0 %v2800
  %v2802 = vpop.xlane.xlu0 %2801
  %v2803 = vsel %vm136, %v2799, -inf
  %2804 = vmax.xlane.f32.xlu0 %v2803
  %v2805 = vpop.xlane.xlu0 %2804
  %v2806 = vsub.f32 %v2798, %v2802
  %v2807 = vsub.f32 %v2799, %v2805
  %v2808 = vmul.f32 %v2806, 1.442695
  %v2809 = vpow.pop %v2808
  %v2810 = vmul.f32 %v2807, 1.442695
  %v2811 = vpow.pop %v2810
  %v2812 = vsel %vm136, %v2809, 0.0
  %2813 = vadd.xlane.f32.xlu0 %v2812
  %v2814 = vpop.xlane.xlu0 %2813
  %v2815 = vsel %vm136, %v2811, 0.0
  %2816 = vadd.xlane.f32.xlu0 %v2815
  %v2817 = vpop.xlane.xlu0 %2816
  %v2818 = vrcp.pop %v2814
  %v2819 = vmul.f32 %v2814, %v2818
  %v2820 = vsub.f32 1.0, %v2819
  %v2821 = vmul.f32 %v2818, %v2820
  %v2822 = vadd.f32 %v2818, %v2821
  %vm2823 = vweird.f32 %v2814
  %vm2824 = vweird.f32 %v2818
  %vm2825 = vmor %vm2823, %vm2824
  %v2826 = vsel %vm2825, %v2818, %v2822
  %v2827 = vand.u32 2147483647, %v2814
  %vm2828 = vcmp.eq.f32.partialorder %v2827, 8.507059e+37
  %v2829 = vand.u32 %v2814, 2147483648
  %v2830 = vor.u32 1.1754944e-38, %v2829
  %v2831 = vsel %vm2828, %v2830, %v2826
  %v2832 = vmul.f32 %v2809, %v2831
  %v2833 = vrcp.pop %v2817
  %v2834 = vmul.f32 %v2817, %v2833
  %v2835 = vsub.f32 1.0, %v2834
  %v2836 = vmul.f32 %v2833, %v2835
  %v2837 = vadd.f32 %v2833, %v2836
  %vm2838 = vweird.f32 %v2817
  %vm2839 = vweird.f32 %v2833
  %vm2840 = vmor %vm2838, %vm2839
  %v2841 = vsel %vm2840, %v2833, %v2837
  %v2842 = vand.u32 2147483647, %v2817
  %vm2843 = vcmp.eq.f32.partialorder %v2842, 8.507059e+37
  %v2844 = vand.u32 %v2817, 2147483648
  %v2845 = vor.u32 1.1754944e-38, %v2844
  %v2846 = vsel %vm2843, %v2845, %v2841
  %v2847 = vmul.f32 %v2811, %v2846
  %2848 = vrot.lane.b32.xlu0 %v2494, 80
  %v2849 = vpop.permute.xlu0 %2848
  %2850 = vrot.lane.b32.xlu0 %v2497, 80
  %v2851 = vpop.permute.xlu0 %2850
  %v2855 = vsel %vm136, %v2832, 0
  %v2858 = vsel %vm136, %v2847, 0
  %2860 = vmatpush.msra.mxu0 0.0
  %2861 = vmatpush.msra.mxu0 0.0
  %2862 = vmatpush.msra.mxu0 0.0
  %2863 = vmatpush.msra.mxu0 0.0
  %2864 = vmatpush.msra.mxu0 0.0
  %2865 = vmatpush.msra.mxu0 0.0
  %2866 = vmatpush.msra.mxu0 0.0
  %2867 = vmatpush.msra.mxu0 0.0
  %2868 = vmatpush.msra.mxu0 0.0
  %2869 = vmatpush.msra.mxu0 0.0
  %2870 = vmatpush.msra.mxu0 0.0
  %2871 = vmatpush.msra.mxu0 0.0
  %2872 = vmatpush.msra.mxu0 0.0
  %2873 = vmatpush.msra.mxu0 0.0
  %2874 = vmatpush.msra.mxu0 %v2851
  %2875 = vmatpush.msra.mxu0 %v2849
  %2876 = vmatmul.f32.gmra.mxu0 %v2855
  %v2877 = vpop.f32.mrf.mxu0
  %v2878 = vadd.f32 0.0, %v2877
  %2879 = vmatmul.f32.gmra.mxu0 %v2858
  %v2880 = vpop.f32.mrf.mxu0
  %v2881 = vadd.f32 0.0, %v2880
  %2882 = vdwg.mxu0
  %2883 = vrot.lane.b32.xlu0 %v2446, 104
  %v2884 = vpop.permute.xlu0 %2883
  %2885 = vrot.lane.b32.xlu0 %v2449, 104
  %v2886 = vpop.permute.xlu0 %2885
  %2887 = vrot.lane.b32.xlu0 %v2494, 104
  %v2888 = vpop.permute.xlu0 %2887
  %2889 = vrot.lane.b32.xlu0 %v2497, 104
  %v2890 = vpop.permute.xlu0 %2889
  %v2891 = vsel %vm94, %v2884, 0
  %v2893 = vsel %vm94, %v2886, 0
  %v2895 = vsel %vm94, %v2888, 0
  %v2897 = vsel %vm94, %v2890, 0
  %2899 = vmatpush.xpose.msra.mxu0 0.0
  %2900 = vmatpush.xpose.msra.mxu0 0.0
  %2901 = vmatpush.xpose.msra.mxu0 0.0
  %2902 = vmatpush.xpose.msra.mxu0 0.0
  %2903 = vmatpush.xpose.msra.mxu0 0.0
  %2904 = vmatpush.xpose.msra.mxu0 0.0
  %2905 = vmatpush.xpose.msra.mxu0 0.0
  %2906 = vmatpush.xpose.msra.mxu0 0.0
  %2907 = vmatpush.xpose.msra.mxu0 0.0
  %2908 = vmatpush.xpose.msra.mxu0 0.0
  %2909 = vmatpush.xpose.msra.mxu0 0.0
  %2910 = vmatpush.xpose.msra.mxu0 0.0
  %2911 = vmatpush.xpose.msra.mxu0 0.0
  %2912 = vmatpush.xpose.msra.mxu0 0.0
  %2913 = vmatpush.xpose.msra.mxu0 %v2897
  %2914 = vmatpush.xpose.msra.mxu0 %v2895
  %2915 = vmatmul.f32.gmra.mxu0 %v2891
  %v2916 = vpop.f32.mrf.mxu0
  %v2917 = vadd.f32 0.0, %v2916
  %2918 = vmatmul.f32.gmra.mxu0 %v2893
  %v2919 = vpop.f32.mrf.mxu0
  %v2920 = vadd.f32 0.0, %v2919
  %2921 = vdwg.mxu0
  %v2922 = vmul.f32 %v2917, 0.17677669
  %v2923 = vmul.f32 %v2920, 0.17677669
  %v2924 = vsel %vm2536, %v2922, -1e+10
  %v2925 = vsel %vm2537, %v2923, -1e+10
  %v2926 = vsel %vm2540, -2e+10, %v2924
  %v2927 = vsel %vm2541, -2e+10, %v2925
  %v2928 = vsel %vm136, %v2926, -inf
  %2929 = vmax.xlane.f32.xlu0 %v2928
  %v2930 = vpop.xlane.xlu0 %2929
  %v2931 = vsel %vm136, %v2927, -inf
  %2932 = vmax.xlane.f32.xlu0 %v2931
  %v2933 = vpop.xlane.xlu0 %2932
  %v2934 = vsub.f32 %v2926, %v2930
  %v2935 = vsub.f32 %v2927, %v2933
  %v2936 = vmul.f32 %v2934, 1.442695
  %v2937 = vpow.pop %v2936
  %v2938 = vmul.f32 %v2935, 1.442695
  %v2939 = vpow.pop %v2938
  %v2940 = vsel %vm136, %v2937, 0.0
  %2941 = vadd.xlane.f32.xlu0 %v2940
  %v2942 = vpop.xlane.xlu0 %2941
  %v2943 = vsel %vm136, %v2939, 0.0
  %2944 = vadd.xlane.f32.xlu0 %v2943
  %v2945 = vpop.xlane.xlu0 %2944
  %v2946 = vrcp.pop %v2942
  %v2947 = vmul.f32 %v2942, %v2946
  %v2948 = vsub.f32 1.0, %v2947
  %v2949 = vmul.f32 %v2946, %v2948
  %v2950 = vadd.f32 %v2946, %v2949
  %vm2951 = vweird.f32 %v2942
  %vm2952 = vweird.f32 %v2946
  %vm2953 = vmor %vm2951, %vm2952
  %v2954 = vsel %vm2953, %v2946, %v2950
  %v2955 = vand.u32 2147483647, %v2942
  %vm2956 = vcmp.eq.f32.partialorder %v2955, 8.507059e+37
  %v2957 = vand.u32 %v2942, 2147483648
  %v2958 = vor.u32 1.1754944e-38, %v2957
  %v2959 = vsel %vm2956, %v2958, %v2954
  %v2960 = vmul.f32 %v2937, %v2959
  %v2961 = vrcp.pop %v2945
  %v2962 = vmul.f32 %v2945, %v2961
  %v2963 = vsub.f32 1.0, %v2962
  %v2964 = vmul.f32 %v2961, %v2963
  %v2965 = vadd.f32 %v2961, %v2964
  %vm2966 = vweird.f32 %v2945
  %vm2967 = vweird.f32 %v2961
  %vm2968 = vmor %vm2966, %vm2967
  %v2969 = vsel %vm2968, %v2961, %v2965
  %v2970 = vand.u32 2147483647, %v2945
  %vm2971 = vcmp.eq.f32.partialorder %v2970, 8.507059e+37
  %v2972 = vand.u32 %v2945, 2147483648
  %v2973 = vor.u32 1.1754944e-38, %v2972
  %v2974 = vsel %vm2971, %v2973, %v2969
  %v2975 = vmul.f32 %v2939, %v2974
  %2976 = vrot.lane.b32.xlu0 %v2494, 72
  %v2977 = vpop.permute.xlu0 %2976
  %2978 = vrot.lane.b32.xlu0 %v2497, 72
  %v2979 = vpop.permute.xlu0 %2978
  %v2983 = vsel %vm136, %v2960, 0
  %v2986 = vsel %vm136, %v2975, 0
  %2988 = vmatpush.msra.mxu0 0.0
  %2989 = vmatpush.msra.mxu0 0.0
  %2990 = vmatpush.msra.mxu0 0.0
  %2991 = vmatpush.msra.mxu0 0.0
  %2992 = vmatpush.msra.mxu0 0.0
  %2993 = vmatpush.msra.mxu0 0.0
  %2994 = vmatpush.msra.mxu0 0.0
  %2995 = vmatpush.msra.mxu0 0.0
  %2996 = vmatpush.msra.mxu0 0.0
  %2997 = vmatpush.msra.mxu0 0.0
  %2998 = vmatpush.msra.mxu0 0.0
  %2999 = vmatpush.msra.mxu0 0.0
  %3000 = vmatpush.msra.mxu0 0.0
  %3001 = vmatpush.msra.mxu0 0.0
  %3002 = vmatpush.msra.mxu0 %v2979
  %3003 = vmatpush.msra.mxu0 %v2977
  %3004 = vmatmul.f32.gmra.mxu0 %v2983
  %v3005 = vpop.f32.mrf.mxu0
  %v3006 = vadd.f32 0.0, %v3005
  %3007 = vmatmul.f32.gmra.mxu0 %v2986
  %v3008 = vpop.f32.mrf.mxu0
  %v3009 = vadd.f32 0.0, %v3008
  %3010 = vdwg.mxu0
  %3013 = vrot.lane.b32.xlu0 %v2750, 8
  %v3014 = vpop.permute.xlu0 %3013
  %3015 = vrot.lane.b32.xlu0 %v2753, 8
  %v3016 = vpop.permute.xlu0 %3015
  %3021 = vrot.lane.b32.xlu0 %v2878, 16
  %v3022 = vpop.permute.xlu0 %3021
  %3023 = vrot.lane.b32.xlu0 %v2881, 16
  %v3024 = vpop.permute.xlu0 %3023
  %3029 = vrot.lane.b32.xlu0 %v3006, 24
  %v3030 = vpop.permute.xlu0 %3029
  %3031 = vrot.lane.b32.xlu0 %v3009, 24
  %v3032 = vpop.permute.xlu0 %3031
  %v3035 = vsel %vm94, %v2622, %v3014
  %v3036 = vsel %vm94, %v2625, %v3016
  %v3037 = vsel %vm136, %v3035, %v3022
  %v3038 = vsel %vm136, %v3036, %v3024
  %v3039 = vsel %vm632, %v3037, %v3030
  %v3040 = vsel %vm632, %v3038, %v3032
  %3041 = vrot.lane.b32.xlu0 %v2413, 32
  %v3042 = vpop.permute.xlu0 %3041
  %3043 = vrot.lane.b32.xlu0 %v2414, 32
  %v3044 = vpop.permute.xlu0 %3043
  %3045 = vrot.lane.b32.xlu0 %v2415, 32
  %v3046 = vpop.permute.xlu0 %3045
  %3047 = vrot.lane.b32.xlu0 %v2416, 32
  %v3048 = vpop.permute.xlu0 %3047
  %3053 = vrot.lane.b32.xlu0 %v2420, 32
  %v3054 = vpop.permute.xlu0 %3053
  %v3057 = vsel %vm58, %v3039, 0
  %v3060 = vsel %vm58, %v3040, 0
  %3062 = vmatpush.msra.mxu0 0.0
  %3063 = vmatpush.msra.mxu0 0.0
  %3064 = vmatpush.msra.mxu0 0.0
  %3065 = vmatpush.msra.mxu0 0.0
  %3066 = vmatpush.msra.mxu0 0.0
  %3067 = vmatpush.msra.mxu0 0.0
  %3068 = vmatpush.msra.mxu0 0.0
  %3069 = vmatpush.msra.mxu0 0.0
  %3070 = vmatpush.msra.mxu0 0.0
  %3071 = vmatpush.msra.mxu0 0.0
  %3072 = vmatpush.msra.mxu0 0.0
  %3073 = vmatpush.msra.mxu0 0.0
  %3074 = vmatpush.msra.mxu0 %v3048
  %3075 = vmatpush.msra.mxu0 %v3046
  %3076 = vmatpush.msra.mxu0 %v3044
  %3077 = vmatpush.msra.mxu0 %v3042
  %3078 = vmatmul.f32.gmra.mxu0 %v3057
  %v3079 = vpop.f32.mrf.mxu0
  %v3080 = vadd.f32 %v3054, %v3079
  %3081 = vmatmul.f32.gmra.mxu0 %v3060
  %v3082 = vpop.f32.mrf.mxu0
  %v3083 = vadd.f32 %v3054, %v3082
  %3084 = vdwg.mxu0
  %v3085 = vadd.f32 %v2410, %v3080
  %v3086 = vadd.f32 %v2411, %v3083
  %s3087 = scalar_lea.vmem %s10, 10
  %v3088 = vld [vmem:[%s3087] sm:$0x1]
  %s3089 = scalar_lea.vmem %s10, 11
  %v3090 = vld [vmem:[%s3089] sm:$0x1]
  %v3091 = vsel %vm58, %v3085, 0.0
  %3092 = vadd.xlane.f32.xlu0 %v3091
  %v3093 = vpop.xlane.xlu0 %3092
  %v3094 = vsel %vm58, %v3086, 0.0
  %3095 = vadd.xlane.f32.xlu0 %v3094
  %v3096 = vpop.xlane.xlu0 %3095
  %v3097 = vmul.f32 %v3093, %v700
  %v3098 = vmul.f32 %v3096, %v700
  %v3099 = vsub.f32 %v3085, %v3097
  %v3100 = vsub.f32 %v3086, %v3098
  %v3101 = vmul.f32 %v3099, %v3099
  %v3102 = vmul.f32 %v3100, %v3100
  %v3103 = vsel %vm58, %v3101, 0.0
  %3104 = vadd.xlane.f32.xlu0 %v3103
  %v3105 = vpop.xlane.xlu0 %3104
  %v3106 = vsel %vm58, %v3102, 0.0
  %3107 = vadd.xlane.f32.xlu0 %v3106
  %v3108 = vpop.xlane.xlu0 %3107
  %v3109 = vmul.f32 %v3105, %v700
  %v3110 = vmul.f32 %v3108, %v700
  %v3111 = vadd.f32 %v3109, 1e-05
  %v3112 = vadd.f32 %v3110, 1e-05
  %v3113 = vrsqrt.pop %v3111
  %v3114 = vmul.f32 %v3113, %v3111
  %v3115 = vmul.f32 %v3114, %v3113
  %v3116 = vmul.f32 0.5, %v3115
  %v3117 = vsub.f32 1.5, %v3116
  %v3118 = vmul.f32 %v3113, %v3117
  %vm3119 = vweird.f32 %v3111
  %vm3120 = vweird.f32 %v3113
  %vm3121 = vmor %vm3119, %vm3120
  %v3122 = vsel %vm3121, %v3113, %v3118
  %v3123 = vrsqrt.pop %v3112
  %v3124 = vmul.f32 %v3123, %v3112
  %v3125 = vmul.f32 %v3124, %v3123
  %v3126 = vmul.f32 0.5, %v3125
  %v3127 = vsub.f32 1.5, %v3126
  %v3128 = vmul.f32 %v3123, %v3127
  %vm3129 = vweird.f32 %v3112
  %vm3130 = vweird.f32 %v3123
  %vm3131 = vmor %vm3129, %vm3130
  %v3132 = vsel %vm3131, %v3123, %v3128
  %v3133 = vmul.f32 %v3099, %v3122
  %v3134 = vmul.f32 %v3100, %v3132
  %v3136 = vperm.slane %v3088, 0
  %v3138 = vmul.f32 %v3133, %v3136
  %v3139 = vmul.f32 %v3134, %v3136
  %v3141 = vperm.slane %v3090, 0
  %v3143 = vadd.f32 %v3138, %v3141
  %v3144 = vadd.f32 %v3139, %v3141
  %s3145 = scalar_lea.vmem %s6, 64
  %v3146 = vld [vmem:[%s3145] sm:$0xff]
  %v3147 = vld [vmem:[%s3145 + $0x8] sm:$0xff]
  %v3148 = vld [vmem:[%s3145 + $0x10] sm:$0xff]
  %v3149 = vld [vmem:[%s3145 + $0x18] sm:$0xff]
  %s3150 = scalar_lea.vmem %s7, 2
  %v3151 = vld [vmem:[%s3150] sm:$0x1]
  %v3153 = vperm.slane %v3151, 0
  %v3156 = vsel %vm58, %v3143, 0
  %v3159 = vsel %vm58, %v3144, 0
  %3161 = vmatpush.msra.mxu0 0.0
  %3162 = vmatpush.msra.mxu0 0.0
  %3163 = vmatpush.msra.mxu0 0.0
  %3164 = vmatpush.msra.mxu0 0.0
  %3165 = vmatpush.msra.mxu0 0.0
  %3166 = vmatpush.msra.mxu0 0.0
  %3167 = vmatpush.msra.mxu0 0.0
  %3168 = vmatpush.msra.mxu0 0.0
  %3169 = vmatpush.msra.mxu0 0.0
  %3170 = vmatpush.msra.mxu0 0.0
  %3171 = vmatpush.msra.mxu0 0.0
  %3172 = vmatpush.msra.mxu0 0.0
  %3173 = vmatpush.msra.mxu0 %v3149
  %3174 = vmatpush.msra.mxu0 %v3148
  %3175 = vmatpush.msra.mxu0 %v3147
  %3176 = vmatpush.msra.mxu0 %v3146
  %3177 = vmatmul.f32.gmra.mxu0 %v3156
  %v3178 = vpop.f32.mrf.mxu0
  %v3179 = vadd.f32 %v3153, %v3178
  %3180 = vmatmul.f32.gmra.mxu0 %v3159
  %v3181 = vpop.f32.mrf.mxu0
  %v3182 = vadd.f32 %v3153, %v3181
  %3183 = vdwg.mxu0
  %v3184 = vmax.f32 %v3179, 0.0
  %v3185 = vmax.f32 %v3182, 0.0
  %s3186 = scalar_lea.vmem %s8, 128
  %v3187 = vld [vmem:[%s3186] sm:$0xff]
  %v3188 = vld [vmem:[%s3186 + $0x8] sm:$0xff]
  %v3189 = vld [vmem:[%s3186 + $0x10] sm:$0xff]
  %v3190 = vld [vmem:[%s3186 + $0x18] sm:$0xff]
  %v3191 = vld [vmem:[%s3186 + $0x20] sm:$0xff]
  %v3192 = vld [vmem:[%s3186 + $0x28] sm:$0xff]
  %v3193 = vld [vmem:[%s3186 + $0x30] sm:$0xff]
  %v3194 = vld [vmem:[%s3186 + $0x38] sm:$0xff]
  %s3195 = scalar_lea.vmem %s9, 2
  %v3196 = vld [vmem:[%s3195] sm:$0x1]
  %v3198 = vperm.slane %v3196, 0
  %v3201 = vsel %vm800, %v3184, 0
  %v3204 = vsel %vm800, %v3185, 0
  %3206 = vmatpush.msra.mxu0 0.0
  %3207 = vmatpush.msra.mxu0 0.0
  %3208 = vmatpush.msra.mxu0 0.0
  %3209 = vmatpush.msra.mxu0 0.0
  %3210 = vmatpush.msra.mxu0 0.0
  %3211 = vmatpush.msra.mxu0 0.0
  %3212 = vmatpush.msra.mxu0 0.0
  %3213 = vmatpush.msra.mxu0 0.0
  %3214 = vmatpush.msra.mxu0 %v3194
  %3215 = vmatpush.msra.mxu0 %v3193
  %3216 = vmatpush.msra.mxu0 %v3192
  %3217 = vmatpush.msra.mxu0 %v3191
  %3218 = vmatpush.msra.mxu0 %v3190
  %3219 = vmatpush.msra.mxu0 %v3189
  %3220 = vmatpush.msra.mxu0 %v3188
  %3221 = vmatpush.msra.mxu0 %v3187
  %3222 = vmatmul.f32.gmra.mxu0 %v3201
  %v3223 = vpop.f32.mrf.mxu0
  %v3224 = vadd.f32 %v3198, %v3223
  %3225 = vmatmul.f32.gmra.mxu0 %v3204
  %v3226 = vpop.f32.mrf.mxu0
  %v3227 = vadd.f32 %v3198, %v3226
  %3228 = vdwg.mxu0
  %v3229 = vadd.f32 %v3143, %v3224
  %v3230 = vadd.f32 %v3144, %v3227
  %s3231 = scalar_lea.vmem %s10, 12
  %v3232 = vld [vmem:[%s3231] sm:$0x1]
  %s3233 = scalar_lea.vmem %s10, 13
  %v3234 = vld [vmem:[%s3233] sm:$0x1]
  %v3235 = vsel %vm58, %v3229, 0.0
  %3236 = vadd.xlane.f32.xlu0 %v3235
  %v3237 = vpop.xlane.xlu0 %3236
  %v3238 = vsel %vm58, %v3230, 0.0
  %3239 = vadd.xlane.f32.xlu0 %v3238
  %v3240 = vpop.xlane.xlu0 %3239
  %v3241 = vmul.f32 %v3237, %v700
  %v3242 = vmul.f32 %v3240, %v700
  %v3243 = vsub.f32 %v3229, %v3241
  %v3244 = vsub.f32 %v3230, %v3242
  %v3245 = vmul.f32 %v3243, %v3243
  %v3246 = vmul.f32 %v3244, %v3244
  %v3247 = vsel %vm58, %v3245, 0.0
  %3248 = vadd.xlane.f32.xlu0 %v3247
  %v3249 = vpop.xlane.xlu0 %3248
  %v3250 = vsel %vm58, %v3246, 0.0
  %3251 = vadd.xlane.f32.xlu0 %v3250
  %v3252 = vpop.xlane.xlu0 %3251
  %v3253 = vmul.f32 %v3249, %v700
  %v3254 = vmul.f32 %v3252, %v700
  %v3255 = vadd.f32 %v3253, 1e-05
  %v3256 = vadd.f32 %v3254, 1e-05
  %v3257 = vrsqrt.pop %v3255
  %v3258 = vmul.f32 %v3257, %v3255
  %v3259 = vmul.f32 %v3258, %v3257
  %v3260 = vmul.f32 0.5, %v3259
  %v3261 = vsub.f32 1.5, %v3260
  %v3262 = vmul.f32 %v3257, %v3261
  %vm3263 = vweird.f32 %v3255
  %vm3264 = vweird.f32 %v3257
  %vm3265 = vmor %vm3263, %vm3264
  %v3266 = vsel %vm3265, %v3257, %v3262
  %v3267 = vrsqrt.pop %v3256
  %v3268 = vmul.f32 %v3267, %v3256
  %v3269 = vmul.f32 %v3268, %v3267
  %v3270 = vmul.f32 0.5, %v3269
  %v3271 = vsub.f32 1.5, %v3270
  %v3272 = vmul.f32 %v3267, %v3271
  %vm3273 = vweird.f32 %v3256
  %vm3274 = vweird.f32 %v3267
  %vm3275 = vmor %vm3273, %vm3274
  %v3276 = vsel %vm3275, %v3267, %v3272
  %v3277 = vmul.f32 %v3243, %v3266
  %v3278 = vmul.f32 %v3244, %v3276
  %v3280 = vperm.slane %v3232, 0
  %v3282 = vmul.f32 %v3277, %v3280
  %v3283 = vmul.f32 %v3278, %v3280
  %v3285 = vperm.slane %v3234, 0
  %v3287 = vadd.f32 %v3282, %v3285
  %v3288 = vadd.f32 %v3283, %v3285
  %s3289 = scalar_lea.vmem %s4, 128
  %v3290 = vld [vmem:[%s3289] sm:$0xff]
  %v3291 = vld [vmem:[%s3289 + $0x8] sm:$0xff]
  %v3292 = vld [vmem:[%s3289 + $0x10] sm:$0xff]
  %v3293 = vld [vmem:[%s3289 + $0x18] sm:$0xff]
  %s3294 = scalar_lea.vmem %s5, 4
  %v3295 = vld [vmem:[%s3294] sm:$0x1]
  %v3297 = vperm.slane %v3295, 0
  %v3300 = vsel %vm58, %v3287, 0
  %v3303 = vsel %vm58, %v3288, 0
  %3305 = vmatpush.msra.mxu0 0.0
  %3306 = vmatpush.msra.mxu0 0.0
  %3307 = vmatpush.msra.mxu0 0.0
  %3308 = vmatpush.msra.mxu0 0.0
  %3309 = vmatpush.msra.mxu0 0.0
  %3310 = vmatpush.msra.mxu0 0.0
  %3311 = vmatpush.msra.mxu0 0.0
  %3312 = vmatpush.msra.mxu0 0.0
  %3313 = vmatpush.msra.mxu0 0.0
  %3314 = vmatpush.msra.mxu0 0.0
  %3315 = vmatpush.msra.mxu0 0.0
  %3316 = vmatpush.msra.mxu0 0.0
  %3317 = vmatpush.msra.mxu0 %v3293
  %3318 = vmatpush.msra.mxu0 %v3292
  %3319 = vmatpush.msra.mxu0 %v3291
  %3320 = vmatpush.msra.mxu0 %v3290
  %3321 = vmatmul.f32.gmra.mxu0 %v3300
  %v3322 = vpop.f32.mrf.mxu0
  %v3323 = vadd.f32 %v3297, %v3322
  %3324 = vmatmul.f32.gmra.mxu0 %v3303
  %v3325 = vpop.f32.mrf.mxu0
  %v3326 = vadd.f32 %v3297, %v3325
  %3327 = vdwg.mxu0
  %3330 = vrot.lane.b32.xlu0 %v3323, 96
  %v3331 = vpop.permute.xlu0 %3330
  %3332 = vrot.lane.b32.xlu0 %v3326, 96
  %v3333 = vpop.permute.xlu0 %3332
  %v3334 = vsel %vm94, %v3323, 0
  %v3336 = vsel %vm94, %v3326, 0
  %v3338 = vsel %vm94, %v3331, 0
  %v3340 = vsel %vm94, %v3333, 0
  %3342 = vmatpush.xpose.msra.mxu0 0.0
  %3343 = vmatpush.xpose.msra.mxu0 0.0
  %3344 = vmatpush.xpose.msra.mxu0 0.0
  %3345 = vmatpush.xpose.msra.mxu0 0.0
  %3346 = vmatpush.xpose.msra.mxu0 0.0
  %3347 = vmatpush.xpose.msra.mxu0 0.0
  %3348 = vmatpush.xpose.msra.mxu0 0.0
  %3349 = vmatpush.xpose.msra.mxu0 0.0
  %3350 = vmatpush.xpose.msra.mxu0 0.0
  %3351 = vmatpush.xpose.msra.mxu0 0.0
  %3352 = vmatpush.xpose.msra.mxu0 0.0
  %3353 = vmatpush.xpose.msra.mxu0 0.0
  %3354 = vmatpush.xpose.msra.mxu0 0.0
  %3355 = vmatpush.xpose.msra.mxu0 0.0
  %3356 = vmatpush.xpose.msra.mxu0 %v3340
  %3357 = vmatpush.xpose.msra.mxu0 %v3338
  %3358 = vmatmul.f32.gmra.mxu0 %v3334
  %v3359 = vpop.f32.mrf.mxu0
  %v3360 = vadd.f32 0.0, %v3359
  %3361 = vmatmul.f32.gmra.mxu0 %v3336
  %v3362 = vpop.f32.mrf.mxu0
  %v3363 = vadd.f32 0.0, %v3362
  %3364 = vdwg.mxu0
  %v3365 = vmul.f32 %v3360, 0.17677669
  %v3366 = vmul.f32 %v3363, 0.17677669
  %v3367 = vsel %vm1799, %v3365, -1e+10
  %v3368 = vsel %vm1800, %v3366, -1e+10
  %v3369 = vsel %vm1803, -2e+10, %v3367
  %v3370 = vsel %vm1804, -2e+10, %v3368
  %v3371 = vsel %vm136, %v3369, -inf
  %3372 = vmax.xlane.f32.xlu0 %v3371
  %v3373 = vpop.xlane.xlu0 %3372
  %v3374 = vsel %vm136, %v3370, -inf
  %3375 = vmax.xlane.f32.xlu0 %v3374
  %v3376 = vpop.xlane.xlu0 %3375
  %v3377 = vsub.f32 %v3369, %v3373
  %v3378 = vsub.f32 %v3370, %v3376
  %v3379 = vmul.f32 %v3377, 1.442695
  %v3380 = vpow.pop %v3379
  %v3381 = vmul.f32 %v3378, 1.442695
  %v3382 = vpow.pop %v3381
  %v3383 = vsel %vm136, %v3380, 0.0
  %3384 = vadd.xlane.f32.xlu0 %v3383
  %v3385 = vpop.xlane.xlu0 %3384
  %v3386 = vsel %vm136, %v3382, 0.0
  %3387 = vadd.xlane.f32.xlu0 %v3386
  %v3388 = vpop.xlane.xlu0 %3387
  %v3389 = vrcp.pop %v3385
  %v3390 = vmul.f32 %v3385, %v3389
  %v3391 = vsub.f32 1.0, %v3390
  %v3392 = vmul.f32 %v3389, %v3391
  %v3393 = vadd.f32 %v3389, %v3392
  %vm3394 = vweird.f32 %v3385
  %vm3395 = vweird.f32 %v3389
  %vm3396 = vmor %vm3394, %vm3395
  %v3397 = vsel %vm3396, %v3389, %v3393
  %v3398 = vand.u32 2147483647, %v3385
  %vm3399 = vcmp.eq.f32.partialorder %v3398, 8.507059e+37
  %v3400 = vand.u32 %v3385, 2147483648
  %v3401 = vor.u32 1.1754944e-38, %v3400
  %v3402 = vsel %vm3399, %v3401, %v3397
  %v3403 = vmul.f32 %v3380, %v3402
  %v3404 = vrcp.pop %v3388
  %v3405 = vmul.f32 %v3388, %v3404
  %v3406 = vsub.f32 1.0, %v3405
  %v3407 = vmul.f32 %v3404, %v3406
  %v3408 = vadd.f32 %v3404, %v3407
  %vm3409 = vweird.f32 %v3388
  %vm3410 = vweird.f32 %v3404
  %vm3411 = vmor %vm3409, %vm3410
  %v3412 = vsel %vm3411, %v3404, %v3408
  %v3413 = vand.u32 2147483647, %v3388
  %vm3414 = vcmp.eq.f32.partialorder %v3413, 8.507059e+37
  %v3415 = vand.u32 %v3388, 2147483648
  %v3416 = vor.u32 1.1754944e-38, %v3415
  %v3417 = vsel %vm3414, %v3416, %v3412
  %v3418 = vmul.f32 %v3382, %v3417
  %3419 = vrot.lane.b32.xlu0 %v3323, 64
  %v3420 = vpop.permute.xlu0 %3419
  %3421 = vrot.lane.b32.xlu0 %v3326, 64
  %v3422 = vpop.permute.xlu0 %3421
  %v3426 = vsel %vm136, %v3403, 0
  %v3429 = vsel %vm136, %v3418, 0
  %3431 = vmatpush.msra.mxu0 0.0
  %3432 = vmatpush.msra.mxu0 0.0
  %3433 = vmatpush.msra.mxu0 0.0
  %3434 = vmatpush.msra.mxu0 0.0
  %3435 = vmatpush.msra.mxu0 0.0
  %3436 = vmatpush.msra.mxu0 0.0
  %3437 = vmatpush.msra.mxu0 0.0
  %3438 = vmatpush.msra.mxu0 0.0
  %3439 = vmatpush.msra.mxu0 0.0
  %3440 = vmatpush.msra.mxu0 0.0
  %3441 = vmatpush.msra.mxu0 0.0
  %3442 = vmatpush.msra.mxu0 0.0
  %3443 = vmatpush.msra.mxu0 0.0
  %3444 = vmatpush.msra.mxu0 0.0
  %3445 = vmatpush.msra.mxu0 %v3422
  %3446 = vmatpush.msra.mxu0 %v3420
  %3447 = vmatmul.f32.gmra.mxu0 %v3426
  %v3448 = vpop.f32.mrf.mxu0
  %v3449 = vadd.f32 0.0, %v3448
  %3450 = vmatmul.f32.gmra.mxu0 %v3429
  %v3451 = vpop.f32.mrf.mxu0
  %v3452 = vadd.f32 0.0, %v3451
  %3453 = vdwg.mxu0
  %3454 = vrot.lane.b32.xlu0 %v3323, 120
  %v3455 = vpop.permute.xlu0 %3454
  %3456 = vrot.lane.b32.xlu0 %v3326, 120
  %v3457 = vpop.permute.xlu0 %3456
  %3458 = vrot.lane.b32.xlu0 %v3323, 88
  %v3459 = vpop.permute.xlu0 %3458
  %3460 = vrot.lane.b32.xlu0 %v3326, 88
  %v3461 = vpop.permute.xlu0 %3460
  %v3462 = vsel %vm94, %v3455, 0
  %v3464 = vsel %vm94, %v3457, 0
  %v3466 = vsel %vm94, %v3459, 0
  %v3468 = vsel %vm94, %v3461, 0
  %3470 = vmatpush.xpose.msra.mxu0 0.0
  %3471 = vmatpush.xpose.msra.mxu0 0.0
  %3472 = vmatpush.xpose.msra.mxu0 0.0
  %3473 = vmatpush.xpose.msra.mxu0 0.0
  %3474 = vmatpush.xpose.msra.mxu0 0.0
  %3475 = vmatpush.xpose.msra.mxu0 0.0
  %3476 = vmatpush.xpose.msra.mxu0 0.0
  %3477 = vmatpush.xpose.msra.mxu0 0.0
  %3478 = vmatpush.xpose.msra.mxu0 0.0
  %3479 = vmatpush.xpose.msra.mxu0 0.0
  %3480 = vmatpush.xpose.msra.mxu0 0.0
  %3481 = vmatpush.xpose.msra.mxu0 0.0
  %3482 = vmatpush.xpose.msra.mxu0 0.0
  %3483 = vmatpush.xpose.msra.mxu0 0.0
  %3484 = vmatpush.xpose.msra.mxu0 %v3468
  %3485 = vmatpush.xpose.msra.mxu0 %v3466
  %3486 = vmatmul.f32.gmra.mxu0 %v3462
  %v3487 = vpop.f32.mrf.mxu0
  %v3488 = vadd.f32 0.0, %v3487
  %3489 = vmatmul.f32.gmra.mxu0 %v3464
  %v3490 = vpop.f32.mrf.mxu0
  %v3491 = vadd.f32 0.0, %v3490
  %3492 = vdwg.mxu0
  %v3493 = vmul.f32 %v3488, 0.17677669
  %v3494 = vmul.f32 %v3491, 0.17677669
  %v3495 = vsel %vm1799, %v3493, -1e+10
  %v3496 = vsel %vm1800, %v3494, -1e+10
  %v3497 = vsel %vm1803, -2e+10, %v3495
  %v3498 = vsel %vm1804, -2e+10, %v3496
  %v3499 = vsel %vm136, %v3497, -inf
  %3500 = vmax.xlane.f32.xlu0 %v3499
  %v3501 = vpop.xlane.xlu0 %3500
  %v3502 = vsel %vm136, %v3498, -inf
  %3503 = vmax.xlane.f32.xlu0 %v3502
  %v3504 = vpop.xlane.xlu0 %3503
  %v3505 = vsub.f32 %v3497, %v3501
  %v3506 = vsub.f32 %v3498, %v3504
  %v3507 = vmul.f32 %v3505, 1.442695
  %v3508 = vpow.pop %v3507
  %v3509 = vmul.f32 %v3506, 1.442695
  %v3510 = vpow.pop %v3509
  %v3511 = vsel %vm136, %v3508, 0.0
  %3512 = vadd.xlane.f32.xlu0 %v3511
  %v3513 = vpop.xlane.xlu0 %3512
  %v3514 = vsel %vm136, %v3510, 0.0
  %3515 = vadd.xlane.f32.xlu0 %v3514
  %v3516 = vpop.xlane.xlu0 %3515
  %v3517 = vrcp.pop %v3513
  %v3518 = vmul.f32 %v3513, %v3517
  %v3519 = vsub.f32 1.0, %v3518
  %v3520 = vmul.f32 %v3517, %v3519
  %v3521 = vadd.f32 %v3517, %v3520
  %vm3522 = vweird.f32 %v3513
  %vm3523 = vweird.f32 %v3517
  %vm3524 = vmor %vm3522, %vm3523
  %v3525 = vsel %vm3524, %v3517, %v3521
  %v3526 = vand.u32 2147483647, %v3513
  %vm3527 = vcmp.eq.f32.partialorder %v3526, 8.507059e+37
  %v3528 = vand.u32 %v3513, 2147483648
  %v3529 = vor.u32 1.1754944e-38, %v3528
  %v3530 = vsel %vm3527, %v3529, %v3525
  %v3531 = vmul.f32 %v3508, %v3530
  %v3532 = vrcp.pop %v3516
  %v3533 = vmul.f32 %v3516, %v3532
  %v3534 = vsub.f32 1.0, %v3533
  %v3535 = vmul.f32 %v3532, %v3534
  %v3536 = vadd.f32 %v3532, %v3535
  %vm3537 = vweird.f32 %v3516
  %vm3538 = vweird.f32 %v3532
  %vm3539 = vmor %vm3537, %vm3538
  %v3540 = vsel %vm3539, %v3532, %v3536
  %v3541 = vand.u32 2147483647, %v3516
  %vm3542 = vcmp.eq.f32.partialorder %v3541, 8.507059e+37
  %v3543 = vand.u32 %v3516, 2147483648
  %v3544 = vor.u32 1.1754944e-38, %v3543
  %v3545 = vsel %vm3542, %v3544, %v3540
  %v3546 = vmul.f32 %v3510, %v3545
  %3547 = vrot.lane.b32.xlu0 %v3323, 56
  %v3548 = vpop.permute.xlu0 %3547
  %3549 = vrot.lane.b32.xlu0 %v3326, 56
  %v3550 = vpop.permute.xlu0 %3549
  %v3554 = vsel %vm136, %v3531, 0
  %v3557 = vsel %vm136, %v3546, 0
  %3559 = vmatpush.msra.mxu0 0.0
  %3560 = vmatpush.msra.mxu0 0.0
  %3561 = vmatpush.msra.mxu0 0.0
  %3562 = vmatpush.msra.mxu0 0.0
  %3563 = vmatpush.msra.mxu0 0.0
  %3564 = vmatpush.msra.mxu0 0.0
  %3565 = vmatpush.msra.mxu0 0.0
  %3566 = vmatpush.msra.mxu0 0.0
  %3567 = vmatpush.msra.mxu0 0.0
  %3568 = vmatpush.msra.mxu0 0.0
  %3569 = vmatpush.msra.mxu0 0.0
  %3570 = vmatpush.msra.mxu0 0.0
  %3571 = vmatpush.msra.mxu0 0.0
  %3572 = vmatpush.msra.mxu0 0.0
  %3573 = vmatpush.msra.mxu0 %v3550
  %3574 = vmatpush.msra.mxu0 %v3548
  %3575 = vmatmul.f32.gmra.mxu0 %v3554
  %v3576 = vpop.f32.mrf.mxu0
  %v3577 = vadd.f32 0.0, %v3576
  %3578 = vmatmul.f32.gmra.mxu0 %v3557
  %v3579 = vpop.f32.mrf.mxu0
  %v3580 = vadd.f32 0.0, %v3579
  %3581 = vdwg.mxu0
  %3582 = vrot.lane.b32.xlu0 %v3323, 112
  %v3583 = vpop.permute.xlu0 %3582
  %3584 = vrot.lane.b32.xlu0 %v3326, 112
  %v3585 = vpop.permute.xlu0 %3584
  %3586 = vrot.lane.b32.xlu0 %v3323, 80
  %v3587 = vpop.permute.xlu0 %3586
  %3588 = vrot.lane.b32.xlu0 %v3326, 80
  %v3589 = vpop.permute.xlu0 %3588
  %v3590 = vsel %vm94, %v3583, 0
  %v3592 = vsel %vm94, %v3585, 0
  %v3594 = vsel %vm94, %v3587, 0
  %v3596 = vsel %vm94, %v3589, 0
  %3598 = vmatpush.xpose.msra.mxu0 0.0
  %3599 = vmatpush.xpose.msra.mxu0 0.0
  %3600 = vmatpush.xpose.msra.mxu0 0.0
  %3601 = vmatpush.xpose.msra.mxu0 0.0
  %3602 = vmatpush.xpose.msra.mxu0 0.0
  %3603 = vmatpush.xpose.msra.mxu0 0.0
  %3604 = vmatpush.xpose.msra.mxu0 0.0
  %3605 = vmatpush.xpose.msra.mxu0 0.0
  %3606 = vmatpush.xpose.msra.mxu0 0.0
  %3607 = vmatpush.xpose.msra.mxu0 0.0
  %3608 = vmatpush.xpose.msra.mxu0 0.0
  %3609 = vmatpush.xpose.msra.mxu0 0.0
  %3610 = vmatpush.xpose.msra.mxu0 0.0
  %3611 = vmatpush.xpose.msra.mxu0 0.0
  %3612 = vmatpush.xpose.msra.mxu0 %v3596
  %3613 = vmatpush.xpose.msra.mxu0 %v3594
  %3614 = vmatmul.f32.gmra.mxu0 %v3590
  %v3615 = vpop.f32.mrf.mxu0
  %v3616 = vadd.f32 0.0, %v3615
  %3617 = vmatmul.f32.gmra.mxu0 %v3592
  %v3618 = vpop.f32.mrf.mxu0
  %v3619 = vadd.f32 0.0, %v3618
  %3620 = vdwg.mxu0
  %v3621 = vmul.f32 %v3616, 0.17677669
  %v3622 = vmul.f32 %v3619, 0.17677669
  %v3623 = vsel %vm1799, %v3621, -1e+10
  %v3624 = vsel %vm1800, %v3622, -1e+10
  %v3625 = vsel %vm1803, -2e+10, %v3623
  %v3626 = vsel %vm1804, -2e+10, %v3624
  %v3627 = vsel %vm136, %v3625, -inf
  %3628 = vmax.xlane.f32.xlu0 %v3627
  %v3629 = vpop.xlane.xlu0 %3628
  %v3630 = vsel %vm136, %v3626, -inf
  %3631 = vmax.xlane.f32.xlu0 %v3630
  %v3632 = vpop.xlane.xlu0 %3631
  %v3633 = vsub.f32 %v3625, %v3629
  %v3634 = vsub.f32 %v3626, %v3632
  %v3635 = vmul.f32 %v3633, 1.442695
  %v3636 = vpow.pop %v3635
  %v3637 = vmul.f32 %v3634, 1.442695
  %v3638 = vpow.pop %v3637
  %v3639 = vsel %vm136, %v3636, 0.0
  %3640 = vadd.xlane.f32.xlu0 %v3639
  %v3641 = vpop.xlane.xlu0 %3640
  %v3642 = vsel %vm136, %v3638, 0.0
  %3643 = vadd.xlane.f32.xlu0 %v3642
  %v3644 = vpop.xlane.xlu0 %3643
  %v3645 = vrcp.pop %v3641
  %v3646 = vmul.f32 %v3641, %v3645
  %v3647 = vsub.f32 1.0, %v3646
  %v3648 = vmul.f32 %v3645, %v3647
  %v3649 = vadd.f32 %v3645, %v3648
  %vm3650 = vweird.f32 %v3641
  %vm3651 = vweird.f32 %v3645
  %vm3652 = vmor %vm3650, %vm3651
  %v3653 = vsel %vm3652, %v3645, %v3649
  %v3654 = vand.u32 2147483647, %v3641
  %vm3655 = vcmp.eq.f32.partialorder %v3654, 8.507059e+37
  %v3656 = vand.u32 %v3641, 2147483648
  %v3657 = vor.u32 1.1754944e-38, %v3656
  %v3658 = vsel %vm3655, %v3657, %v3653
  %v3659 = vmul.f32 %v3636, %v3658
  %v3660 = vrcp.pop %v3644
  %v3661 = vmul.f32 %v3644, %v3660
  %v3662 = vsub.f32 1.0, %v3661
  %v3663 = vmul.f32 %v3660, %v3662
  %v3664 = vadd.f32 %v3660, %v3663
  %vm3665 = vweird.f32 %v3644
  %vm3666 = vweird.f32 %v3660
  %vm3667 = vmor %vm3665, %vm3666
  %v3668 = vsel %vm3667, %v3660, %v3664
  %v3669 = vand.u32 2147483647, %v3644
  %vm3670 = vcmp.eq.f32.partialorder %v3669, 8.507059e+37
  %v3671 = vand.u32 %v3644, 2147483648
  %v3672 = vor.u32 1.1754944e-38, %v3671
  %v3673 = vsel %vm3670, %v3672, %v3668
  %v3674 = vmul.f32 %v3638, %v3673
  %3675 = vrot.lane.b32.xlu0 %v3323, 48
  %v3676 = vpop.permute.xlu0 %3675
  %3677 = vrot.lane.b32.xlu0 %v3326, 48
  %v3678 = vpop.permute.xlu0 %3677
  %v3682 = vsel %vm136, %v3659, 0
  %v3685 = vsel %vm136, %v3674, 0
  %3687 = vmatpush.msra.mxu0 0.0
  %3688 = vmatpush.msra.mxu0 0.0
  %3689 = vmatpush.msra.mxu0 0.0
  %3690 = vmatpush.msra.mxu0 0.0
  %3691 = vmatpush.msra.mxu0 0.0
  %3692 = vmatpush.msra.mxu0 0.0
  %3693 = vmatpush.msra.mxu0 0.0
  %3694 = vmatpush.msra.mxu0 0.0
  %3695 = vmatpush.msra.mxu0 0.0
  %3696 = vmatpush.msra.mxu0 0.0
  %3697 = vmatpush.msra.mxu0 0.0
  %3698 = vmatpush.msra.mxu0 0.0
  %3699 = vmatpush.msra.mxu0 0.0
  %3700 = vmatpush.msra.mxu0 0.0
  %3701 = vmatpush.msra.mxu0 %v3678
  %3702 = vmatpush.msra.mxu0 %v3676
  %3703 = vmatmul.f32.gmra.mxu0 %v3682
  %v3704 = vpop.f32.mrf.mxu0
  %v3705 = vadd.f32 0.0, %v3704
  %3706 = vmatmul.f32.gmra.mxu0 %v3685
  %v3707 = vpop.f32.mrf.mxu0
  %v3708 = vadd.f32 0.0, %v3707
  %3709 = vdwg.mxu0
  %3710 = vrot.lane.b32.xlu0 %v3323, 104
  %v3711 = vpop.permute.xlu0 %3710
  %3712 = vrot.lane.b32.xlu0 %v3326, 104
  %v3713 = vpop.permute.xlu0 %3712
  %3714 = vrot.lane.b32.xlu0 %v3323, 72
  %v3715 = vpop.permute.xlu0 %3714
  %3716 = vrot.lane.b32.xlu0 %v3326, 72
  %v3717 = vpop.permute.xlu0 %3716
  %v3718 = vsel %vm94, %v3711, 0
  %v3720 = vsel %vm94, %v3713, 0
  %v3722 = vsel %vm94, %v3715, 0
  %v3724 = vsel %vm94, %v3717, 0
  %3726 = vmatpush.xpose.msra.mxu0 0.0
  %3727 = vmatpush.xpose.msra.mxu0 0.0
  %3728 = vmatpush.xpose.msra.mxu0 0.0
  %3729 = vmatpush.xpose.msra.mxu0 0.0
  %3730 = vmatpush.xpose.msra.mxu0 0.0
  %3731 = vmatpush.xpose.msra.mxu0 0.0
  %3732 = vmatpush.xpose.msra.mxu0 0.0
  %3733 = vmatpush.xpose.msra.mxu0 0.0
  %3734 = vmatpush.xpose.msra.mxu0 0.0
  %3735 = vmatpush.xpose.msra.mxu0 0.0
  %3736 = vmatpush.xpose.msra.mxu0 0.0
  %3737 = vmatpush.xpose.msra.mxu0 0.0
  %3738 = vmatpush.xpose.msra.mxu0 0.0
  %3739 = vmatpush.xpose.msra.mxu0 0.0
  %3740 = vmatpush.xpose.msra.mxu0 %v3724
  %3741 = vmatpush.xpose.msra.mxu0 %v3722
  %3742 = vmatmul.f32.gmra.mxu0 %v3718
  %v3743 = vpop.f32.mrf.mxu0
  %v3744 = vadd.f32 0.0, %v3743
  %3745 = vmatmul.f32.gmra.mxu0 %v3720
  %v3746 = vpop.f32.mrf.mxu0
  %v3747 = vadd.f32 0.0, %v3746
  %3748 = vdwg.mxu0
  %v3749 = vmul.f32 %v3744, 0.17677669
  %v3750 = vmul.f32 %v3747, 0.17677669
  %v3751 = vsel %vm1799, %v3749, -1e+10
  %v3752 = vsel %vm1800, %v3750, -1e+10
  %v3753 = vsel %vm1803, -2e+10, %v3751
  %v3754 = vsel %vm1804, -2e+10, %v3752
  %v3755 = vsel %vm136, %v3753, -inf
  %3756 = vmax.xlane.f32.xlu0 %v3755
  %v3757 = vpop.xlane.xlu0 %3756
  %v3758 = vsel %vm136, %v3754, -inf
  %3759 = vmax.xlane.f32.xlu0 %v3758
  %v3760 = vpop.xlane.xlu0 %3759
  %v3761 = vsub.f32 %v3753, %v3757
  %v3762 = vsub.f32 %v3754, %v3760
  %v3763 = vmul.f32 %v3761, 1.442695
  %v3764 = vpow.pop %v3763
  %v3765 = vmul.f32 %v3762, 1.442695
  %v3766 = vpow.pop %v3765
  %v3767 = vsel %vm136, %v3764, 0.0
  %3768 = vadd.xlane.f32.xlu0 %v3767
  %v3769 = vpop.xlane.xlu0 %3768
  %v3770 = vsel %vm136, %v3766, 0.0
  %3771 = vadd.xlane.f32.xlu0 %v3770
  %v3772 = vpop.xlane.xlu0 %3771
  %v3773 = vrcp.pop %v3769
  %v3774 = vmul.f32 %v3769, %v3773
  %v3775 = vsub.f32 1.0, %v3774
  %v3776 = vmul.f32 %v3773, %v3775
  %v3777 = vadd.f32 %v3773, %v3776
  %vm3778 = vweird.f32 %v3769
  %vm3779 = vweird.f32 %v3773
  %vm3780 = vmor %vm3778, %vm3779
  %v3781 = vsel %vm3780, %v3773, %v3777
  %v3782 = vand.u32 2147483647, %v3769
  %vm3783 = vcmp.eq.f32.partialorder %v3782, 8.507059e+37
  %v3784 = vand.u32 %v3769, 2147483648
  %v3785 = vor.u32 1.1754944e-38, %v3784
  %v3786 = vsel %vm3783, %v3785, %v3781
  %v3787 = vmul.f32 %v3764, %v3786
  %v3788 = vrcp.pop %v3772
  %v3789 = vmul.f32 %v3772, %v3788
  %v3790 = vsub.f32 1.0, %v3789
  %v3791 = vmul.f32 %v3788, %v3790
  %v3792 = vadd.f32 %v3788, %v3791
  %vm3793 = vweird.f32 %v3772
  %vm3794 = vweird.f32 %v3788
  %vm3795 = vmor %vm3793, %vm3794
  %v3796 = vsel %vm3795, %v3788, %v3792
  %v3797 = vand.u32 2147483647, %v3772
  %vm3798 = vcmp.eq.f32.partialorder %v3797, 8.507059e+37
  %v3799 = vand.u32 %v3772, 2147483648
  %v3800 = vor.u32 1.1754944e-38, %v3799
  %v3801 = vsel %vm3798, %v3800, %v3796
  %v3802 = vmul.f32 %v3766, %v3801
  %3803 = vrot.lane.b32.xlu0 %v3323, 40
  %v3804 = vpop.permute.xlu0 %3803
  %3805 = vrot.lane.b32.xlu0 %v3326, 40
  %v3806 = vpop.permute.xlu0 %3805
  %v3810 = vsel %vm136, %v3787, 0
  %v3813 = vsel %vm136, %v3802, 0
  %3815 = vmatpush.msra.mxu0 0.0
  %3816 = vmatpush.msra.mxu0 0.0
  %3817 = vmatpush.msra.mxu0 0.0
  %3818 = vmatpush.msra.mxu0 0.0
  %3819 = vmatpush.msra.mxu0 0.0
  %3820 = vmatpush.msra.mxu0 0.0
  %3821 = vmatpush.msra.mxu0 0.0
  %3822 = vmatpush.msra.mxu0 0.0
  %3823 = vmatpush.msra.mxu0 0.0
  %3824 = vmatpush.msra.mxu0 0.0
  %3825 = vmatpush.msra.mxu0 0.0
  %3826 = vmatpush.msra.mxu0 0.0
  %3827 = vmatpush.msra.mxu0 0.0
  %3828 = vmatpush.msra.mxu0 0.0
  %3829 = vmatpush.msra.mxu0 %v3806
  %3830 = vmatpush.msra.mxu0 %v3804
  %3831 = vmatmul.f32.gmra.mxu0 %v3810
  %v3832 = vpop.f32.mrf.mxu0
  %v3833 = vadd.f32 0.0, %v3832
  %3834 = vmatmul.f32.gmra.mxu0 %v3813
  %v3835 = vpop.f32.mrf.mxu0
  %v3836 = vadd.f32 0.0, %v3835
  %3837 = vdwg.mxu0
  %3840 = vrot.lane.b32.xlu0 %v3577, 8
  %v3841 = vpop.permute.xlu0 %3840
  %3842 = vrot.lane.b32.xlu0 %v3580, 8
  %v3843 = vpop.permute.xlu0 %3842
  %3848 = vrot.lane.b32.xlu0 %v3705, 16
  %v3849 = vpop.permute.xlu0 %3848
  %3850 = vrot.lane.b32.xlu0 %v3708, 16
  %v3851 = vpop.permute.xlu0 %3850
  %3856 = vrot.lane.b32.xlu0 %v3833, 24
  %v3857 = vpop.permute.xlu0 %3856
  %3858 = vrot.lane.b32.xlu0 %v3836, 24
  %v3859 = vpop.permute.xlu0 %3858
  %v3862 = vsel %vm94, %v3449, %v3841
  %v3863 = vsel %vm94, %v3452, %v3843
  %v3864 = vsel %vm136, %v3862, %v3849
  %v3865 = vsel %vm136, %v3863, %v3851
  %v3866 = vsel %vm632, %v3864, %v3857
  %v3867 = vsel %vm632, %v3865, %v3859
  %3872 = vrot.lane.b32.xlu0 %v3290, 32
  %v3873 = vpop.permute.xlu0 %3872
  %3874 = vrot.lane.b32.xlu0 %v3291, 32
  %v3875 = vpop.permute.xlu0 %3874
  %3876 = vrot.lane.b32.xlu0 %v3292, 32
  %v3877 = vpop.permute.xlu0 %3876
  %3878 = vrot.lane.b32.xlu0 %v3293, 32
  %v3879 = vpop.permute.xlu0 %3878
  %3884 = vrot.lane.b32.xlu0 %v3297, 32
  %v3885 = vpop.permute.xlu0 %3884
  %v3888 = vsel %vm58, %v3866, 0
  %v3891 = vsel %vm58, %v3867, 0
  %3893 = vmatpush.msra.mxu0 0.0
  %3894 = vmatpush.msra.mxu0 0.0
  %3895 = vmatpush.msra.mxu0 0.0
  %3896 = vmatpush.msra.mxu0 0.0
  %3897 = vmatpush.msra.mxu0 0.0
  %3898 = vmatpush.msra.mxu0 0.0
  %3899 = vmatpush.msra.mxu0 0.0
  %3900 = vmatpush.msra.mxu0 0.0
  %3901 = vmatpush.msra.mxu0 0.0
  %3902 = vmatpush.msra.mxu0 0.0
  %3903 = vmatpush.msra.mxu0 0.0
  %3904 = vmatpush.msra.mxu0 0.0
  %3905 = vmatpush.msra.mxu0 %v3879
  %3906 = vmatpush.msra.mxu0 %v3877
  %3907 = vmatpush.msra.mxu0 %v3875
  %3908 = vmatpush.msra.mxu0 %v3873
  %3909 = vmatmul.f32.gmra.mxu0 %v3888
  %v3910 = vpop.f32.mrf.mxu0
  %v3911 = vadd.f32 %v3885, %v3910
  %3912 = vmatmul.f32.gmra.mxu0 %v3891
  %v3913 = vpop.f32.mrf.mxu0
  %v3914 = vadd.f32 %v3885, %v3913
  %3915 = vdwg.mxu0
  %v3916 = vadd.f32 %v3287, %v3911
  %v3917 = vadd.f32 %v3288, %v3914
  %s3918 = scalar_lea.vmem %s10, 14
  %v3919 = vld [vmem:[%s3918] sm:$0x1]
  %s3920 = scalar_lea.vmem %s10, 15
  %v3921 = vld [vmem:[%s3920] sm:$0x1]
  %v3922 = vsel %vm58, %v3916, 0.0
  %3923 = vadd.xlane.f32.xlu0 %v3922
  %v3924 = vpop.xlane.xlu0 %3923
  %v3925 = vsel %vm58, %v3917, 0.0
  %3926 = vadd.xlane.f32.xlu0 %v3925
  %v3927 = vpop.xlane.xlu0 %3926
  %v3928 = vmul.f32 %v3924, %v700
  %v3929 = vmul.f32 %v3927, %v700
  %v3930 = vsub.f32 %v3916, %v3928
  %v3931 = vsub.f32 %v3917, %v3929
  %v3932 = vmul.f32 %v3930, %v3930
  %v3933 = vmul.f32 %v3931, %v3931
  %v3934 = vsel %vm58, %v3932, 0.0
  %3935 = vadd.xlane.f32.xlu0 %v3934
  %v3936 = vpop.xlane.xlu0 %3935
  %v3937 = vsel %vm58, %v3933, 0.0
  %3938 = vadd.xlane.f32.xlu0 %v3937
  %v3939 = vpop.xlane.xlu0 %3938
  %v3940 = vmul.f32 %v3936, %v700
  %v3941 = vmul.f32 %v3939, %v700
  %v3942 = vadd.f32 %v3940, 1e-05
  %v3943 = vadd.f32 %v3941, 1e-05
  %v3944 = vrsqrt.pop %v3942
  %v3945 = vmul.f32 %v3944, %v3942
  %v3946 = vmul.f32 %v3945, %v3944
  %v3947 = vmul.f32 0.5, %v3946
  %v3948 = vsub.f32 1.5, %v3947
  %v3949 = vmul.f32 %v3944, %v3948
  %vm3950 = vweird.f32 %v3942
  %vm3951 = vweird.f32 %v3944
  %vm3952 = vmor %vm3950, %vm3951
  %v3953 = vsel %vm3952, %v3944, %v3949
  %v3954 = vrsqrt.pop %v3943
  %v3955 = vmul.f32 %v3954, %v3943
  %v3956 = vmul.f32 %v3955, %v3954
  %v3957 = vmul.f32 0.5, %v3956
  %v3958 = vsub.f32 1.5, %v3957
  %v3959 = vmul.f32 %v3954, %v3958
  %vm3960 = vweird.f32 %v3943
  %vm3961 = vweird.f32 %v3954
  %vm3962 = vmor %vm3960, %vm3961
  %v3963 = vsel %vm3962, %v3954, %v3959
  %v3964 = vmul.f32 %v3930, %v3953
  %v3965 = vmul.f32 %v3931, %v3963
  %v3967 = vperm.slane %v3919, 0
  %v3969 = vmul.f32 %v3964, %v3967
  %v3970 = vmul.f32 %v3965, %v3967
  %v3972 = vperm.slane %v3921, 0
  %v3974 = vadd.f32 %v3969, %v3972
  %v3975 = vadd.f32 %v3970, %v3972
  %s3976 = scalar_lea.vmem %s4, 160
  %v3977 = vld [vmem:[%s3976] sm:$0xff]
  %v3978 = vld [vmem:[%s3976 + $0x8] sm:$0xff]
  %v3979 = vld [vmem:[%s3976 + $0x10] sm:$0xff]
  %v3980 = vld [vmem:[%s3976 + $0x18] sm:$0xff]
  %s3981 = scalar_lea.vmem %s5, 5
  %v3982 = vld [vmem:[%s3981] sm:$0x1]
  %v3984 = vperm.slane %v3982, 0
  %v3987 = vsel %vm58, %v3974, 0
  %v3990 = vsel %vm58, %v3975, 0
  %3992 = vmatpush.msra.mxu0 0.0
  %3993 = vmatpush.msra.mxu0 0.0
  %3994 = vmatpush.msra.mxu0 0.0
  %3995 = vmatpush.msra.mxu0 0.0
  %3996 = vmatpush.msra.mxu0 0.0
  %3997 = vmatpush.msra.mxu0 0.0
  %3998 = vmatpush.msra.mxu0 0.0
  %3999 = vmatpush.msra.mxu0 0.0
  %4000 = vmatpush.msra.mxu0 0.0
  %4001 = vmatpush.msra.mxu0 0.0
  %4002 = vmatpush.msra.mxu0 0.0
  %4003 = vmatpush.msra.mxu0 0.0
  %4004 = vmatpush.msra.mxu0 %v3980
  %4005 = vmatpush.msra.mxu0 %v3979
  %4006 = vmatpush.msra.mxu0 %v3978
  %4007 = vmatpush.msra.mxu0 %v3977
  %4008 = vmatmul.f32.gmra.mxu0 %v3987
  %v4009 = vpop.f32.mrf.mxu0
  %v4010 = vadd.f32 %v3984, %v4009
  %4011 = vmatmul.f32.gmra.mxu0 %v3990
  %v4012 = vpop.f32.mrf.mxu0
  %v4013 = vadd.f32 %v3984, %v4012
  %4014 = vdwg.mxu0
  %4019 = vrot.lane.b32.xlu0 %v3977, 96
  %v4020 = vpop.permute.xlu0 %4019
  %4021 = vrot.lane.b32.xlu0 %v3978, 96
  %v4022 = vpop.permute.xlu0 %4021
  %4023 = vrot.lane.b32.xlu0 %v3979, 96
  %v4024 = vpop.permute.xlu0 %4023
  %4025 = vrot.lane.b32.xlu0 %v3980, 96
  %v4026 = vpop.permute.xlu0 %4025
  %4031 = vrot.lane.b32.xlu0 %v3984, 96
  %v4032 = vpop.permute.xlu0 %4031
  %4034 = vmatpush.msra.mxu0 0.0
  %4035 = vmatpush.msra.mxu0 0.0
  %4036 = vmatpush.msra.mxu0 0.0
  %4037 = vmatpush.msra.mxu0 0.0
  %4038 = vmatpush.msra.mxu0 0.0
  %4039 = vmatpush.msra.mxu0 0.0
  %4040 = vmatpush.msra.mxu0 0.0
  %4041 = vmatpush.msra.mxu0 0.0
  %4042 = vmatpush.msra.mxu0 0.0
  %4043 = vmatpush.msra.mxu0 0.0
  %4044 = vmatpush.msra.mxu0 0.0
  %4045 = vmatpush.msra.mxu0 0.0
  %4046 = vmatpush.msra.mxu0 %v4026
  %4047 = vmatpush.msra.mxu0 %v4024
  %4048 = vmatpush.msra.mxu0 %v4022
  %4049 = vmatpush.msra.mxu0 %v4020
  %4050 = vmatmul.f32.gmra.mxu0 %v2471
  %v4051 = vpop.f32.mrf.mxu0
  %v4052 = vadd.f32 %v4032, %v4051
  %4053 = vmatmul.f32.gmra.mxu0 %v2474
  %v4054 = vpop.f32.mrf.mxu0
  %v4055 = vadd.f32 %v4032, %v4054
  %4056 = vdwg.mxu0
  %v4058 = vsel %vm94, %v4010, 0
  %v4061 = vsel %vm94, %v4013, 0
  %v4064 = vsel %vm94, %v4052, 0
  %v4067 = vsel %vm94, %v4055, 0
  %4069 = vmatpush.xpose.msra.mxu0 0.0
  %4070 = vmatpush.xpose.msra.mxu0 0.0
  %4071 = vmatpush.xpose.msra.mxu0 0.0
  %4072 = vmatpush.xpose.msra.mxu0 0.0
  %4073 = vmatpush.xpose.msra.mxu0 0.0
  %4074 = vmatpush.xpose.msra.mxu0 0.0
  %4075 = vmatpush.xpose.msra.mxu0 0.0
  %4076 = vmatpush.xpose.msra.mxu0 0.0
  %4077 = vmatpush.xpose.msra.mxu0 0.0
  %4078 = vmatpush.xpose.msra.mxu0 0.0
  %4079 = vmatpush.xpose.msra.mxu0 0.0
  %4080 = vmatpush.xpose.msra.mxu0 0.0
  %4081 = vmatpush.xpose.msra.mxu0 0.0
  %4082 = vmatpush.xpose.msra.mxu0 0.0
  %4083 = vmatpush.xpose.msra.mxu0 %v4067
  %4084 = vmatpush.xpose.msra.mxu0 %v4064
  %4085 = vmatmul.f32.gmra.mxu0 %v4058
  %v4086 = vpop.f32.mrf.mxu0
  %v4087 = vadd.f32 0.0, %v4086
  %4088 = vmatmul.f32.gmra.mxu0 %v4061
  %v4089 = vpop.f32.mrf.mxu0
  %v4090 = vadd.f32 0.0, %v4089
  %4091 = vdwg.mxu0
  %v4092 = vmul.f32 %v4087, 0.17677669
  %v4093 = vmul.f32 %v4090, 0.17677669
  %v4094 = vsel %vm2536, %v4092, -1e+10
  %v4095 = vsel %vm2537, %v4093, -1e+10
  %v4096 = vsel %vm2540, -2e+10, %v4094
  %v4097 = vsel %vm2541, -2e+10, %v4095
  %v4098 = vsel %vm136, %v4096, -inf
  %4099 = vmax.xlane.f32.xlu0 %v4098
  %v4100 = vpop.xlane.xlu0 %4099
  %v4101 = vsel %vm136, %v4097, -inf
  %4102 = vmax.xlane.f32.xlu0 %v4101
  %v4103 = vpop.xlane.xlu0 %4102
  %v4104 = vsub.f32 %v4096, %v4100
  %v4105 = vsub.f32 %v4097, %v4103
  %v4106 = vmul.f32 %v4104, 1.442695
  %v4107 = vpow.pop %v4106
  %v4108 = vmul.f32 %v4105, 1.442695
  %v4109 = vpow.pop %v4108
  %v4110 = vsel %vm136, %v4107, 0.0
  %4111 = vadd.xlane.f32.xlu0 %v4110
  %v4112 = vpop.xlane.xlu0 %4111
  %v4113 = vsel %vm136, %v4109, 0.0
  %4114 = vadd.xlane.f32.xlu0 %v4113
  %v4115 = vpop.xlane.xlu0 %4114
  %v4116 = vrcp.pop %v4112
  %v4117 = vmul.f32 %v4112, %v4116
  %v4118 = vsub.f32 1.0, %v4117
  %v4119 = vmul.f32 %v4116, %v4118
  %v4120 = vadd.f32 %v4116, %v4119
  %vm4121 = vweird.f32 %v4112
  %vm4122 = vweird.f32 %v4116
  %vm4123 = vmor %vm4121, %vm4122
  %v4124 = vsel %vm4123, %v4116, %v4120
  %v4125 = vand.u32 2147483647, %v4112
  %vm4126 = vcmp.eq.f32.partialorder %v4125, 8.507059e+37
  %v4127 = vand.u32 %v4112, 2147483648
  %v4128 = vor.u32 1.1754944e-38, %v4127
  %v4129 = vsel %vm4126, %v4128, %v4124
  %v4130 = vmul.f32 %v4107, %v4129
  %v4131 = vrcp.pop %v4115
  %v4132 = vmul.f32 %v4115, %v4131
  %v4133 = vsub.f32 1.0, %v4132
  %v4134 = vmul.f32 %v4131, %v4133
  %v4135 = vadd.f32 %v4131, %v4134
  %vm4136 = vweird.f32 %v4115
  %vm4137 = vweird.f32 %v4131
  %vm4138 = vmor %vm4136, %vm4137
  %v4139 = vsel %vm4138, %v4131, %v4135
  %v4140 = vand.u32 2147483647, %v4115
  %vm4141 = vcmp.eq.f32.partialorder %v4140, 8.507059e+37
  %v4142 = vand.u32 %v4115, 2147483648
  %v4143 = vor.u32 1.1754944e-38, %v4142
  %v4144 = vsel %vm4141, %v4143, %v4139
  %v4145 = vmul.f32 %v4109, %v4144
  %4146 = vrot.lane.b32.xlu0 %v4052, 96
  %v4147 = vpop.permute.xlu0 %4146
  %4148 = vrot.lane.b32.xlu0 %v4055, 96
  %v4149 = vpop.permute.xlu0 %4148
  %v4153 = vsel %vm136, %v4130, 0
  %v4156 = vsel %vm136, %v4145, 0
  %4158 = vmatpush.msra.mxu0 0.0
  %4159 = vmatpush.msra.mxu0 0.0
  %4160 = vmatpush.msra.mxu0 0.0
  %4161 = vmatpush.msra.mxu0 0.0
  %4162 = vmatpush.msra.mxu0 0.0
  %4163 = vmatpush.msra.mxu0 0.0
  %4164 = vmatpush.msra.mxu0 0.0
  %4165 = vmatpush.msra.mxu0 0.0
  %4166 = vmatpush.msra.mxu0 0.0
  %4167 = vmatpush.msra.mxu0 0.0
  %4168 = vmatpush.msra.mxu0 0.0
  %4169 = vmatpush.msra.mxu0 0.0
  %4170 = vmatpush.msra.mxu0 0.0
  %4171 = vmatpush.msra.mxu0 0.0
  %4172 = vmatpush.msra.mxu0 %v4149
  %4173 = vmatpush.msra.mxu0 %v4147
  %4174 = vmatmul.f32.gmra.mxu0 %v4153
  %v4175 = vpop.f32.mrf.mxu0
  %v4176 = vadd.f32 0.0, %v4175
  %4177 = vmatmul.f32.gmra.mxu0 %v4156
  %v4178 = vpop.f32.mrf.mxu0
  %v4179 = vadd.f32 0.0, %v4178
  %4180 = vdwg.mxu0
  %4181 = vrot.lane.b32.xlu0 %v4010, 120
  %v4182 = vpop.permute.xlu0 %4181
  %4183 = vrot.lane.b32.xlu0 %v4013, 120
  %v4184 = vpop.permute.xlu0 %4183
  %4185 = vrot.lane.b32.xlu0 %v4052, 120
  %v4186 = vpop.permute.xlu0 %4185
  %4187 = vrot.lane.b32.xlu0 %v4055, 120
  %v4188 = vpop.permute.xlu0 %4187
  %v4189 = vsel %vm94, %v4182, 0
  %v4191 = vsel %vm94, %v4184, 0
  %v4193 = vsel %vm94, %v4186, 0
  %v4195 = vsel %vm94, %v4188, 0
  %4197 = vmatpush.xpose.msra.mxu0 0.0
  %4198 = vmatpush.xpose.msra.mxu0 0.0
  %4199 = vmatpush.xpose.msra.mxu0 0.0
  %4200 = vmatpush.xpose.msra.mxu0 0.0
  %4201 = vmatpush.xpose.msra.mxu0 0.0
  %4202 = vmatpush.xpose.msra.mxu0 0.0
  %4203 = vmatpush.xpose.msra.mxu0 0.0
  %4204 = vmatpush.xpose.msra.mxu0 0.0
  %4205 = vmatpush.xpose.msra.mxu0 0.0
  %4206 = vmatpush.xpose.msra.mxu0 0.0
  %4207 = vmatpush.xpose.msra.mxu0 0.0
  %4208 = vmatpush.xpose.msra.mxu0 0.0
  %4209 = vmatpush.xpose.msra.mxu0 0.0
  %4210 = vmatpush.xpose.msra.mxu0 0.0
  %4211 = vmatpush.xpose.msra.mxu0 %v4195
  %4212 = vmatpush.xpose.msra.mxu0 %v4193
  %4213 = vmatmul.f32.gmra.mxu0 %v4189
  %v4214 = vpop.f32.mrf.mxu0
  %v4215 = vadd.f32 0.0, %v4214
  %4216 = vmatmul.f32.gmra.mxu0 %v4191
  %v4217 = vpop.f32.mrf.mxu0
  %v4218 = vadd.f32 0.0, %v4217
  %4219 = vdwg.mxu0
  %v4220 = vmul.f32 %v4215, 0.17677669
  %v4221 = vmul.f32 %v4218, 0.17677669
  %v4222 = vsel %vm2536, %v4220, -1e+10
  %v4223 = vsel %vm2537, %v4221, -1e+10
  %v4224 = vsel %vm2540, -2e+10, %v4222
  %v4225 = vsel %vm2541, -2e+10, %v4223
  %v4226 = vsel %vm136, %v4224, -inf
  %4227 = vmax.xlane.f32.xlu0 %v4226
  %v4228 = vpop.xlane.xlu0 %4227
  %v4229 = vsel %vm136, %v4225, -inf
  %4230 = vmax.xlane.f32.xlu0 %v4229
  %v4231 = vpop.xlane.xlu0 %4230
  %v4232 = vsub.f32 %v4224, %v4228
  %v4233 = vsub.f32 %v4225, %v4231
  %v4234 = vmul.f32 %v4232, 1.442695
  %v4235 = vpow.pop %v4234
  %v4236 = vmul.f32 %v4233, 1.442695
  %v4237 = vpow.pop %v4236
  %v4238 = vsel %vm136, %v4235, 0.0
  %4239 = vadd.xlane.f32.xlu0 %v4238
  %v4240 = vpop.xlane.xlu0 %4239
  %v4241 = vsel %vm136, %v4237, 0.0
  %4242 = vadd.xlane.f32.xlu0 %v4241
  %v4243 = vpop.xlane.xlu0 %4242
  %v4244 = vrcp.pop %v4240
  %v4245 = vmul.f32 %v4240, %v4244
  %v4246 = vsub.f32 1.0, %v4245
  %v4247 = vmul.f32 %v4244, %v4246
  %v4248 = vadd.f32 %v4244, %v4247
  %vm4249 = vweird.f32 %v4240
  %vm4250 = vweird.f32 %v4244
  %vm4251 = vmor %vm4249, %vm4250
  %v4252 = vsel %vm4251, %v4244, %v4248
  %v4253 = vand.u32 2147483647, %v4240
  %vm4254 = vcmp.eq.f32.partialorder %v4253, 8.507059e+37
  %v4255 = vand.u32 %v4240, 2147483648
  %v4256 = vor.u32 1.1754944e-38, %v4255
  %v4257 = vsel %vm4254, %v4256, %v4252
  %v4258 = vmul.f32 %v4235, %v4257
  %v4259 = vrcp.pop %v4243
  %v4260 = vmul.f32 %v4243, %v4259
  %v4261 = vsub.f32 1.0, %v4260
  %v4262 = vmul.f32 %v4259, %v4261
  %v4263 = vadd.f32 %v4259, %v4262
  %vm4264 = vweird.f32 %v4243
  %vm4265 = vweird.f32 %v4259
  %vm4266 = vmor %vm4264, %vm4265
  %v4267 = vsel %vm4266, %v4259, %v4263
  %v4268 = vand.u32 2147483647, %v4243
  %vm4269 = vcmp.eq.f32.partialorder %v4268, 8.507059e+37
  %v4270 = vand.u32 %v4243, 2147483648
  %v4271 = vor.u32 1.1754944e-38, %v4270
  %v4272 = vsel %vm4269, %v4271, %v4267
  %v4273 = vmul.f32 %v4237, %v4272
  %4274 = vrot.lane.b32.xlu0 %v4052, 88
  %v4275 = vpop.permute.xlu0 %4274
  %4276 = vrot.lane.b32.xlu0 %v4055, 88
  %v4277 = vpop.permute.xlu0 %4276
  %v4281 = vsel %vm136, %v4258, 0
  %v4284 = vsel %vm136, %v4273, 0
  %4286 = vmatpush.msra.mxu0 0.0
  %4287 = vmatpush.msra.mxu0 0.0
  %4288 = vmatpush.msra.mxu0 0.0
  %4289 = vmatpush.msra.mxu0 0.0
  %4290 = vmatpush.msra.mxu0 0.0
  %4291 = vmatpush.msra.mxu0 0.0
  %4292 = vmatpush.msra.mxu0 0.0
  %4293 = vmatpush.msra.mxu0 0.0
  %4294 = vmatpush.msra.mxu0 0.0
  %4295 = vmatpush.msra.mxu0 0.0
  %4296 = vmatpush.msra.mxu0 0.0
  %4297 = vmatpush.msra.mxu0 0.0
  %4298 = vmatpush.msra.mxu0 0.0
  %4299 = vmatpush.msra.mxu0 0.0
  %4300 = vmatpush.msra.mxu0 %v4277
  %4301 = vmatpush.msra.mxu0 %v4275
  %4302 = vmatmul.f32.gmra.mxu0 %v4281
  %v4303 = vpop.f32.mrf.mxu0
  %v4304 = vadd.f32 0.0, %v4303
  %4305 = vmatmul.f32.gmra.mxu0 %v4284
  %v4306 = vpop.f32.mrf.mxu0
  %v4307 = vadd.f32 0.0, %v4306
  %4308 = vdwg.mxu0
  %4309 = vrot.lane.b32.xlu0 %v4010, 112
  %v4310 = vpop.permute.xlu0 %4309
  %4311 = vrot.lane.b32.xlu0 %v4013, 112
  %v4312 = vpop.permute.xlu0 %4311
  %4313 = vrot.lane.b32.xlu0 %v4052, 112
  %v4314 = vpop.permute.xlu0 %4313
  %4315 = vrot.lane.b32.xlu0 %v4055, 112
  %v4316 = vpop.permute.xlu0 %4315
  %v4317 = vsel %vm94, %v4310, 0
  %v4319 = vsel %vm94, %v4312, 0
  %v4321 = vsel %vm94, %v4314, 0
  %v4323 = vsel %vm94, %v4316, 0
  %4325 = vmatpush.xpose.msra.mxu0 0.0
  %4326 = vmatpush.xpose.msra.mxu0 0.0
  %4327 = vmatpush.xpose.msra.mxu0 0.0
  %4328 = vmatpush.xpose.msra.mxu0 0.0
  %4329 = vmatpush.xpose.msra.mxu0 0.0
  %4330 = vmatpush.xpose.msra.mxu0 0.0
  %4331 = vmatpush.xpose.msra.mxu0 0.0
  %4332 = vmatpush.xpose.msra.mxu0 0.0
  %4333 = vmatpush.xpose.msra.mxu0 0.0
  %4334 = vmatpush.xpose.msra.mxu0 0.0
  %4335 = vmatpush.xpose.msra.mxu0 0.0
  %4336 = vmatpush.xpose.msra.mxu0 0.0
  %4337 = vmatpush.xpose.msra.mxu0 0.0
  %4338 = vmatpush.xpose.msra.mxu0 0.0
  %4339 = vmatpush.xpose.msra.mxu0 %v4323
  %4340 = vmatpush.xpose.msra.mxu0 %v4321
  %4341 = vmatmul.f32.gmra.mxu0 %v4317
  %v4342 = vpop.f32.mrf.mxu0
  %v4343 = vadd.f32 0.0, %v4342
  %4344 = vmatmul.f32.gmra.mxu0 %v4319
  %v4345 = vpop.f32.mrf.mxu0
  %v4346 = vadd.f32 0.0, %v4345
  %4347 = vdwg.mxu0
  %v4348 = vmul.f32 %v4343, 0.17677669
  %v4349 = vmul.f32 %v4346, 0.17677669
  %v4350 = vsel %vm2536, %v4348, -1e+10
  %v4351 = vsel %vm2537, %v4349, -1e+10
  %v4352 = vsel %vm2540, -2e+10, %v4350
  %v4353 = vsel %vm2541, -2e+10, %v4351
  %v4354 = vsel %vm136, %v4352, -inf
  %4355 = vmax.xlane.f32.xlu0 %v4354
  %v4356 = vpop.xlane.xlu0 %4355
  %v4357 = vsel %vm136, %v4353, -inf
  %4358 = vmax.xlane.f32.xlu0 %v4357
  %v4359 = vpop.xlane.xlu0 %4358
  %v4360 = vsub.f32 %v4352, %v4356
  %v4361 = vsub.f32 %v4353, %v4359
  %v4362 = vmul.f32 %v4360, 1.442695
  %v4363 = vpow.pop %v4362
  %v4364 = vmul.f32 %v4361, 1.442695
  %v4365 = vpow.pop %v4364
  %v4366 = vsel %vm136, %v4363, 0.0
  %4367 = vadd.xlane.f32.xlu0 %v4366
  %v4368 = vpop.xlane.xlu0 %4367
  %v4369 = vsel %vm136, %v4365, 0.0
  %4370 = vadd.xlane.f32.xlu0 %v4369
  %v4371 = vpop.xlane.xlu0 %4370
  %v4372 = vrcp.pop %v4368
  %v4373 = vmul.f32 %v4368, %v4372
  %v4374 = vsub.f32 1.0, %v4373
  %v4375 = vmul.f32 %v4372, %v4374
  %v4376 = vadd.f32 %v4372, %v4375
  %vm4377 = vweird.f32 %v4368
  %vm4378 = vweird.f32 %v4372
  %vm4379 = vmor %vm4377, %vm4378
  %v4380 = vsel %vm4379, %v4372, %v4376
  %v4381 = vand.u32 2147483647, %v4368
  %vm4382 = vcmp.eq.f32.partialorder %v4381, 8.507059e+37
  %v4383 = vand.u32 %v4368, 2147483648
  %v4384 = vor.u32 1.1754944e-38, %v4383
  %v4385 = vsel %vm4382, %v4384, %v4380
  %v4386 = vmul.f32 %v4363, %v4385
  %v4387 = vrcp.pop %v4371
  %v4388 = vmul.f32 %v4371, %v4387
  %v4389 = vsub.f32 1.0, %v4388
  %v4390 = vmul.f32 %v4387, %v4389
  %v4391 = vadd.f32 %v4387, %v4390
  %vm4392 = vweird.f32 %v4371
  %vm4393 = vweird.f32 %v4387
  %vm4394 = vmor %vm4392, %vm4393
  %v4395 = vsel %vm4394, %v4387, %v4391
  %v4396 = vand.u32 2147483647, %v4371
  %vm4397 = vcmp.eq.f32.partialorder %v4396, 8.507059e+37
  %v4398 = vand.u32 %v4371, 2147483648
  %v4399 = vor.u32 1.1754944e-38, %v4398
  %v4400 = vsel %vm4397, %v4399, %v4395
  %v4401 = vmul.f32 %v4365, %v4400
  %4402 = vrot.lane.b32.xlu0 %v4052, 80
  %v4403 = vpop.permute.xlu0 %4402
  %4404 = vrot.lane.b32.xlu0 %v4055, 80
  %v4405 = vpop.permute.xlu0 %4404
  %v4409 = vsel %vm136, %v4386, 0
  %v4412 = vsel %vm136, %v4401, 0
  %4414 = vmatpush.msra.mxu0 0.0
  %4415 = vmatpush.msra.mxu0 0.0
  %4416 = vmatpush.msra.mxu0 0.0
  %4417 = vmatpush.msra.mxu0 0.0
  %4418 = vmatpush.msra.mxu0 0.0
  %4419 = vmatpush.msra.mxu0 0.0
  %4420 = vmatpush.msra.mxu0 0.0
  %4421 = vmatpush.msra.mxu0 0.0
  %4422 = vmatpush.msra.mxu0 0.0
  %4423 = vmatpush.msra.mxu0 0.0
  %4424 = vmatpush.msra.mxu0 0.0
  %4425 = vmatpush.msra.mxu0 0.0
  %4426 = vmatpush.msra.mxu0 0.0
  %4427 = vmatpush.msra.mxu0 0.0
  %4428 = vmatpush.msra.mxu0 %v4405
  %4429 = vmatpush.msra.mxu0 %v4403
  %4430 = vmatmul.f32.gmra.mxu0 %v4409
  %v4431 = vpop.f32.mrf.mxu0
  %v4432 = vadd.f32 0.0, %v4431
  %4433 = vmatmul.f32.gmra.mxu0 %v4412
  %v4434 = vpop.f32.mrf.mxu0
  %v4435 = vadd.f32 0.0, %v4434
  %4436 = vdwg.mxu0
  %4437 = vrot.lane.b32.xlu0 %v4010, 104
  %v4438 = vpop.permute.xlu0 %4437
  %4439 = vrot.lane.b32.xlu0 %v4013, 104
  %v4440 = vpop.permute.xlu0 %4439
  %4441 = vrot.lane.b32.xlu0 %v4052, 104
  %v4442 = vpop.permute.xlu0 %4441
  %4443 = vrot.lane.b32.xlu0 %v4055, 104
  %v4444 = vpop.permute.xlu0 %4443
  %v4445 = vsel %vm94, %v4438, 0
  %v4447 = vsel %vm94, %v4440, 0
  %v4449 = vsel %vm94, %v4442, 0
  %v4451 = vsel %vm94, %v4444, 0
  %4453 = vmatpush.xpose.msra.mxu0 0.0
  %4454 = vmatpush.xpose.msra.mxu0 0.0
  %4455 = vmatpush.xpose.msra.mxu0 0.0
  %4456 = vmatpush.xpose.msra.mxu0 0.0
  %4457 = vmatpush.xpose.msra.mxu0 0.0
  %4458 = vmatpush.xpose.msra.mxu0 0.0
  %4459 = vmatpush.xpose.msra.mxu0 0.0
  %4460 = vmatpush.xpose.msra.mxu0 0.0
  %4461 = vmatpush.xpose.msra.mxu0 0.0
  %4462 = vmatpush.xpose.msra.mxu0 0.0
  %4463 = vmatpush.xpose.msra.mxu0 0.0
  %4464 = vmatpush.xpose.msra.mxu0 0.0
  %4465 = vmatpush.xpose.msra.mxu0 0.0
  %4466 = vmatpush.xpose.msra.mxu0 0.0
  %4467 = vmatpush.xpose.msra.mxu0 %v4451
  %4468 = vmatpush.xpose.msra.mxu0 %v4449
  %4469 = vmatmul.f32.gmra.mxu0 %v4445
  %v4470 = vpop.f32.mrf.mxu0
  %v4471 = vadd.f32 0.0, %v4470
  %4472 = vmatmul.f32.gmra.mxu0 %v4447
  %v4473 = vpop.f32.mrf.mxu0
  %v4474 = vadd.f32 0.0, %v4473
  %4475 = vdwg.mxu0
  %v4476 = vmul.f32 %v4471, 0.17677669
  %v4477 = vmul.f32 %v4474, 0.17677669
  %v4478 = vsel %vm2536, %v4476, -1e+10
  %v4479 = vsel %vm2537, %v4477, -1e+10
  %v4480 = vsel %vm2540, -2e+10, %v4478
  %v4481 = vsel %vm2541, -2e+10, %v4479
  %v4482 = vsel %vm136, %v4480, -inf
  %4483 = vmax.xlane.f32.xlu0 %v4482
  %v4484 = vpop.xlane.xlu0 %4483
  %v4485 = vsel %vm136, %v4481, -inf
  %4486 = vmax.xlane.f32.xlu0 %v4485
  %v4487 = vpop.xlane.xlu0 %4486
  %v4488 = vsub.f32 %v4480, %v4484
  %v4489 = vsub.f32 %v4481, %v4487
  %v4490 = vmul.f32 %v4488, 1.442695
  %v4491 = vpow.pop %v4490
  %v4492 = vmul.f32 %v4489, 1.442695
  %v4493 = vpow.pop %v4492
  %v4494 = vsel %vm136, %v4491, 0.0
  %4495 = vadd.xlane.f32.xlu0 %v4494
  %v4496 = vpop.xlane.xlu0 %4495
  %v4497 = vsel %vm136, %v4493, 0.0
  %4498 = vadd.xlane.f32.xlu0 %v4497
  %v4499 = vpop.xlane.xlu0 %4498
  %v4500 = vrcp.pop %v4496
  %v4501 = vmul.f32 %v4496, %v4500
  %v4502 = vsub.f32 1.0, %v4501
  %v4503 = vmul.f32 %v4500, %v4502
  %v4504 = vadd.f32 %v4500, %v4503
  %vm4505 = vweird.f32 %v4496
  %vm4506 = vweird.f32 %v4500
  %vm4507 = vmor %vm4505, %vm4506
  %v4508 = vsel %vm4507, %v4500, %v4504
  %v4509 = vand.u32 2147483647, %v4496
  %vm4510 = vcmp.eq.f32.partialorder %v4509, 8.507059e+37
  %v4511 = vand.u32 %v4496, 2147483648
  %v4512 = vor.u32 1.1754944e-38, %v4511
  %v4513 = vsel %vm4510, %v4512, %v4508
  %v4514 = vmul.f32 %v4491, %v4513
  %v4515 = vrcp.pop %v4499
  %v4516 = vmul.f32 %v4499, %v4515
  %v4517 = vsub.f32 1.0, %v4516
  %v4518 = vmul.f32 %v4515, %v4517
  %v4519 = vadd.f32 %v4515, %v4518
  %vm4520 = vweird.f32 %v4499
  %vm4521 = vweird.f32 %v4515
  %vm4522 = vmor %vm4520, %vm4521
  %v4523 = vsel %vm4522, %v4515, %v4519
  %v4524 = vand.u32 2147483647, %v4499
  %vm4525 = vcmp.eq.f32.partialorder %v4524, 8.507059e+37
  %v4526 = vand.u32 %v4499, 2147483648
  %v4527 = vor.u32 1.1754944e-38, %v4526
  %v4528 = vsel %vm4525, %v4527, %v4523
  %v4529 = vmul.f32 %v4493, %v4528
  %4530 = vrot.lane.b32.xlu0 %v4052, 72
  %v4531 = vpop.permute.xlu0 %4530
  %4532 = vrot.lane.b32.xlu0 %v4055, 72
  %v4533 = vpop.permute.xlu0 %4532
  %v4537 = vsel %vm136, %v4514, 0
  %v4540 = vsel %vm136, %v4529, 0
  %4542 = vmatpush.msra.mxu0 0.0
  %4543 = vmatpush.msra.mxu0 0.0
  %4544 = vmatpush.msra.mxu0 0.0
  %4545 = vmatpush.msra.mxu0 0.0
  %4546 = vmatpush.msra.mxu0 0.0
  %4547 = vmatpush.msra.mxu0 0.0
  %4548 = vmatpush.msra.mxu0 0.0
  %4549 = vmatpush.msra.mxu0 0.0
  %4550 = vmatpush.msra.mxu0 0.0
  %4551 = vmatpush.msra.mxu0 0.0
  %4552 = vmatpush.msra.mxu0 0.0
  %4553 = vmatpush.msra.mxu0 0.0
  %4554 = vmatpush.msra.mxu0 0.0
  %4555 = vmatpush.msra.mxu0 0.0
  %4556 = vmatpush.msra.mxu0 %v4533
  %4557 = vmatpush.msra.mxu0 %v4531
  %4558 = vmatmul.f32.gmra.mxu0 %v4537
  %v4559 = vpop.f32.mrf.mxu0
  %v4560 = vadd.f32 0.0, %v4559
  %4561 = vmatmul.f32.gmra.mxu0 %v4540
  %v4562 = vpop.f32.mrf.mxu0
  %v4563 = vadd.f32 0.0, %v4562
  %4564 = vdwg.mxu0
  %4567 = vrot.lane.b32.xlu0 %v4304, 8
  %v4568 = vpop.permute.xlu0 %4567
  %4569 = vrot.lane.b32.xlu0 %v4307, 8
  %v4570 = vpop.permute.xlu0 %4569
  %4575 = vrot.lane.b32.xlu0 %v4432, 16
  %v4576 = vpop.permute.xlu0 %4575
  %4577 = vrot.lane.b32.xlu0 %v4435, 16
  %v4578 = vpop.permute.xlu0 %4577
  %4583 = vrot.lane.b32.xlu0 %v4560, 24
  %v4584 = vpop.permute.xlu0 %4583
  %4585 = vrot.lane.b32.xlu0 %v4563, 24
  %v4586 = vpop.permute.xlu0 %4585
  %v4589 = vsel %vm94, %v4176, %v4568
  %v4590 = vsel %vm94, %v4179, %v4570
  %v4591 = vsel %vm136, %v4589, %v4576
  %v4592 = vsel %vm136, %v4590, %v4578
  %v4593 = vsel %vm632, %v4591, %v4584
  %v4594 = vsel %vm632, %v4592, %v4586
  %4595 = vrot.lane.b32.xlu0 %v4258, 16
  %v4596 = vpop.permute.xlu0 %4595
  %4597 = vrot.lane.b32.xlu0 %v4273, 16
  %v4598 = vpop.permute.xlu0 %4597
  %4601 = vrot.lane.b32.xlu0 %v4386, 32
  %v4602 = vpop.permute.xlu0 %4601
  %4603 = vrot.lane.b32.xlu0 %v4401, 32
  %v4604 = vpop.permute.xlu0 %4603
  %4607 = vrot.lane.b32.xlu0 %v4514, 48
  %v4608 = vpop.permute.xlu0 %4607
  %4609 = vrot.lane.b32.xlu0 %v4529, 48
  %v4610 = vpop.permute.xlu0 %4609
  %v4613 = vsel %vm136, %v4130, %v4596
  %v4614 = vsel %vm136, %v4145, %v4598
  %v4615 = vsel %vm58, %v4613, %v4602
  %v4616 = vsel %vm58, %v4614, %v4604
  %vm4617 = vcmask 392192
  %v4618 = vsel %vm4617, %v4615, %v4608
  %v4619 = vsel %vm4617, %v4616, %v4610
  %v4620 = vsel %vm800, %v4618, 0.0
  %v4621 = vsel %vm800, %v4619, 0.0
  %4622 = vst [vmem:[%s12] sm:$0xff] %v4620
  %4623 = vst [vmem:[%s12 + $0x8] sm:$0xff] %v4621
  %4624 = vrot.lane.b32.xlu0 %v3977, 32
  %v4625 = vpop.permute.xlu0 %4624
  %4626 = vrot.lane.b32.xlu0 %v3978, 32
  %v4627 = vpop.permute.xlu0 %4626
  %4628 = vrot.lane.b32.xlu0 %v3979, 32
  %v4629 = vpop.permute.xlu0 %4628
  %4630 = vrot.lane.b32.xlu0 %v3980, 32
  %v4631 = vpop.permute.xlu0 %4630
  %4636 = vrot.lane.b32.xlu0 %v3984, 32
  %v4637 = vpop.permute.xlu0 %4636
  %v4640 = vsel %vm58, %v4593, 0
  %v4643 = vsel %vm58, %v4594, 0
  %4645 = vmatpush.msra.mxu0 0.0
  %4646 = vmatpush.msra.mxu0 0.0
  %4647 = vmatpush.msra.mxu0 0.0
  %4648 = vmatpush.msra.mxu0 0.0
  %4649 = vmatpush.msra.mxu0 0.0
  %4650 = vmatpush.msra.mxu0 0.0
  %4651 = vmatpush.msra.mxu0 0.0
  %4652 = vmatpush.msra.mxu0 0.0
  %4653 = vmatpush.msra.mxu0 0.0
  %4654 = vmatpush.msra.mxu0 0.0
  %4655 = vmatpush.msra.mxu0 0.0
  %4656 = vmatpush.msra.mxu0 0.0
  %4657 = vmatpush.msra.mxu0 %v4631
  %4658 = vmatpush.msra.mxu0 %v4629
  %4659 = vmatpush.msra.mxu0 %v4627
  %4660 = vmatpush.msra.mxu0 %v4625
  %4661 = vmatmul.f32.gmra.mxu0 %v4640
  %v4662 = vpop.f32.mrf.mxu0
  %v4663 = vadd.f32 %v4637, %v4662
  %4664 = vmatmul.f32.gmra.mxu0 %v4643
  %v4665 = vpop.f32.mrf.mxu0
  %v4666 = vadd.f32 %v4637, %v4665
  %4667 = vdwg.mxu0
  %v4668 = vadd.f32 %v3974, %v4663
  %v4669 = vadd.f32 %v3975, %v4666
  %s4670 = scalar_lea.vmem %s10, 16
  %v4671 = vld [vmem:[%s4670] sm:$0x1]
  %s4672 = scalar_lea.vmem %s10, 17
  %v4673 = vld [vmem:[%s4672] sm:$0x1]
  %v4674 = vsel %vm58, %v4668, 0.0
  %4675 = vadd.xlane.f32.xlu0 %v4674
  %v4676 = vpop.xlane.xlu0 %4675
  %v4677 = vsel %vm58, %v4669, 0.0
  %4678 = vadd.xlane.f32.xlu0 %v4677
  %v4679 = vpop.xlane.xlu0 %4678
  %v4680 = vmul.f32 %v4676, %v700
  %v4681 = vmul.f32 %v4679, %v700
  %v4682 = vsub.f32 %v4668, %v4680
  %v4683 = vsub.f32 %v4669, %v4681
  %v4684 = vmul.f32 %v4682, %v4682
  %v4685 = vmul.f32 %v4683, %v4683
  %v4686 = vsel %vm58, %v4684, 0.0
  %4687 = vadd.xlane.f32.xlu0 %v4686
  %v4688 = vpop.xlane.xlu0 %4687
  %v4689 = vsel %vm58, %v4685, 0.0
  %4690 = vadd.xlane.f32.xlu0 %v4689
  %v4691 = vpop.xlane.xlu0 %4690
  %v4692 = vmul.f32 %v4688, %v700
  %v4693 = vmul.f32 %v4691, %v700
  %v4694 = vadd.f32 %v4692, 1e-05
  %v4695 = vadd.f32 %v4693, 1e-05
  %v4696 = vrsqrt.pop %v4694
  %v4697 = vmul.f32 %v4696, %v4694
  %v4698 = vmul.f32 %v4697, %v4696
  %v4699 = vmul.f32 0.5, %v4698
  %v4700 = vsub.f32 1.5, %v4699
  %v4701 = vmul.f32 %v4696, %v4700
  %vm4702 = vweird.f32 %v4694
  %vm4703 = vweird.f32 %v4696
  %vm4704 = vmor %vm4702, %vm4703
  %v4705 = vsel %vm4704, %v4696, %v4701
  %v4706 = vrsqrt.pop %v4695
  %v4707 = vmul.f32 %v4706, %v4695
  %v4708 = vmul.f32 %v4707, %v4706
  %v4709 = vmul.f32 0.5, %v4708
  %v4710 = vsub.f32 1.5, %v4709
  %v4711 = vmul.f32 %v4706, %v4710
  %vm4712 = vweird.f32 %v4695
  %vm4713 = vweird.f32 %v4706
  %vm4714 = vmor %vm4712, %vm4713
  %v4715 = vsel %vm4714, %v4706, %v4711
  %v4716 = vmul.f32 %v4682, %v4705
  %v4717 = vmul.f32 %v4683, %v4715
  %v4719 = vperm.slane %v4671, 0
  %v4721 = vmul.f32 %v4716, %v4719
  %v4722 = vmul.f32 %v4717, %v4719
  %v4724 = vperm.slane %v4673, 0
  %v4726 = vadd.f32 %v4721, %v4724
  %v4727 = vadd.f32 %v4722, %v4724
  %s4728 = scalar_lea.vmem %s6, 96
  %v4729 = vld [vmem:[%s4728] sm:$0xff]
  %v4730 = vld [vmem:[%s4728 + $0x8] sm:$0xff]
  %v4731 = vld [vmem:[%s4728 + $0x10] sm:$0xff]
  %v4732 = vld [vmem:[%s4728 + $0x18] sm:$0xff]
  %s4733 = scalar_lea.vmem %s7, 3
  %v4734 = vld [vmem:[%s4733] sm:$0x1]
  %v4736 = vperm.slane %v4734, 0
  %v4739 = vsel %vm58, %v4726, 0
  %v4742 = vsel %vm58, %v4727, 0
  %4744 = vmatpush.msra.mxu0 0.0
  %4745 = vmatpush.msra.mxu0 0.0
  %4746 = vmatpush.msra.mxu0 0.0
  %4747 = vmatpush.msra.mxu0 0.0
  %4748 = vmatpush.msra.mxu0 0.0
  %4749 = vmatpush.msra.mxu0 0.0
  %4750 = vmatpush.msra.mxu0 0.0
  %4751 = vmatpush.msra.mxu0 0.0
  %4752 = vmatpush.msra.mxu0 0.0
  %4753 = vmatpush.msra.mxu0 0.0
  %4754 = vmatpush.msra.mxu0 0.0
  %4755 = vmatpush.msra.mxu0 0.0
  %4756 = vmatpush.msra.mxu0 %v4732
  %4757 = vmatpush.msra.mxu0 %v4731
  %4758 = vmatpush.msra.mxu0 %v4730
  %4759 = vmatpush.msra.mxu0 %v4729
  %4760 = vmatmul.f32.gmra.mxu0 %v4739
  %v4761 = vpop.f32.mrf.mxu0
  %v4762 = vadd.f32 %v4736, %v4761
  %4763 = vmatmul.f32.gmra.mxu0 %v4742
  %v4764 = vpop.f32.mrf.mxu0
  %v4765 = vadd.f32 %v4736, %v4764
  %4766 = vdwg.mxu0
  %v4767 = vmax.f32 %v4762, 0.0
  %v4768 = vmax.f32 %v4765, 0.0
  %s4769 = scalar_lea.vmem %s8, 192
  %v4770 = vld [vmem:[%s4769] sm:$0xff]
  %v4771 = vld [vmem:[%s4769 + $0x8] sm:$0xff]
  %v4772 = vld [vmem:[%s4769 + $0x10] sm:$0xff]
  %v4773 = vld [vmem:[%s4769 + $0x18] sm:$0xff]
  %v4774 = vld [vmem:[%s4769 + $0x20] sm:$0xff]
  %v4775 = vld [vmem:[%s4769 + $0x28] sm:$0xff]
  %v4776 = vld [vmem:[%s4769 + $0x30] sm:$0xff]
  %v4777 = vld [vmem:[%s4769 + $0x38] sm:$0xff]
  %s4778 = scalar_lea.vmem %s9, 3
  %v4779 = vld [vmem:[%s4778] sm:$0x1]
  %v4781 = vperm.slane %v4779, 0
  %v4784 = vsel %vm800, %v4767, 0
  %v4787 = vsel %vm800, %v4768, 0
  %4789 = vmatpush.msra.mxu0 0.0
  %4790 = vmatpush.msra.mxu0 0.0
  %4791 = vmatpush.msra.mxu0 0.0
  %4792 = vmatpush.msra.mxu0 0.0
  %4793 = vmatpush.msra.mxu0 0.0
  %4794 = vmatpush.msra.mxu0 0.0
  %4795 = vmatpush.msra.mxu0 0.0
  %4796 = vmatpush.msra.mxu0 0.0
  %4797 = vmatpush.msra.mxu0 %v4777
  %4798 = vmatpush.msra.mxu0 %v4776
  %4799 = vmatpush.msra.mxu0 %v4775
  %4800 = vmatpush.msra.mxu0 %v4774
  %4801 = vmatpush.msra.mxu0 %v4773
  %4802 = vmatpush.msra.mxu0 %v4772
  %4803 = vmatpush.msra.mxu0 %v4771
  %4804 = vmatpush.msra.mxu0 %v4770
  %4805 = vmatmul.f32.gmra.mxu0 %v4784
  %v4806 = vpop.f32.mrf.mxu0
  %v4807 = vadd.f32 %v4781, %v4806
  %4808 = vmatmul.f32.gmra.mxu0 %v4787
  %v4809 = vpop.f32.mrf.mxu0
  %v4810 = vadd.f32 %v4781, %v4809
  %4811 = vdwg.mxu0
  %v4812 = vadd.f32 %v4726, %v4807
  %v4813 = vadd.f32 %v4727, %v4810
  %s4814 = scalar_lea.vmem %s10, 18
  %v4815 = vld [vmem:[%s4814] sm:$0x1]
  %s4816 = scalar_lea.vmem %s10, 19
  %v4817 = vld [vmem:[%s4816] sm:$0x1]
  %v4818 = vsel %vm58, %v4812, 0.0
  %4819 = vadd.xlane.f32.xlu0 %v4818
  %v4820 = vpop.xlane.xlu0 %4819
  %v4821 = vsel %vm58, %v4813, 0.0
  %4822 = vadd.xlane.f32.xlu0 %v4821
  %v4823 = vpop.xlane.xlu0 %4822
  %v4824 = vmul.f32 %v4820, %v700
  %v4825 = vmul.f32 %v4823, %v700
  %v4826 = vsub.f32 %v4812, %v4824
  %v4827 = vsub.f32 %v4813, %v4825
  %v4828 = vmul.f32 %v4826, %v4826
  %v4829 = vmul.f32 %v4827, %v4827
  %v4830 = vsel %vm58, %v4828, 0.0
  %4831 = vadd.xlane.f32.xlu0 %v4830
  %v4832 = vpop.xlane.xlu0 %4831
  %v4833 = vsel %vm58, %v4829, 0.0
  %4834 = vadd.xlane.f32.xlu0 %v4833
  %v4835 = vpop.xlane.xlu0 %4834
  %v4836 = vmul.f32 %v4832, %v700
  %v4837 = vmul.f32 %v4835, %v700
  %v4838 = vadd.f32 %v4836, 1e-05
  %v4839 = vadd.f32 %v4837, 1e-05
  %v4840 = vrsqrt.pop %v4838
  %v4841 = vmul.f32 %v4840, %v4838
  %v4842 = vmul.f32 %v4841, %v4840
  %v4843 = vmul.f32 0.5, %v4842
  %v4844 = vsub.f32 1.5, %v4843
  %v4845 = vmul.f32 %v4840, %v4844
  %vm4846 = vweird.f32 %v4838
  %vm4847 = vweird.f32 %v4840
  %vm4848 = vmor %vm4846, %vm4847
  %v4849 = vsel %vm4848, %v4840, %v4845
  %v4850 = vrsqrt.pop %v4839
  %v4851 = vmul.f32 %v4850, %v4839
  %v4852 = vmul.f32 %v4851, %v4850
  %v4853 = vmul.f32 0.5, %v4852
  %v4854 = vsub.f32 1.5, %v4853
  %v4855 = vmul.f32 %v4850, %v4854
  %vm4856 = vweird.f32 %v4839
  %vm4857 = vweird.f32 %v4850
  %vm4858 = vmor %vm4856, %vm4857
  %v4859 = vsel %vm4858, %v4850, %v4855
  %v4860 = vmul.f32 %v4826, %v4849
  %v4861 = vmul.f32 %v4827, %v4859
  %v4863 = vperm.slane %v4815, 0
  %v4865 = vmul.f32 %v4860, %v4863
  %v4866 = vmul.f32 %v4861, %v4863
  %v4868 = vperm.slane %v4817, 0
  %v4870 = vadd.f32 %v4865, %v4868
  %v4871 = vadd.f32 %v4866, %v4868
  %s4872 = scalar_lea.vmem %s4, 192
  %v4873 = vld [vmem:[%s4872] sm:$0xff]
  %v4874 = vld [vmem:[%s4872 + $0x8] sm:$0xff]
  %v4875 = vld [vmem:[%s4872 + $0x10] sm:$0xff]
  %v4876 = vld [vmem:[%s4872 + $0x18] sm:$0xff]
  %s4877 = scalar_lea.vmem %s5, 6
  %v4878 = vld [vmem:[%s4877] sm:$0x1]
  %v4880 = vperm.slane %v4878, 0
  %v4883 = vsel %vm58, %v4870, 0
  %v4886 = vsel %vm58, %v4871, 0
  %4888 = vmatpush.msra.mxu0 0.0
  %4889 = vmatpush.msra.mxu0 0.0
  %4890 = vmatpush.msra.mxu0 0.0
  %4891 = vmatpush.msra.mxu0 0.0
  %4892 = vmatpush.msra.mxu0 0.0
  %4893 = vmatpush.msra.mxu0 0.0
  %4894 = vmatpush.msra.mxu0 0.0
  %4895 = vmatpush.msra.mxu0 0.0
  %4896 = vmatpush.msra.mxu0 0.0
  %4897 = vmatpush.msra.mxu0 0.0
  %4898 = vmatpush.msra.mxu0 0.0
  %4899 = vmatpush.msra.mxu0 0.0
  %4900 = vmatpush.msra.mxu0 %v4876
  %4901 = vmatpush.msra.mxu0 %v4875
  %4902 = vmatpush.msra.mxu0 %v4874
  %4903 = vmatpush.msra.mxu0 %v4873
  %4904 = vmatmul.f32.gmra.mxu0 %v4883
  %v4905 = vpop.f32.mrf.mxu0
  %v4906 = vadd.f32 %v4880, %v4905
  %4907 = vmatmul.f32.gmra.mxu0 %v4886
  %v4908 = vpop.f32.mrf.mxu0
  %v4909 = vadd.f32 %v4880, %v4908
  %4910 = vdwg.mxu0
  %4911 = vst [vmem:[%s11] sm:$0xff] %v4906
  %4912 = vst [vmem:[%s11 + $0x8] sm:$0xff] %v4909
  // Predicated region
  $region46: #{transformer_forward.1} parent=0 // pred_check
    _
  $region47: #{transformer_forward.1} parent=0 // pred_check_branch
    %4914 = sbr.rel (0) target = $region49
  $region48: #{transformer_forward.1} parent=0 // pred_region
    _
  $region49: #{transformer_forward.1} parent=0 // pred_fallthru
    _
  // Predicated region
  $region50: #{transformer_forward.1} parent=0 // pred_check
    _
  $region51: #{transformer_forward.1} parent=0 // pred_check_branch
    %4916 = sbr.rel (0) target = $region53
  $region52: #{transformer_forward.1} parent=0 // pred_region
    _
  $region53: #{transformer_forward.1} parent=0 // pred_fallthru
    _
  // Predicated region
  $region54: #{transformer_forward.1} parent=0 // pred_check
    _
  $region55: #{transformer_forward.1} parent=0 // pred_check_branch
    %4918 = sbr.rel (0) target = $region57
  $region56: #{transformer_forward.1} parent=0 // pred_region
    _
  $region57: #{transformer_forward.1} parent=0 // pred_fallthru
    _
  // Predicated region
  $region58: #{transformer_forward.1} parent=0 // pred_check
    _
  $region59: #{transformer_forward.1} parent=0 // pred_check_branch
    %4920 = sbr.rel (0) target = $region61
  $region60: #{transformer_forward.1} parent=0 // pred_region
    _
  $region61: #{transformer_forward.1} parent=0 // pred_fallthru
    _

</llo_original>
